<compile_context>
chip_gen: v7x
topology: tpu7x:2x2x1
jax: 0.10.0
libtpu: 0.0.40
codegen_flags: <defaults>
</compile_context>

<pallas_src>
import math
import functools

import jax
import jax.numpy as jnp
from jax.experimental import pallas as pl
from jax.experimental.pallas import tpu as pltpu

# ----------------------------- configuration (small shapes) -----------------------------
ITEM_DIM = 128          # args.item_dim
ATTR_DIM = 128          # args.attribute_dim (== item_dim, as the original code implies)
NUM_ITEMS = 33          # embedding rows; index 0 = padding -> 32 "real" items
NUM_CATS = 9            # index 0 = "no category"
NUM_BRANDS = 9
BATCH = 8
SEQ_LEN = 8
NUM_SAMPLES = 4         # viewed/bought samples per position
NUM_CONV_LAYERS = 2
NUM_COARSE = 8          # args.num_coarse_sampling
NUM_EXPANDED = 4        # args.num_expanded_samples
TAU = 0.2
ALPHA = 0.2             # LeakyReLU slope
NP_ITEMS = 128          # lane-dense padding for the item-score output


# ----------------------------------- Pallas kernels ------------------------------------
def _sess_scores_kernel(seq_ref, mask_ref, pos_ref, w1_ref, w2row_ref,
                        g1w_ref, g1b_ref, g2w_ref, itemsT_ref, scores_ref, *, dim):
    """Fused generate_sess_emb (gated attention pooling) + recommendation scores.

    scores = 10 * normalize(sess) @ itemsT  (items pre-normalized/transposed in XLA,
    lane-dense 128-padded columns).
    """
    B, L, _ = seq_ref.shape
    seq = seq_ref[...]                                          # (B, L, D) f32
    m = mask_ref[...][..., None]                                # (B, L, 1)
    hs = jnp.sum(seq * m, axis=1) / jnp.maximum(jnp.sum(m, axis=1), 1.0)    # (B, D)

    posw = jnp.dot(pos_ref[...], w1_ref[0:dim, :],
                   preferred_element_type=jnp.float32)          # (L, D)
    seqw = jnp.dot(seq.reshape(B * L, dim).astype(jnp.bfloat16), w1_ref[dim:, :],
                   preferred_element_type=jnp.float32).reshape(B, L, dim)
    nh = jnp.tanh(posw[None, :, :] + seqw)
    g1 = jnp.dot(nh.reshape(B * L, dim).astype(jnp.bfloat16), g1w_ref[...],
                 preferred_element_type=jnp.float32).reshape(B, L, dim)
    g2 = jnp.dot(hs.astype(jnp.bfloat16), g2w_ref[...],
                 preferred_element_type=jnp.float32)            # (B, D)
    gate = jax.nn.sigmoid(g1 + g1b_ref[...] + g2[:, None, :])
    beta = jnp.sum(gate * w2row_ref[...], axis=-1, keepdims=True) * m       # (B, L, 1)
    sess = jnp.sum(beta * seq, axis=1)                          # (B, D)

    inv = jax.lax.rsqrt(jnp.maximum(jnp.sum(sess * sess, axis=-1, keepdims=True), 1e-24))
    s = sess * inv
    scores_ref[...] = 10.0 * jnp.dot(s.astype(jnp.bfloat16), itemsT_ref[...],
                                     preferred_element_type=jnp.float32)


def sess_emb_and_scores(inter_feat0, masks_f, pos_bf16, kparams, items_nT):
    """One Pallas call: inter session embedding + lane-dense item scores."""
    B, L, D = inter_feat0.shape
    kern = functools.partial(_sess_scores_kernel, dim=D)
    scores = pl.pallas_call(
        kern,
        out_shape=jax.ShapeDtypeStruct((B, NP_ITEMS), jnp.float32),
    )(inter_feat0, masks_f, pos_bf16,
      kparams["w_1"], kparams["w_2_row"],
      kparams["glu1_w"], kparams["glu1_b_row"], kparams["glu2_w"],
      items_nT)
    return scores


def _map_disen_kernel(x_ref, md_ref, wx_ref, w2h_ref, w3h_ref, b_ref, o_ref, *, dim, alpha):
    """Fused map_dense projection + 3-layer residual-concat MLP (inter/attr disen).

    x-residual contributions of all three layers come from one widened dot:
       xcat = mapped @ [W1 | W2[D:] | W3[D:]]   (N = 3D = 384, fills 256-wide MXU).
    """
    xb = x_ref[0]                                               # (M, D) bf16
    mapped = jnp.dot(xb, md_ref[...], preferred_element_type=jnp.float32)   # (M, D) f32
    mb = mapped.astype(jnp.bfloat16)
    xcat = jnp.dot(mb, wx_ref[0], preferred_element_type=jnp.float32)       # (M, 3D) f32
    b = b_ref[0]                                                # (3, D) f32

    def leaky(v):
        return jnp.maximum(v, alpha * v)

    h1 = leaky(xcat[:, 0:dim] + b[0:1])
    h2 = leaky(jnp.dot(h1.astype(jnp.bfloat16), w2h_ref[0],
                       preferred_element_type=jnp.float32)
               + xcat[:, dim:2 * dim] + b[1:2])
    h3 = leaky(jnp.dot(h2.astype(jnp.bfloat16), w3h_ref[0],
                       preferred_element_type=jnp.float32)
               + xcat[:, 2 * dim:3 * dim] + b[2:3])
    o_ref[0] = h3


def map_disen(x_sets_bf16, kparams):
    """Both disen passes (inter + attr weight sets) in ONE gridded Pallas call.

    grid=(2,), "parallel": on v7x each TensorCore takes one set; on v5e/v6e this
    is 2 fat serial steps (minimal per-step overhead).
    """
    S, M, D = x_sets_bf16.shape
    kern = functools.partial(_map_disen_kernel, dim=D, alpha=ALPHA)
    out = pl.pallas_call(
        kern,
        out_shape=jax.ShapeDtypeStruct((S, M, D), jnp.float32),
        grid=(S,),
        in_specs=[pl.BlockSpec((1, M, D), lambda i: (i, 0, 0)),
                  pl.BlockSpec((D, D), lambda i: (0, 0)),
                  pl.BlockSpec((1, D, 3 * D), lambda i: (i, 0, 0)),
                  pl.BlockSpec((1, D, D), lambda i: (i, 0, 0)),
                  pl.BlockSpec((1, D, D), lambda i: (i, 0, 0)),
                  pl.BlockSpec((1, 3, D), lambda i: (i, 0, 0))],
        out_specs=pl.BlockSpec((1, M, D), lambda i: (i, 0, 0)),
        compiler_params=pltpu.CompilerParams(
            dimension_semantics=("parallel",),
            vmem_limit_bytes=32 * 1024 * 1024),
    )(x_sets_bf16, kparams["map_dense"], kparams["wx_sets"],
      kparams["w2h_sets"], kparams["w3h_sets"], kparams["b_sets"])
    return out


# --------------------------------- plain-JAX glue ops -----------------------------------
def l2_normalize(x, eps=1e-12):
    return x * jax.lax.rsqrt(jnp.maximum(jnp.sum(x * x, axis=-1, keepdims=True), eps * eps))


def cross_entropy(logits, labels):
    logp = jax.nn.log_softmax(logits, axis=-1)
    return -jnp.mean(jnp.take_along_axis(logp, labels[:, None], axis=-1)[:, 0])


def weighted_cross_entropy(logits, labels, weights):
    logp = jax.nn.log_softmax(logits, axis=-1)
    nll = -jnp.take_along_axis(logp, labels[:, None], axis=-1)[:, 0]
    return jnp.sum(nll * weights) / jnp.maximum(jnp.sum(weights), 1.0)


def item_conv(adjacency, item_emb, layers):
    # TODO(synk): ItemConv source not provided; standard layered graph conv with mean readout.
    # 32x32x128 matmuls: kept in XLA (sub-microsecond; a Pallas launch would cost more).
    h = item_emb
    acc = item_emb
    for _ in range(layers):
        h = jnp.dot(adjacency, h)
        acc = acc + h
    return acc / (layers + 1)


def extract_topk_samples_batched(viewed_emb, bought_emb, all_items_embedd, key):
    """Coarse top-k sampling for viewed + bought samples, batched into one sim/top_k."""
    B, L, S, D = viewed_emb.shape
    M = B * L * S
    samples = jnp.concatenate([viewed_emb.reshape(M, D), bought_emb.reshape(M, D)], axis=0)
    # softmax dropped before top_k: monotonic per row, identical indices.
    sim = jax.lax.dot_general(samples, all_items_embedd,
                              (((1,), (1,)), ((), ())),
                              preferred_element_type=jnp.float32)          # (2M, N)
    _, pos_items = jax.lax.top_k(sim, NUM_COARSE)                          # (2M, k)
    k1, k2 = jax.random.split(key)
    rs_v = jax.random.randint(k1, (NUM_EXPANDED,), NUM_EXPANDED, NUM_COARSE)
    rs_b = jax.random.randint(k2, (NUM_EXPANDED,), NUM_EXPANDED, NUM_COARSE)
    sel_v = pos_items[:M][:, rs_v]                                         # (M, E)
    sel_b = pos_items[M:][:, rs_b]
    neg_v = jnp.take(all_items_embedd, sel_v, axis=0).reshape(B, L, S * NUM_EXPANDED, D)
    neg_b = jnp.take(all_items_embedd, sel_b, axis=0).reshape(B, L, S * NUM_EXPANDED, D)
    return neg_v, neg_b


def relation_nce_loss(feat, pos_emb, neg_emb, masks, tau):
    # TODO(synk): relation_nce_loss source not provided; standard masked InfoNCE stand-in.
    f = l2_normalize(feat)
    p = l2_normalize(pos_emb)
    n = l2_normalize(neg_emb)
    pos_s = jnp.sum(jnp.exp(jnp.einsum("bld,blsd->bls", f, p) / tau), axis=-1)
    neg_s = jnp.sum(jnp.exp(jnp.einsum("bld,blsd->bls", f, n) / tau), axis=-1)
    loss = -jnp.log(pos_s / (pos_s + neg_s) + 1e-8)
    m = masks.astype(jnp.float32)
    return jnp.sum(loss * m) / jnp.maximum(jnp.sum(m), 1.0)


def loss_predict_attribute(feat, cat_table, brand_table, cats, brands, masks):
    # Tiny (64x128)@(128x8) score heads feeding masked CE: kept in XLA (fuses with CE).
    A = feat.shape[-1]
    f = l2_normalize(feat).reshape(-1, A)
    scores_cat = jnp.dot(f, cat_table.T)
    scores_brand = jnp.dot(f, brand_table.T)
    lab_cat = cats.reshape(-1)
    lab_brand = brands.reshape(-1)
    m = masks.reshape(-1) == 1
    # masked_select(...) + mean CE  ==  weighted CE with 0/1 weights
    w_cat = (m & (lab_cat != 0)).astype(jnp.float32)
    w_brand = (m & (lab_brand != 0)).astype(jnp.float32)
    loss_cat = weighted_cross_entropy(scores_cat, jnp.maximum(lab_cat - 1, 0), w_cat)
    loss_brand = weighted_cross_entropy(scores_brand, jnp.maximum(lab_brand - 1, 0), w_brand)
    return loss_cat, loss_brand


def _split_rows(flat, like_parts):
    """Split a (sum(M_i), D) array back into the original leading shapes."""
    outs = []
    off = 0
    for p in like_parts:
        n = int(math.prod(p.shape[:-1]))
        outs.append(flat[off:off + n].reshape(p.shape))
        off += n
    return outs


# ------------------------------------- parameters ---------------------------------------
def init_params(key):
    stdv = 1.0 / math.sqrt(ITEM_DIM)

    def u(k, shape):
        return jax.random.uniform(k, shape, jnp.float32, -stdv, stdv)

    ks = iter(jax.random.split(key, 32))
    p = {
        "embedding": u(next(ks), (NUM_ITEMS, ITEM_DIM)),
        "cat_embedding": u(next(ks), (NUM_CATS, ATTR_DIM)),
        "brand_embedding": u(next(ks), (NUM_BRANDS, ATTR_DIM)),
        "pos_embedding": u(next(ks), (200, ITEM_DIM)),
        "w_1": u(next(ks), (2 * ITEM_DIM, ITEM_DIM)),
        "w_2": u(next(ks), (ITEM_DIM, 1)),
        "glu1_w": u(next(ks), (ITEM_DIM, ITEM_DIM)),
        "glu1_b": u(next(ks), (ITEM_DIM,)),
        "glu2_w": u(next(ks), (ITEM_DIM, ITEM_DIM)),
        "map_dense": u(next(ks), (ITEM_DIM, ITEM_DIM)),
        "w_3": u(next(ks), (ITEM_DIM, ATTR_DIM)),
        "w_recon": u(next(ks), (2 * ITEM_DIM, ITEM_DIM)),
    }
    for name in ["inter_dense1", "inter_dense2", "inter_dense3",
                 "attr_dense1", "attr_dense2", "attr_dense3"]:
        in_dim = ITEM_DIM if name.endswith("1") else 2 * ITEM_DIM
        p[name + "_w"] = u(next(ks), (in_dim, ITEM_DIM))
        p[name + "_b"] = u(next(ks), (ITEM_DIM,))
    return p


def prepare_kernel_params(p):
    """Pre-cast weights to bf16 and pre-stack the disen weight sets ONCE (outside jit)."""
    D = ITEM_DIM

    def bf(x):
        return x.astype(jnp.bfloat16)

    def pack_set(prefix):
        w1 = p[prefix + "dense1_w"]
        w2 = p[prefix + "dense2_w"]
        w3 = p[prefix + "dense3_w"]
        # widened x-residual weight: [W1 | W2[D:] | W3[D:]]  -> (D, 3D)
        wx = jnp.concatenate([w1, w2[D:], w3[D:]], axis=1)
        b = jnp.stack([p[prefix + "dense1_b"], p[prefix + "dense2_b"],
                       p[prefix + "dense3_b"]], axis=0)                 # (3, D)
        return bf(wx), bf(w2[:D]), bf(w3[:D]), b

    i_wx, i_w2h, i_w3h, i_b = pack_set("inter_")
    a_wx, a_w2h, a_w3h, a_b = pack_set("attr_")

    return {
        "map_dense": bf(p["map_dense"]),
        "wx_sets": jnp.stack([i_wx, a_wx], axis=0),     # (2, D, 3D) bf16
        "w2h_sets": jnp.stack([i_w2h, a_w2h], axis=0),  # (2, D, D)  bf16
        "w3h_sets": jnp.stack([i_w3h, a_w3h], axis=0),  # (2, D, D)  bf16
        "b_sets": jnp.stack([i_b, a_b], axis=0),        # (2, 3, D)  f32
        "pos": bf(p["pos_embedding"]),                  # (200, D)   bf16
        "w_1": bf(p["w_1"]),                            # (2D, D)    bf16
        "w_2_row": p["w_2"].reshape(1, D),              # (1, D)     f32
        "glu1_w": bf(p["glu1_w"]),
        "glu1_b_row": p["glu1_b"].reshape(1, D),
        "glu2_w": bf(p["glu2_w"]),
    }


# --------------------------------------- forward ----------------------------------------
def forward(params, kparams, adjacency, inputs, targets, masks, cats, brands,
            viewed_items, bought_items, rng):
    D = ITEM_DIM
    N = NUM_ITEMS - 1
    emb = params["embedding"]

    # Item graph convolution over the (num_items-1) real items (XLA; tiny).
    all_item_embeddings_i = item_conv(adjacency, emb[1:], NUM_CONV_LAYERS)

    # get_batch_item_embeddings: row 0 = zeros, then gather.
    table = jnp.concatenate([jnp.zeros((1, D), jnp.float32), all_item_embeddings_i], axis=0)
    inter_feat0 = jnp.take(table, inputs, axis=0)                  # (B, L, D)

    # TODO(synk): Attribute_cosmetics source not provided; masked sum of attribute embeddings.
    attr_feat0 = (jnp.take(params["cat_embedding"], cats, axis=0)
                  + jnp.take(params["brand_embedding"], brands, axis=0))
    attr_feat0 = attr_feat0 * masks[..., None].astype(jnp.float32)

    # Pre-normalized + transposed + lane-padded item table (XLA; fuses, grid-invariant).
    itn = l2_normalize(all_item_embeddings_i)                      # (N, D)
    items_nT = jnp.zeros((D, NP_ITEMS), jnp.bfloat16).at[:, :N].set(itn.T.astype(jnp.bfloat16))

    # Fused: session attention pooling + lane-dense item scores (one Pallas call).
    # (sess_emb_a and the sess-vector projections are dead: they only feed
    #  loss_batch_sess which the original forward hard-codes to 0.)
    masks_f = masks.astype(jnp.float32)
    L = inputs.shape[1]
    scores_full = sess_emb_and_scores(inter_feat0, masks_f, kparams["pos"][:L],
                                      kparams, items_nT)
    scores_item = scores_full[:, :N]
    loss_rec = cross_entropy(scores_item, targets - 1)

    viewed_emb = jnp.take(emb, viewed_items, axis=0)               # (B, L, S, D)
    bought_emb = jnp.take(emb, bought_items, axis=0)

    expanded_substi, expanded_comple = extract_topk_samples_batched(
        viewed_emb, bought_emb, emb[1:], rng)                      # (B, L, S*E, D)

    # attr_feat (post map_dense) is the only mapped tensor needed outside the disen
    # MLPs (it anchors loss2) -> tiny 64-row matmul kept in XLA (f32).
    attr_feat = jnp.dot(attr_feat0.reshape(-1, D),
                        params["map_dense"]).reshape(attr_feat0.shape)

    # Fused map_dense + disen MLP over BOTH weight sets: ONE Pallas launch.
    #   set 0 (inter_disen): inter_feat, comple(=bought), expanded_substi   (all post-map)
    #   set 1 (attr_disen) : inter_feat, substi(=viewed), expanded_comple   (all post-map)
    i_parts = [inter_feat0, bought_emb, expanded_substi]
    a_parts = [inter_feat0, viewed_emb, expanded_comple]
    inter_in = jnp.concatenate([x.reshape(-1, D) for x in i_parts], axis=0)
    attr_in = jnp.concatenate([x.reshape(-1, D) for x in a_parts], axis=0)
    x_sets = jnp.stack([inter_in, attr_in], axis=0).astype(jnp.bfloat16)   # (2, M, D) bf16
    out_sets = map_disen(x_sets, kparams)                                  # (2, M, D) f32

    disen_inter_feat, disen_inter_comple, disen_inter_exp_substi = _split_rows(out_sets[0], i_parts)
    disen_attr_feat, disen_attr_substi, disen_attr_exp_comple = _split_rows(out_sets[1], a_parts)

    # w_recon reconstruction + w_3 projection: tiny (64,128) matmuls, XLA (fuse with losses).
    B = inputs.shape[0]
    di = disen_inter_feat.reshape(-1, D)
    da = disen_attr_feat.reshape(-1, D)
    recon = (jnp.dot(di, params["w_recon"][:D]) + jnp.dot(da, params["w_recon"][D:]))
    disen_attr_feat_1 = jnp.dot(da, params["w_3"]).reshape(B, L, D)

    loss_cat, loss_brand = loss_predict_attribute(
        disen_attr_feat_1, params["cat_embedding"][1:], params["brand_embedding"][1:],
        cats, brands, masks)
    loss_attribute = loss_cat + loss_brand

    original_item_embeddings = jnp.take(emb, inputs, axis=0)
    loss_reconstruction = jnp.mean((recon.reshape(B, L, D) - original_item_embeddings) ** 2)

    loss1 = relation_nce_loss(disen_inter_feat, disen_inter_comple,
                              disen_inter_exp_substi, masks, TAU)
    # NOTE: matches original -- loss2 anchors on attr_feat (post-map, pre-disen).
    loss2 = relation_nce_loss(attr_feat, disen_attr_substi,
                              disen_attr_exp_comple, masks, TAU)
    loss_contra = loss1 + loss2

    # Original forward hard-codes this to 0 right before returning.
    loss_batch_sess = jnp.float32(0.0)

    return (scores_item, loss_rec, loss_attribute, loss_reconstruction,
            loss_contra, loss_batch_sess)


# ----------------------------------------- main ------------------------------------------
if __name__ == "__main__":
    key = jax.random.PRNGKey(0)
    (k_params, k_adj, k_in, k_tgt, k_len, k_cat,
     k_brand, k_view, k_bought, k_rng) = jax.random.split(key, 10)

    params = init_params(k_params)
    kparams = prepare_kernel_params(params)   # bf16 / stacked weights, computed ONCE

    adj = jax.random.uniform(k_adj, (NUM_ITEMS - 1, NUM_ITEMS - 1), jnp.float32)
    adj = adj / jnp.sum(adj, axis=1, keepdims=True)

    lengths = jax.random.randint(k_len, (BATCH,), 2, SEQ_LEN + 1)
    masks = (jnp.arange(SEQ_LEN)[None, :] < lengths[:, None]).astype(jnp.int32)
    inputs = jax.random.randint(k_in, (BATCH, SEQ_LEN), 1, NUM_ITEMS) * masks
    targets = jax.random.randint(k_tgt, (BATCH,), 1, NUM_ITEMS)
    cats = jax.random.randint(k_cat, (BATCH, SEQ_LEN), 1, NUM_CATS) * masks
    brands = jax.random.randint(k_brand, (BATCH, SEQ_LEN), 1, NUM_BRANDS) * masks
    viewed_items = jax.random.randint(k_view, (BATCH, SEQ_LEN, NUM_SAMPLES), 1, NUM_ITEMS)
    bought_items = jax.random.randint(k_bought, (BATCH, SEQ_LEN, NUM_SAMPLES), 1, NUM_ITEMS)

    forward_jit = jax.jit(forward)
    out = forward_jit(params, kparams, adj, inputs, targets, masks, cats, brands,
                      viewed_items, bought_items, k_rng)
    out = jax.block_until_ready(out)

    scores_item, loss_rec, loss_attr, loss_recon, loss_contra, loss_bs = out
    assert scores_item.shape == (BATCH, NUM_ITEMS - 1)
    for v in (loss_rec, loss_attr, loss_recon, loss_contra):
        assert jnp.isfinite(v)
    print("KERNEL_OK")
</pallas_src>

<mosaic_0001>
module attributes {stable_mosaic.version = 11 : i64} {
  func.func @_sess_scores_kernel(%arg0: memref<8x8x128xf32, #tpu.memory_space<vmem>>, %arg1: memref<8x8xf32, #tpu.memory_space<vmem>>, %arg2: memref<8x128xbf16, #tpu.memory_space<vmem>>, %arg3: memref<256x128xbf16, #tpu.memory_space<vmem>>, %arg4: memref<1x128xf32, #tpu.memory_space<vmem>>, %arg5: memref<128x128xbf16, #tpu.memory_space<vmem>>, %arg6: memref<1x128xf32, #tpu.memory_space<vmem>>, %arg7: memref<128x128xbf16, #tpu.memory_space<vmem>>, %arg8: memref<128x128xbf16, #tpu.memory_space<vmem>>, %arg9: memref<8x128xf32, #tpu.memory_space<vmem>>) attributes {dimension_semantics = [], scalar_prefetch = 0 : i64, scratch_operands = 0 : i64, tpu.core_type = #tpu.core_type<tc>} {
    %c0 = arith.constant 0 : index
    %c0_0 = arith.constant 0 : index
    %c0_1 = arith.constant 0 : index
    %0 = vector.load %arg0[%c0, %c0_0, %c0_1] : memref<8x8x128xf32, #tpu.memory_space<vmem>>, vector<8x8x128xf32>
    %c0_2 = arith.constant 0 : index
    %c0_3 = arith.constant 0 : index
    %1 = vector.load %arg1[%c0_2, %c0_3] : memref<8x8xf32, #tpu.memory_space<vmem>>, vector<8x8xf32>
    %2 = vector.shape_cast %1 : vector<8x8xf32> to vector<8x8x1xf32>
    %3 = vector.broadcast %2 : vector<8x8x1xf32> to vector<8x8x128xf32>
    %4 = arith.mulf %0, %3 : vector<8x8x128xf32>
    %cst = arith.constant dense<0.000000e+00> : vector<8x128xf32>
    %5 = vector.multi_reduction <add>, %4, %cst [1] : vector<8x8x128xf32> to vector<8x128xf32>
    %cst_4 = arith.constant dense<0.000000e+00> : vector<8x1xf32>
    %6 = vector.multi_reduction <add>, %2, %cst_4 [1] : vector<8x8x1xf32> to vector<8x1xf32>
    %cst_5 = arith.constant 1.000000e+00 : f32
    %7 = vector.broadcast %cst_5 : f32 to vector<8x1xf32>
    %8 = arith.maximumf %6, %7 : vector<8x1xf32>
    %9 = vector.broadcast %8 : vector<8x1xf32> to vector<8x128xf32>
    %10 = arith.divf %5, %9 : vector<8x128xf32>
    %c0_6 = arith.constant 0 : index
    %c0_7 = arith.constant 0 : index
    %11 = vector.load %arg2[%c0_6, %c0_7] : memref<8x128xbf16, #tpu.memory_space<vmem>>, vector<8x128xbf16>
    %c0_8 = arith.constant 0 : index
    %c0_9 = arith.constant 0 : index
    %12 = vector.load %arg3[%c0_8, %c0_9] : memref<256x128xbf16, #tpu.memory_space<vmem>>, vector<128x128xbf16>
    %cst_10 = arith.constant dense<0.000000e+00> : vector<8x128xf32>
    %13 = tpu.matmul %11, %12, %cst_10 {dimension_numbers = #tpu.dot_dimension_numbers<[1], [0], [0], [1], [0, 0, 1, 1], [], []>} : vector<8x128xbf16>, vector<128x128xbf16>, vector<8x128xf32> -> vector<8x128xf32>
    %14 = vector.shape_cast %0 : vector<8x8x128xf32> to vector<64x128xf32>
    %15 = arith.truncf %14 : vector<64x128xf32> to vector<64x128xbf16>
    %c128 = arith.constant 128 : index
    %c0_11 = arith.constant 0 : index
    %16 = vector.load %arg3[%c128, %c0_11] : memref<256x128xbf16, #tpu.memory_space<vmem>>, vector<128x128xbf16>
    %cst_12 = arith.constant dense<0.000000e+00> : vector<64x128xf32>
    %17 = tpu.matmul %15, %16, %cst_12 {dimension_numbers = #tpu.dot_dimension_numbers<[1], [0], [0], [1], [0, 0, 1, 1], [], []>} : vector<64x128xbf16>, vector<128x128xbf16>, vector<64x128xf32> -> vector<64x128xf32>
    %18 = vector.shape_cast %17 : vector<64x128xf32> to vector<8x8x128xf32>
    %19 = vector.shape_cast %13 : vector<8x128xf32> to vector<1x8x128xf32>
    %20 = vector.broadcast %19 : vector<1x8x128xf32> to vector<8x8x128xf32>
    %21 = arith.addf %20, %18 : vector<8x8x128xf32>
    %22 = math.tanh %21 : vector<8x8x128xf32>
    %23 = vector.shape_cast %22 : vector<8x8x128xf32> to vector<64x128xf32>
    %24 = arith.truncf %23 : vector<64x128xf32> to vector<64x128xbf16>
    %c0_13 = arith.constant 0 : index
    %c0_14 = arith.constant 0 : index
    %25 = vector.load %arg5[%c0_13, %c0_14] : memref<128x128xbf16, #tpu.memory_space<vmem>>, vector<128x128xbf16>
    %cst_15 = arith.constant dense<0.000000e+00> : vector<64x128xf32>
    %26 = tpu.matmul %24, %25, %cst_15 {dimension_numbers = #tpu.dot_dimension_numbers<[1], [0], [0], [1], [0, 0, 1, 1], [], []>} : vector<64x128xbf16>, vector<128x128xbf16>, vector<64x128xf32> -> vector<64x128xf32>
    %27 = vector.shape_cast %26 : vector<64x128xf32> to vector<8x8x128xf32>
    %28 = arith.truncf %10 : vector<8x128xf32> to vector<8x128xbf16>
    %c0_16 = arith.constant 0 : index
    %c0_17 = arith.constant 0 : index
    %29 = vector.load %arg7[%c0_16, %c0_17] : memref<128x128xbf16, #tpu.memory_space<vmem>>, vector<128x128xbf16>
    %cst_18 = arith.constant dense<0.000000e+00> : vector<8x128xf32>
    %30 = tpu.matmul %28, %29, %cst_18 {dimension_numbers = #tpu.dot_dimension_numbers<[1], [0], [0], [1], [0, 0, 1, 1], [], []>} : vector<8x128xbf16>, vector<128x128xbf16>, vector<8x128xf32> -> vector<8x128xf32>
    %c0_19 = arith.constant 0 : index
    %c0_20 = arith.constant 0 : index
    %31 = vector.load %arg6[%c0_19, %c0_20] : memref<1x128xf32, #tpu.memory_space<vmem>>, vector<1x128xf32>
    %32 = vector.shape_cast %31 : vector<1x128xf32> to vector<1x1x128xf32>
    %33 = vector.broadcast %32 : vector<1x1x128xf32> to vector<8x8x128xf32>
    %34 = arith.addf %27, %33 : vector<8x8x128xf32>
    %35 = vector.shape_cast %30 : vector<8x128xf32> to vector<8x1x128xf32>
    %36 = vector.broadcast %35 : vector<8x1x128xf32> to vector<8x8x128xf32>
    %37 = arith.addf %34, %36 : vector<8x8x128xf32>
    %38 = arith.negf %37 : vector<8x8x128xf32>
    %39 = math.exp %38 : vector<8x8x128xf32>
    %cst_21 = arith.constant 1.000000e+00 : f32
    %40 = vector.broadcast %cst_21 : f32 to vector<8x8x128xf32>
    %41 = arith.addf %40, %39 : vector<8x8x128xf32>
    %42 = arith.divf %40, %41 : vector<8x8x128xf32>
    %c0_22 = arith.constant 0 : index
    %c0_23 = arith.constant 0 : index
    %43 = vector.load %arg4[%c0_22, %c0_23] : memref<1x128xf32, #tpu.memory_space<vmem>>, vector<1x128xf32>
    %44 = vector.shape_cast %43 : vector<1x128xf32> to vector<1x1x128xf32>
    %45 = vector.broadcast %44 : vector<1x1x128xf32> to vector<8x8x128xf32>
    %46 = arith.mulf %42, %45 : vector<8x8x128xf32>
    %cst_24 = arith.constant dense<0.000000e+00> : vector<8x8xf32>
    %47 = vector.multi_reduction <add>, %46, %cst_24 [2] : vector<8x8x128xf32> to vector<8x8xf32>
    %48 = vector.shape_cast %47 : vector<8x8xf32> to vector<8x8x1xf32>
    %49 = arith.mulf %48, %2 : vector<8x8x1xf32>
    %50 = vector.broadcast %49 : vector<8x8x1xf32> to vector<8x8x128xf32>
    %51 = arith.mulf %50, %0 : vector<8x8x128xf32>
    %cst_25 = arith.constant dense<0.000000e+00> : vector<8x128xf32>
    %52 = vector.multi_reduction <add>, %51, %cst_25 [1] : vector<8x8x128xf32> to vector<8x128xf32>
    %53 = arith.mulf %52, %52 : vector<8x128xf32>
    %cst_26 = arith.constant dense<0.000000e+00> : vector<8xf32>
    %54 = vector.multi_reduction <add>, %53, %cst_26 [1] : vector<8x128xf32> to vector<8xf32>
    %55 = vector.shape_cast %54 : vector<8xf32> to vector<8x1xf32>
    %cst_27 = arith.constant 1.000000e-24 : f32
    %56 = vector.broadcast %cst_27 : f32 to vector<8x1xf32>
    %57 = arith.maximumf %55, %56 : vector<8x1xf32>
    %58 = math.rsqrt %57 : vector<8x1xf32>
    %59 = vector.broadcast %58 : vector<8x1xf32> to vector<8x128xf32>
    %60 = arith.mulf %52, %59 : vector<8x128xf32>
    %61 = arith.truncf %60 : vector<8x128xf32> to vector<8x128xbf16>
    %c0_28 = arith.constant 0 : index
    %c0_29 = arith.constant 0 : index
    %62 = vector.load %arg8[%c0_28, %c0_29] : memref<128x128xbf16, #tpu.memory_space<vmem>>, vector<128x128xbf16>
    %cst_30 = arith.constant dense<0.000000e+00> : vector<8x128xf32>
    %63 = tpu.matmul %61, %62, %cst_30 {dimension_numbers = #tpu.dot_dimension_numbers<[1], [0], [0], [1], [0, 0, 1, 1], [], []>} : vector<8x128xbf16>, vector<128x128xbf16>, vector<8x128xf32> -> vector<8x128xf32>
    %cst_31 = arith.constant 1.000000e+01 : f32
    %64 = vector.broadcast %cst_31 : f32 to vector<8x128xf32>
    %65 = arith.mulf %64, %63 : vector<8x128xf32>
    %c0_32 = arith.constant 0 : index
    %c0_33 = arith.constant 0 : index
    %66 = vector.load %arg9[%c0_32, %c0_33] : memref<8x128xf32, #tpu.memory_space<vmem>>, vector<8x128xf32>
    tpu.vector_store %arg9[%c0_32, %c0_33], %65 {strides = array<i32>} : memref<8x128xf32, #tpu.memory_space<vmem>>, vector<8x128xf32>,
    return
  }
}

module attributes {stable_mosaic.version = 11 : i64} {
  func.func @_map_disen_kernel(%arg0: i32, %arg1: memref<1x1344x128xbf16, #tpu.memory_space<vmem>>, %arg2: memref<128x128xbf16, #tpu.memory_space<vmem>>, %arg3: memref<1x128x384xbf16, #tpu.memory_space<vmem>>, %arg4: memref<1x128x128xbf16, #tpu.memory_space<vmem>>, %arg5: memref<1x128x128xbf16, #tpu.memory_space<vmem>>, %arg6: memref<1x3x128xf32, #tpu.memory_space<vmem>>, %arg7: memref<1x1344x128xf32, #tpu.memory_space<vmem>>) attributes {dimension_semantics = [#tpu.dimension_semantics<parallel>], iteration_bounds = array<i64: 2>, scalar_prefetch = 0 : i64, scratch_operands = 0 : i64, tpu.core_type = #tpu.core_type<tc>, window_params = [{transform_indices = @transform_0, window_bounds = array<i64: 1, 1344, 128>}, {pipeline_mode = #tpu.pipeline_mode<synchronous>, transform_indices = @transform_1, window_bounds = array<i64: 128, 128>}, {transform_indices = @transform_2, window_bounds = array<i64: 1, 128, 384>}, {transform_indices = @transform_3, window_bounds = array<i64: 1, 128, 128>}, {transform_indices = @transform_4, window_bounds = array<i64: 1, 128, 128>}, {transform_indices = @transform_5, window_bounds = array<i64: 1, 3, 128>}, {transform_indices = @transform_6, window_bounds = array<i64: 1, 1344, 128>}]} {
    %c0 = arith.constant 0 : index
    %c0_0 = arith.constant 0 : index
    %c0_1 = arith.constant 0 : index
    %0 = vector.load %arg1[%c0, %c0_0, %c0_1] : memref<1x1344x128xbf16, #tpu.memory_space<vmem>>, vector<1x1344x128xbf16>
    %1 = vector.shape_cast %0 : vector<1x1344x128xbf16> to vector<1344x128xbf16>
    %c0_2 = arith.constant 0 : index
    %c0_3 = arith.constant 0 : index
    %2 = vector.load %arg2[%c0_2, %c0_3] : memref<128x128xbf16, #tpu.memory_space<vmem>>, vector<128x128xbf16>
    %cst = arith.constant dense<0.000000e+00> : vector<1344x128xf32>
    %3 = tpu.matmul %1, %2, %cst {dimension_numbers = #tpu.dot_dimension_numbers<[1], [0], [0], [1], [0, 0, 1, 1], [], []>} : vector<1344x128xbf16>, vector<128x128xbf16>, vector<1344x128xf32> -> vector<1344x128xf32>
    %4 = arith.truncf %3 : vector<1344x128xf32> to vector<1344x128xbf16>
    %c0_4 = arith.constant 0 : index
    %c0_5 = arith.constant 0 : index
    %c0_6 = arith.constant 0 : index
    %5 = vector.load %arg3[%c0_4, %c0_5, %c0_6] : memref<1x128x384xbf16, #tpu.memory_space<vmem>>, vector<1x128x384xbf16>
    %6 = vector.shape_cast %5 : vector<1x128x384xbf16> to vector<128x384xbf16>
    %cst_7 = arith.constant dense<0.000000e+00> : vector<1344x384xf32>
    %7 = tpu.matmul %4, %6, %cst_7 {dimension_numbers = #tpu.dot_dimension_numbers<[1], [0], [0], [1], [0, 0, 1, 1], [], []>} : vector<1344x128xbf16>, vector<128x384xbf16>, vector<1344x384xf32> -> vector<1344x384xf32>
    %c0_8 = arith.constant 0 : index
    %c0_9 = arith.constant 0 : index
    %c0_10 = arith.constant 0 : index
    %8 = vector.load %arg6[%c0_8, %c0_9, %c0_10] : memref<1x3x128xf32, #tpu.memory_space<vmem>>, vector<1x3x128xf32>
    %9 = vector.shape_cast %8 : vector<1x3x128xf32> to vector<3x128xf32>
    %10 = vector.extract_strided_slice %7 {offsets = [0, 0], sizes = [1344, 128], strides = [1, 1]} : vector<1344x384xf32> to vector<1344x128xf32>
    %11 = vector.extract_strided_slice %9 {offsets = [0, 0], sizes = [1, 128], strides = [1, 1]} : vector<3x128xf32> to vector<1x128xf32>
    %12 = vector.broadcast %11 : vector<1x128xf32> to vector<1344x128xf32>
    %13 = arith.addf %10, %12 : vector<1344x128xf32>
    %cst_11 = arith.constant 2.000000e-01 : f32
    %14 = vector.broadcast %cst_11 : f32 to vector<1344x128xf32>
    %15 = arith.mulf %14, %13 : vector<1344x128xf32>
    %16 = arith.maximumf %13, %15 : vector<1344x128xf32>
    %17 = arith.truncf %16 : vector<1344x128xf32> to vector<1344x128xbf16>
    %c0_12 = arith.constant 0 : index
    %c0_13 = arith.constant 0 : index
    %c0_14 = arith.constant 0 : index
    %18 = vector.load %arg4[%c0_12, %c0_13, %c0_14] : memref<1x128x128xbf16, #tpu.memory_space<vmem>>, vector<1x128x128xbf16>
    %19 = vector.shape_cast %18 : vector<1x128x128xbf16> to vector<128x128xbf16>
    %cst_15 = arith.constant dense<0.000000e+00> : vector<1344x128xf32>
    %20 = tpu.matmul %17, %19, %cst_15 {dimension_numbers = #tpu.dot_dimension_numbers<[1], [0], [0], [1], [0, 0, 1, 1], [], []>} : vector<1344x128xbf16>, vector<128x128xbf16>, vector<1344x128xf32> -> vector<1344x128xf32>
    %21 = vector.extract_strided_slice %7 {offsets = [0, 128], sizes = [1344, 128], strides = [1, 1]} : vector<1344x384xf32> to vector<1344x128xf32>
    %22 = arith.addf %20, %21 : vector<1344x128xf32>
    %23 = vector.extract_strided_slice %9 {offsets = [1, 0], sizes = [1, 128], strides = [1, 1]} : vector<3x128xf32> to vector<1x128xf32>
    %24 = vector.broadcast %23 : vector<1x128xf32> to vector<1344x128xf32>
    %25 = arith.addf %22, %24 : vector<1344x128xf32>
    %cst_16 = arith.constant 2.000000e-01 : f32
    %26 = vector.broadcast %cst_16 : f32 to vector<1344x128xf32>
    %27 = arith.mulf %26, %25 : vector<1344x128xf32>
    %28 = arith.maximumf %25, %27 : vector<1344x128xf32>
    %29 = arith.truncf %28 : vector<1344x128xf32> to vector<1344x128xbf16>
    %c0_17 = arith.constant 0 : index
    %c0_18 = arith.constant 0 : index
    %c0_19 = arith.constant 0 : index
    %30 = vector.load %arg5[%c0_17, %c0_18, %c0_19] : memref<1x128x128xbf16, #tpu.memory_space<vmem>>, vector<1x128x128xbf16>
    %31 = vector.shape_cast %30 : vector<1x128x128xbf16> to vector<128x128xbf16>
    %cst_20 = arith.constant dense<0.000000e+00> : vector<1344x128xf32>
    %32 = tpu.matmul %29, %31, %cst_20 {dimension_numbers = #tpu.dot_dimension_numbers<[1], [0], [0], [1], [0, 0, 1, 1], [], []>} : vector<1344x128xbf16>, vector<128x128xbf16>, vector<1344x128xf32> -> vector<1344x128xf32>
    %33 = vector.extract_strided_slice %7 {offsets = [0, 256], sizes = [1344, 128], strides = [1, 1]} : vector<1344x384xf32> to vector<1344x128xf32>
    %34 = arith.addf %32, %33 : vector<1344x128xf32>
    %35 = vector.extract_strided_slice %9 {offsets = [2, 0], sizes = [1, 128], strides = [1, 1]} : vector<3x128xf32> to vector<1x128xf32>
    %36 = vector.broadcast %35 : vector<1x128xf32> to vector<1344x128xf32>
    %37 = arith.addf %34, %36 : vector<1344x128xf32>
    %cst_21 = arith.constant 2.000000e-01 : f32
    %38 = vector.broadcast %cst_21 : f32 to vector<1344x128xf32>
    %39 = arith.mulf %38, %37 : vector<1344x128xf32>
    %40 = arith.maximumf %37, %39 : vector<1344x128xf32>
    %c0_22 = arith.constant 0 : index
    %c0_23 = arith.constant 0 : index
    %c0_24 = arith.constant 0 : index
    %41 = vector.load %arg7[%c0_22, %c0_23, %c0_24] : memref<1x1344x128xf32, #tpu.memory_space<vmem>>, vector<1x1344x128xf32>
    %42 = vector.shape_cast %41 : vector<1x1344x128xf32> to vector<1344x128xf32>
    %43 = vector.shape_cast %40 : vector<1344x128xf32> to vector<1x1344x128xf32>
    tpu.vector_store %arg7[%c0_22, %c0_23, %c0_24], %43 {strides = array<i32>} : memref<1x1344x128xf32, #tpu.memory_space<vmem>>, vector<1x1344x128xf32>,
    return
  }
  func.func @transform_0(%arg0: i32) -> (i32, i32, i32) {
    %c0_i32 = arith.constant 0 : i32
    %c0_i32_0 = arith.constant 0 : i32
    %c0_i32_1 = arith.constant 0 : i32
    return %arg0, %c0_i32, %c0_i32_0 : i32, i32, i32
  }
  func.func @transform_1(%arg0: i32) -> (i32, i32) {
    %c0_i32 = arith.constant 0 : i32
    %c0_i32_0 = arith.constant 0 : i32
    %c0_i32_1 = arith.constant 0 : i32
    return %c0_i32, %c0_i32_0 : i32, i32
  }
  func.func @transform_2(%arg0: i32) -> (i32, i32, i32) {
    %c0_i32 = arith.constant 0 : i32
    %c0_i32_0 = arith.constant 0 : i32
    %c0_i32_1 = arith.constant 0 : i32
    return %arg0, %c0_i32, %c0_i32_0 : i32, i32, i32
  }
  func.func @transform_3(%arg0: i32) -> (i32, i32, i32) {
    %c0_i32 = arith.constant 0 : i32
    %c0_i32_0 = arith.constant 0 : i32
    %c0_i32_1 = arith.constant 0 : i32
    return %arg0, %c0_i32, %c0_i32_0 : i32, i32, i32
  }
  func.func @transform_4(%arg0: i32) -> (i32, i32, i32) {
    %c0_i32 = arith.constant 0 : i32
    %c0_i32_0 = arith.constant 0 : i32
    %c0_i32_1 = arith.constant 0 : i32
    return %arg0, %c0_i32, %c0_i32_0 : i32, i32, i32
  }
  func.func @transform_5(%arg0: i32) -> (i32, i32, i32) {
    %c0_i32 = arith.constant 0 : i32
    %c0_i32_0 = arith.constant 0 : i32
    %c0_i32_1 = arith.constant 0 : i32
    return %arg0, %c0_i32, %c0_i32_0 : i32, i32, i32
  }
  func.func @transform_6(%arg0: i32) -> (i32, i32, i32) {
    %c0_i32 = arith.constant 0 : i32
    %c0_i32_0 = arith.constant 0 : i32
    %c0_i32_1 = arith.constant 0 : i32
    return %arg0, %c0_i32, %c0_i32_0 : i32, i32, i32
  }
}

</mosaic_0001>

<llo_original>
// kernel: forward.2
$region0: #{forward.2}
  #allocation0 [shape = 'u32[]', space=smem, size = 0x4, offset = 0x4, fixed_abs, tag = 'smem constant byte address 0x4 - core index']
  #allocation1 [shape = 'u32[144,128]{1,0:T(1,128)}', space=vmem, size = 0x12000, scoped, tag = 'internal scratch']
  %s0 = inlined_call_operand.vmem [shape: f32[8,8,128], index: 0, kind: input, shape index: {}]
  %s1 = inlined_call_operand.vmem [shape: f32[8,8], index: 1, kind: input, shape index: {}]
  %s2 = inlined_call_operand.vmem [shape: bf16[8,128], index: 2, kind: input, shape index: {}]
  %s3 = inlined_call_operand.hbm [shape: bf16[256,128], index: 3, kind: input, shape index: {}]
  %s4 = inlined_call_operand.hbm [shape: f32[1,128], index: 4, kind: input, shape index: {}]
  %s5 = inlined_call_operand.hbm [shape: bf16[128,128], index: 5, kind: input, shape index: {}]
  %s6 = inlined_call_operand.hbm [shape: f32[1,128], index: 6, kind: input, shape index: {}]
  %s7 = inlined_call_operand.hbm [shape: bf16[128,128], index: 7, kind: input, shape index: {}]
  %s8 = inlined_call_operand.vmem [shape: bf16[128,128], index: 8, kind: input, shape index: {}]
  %s9 = inlined_call_operand.vmem [shape: f32[8,128], index: 9, kind: output, shape index: {}]
  %s10 = sld [smem:[#allocation0]]
  $region66: #{forward.2} parent=0
    _
  %s12 = ssub.s32 1, %s10
  %s13 = scalar_select 0, %s12, %s10
  $region1: #{forward.2} parent=0
    #allocation2 [shape = 'u8[65536]{0}', space=vmem, size = 0x10000, scoped, tag = 'input window, operand 3, single buffered']
    #allocation3 [shape = 's32[1]{0}', space=sflag, size = 0x4, scoped, tag = 'scoped memory for forward.2']
    #allocation4 [shape = 'u8[512]{0}', space=vmem, size = 0x400, scoped, tag = 'input window, operand 4, single buffered']
    #allocation5 [shape = 's32[1]{0}', space=sflag, size = 0x4, scoped, tag = 'scoped memory for forward.2']
    #allocation6 [shape = 'u8[32768]{0}', space=vmem, size = 0x8000, scoped, tag = 'input window, operand 5, single buffered']
    #allocation7 [shape = 'u8[512]{0}', space=vmem, size = 0x400, scoped, tag = 'input window, operand 6, single buffered']
    #allocation8 [shape = 's32[1]{0}', space=sflag, size = 0x4, scoped, tag = 'scoped memory for forward.2']
    #allocation9 [shape = 'u8[32768]{0}', space=vmem, size = 0x8000, scoped, tag = 'input window, operand 7, single buffered']
    %14 = vsyncpa [#allocation3], 0
    %15 = vsyncpa [#allocation5], 0
    %16 = vsyncpa [#allocation8], 0
    // Predicated region
    $region2: #{forward.2} parent=1 // pred_check
      _
    $region3: #{forward.2} parent=1 // pred_check_branch
      %18 = sbr.rel (0) target = $region5
    $region4: #{forward.2} parent=1 // pred_region
      _
    $region5: #{forward.2} parent=1 // pred_fallthru
      _
    // Predicated region
    $region6: #{forward.2} parent=1 // pred_check
      _
    $region7: #{forward.2} parent=1 // pred_check_branch
      %20 = sbr.rel (0) target = $region9
    $region8: #{forward.2} parent=1 // pred_region
      _
    $region9: #{forward.2} parent=1 // pred_fallthru
      _
    // Predicated region
    $region10: #{forward.2} parent=1 // pred_check
      _
    $region11: #{forward.2} parent=1 // pred_check_branch
      %22 = sbr.rel (0) target = $region13
    $region12: #{forward.2} parent=1 // pred_region
      _
    $region13: #{forward.2} parent=1 // pred_fallthru
      _
    // Predicated region
    $region14: #{forward.2} parent=1 // pred_check
      _
    $region15: #{forward.2} parent=1 // pred_check_branch
      %24 = sbr.rel (0) target = $region17
    $region16: #{forward.2} parent=1 // pred_region
      %s26 = ssub.s32 2048, 2048
      %27 = vsyncadd [#allocation3], %s26
      %s28 = sshll.u32 [#allocation2], 4
      %s29 = int_to_ptr.vmem [resolvable:$true] %s28
      %34 = dma.hbm_to_vmem [thread:$0]  %s3, 2048, %s29, [#allocation3], 64, 64, 4
    $region17: #{forward.2} parent=1 // pred_fallthru
      _
    // Predicated region
    $region18: #{forward.2} parent=1 // pred_check
      _
    $region19: #{forward.2} parent=1 // pred_check_branch
      %36 = sbr.rel (0) target = $region21
    $region20: #{forward.2} parent=1 // pred_region
      %s38 = ssub.s32 16, 16
      %39 = vsyncadd [#allocation5], %s38
      %s41 = sshll.u32 [#allocation4], 4
      %s42 = int_to_ptr.vmem [resolvable:$true] %s41
      %44 = dma.hbm_to_vmem [thread:$0]  %s4, 16, %s42, [#allocation5]
    $region21: #{forward.2} parent=1 // pred_fallthru
      _
    // Predicated region
    $region22: #{forward.2} parent=1 // pred_check
      _
    $region23: #{forward.2} parent=1 // pred_check_branch
      %46 = sbr.rel (0) target = $region25
    $region24: #{forward.2} parent=1 // pred_region
      %s48 = ssub.s32 1024, 1024
      %49 = vsyncadd [#allocation5], %s48
      %s50 = sshll.u32 [#allocation6], 4
      %s51 = int_to_ptr.vmem [resolvable:$true] %s50
      %56 = dma.hbm_to_vmem [thread:$0]  %s5, 1024, %s51, [#allocation5], 64, 64, 4
    $region25: #{forward.2} parent=1 // pred_fallthru
      _
    // Predicated region
    $region26: #{forward.2} parent=1 // pred_check
      _
    $region27: #{forward.2} parent=1 // pred_check_branch
      %58 = sbr.rel (0) target = $region29
    $region28: #{forward.2} parent=1 // pred_region
      %s60 = ssub.s32 16, 16
      %61 = vsyncadd [#allocation8], %s60
      %s63 = sshll.u32 [#allocation7], 4
      %s64 = int_to_ptr.vmem [resolvable:$true] %s63
      %66 = dma.hbm_to_vmem [thread:$0]  %s6, 16, %s64, [#allocation8]
    $region29: #{forward.2} parent=1 // pred_fallthru
      _
    // Predicated region
    $region30: #{forward.2} parent=1 // pred_check
      _
    $region31: #{forward.2} parent=1 // pred_check_branch
      %68 = sbr.rel (0) target = $region33
    $region32: #{forward.2} parent=1 // pred_region
      %s70 = ssub.s32 1024, 1024
      %71 = vsyncadd [#allocation8], %s70
      %s72 = sshll.u32 [#allocation9], 4
      %s73 = int_to_ptr.vmem [resolvable:$true] %s72
      %78 = dma.hbm_to_vmem [thread:$0]  %s7, 1024, %s73, [#allocation8], 64, 64, 4
    $region33: #{forward.2} parent=1 // pred_fallthru
      _
    // Predicated region
    $region34: #{forward.2} parent=1 // pred_check
      _
    $region35: #{forward.2} parent=1 // pred_check_branch
      %80 = sbr.rel (0) target = $region37
    $region36: #{forward.2} parent=1 // pred_region
      _
    $region37: #{forward.2} parent=1 // pred_fallthru
      _
    // Predicated region
    $region38: #{forward.2} parent=1 // pred_check
      _
    $region39: #{forward.2} parent=1 // pred_check_branch
      %82 = sbr.rel (0) target = $region41
    $region40: #{forward.2} parent=1 // pred_region
      %83 = dma.done [#allocation3], 2048
    $region41: #{forward.2} parent=1 // pred_fallthru
      _
    // Predicated region
    $region42: #{forward.2} parent=1 // pred_check
      _
    $region43: #{forward.2} parent=1 // pred_check_branch
      %85 = sbr.rel (0) target = $region45
    $region44: #{forward.2} parent=1 // pred_region
      %86 = dma.done [#allocation5], 16
    $region45: #{forward.2} parent=1 // pred_fallthru
      _
    // Predicated region
    $region46: #{forward.2} parent=1 // pred_check
      _
    $region47: #{forward.2} parent=1 // pred_check_branch
      %88 = sbr.rel (0) target = $region49
    $region48: #{forward.2} parent=1 // pred_region
      %89 = dma.done [#allocation5], 1024
    $region49: #{forward.2} parent=1 // pred_fallthru
      _
    // Predicated region
    $region50: #{forward.2} parent=1 // pred_check
      _
    $region51: #{forward.2} parent=1 // pred_check_branch
      %91 = sbr.rel (0) target = $region53
    $region52: #{forward.2} parent=1 // pred_region
      %92 = dma.done [#allocation8], 16
    $region53: #{forward.2} parent=1 // pred_fallthru
      _
    // Predicated region
    $region54: #{forward.2} parent=1 // pred_check
      _
    $region55: #{forward.2} parent=1 // pred_check_branch
      %94 = sbr.rel (0) target = $region57
    $region56: #{forward.2} parent=1 // pred_region
      %95 = dma.done [#allocation8], 1024
    $region57: #{forward.2} parent=1 // pred_fallthru
      _
    %v97 = vld [vmem:[%s0] sm:$0xff]
    %v98 = vld [vmem:[%s0 + $0x8] sm:$0xff]
    %v99 = vld [vmem:[%s0 + $0x10] sm:$0xff]
    %v100 = vld [vmem:[%s0 + $0x18] sm:$0xff]
    %v101 = vld [vmem:[%s0 + $0x20] sm:$0xff]
    %v102 = vld [vmem:[%s0 + $0x28] sm:$0xff]
    %v103 = vld [vmem:[%s0 + $0x30] sm:$0xff]
    %v104 = vld [vmem:[%s0 + $0x38] sm:$0xff]
    %v105 = vld [vmem:[%s1] sm:$0xff]
    %v106 = vlaneseq
    %v107 = vshrl.u32 %v106, 7
    %v108 = vsub.s32 0, %v107
    %v109 = vrot.slane %v105, %v108
    %111 = vbcast.lane.b32.xlu0 %v109, 256
    %v112 = vpop.permute.xlu0 %111
    %v113 = vlaneseq
    %v114 = vshrl.u32 %v113, 7
    %v115 = vsub.s32 1, %v114
    %v116 = vrot.slane %v105, %v115
    %118 = vbcast.lane.b32.xlu0 %v116, 256
    %v119 = vpop.permute.xlu0 %118
    %v120 = vlaneseq
    %v121 = vshrl.u32 %v120, 7
    %v122 = vsub.s32 2, %v121
    %v123 = vrot.slane %v105, %v122
    %125 = vbcast.lane.b32.xlu0 %v123, 256
    %v126 = vpop.permute.xlu0 %125
    %v127 = vlaneseq
    %v128 = vshrl.u32 %v127, 7
    %v129 = vsub.s32 3, %v128
    %v130 = vrot.slane %v105, %v129
    %132 = vbcast.lane.b32.xlu0 %v130, 256
    %v133 = vpop.permute.xlu0 %132
    %v134 = vlaneseq
    %v135 = vshrl.u32 %v134, 7
    %v136 = vsub.s32 4, %v135
    %v137 = vrot.slane %v105, %v136
    %139 = vbcast.lane.b32.xlu0 %v137, 256
    %v140 = vpop.permute.xlu0 %139
    %v141 = vlaneseq
    %v142 = vshrl.u32 %v141, 7
    %v143 = vsub.s32 5, %v142
    %v144 = vrot.slane %v105, %v143
    %146 = vbcast.lane.b32.xlu0 %v144, 256
    %v147 = vpop.permute.xlu0 %146
    %v148 = vlaneseq
    %v149 = vshrl.u32 %v148, 7
    %v150 = vsub.s32 6, %v149
    %v151 = vrot.slane %v105, %v150
    %153 = vbcast.lane.b32.xlu0 %v151, 256
    %v154 = vpop.permute.xlu0 %153
    %v155 = vlaneseq
    %v156 = vshrl.u32 %v155, 7
    %v157 = vsub.s32 7, %v156
    %v158 = vrot.slane %v105, %v157
    %160 = vbcast.lane.b32.xlu0 %v158, 256
    %v161 = vpop.permute.xlu0 %160
    %v162 = vmul.f32 %v97, %v112
    %v163 = vmul.f32 %v98, %v119
    %v164 = vmul.f32 %v99, %v126
    %v165 = vmul.f32 %v100, %v133
    %v166 = vmul.f32 %v101, %v140
    %v167 = vmul.f32 %v102, %v147
    %v168 = vmul.f32 %v103, %v154
    %v169 = vmul.f32 %v104, %v161
    %v170 = vrot.slane %v162, 4
    %v171 = vadd.f32 %v162, %v170
    %v172 = vrot.slane %v171, 2
    %v173 = vadd.f32 %v171, %v172
    %v174 = vrot.slane %v173, 1
    %v175 = vadd.f32 %v173, %v174
    %v176 = vrot.slane %v163, 4
    %v177 = vadd.f32 %v163, %v176
    %v178 = vrot.slane %v177, 2
    %v179 = vadd.f32 %v177, %v178
    %v180 = vrot.slane %v179, 1
    %v181 = vadd.f32 %v179, %v180
    %v182 = vrot.slane %v164, 4
    %v183 = vadd.f32 %v164, %v182
    %v184 = vrot.slane %v183, 2
    %v185 = vadd.f32 %v183, %v184
    %v186 = vrot.slane %v185, 1
    %v187 = vadd.f32 %v185, %v186
    %v188 = vrot.slane %v165, 4
    %v189 = vadd.f32 %v165, %v188
    %v190 = vrot.slane %v189, 2
    %v191 = vadd.f32 %v189, %v190
    %v192 = vrot.slane %v191, 1
    %v193 = vadd.f32 %v191, %v192
    %v194 = vrot.slane %v166, 4
    %v195 = vadd.f32 %v166, %v194
    %v196 = vrot.slane %v195, 2
    %v197 = vadd.f32 %v195, %v196
    %v198 = vrot.slane %v197, 1
    %v199 = vadd.f32 %v197, %v198
    %v200 = vrot.slane %v167, 4
    %v201 = vadd.f32 %v167, %v200
    %v202 = vrot.slane %v201, 2
    %v203 = vadd.f32 %v201, %v202
    %v204 = vrot.slane %v203, 1
    %v205 = vadd.f32 %v203, %v204
    %v206 = vrot.slane %v168, 4
    %v207 = vadd.f32 %v168, %v206
    %v208 = vrot.slane %v207, 2
    %v209 = vadd.f32 %v207, %v208
    %v210 = vrot.slane %v209, 1
    %v211 = vadd.f32 %v209, %v210
    %v212 = vrot.slane %v169, 4
    %v213 = vadd.f32 %v169, %v212
    %v214 = vrot.slane %v213, 2
    %v215 = vadd.f32 %v213, %v214
    %v216 = vrot.slane %v215, 1
    %v217 = vadd.f32 %v215, %v216
    %v218 = vrot.slane %v112, 4
    %v219 = vadd.f32 %v112, %v218
    %v220 = vrot.slane %v219, 2
    %v221 = vadd.f32 %v219, %v220
    %v222 = vrot.slane %v221, 1
    %v223 = vadd.f32 %v221, %v222
    %v224 = vrot.slane %v119, 4
    %v225 = vadd.f32 %v119, %v224
    %v226 = vrot.slane %v225, 2
    %v227 = vadd.f32 %v225, %v226
    %v228 = vrot.slane %v227, 1
    %v229 = vadd.f32 %v227, %v228
    %v230 = vrot.slane %v126, 4
    %v231 = vadd.f32 %v126, %v230
    %v232 = vrot.slane %v231, 2
    %v233 = vadd.f32 %v231, %v232
    %v234 = vrot.slane %v233, 1
    %v235 = vadd.f32 %v233, %v234
    %v236 = vrot.slane %v133, 4
    %v237 = vadd.f32 %v133, %v236
    %v238 = vrot.slane %v237, 2
    %v239 = vadd.f32 %v237, %v238
    %v240 = vrot.slane %v239, 1
    %v241 = vadd.f32 %v239, %v240
    %v242 = vrot.slane %v140, 4
    %v243 = vadd.f32 %v140, %v242
    %v244 = vrot.slane %v243, 2
    %v245 = vadd.f32 %v243, %v244
    %v246 = vrot.slane %v245, 1
    %v247 = vadd.f32 %v245, %v246
    %v248 = vrot.slane %v147, 4
    %v249 = vadd.f32 %v147, %v248
    %v250 = vrot.slane %v249, 2
    %v251 = vadd.f32 %v249, %v250
    %v252 = vrot.slane %v251, 1
    %v253 = vadd.f32 %v251, %v252
    %v254 = vrot.slane %v154, 4
    %v255 = vadd.f32 %v154, %v254
    %v256 = vrot.slane %v255, 2
    %v257 = vadd.f32 %v255, %v256
    %v258 = vrot.slane %v257, 1
    %v259 = vadd.f32 %v257, %v258
    %v260 = vrot.slane %v161, 4
    %v261 = vadd.f32 %v161, %v260
    %v262 = vrot.slane %v261, 2
    %v263 = vadd.f32 %v261, %v262
    %v264 = vrot.slane %v263, 1
    %v265 = vadd.f32 %v263, %v264
    %v266 = vmax.f32 %v223, 1.0
    %v267 = vmax.f32 %v229, 1.0
    %v268 = vmax.f32 %v235, 1.0
    %v269 = vmax.f32 %v241, 1.0
    %v270 = vmax.f32 %v247, 1.0
    %v271 = vmax.f32 %v253, 1.0
    %v272 = vmax.f32 %v259, 1.0
    %v273 = vmax.f32 %v265, 1.0
    %v274 = vrcp.pop %v266
    %v275 = vmul.f32 %v175, %v274
    %v276 = vrcp.pop %v267
    %v277 = vmul.f32 %v181, %v276
    %v278 = vrcp.pop %v268
    %v279 = vmul.f32 %v187, %v278
    %v280 = vrcp.pop %v269
    %v281 = vmul.f32 %v193, %v280
    %v282 = vrcp.pop %v270
    %v283 = vmul.f32 %v199, %v282
    %v284 = vrcp.pop %v271
    %v285 = vmul.f32 %v205, %v284
    %v286 = vrcp.pop %v272
    %v287 = vmul.f32 %v211, %v286
    %v288 = vrcp.pop %v273
    %v289 = vmul.f32 %v217, %v288
    %v290 = vld [vmem:[%s2] sm:$0xf]
    %v291 = vld [vmem:[#allocation2] sm:$0xf]
    %v292 = vld [vmem:[#allocation2 + $0x4] sm:$0xf]
    %v293 = vld [vmem:[#allocation2 + $0x8] sm:$0xf]
    %v294 = vld [vmem:[#allocation2 + $0xc] sm:$0xf]
    %v295 = vld [vmem:[#allocation2 + $0x10] sm:$0xf]
    %v296 = vld [vmem:[#allocation2 + $0x14] sm:$0xf]
    %v297 = vld [vmem:[#allocation2 + $0x18] sm:$0xf]
    %v298 = vld [vmem:[#allocation2 + $0x1c] sm:$0xf]
    %v299 = vld [vmem:[#allocation2 + $0x20] sm:$0xf]
    %v300 = vld [vmem:[#allocation2 + $0x24] sm:$0xf]
    %v301 = vld [vmem:[#allocation2 + $0x28] sm:$0xf]
    %v302 = vld [vmem:[#allocation2 + $0x2c] sm:$0xf]
    %v303 = vld [vmem:[#allocation2 + $0x30] sm:$0xf]
    %v304 = vld [vmem:[#allocation2 + $0x34] sm:$0xf]
    %v305 = vld [vmem:[#allocation2 + $0x38] sm:$0xf]
    %v306 = vld [vmem:[#allocation2 + $0x3c] sm:$0xf]
    %v323 = vunpack.c.l.b16 %v291
    %v324 = vunpack.c.l.b16 %v292
    %v325 = vunpack.c.l.b16 %v293
    %v326 = vunpack.c.l.b16 %v294
    %v327 = vunpack.c.l.b16 %v295
    %v328 = vunpack.c.l.b16 %v296
    %v329 = vunpack.c.l.b16 %v297
    %v330 = vunpack.c.l.b16 %v298
    %v331 = vunpack.c.l.b16 %v299
    %v332 = vunpack.c.l.b16 %v300
    %v333 = vunpack.c.l.b16 %v301
    %v334 = vunpack.c.l.b16 %v302
    %v335 = vunpack.c.l.b16 %v303
    %v336 = vunpack.c.l.b16 %v304
    %v337 = vunpack.c.l.b16 %v305
    %v338 = vunpack.c.l.b16 %v306
    %v339 = vpack.c.b16 %v324, %v323
    %v340 = vpack.c.b16 %v326, %v325
    %v341 = vpack.c.b16 %v328, %v327
    %v342 = vpack.c.b16 %v330, %v329
    %v343 = vpack.c.b16 %v332, %v331
    %v344 = vpack.c.b16 %v334, %v333
    %v345 = vpack.c.b16 %v336, %v335
    %v346 = vpack.c.b16 %v338, %v337
    %355 = vmatprep.subr.bf16.mxu0 0
    %356 = vmatpush1.bf16.msra.mxu0 %v339
    %357 = vmatprep.subr.bf16.mxu0 0
    %358 = vmatpush1.bf16.msra.mxu0 %v340
    %359 = vmatprep.subr.bf16.mxu0 0
    %360 = vmatpush1.bf16.msra.mxu0 %v341
    %361 = vmatprep.subr.bf16.mxu0 0
    %362 = vmatpush1.bf16.msra.mxu0 %v342
    %363 = vmatprep.subr.bf16.mxu0 0
    %364 = vmatpush1.bf16.msra.mxu0 %v343
    %365 = vmatprep.subr.bf16.mxu0 0
    %366 = vmatpush1.bf16.msra.mxu0 %v344
    %367 = vmatprep.subr.bf16.mxu0 0
    %368 = vmatpush1.bf16.msra.mxu0 %v345
    %369 = vmatprep.subr.bf16.mxu0 0
    %370 = vmatpush1.bf16.msra.mxu0 %v346
    %371 = vmatprep.subr.bf16.mxu0 0
    %372 = vmatpush1.bf16.msra.mxu0 0
    %373 = vmatprep.subr.bf16.mxu0 0
    %374 = vmatpush1.bf16.msra.mxu0 0
    %375 = vmatprep.subr.bf16.mxu0 0
    %376 = vmatpush1.bf16.msra.mxu0 0
    %377 = vmatprep.subr.bf16.mxu0 0
    %378 = vmatpush1.bf16.msra.mxu0 0
    %379 = vmatprep.subr.bf16.mxu0 0
    %380 = vmatpush1.bf16.msra.mxu0 0
    %381 = vmatprep.subr.bf16.mxu0 0
    %382 = vmatpush1.bf16.msra.mxu0 0
    %383 = vmatprep.subr.bf16.mxu0 0
    %384 = vmatpush1.bf16.msra.mxu0 0
    %385 = vmatprep.subr.bf16.mxu0 0
    %386 = vmatpush1.bf16.msra.mxu0 0
    %387 = vmatprep.mubr.bf16.mxu0 0
    %388 = vmatmul.mubr.bf16.gmra.mrb[0].mxu0 %v290
    %v389 = vpop.f32.mrb[0].mxu0
    %v390 = vadd.f32 0.0, %v389
    %v391 = vpop.f32.mrb[0].mxu0
    %v392 = vpop.f32.mrb[0].mxu0
    %v393 = vpop.f32.mrb[0].mxu0
    %394 = vdwg.mxu0
    %v395 = vpack.c.bf16 %v98, %v97
    %v396 = vpack.c.bf16 %v100, %v99
    %v397 = vpack.c.bf16 %v102, %v101
    %v398 = vpack.c.bf16 %v104, %v103
    %v399 = vld [vmem:[#allocation2 + $0x40] sm:$0xf]
    %v400 = vld [vmem:[#allocation2 + $0x44] sm:$0xf]
    %v401 = vld [vmem:[#allocation2 + $0x48] sm:$0xf]
    %v402 = vld [vmem:[#allocation2 + $0x4c] sm:$0xf]
    %v403 = vld [vmem:[#allocation2 + $0x50] sm:$0xf]
    %v404 = vld [vmem:[#allocation2 + $0x54] sm:$0xf]
    %v405 = vld [vmem:[#allocation2 + $0x58] sm:$0xf]
    %v406 = vld [vmem:[#allocation2 + $0x5c] sm:$0xf]
    %v407 = vld [vmem:[#allocation2 + $0x60] sm:$0xf]
    %v408 = vld [vmem:[#allocation2 + $0x64] sm:$0xf]
    %v409 = vld [vmem:[#allocation2 + $0x68] sm:$0xf]
    %v410 = vld [vmem:[#allocation2 + $0x6c] sm:$0xf]
    %v411 = vld [vmem:[#allocation2 + $0x70] sm:$0xf]
    %v412 = vld [vmem:[#allocation2 + $0x74] sm:$0xf]
    %v413 = vld [vmem:[#allocation2 + $0x78] sm:$0xf]
    %v414 = vld [vmem:[#allocation2 + $0x7c] sm:$0xf]
    %v431 = vunpack.c.l.b16 %v399
    %v432 = vunpack.c.l.b16 %v400
    %v433 = vunpack.c.l.b16 %v401
    %v434 = vunpack.c.l.b16 %v402
    %v435 = vunpack.c.l.b16 %v403
    %v436 = vunpack.c.l.b16 %v404
    %v437 = vunpack.c.l.b16 %v405
    %v438 = vunpack.c.l.b16 %v406
    %v439 = vunpack.c.l.b16 %v407
    %v440 = vunpack.c.l.b16 %v408
    %v441 = vunpack.c.l.b16 %v409
    %v442 = vunpack.c.l.b16 %v410
    %v443 = vunpack.c.l.b16 %v411
    %v444 = vunpack.c.l.b16 %v412
    %v445 = vunpack.c.l.b16 %v413
    %v446 = vunpack.c.l.b16 %v414
    %v447 = vpack.c.b16 %v432, %v431
    %v448 = vpack.c.b16 %v434, %v433
    %v449 = vpack.c.b16 %v436, %v435
    %v450 = vpack.c.b16 %v438, %v437
    %v451 = vpack.c.b16 %v440, %v439
    %v452 = vpack.c.b16 %v442, %v441
    %v453 = vpack.c.b16 %v444, %v443
    %v454 = vpack.c.b16 %v446, %v445
    %463 = vmatprep.subr.bf16.mxu0 0
    %464 = vmatpush1.bf16.msra.mxu0 %v447
    %465 = vmatprep.subr.bf16.mxu0 0
    %466 = vmatpush1.bf16.msra.mxu0 %v448
    %467 = vmatprep.subr.bf16.mxu0 0
    %468 = vmatpush1.bf16.msra.mxu0 %v449
    %469 = vmatprep.subr.bf16.mxu0 0
    %470 = vmatpush1.bf16.msra.mxu0 %v450
    %471 = vmatprep.subr.bf16.mxu0 0
    %472 = vmatpush1.bf16.msra.mxu0 %v451
    %473 = vmatprep.subr.bf16.mxu0 0
    %474 = vmatpush1.bf16.msra.mxu0 %v452
    %475 = vmatprep.subr.bf16.mxu0 0
    %476 = vmatpush1.bf16.msra.mxu0 %v453
    %477 = vmatprep.subr.bf16.mxu0 0
    %478 = vmatpush1.bf16.msra.mxu0 %v454
    %479 = vmatprep.subr.bf16.mxu0 0
    %480 = vmatpush1.bf16.msra.mxu0 0
    %481 = vmatprep.subr.bf16.mxu0 0
    %482 = vmatpush1.bf16.msra.mxu0 0
    %483 = vmatprep.subr.bf16.mxu0 0
    %484 = vmatpush1.bf16.msra.mxu0 0
    %485 = vmatprep.subr.bf16.mxu0 0
    %486 = vmatpush1.bf16.msra.mxu0 0
    %487 = vmatprep.subr.bf16.mxu0 0
    %488 = vmatpush1.bf16.msra.mxu0 0
    %489 = vmatprep.subr.bf16.mxu0 0
    %490 = vmatpush1.bf16.msra.mxu0 0
    %491 = vmatprep.subr.bf16.mxu0 0
    %492 = vmatpush1.bf16.msra.mxu0 0
    %493 = vmatprep.subr.bf16.mxu0 0
    %494 = vmatpush1.bf16.msra.mxu0 0
    %495 = vmatprep.mubr.bf16.mxu0 0
    %496 = vmatmul.mubr.bf16.gmra.mrb[0].mxu0 %v395
    %v497 = vpop.f32.mrb[0].mxu0
    %v498 = vadd.f32 0.0, %v497
    %v499 = vpop.f32.mrb[0].mxu0
    %v500 = vpop.f32.mrb[0].mxu0
    %v501 = vadd.f32 0.0, %v500
    %v502 = vpop.f32.mrb[0].mxu0
    %503 = vmatprep.mubr.bf16.mxu0 0
    %504 = vmatmul.mubr.bf16.gmra.mrb[0].mxu0 %v396
    %v505 = vpop.f32.mrb[0].mxu0
    %v506 = vadd.f32 0.0, %v505
    %v507 = vpop.f32.mrb[0].mxu0
    %v508 = vpop.f32.mrb[0].mxu0
    %v509 = vadd.f32 0.0, %v508
    %v510 = vpop.f32.mrb[0].mxu0
    %511 = vmatprep.mubr.bf16.mxu0 0
    %512 = vmatmul.mubr.bf16.gmra.mrb[0].mxu0 %v397
    %v513 = vpop.f32.mrb[0].mxu0
    %v514 = vadd.f32 0.0, %v513
    %v515 = vpop.f32.mrb[0].mxu0
    %v516 = vpop.f32.mrb[0].mxu0
    %v517 = vadd.f32 0.0, %v516
    %v518 = vpop.f32.mrb[0].mxu0
    %519 = vmatprep.mubr.bf16.mxu0 0
    %520 = vmatmul.mubr.bf16.gmra.mrb[0].mxu0 %v398
    %v521 = vpop.f32.mrb[0].mxu0
    %v522 = vadd.f32 0.0, %v521
    %v523 = vpop.f32.mrb[0].mxu0
    %v524 = vpop.f32.mrb[0].mxu0
    %v525 = vadd.f32 0.0, %v524
    %v526 = vpop.f32.mrb[0].mxu0
    %527 = vdwg.mxu0
    %v528 = vadd.f32 %v390, %v498
    %v529 = vadd.f32 %v390, %v501
    %v530 = vadd.f32 %v390, %v506
    %v531 = vadd.f32 %v390, %v509
    %v532 = vadd.f32 %v390, %v514
    %v533 = vadd.f32 %v390, %v517
    %v534 = vadd.f32 %v390, %v522
    %v535 = vadd.f32 %v390, %v525
    %v536 = vtanh.pop %v528
    %v537 = vtanh.pop %v529
    %v538 = vtanh.pop %v530
    %v539 = vtanh.pop %v531
    %v540 = vtanh.pop %v532
    %v541 = vtanh.pop %v533
    %v542 = vtanh.pop %v534
    %v543 = vtanh.pop %v535
    %v544 = vpack.c.bf16 %v537, %v536
    %v545 = vpack.c.bf16 %v539, %v538
    %v546 = vpack.c.bf16 %v541, %v540
    %v547 = vpack.c.bf16 %v543, %v542
    %v548 = vld [vmem:[#allocation6] sm:$0xf]
    %v549 = vld [vmem:[#allocation6 + $0x4] sm:$0xf]
    %v550 = vld [vmem:[#allocation6 + $0x8] sm:$0xf]
    %v551 = vld [vmem:[#allocation6 + $0xc] sm:$0xf]
    %v552 = vld [vmem:[#allocation6 + $0x10] sm:$0xf]
    %v553 = vld [vmem:[#allocation6 + $0x14] sm:$0xf]
    %v554 = vld [vmem:[#allocation6 + $0x18] sm:$0xf]
    %v555 = vld [vmem:[#allocation6 + $0x1c] sm:$0xf]
    %v556 = vld [vmem:[#allocation6 + $0x20] sm:$0xf]
    %v557 = vld [vmem:[#allocation6 + $0x24] sm:$0xf]
    %v558 = vld [vmem:[#allocation6 + $0x28] sm:$0xf]
    %v559 = vld [vmem:[#allocation6 + $0x2c] sm:$0xf]
    %v560 = vld [vmem:[#allocation6 + $0x30] sm:$0xf]
    %v561 = vld [vmem:[#allocation6 + $0x34] sm:$0xf]
    %v562 = vld [vmem:[#allocation6 + $0x38] sm:$0xf]
    %v563 = vld [vmem:[#allocation6 + $0x3c] sm:$0xf]
    %v580 = vunpack.c.l.b16 %v548
    %v581 = vunpack.c.l.b16 %v549
    %v582 = vunpack.c.l.b16 %v550
    %v583 = vunpack.c.l.b16 %v551
    %v584 = vunpack.c.l.b16 %v552
    %v585 = vunpack.c.l.b16 %v553
    %v586 = vunpack.c.l.b16 %v554
    %v587 = vunpack.c.l.b16 %v555
    %v588 = vunpack.c.l.b16 %v556
    %v589 = vunpack.c.l.b16 %v557
    %v590 = vunpack.c.l.b16 %v558
    %v591 = vunpack.c.l.b16 %v559
    %v592 = vunpack.c.l.b16 %v560
    %v593 = vunpack.c.l.b16 %v561
    %v594 = vunpack.c.l.b16 %v562
    %v595 = vunpack.c.l.b16 %v563
    %v596 = vpack.c.b16 %v581, %v580
    %v597 = vpack.c.b16 %v583, %v582
    %v598 = vpack.c.b16 %v585, %v584
    %v599 = vpack.c.b16 %v587, %v586
    %v600 = vpack.c.b16 %v589, %v588
    %v601 = vpack.c.b16 %v591, %v590
    %v602 = vpack.c.b16 %v593, %v592
    %v603 = vpack.c.b16 %v595, %v594
    %612 = vmatprep.subr.bf16.mxu0 0
    %613 = vmatpush1.bf16.msra.mxu0 %v596
    %614 = vmatprep.subr.bf16.mxu0 0
    %615 = vmatpush1.bf16.msra.mxu0 %v597
    %616 = vmatprep.subr.bf16.mxu0 0
    %617 = vmatpush1.bf16.msra.mxu0 %v598
    %618 = vmatprep.subr.bf16.mxu0 0
    %619 = vmatpush1.bf16.msra.mxu0 %v599
    %620 = vmatprep.subr.bf16.mxu0 0
    %621 = vmatpush1.bf16.msra.mxu0 %v600
    %622 = vmatprep.subr.bf16.mxu0 0
    %623 = vmatpush1.bf16.msra.mxu0 %v601
    %624 = vmatprep.subr.bf16.mxu0 0
    %625 = vmatpush1.bf16.msra.mxu0 %v602
    %626 = vmatprep.subr.bf16.mxu0 0
    %627 = vmatpush1.bf16.msra.mxu0 %v603
    %628 = vmatprep.subr.bf16.mxu0 0
    %629 = vmatpush1.bf16.msra.mxu0 0
    %630 = vmatprep.subr.bf16.mxu0 0
    %631 = vmatpush1.bf16.msra.mxu0 0
    %632 = vmatprep.subr.bf16.mxu0 0
    %633 = vmatpush1.bf16.msra.mxu0 0
    %634 = vmatprep.subr.bf16.mxu0 0
    %635 = vmatpush1.bf16.msra.mxu0 0
    %636 = vmatprep.subr.bf16.mxu0 0
    %637 = vmatpush1.bf16.msra.mxu0 0
    %638 = vmatprep.subr.bf16.mxu0 0
    %639 = vmatpush1.bf16.msra.mxu0 0
    %640 = vmatprep.subr.bf16.mxu0 0
    %641 = vmatpush1.bf16.msra.mxu0 0
    %642 = vmatprep.subr.bf16.mxu0 0
    %643 = vmatpush1.bf16.msra.mxu0 0
    %644 = vmatprep.mubr.bf16.mxu0 0
    %645 = vmatmul.mubr.bf16.gmra.mrb[0].mxu0 %v544
    %v646 = vpop.f32.mrb[0].mxu0
    %v647 = vadd.f32 0.0, %v646
    %v648 = vpop.f32.mrb[0].mxu0
    %v649 = vpop.f32.mrb[0].mxu0
    %v650 = vadd.f32 0.0, %v649
    %v651 = vpop.f32.mrb[0].mxu0
    %652 = vmatprep.mubr.bf16.mxu0 0
    %653 = vmatmul.mubr.bf16.gmra.mrb[0].mxu0 %v545
    %v654 = vpop.f32.mrb[0].mxu0
    %v655 = vadd.f32 0.0, %v654
    %v656 = vpop.f32.mrb[0].mxu0
    %v657 = vpop.f32.mrb[0].mxu0
    %v658 = vadd.f32 0.0, %v657
    %v659 = vpop.f32.mrb[0].mxu0
    %660 = vmatprep.mubr.bf16.mxu0 0
    %661 = vmatmul.mubr.bf16.gmra.mrb[0].mxu0 %v546
    %v662 = vpop.f32.mrb[0].mxu0
    %v663 = vadd.f32 0.0, %v662
    %v664 = vpop.f32.mrb[0].mxu0
    %v665 = vpop.f32.mrb[0].mxu0
    %v666 = vadd.f32 0.0, %v665
    %v667 = vpop.f32.mrb[0].mxu0
    %668 = vmatprep.mubr.bf16.mxu0 0
    %669 = vmatmul.mubr.bf16.gmra.mrb[0].mxu0 %v547
    %v670 = vpop.f32.mrb[0].mxu0
    %v671 = vadd.f32 0.0, %v670
    %v672 = vpop.f32.mrb[0].mxu0
    %v673 = vpop.f32.mrb[0].mxu0
    %v674 = vadd.f32 0.0, %v673
    %v675 = vpop.f32.mrb[0].mxu0
    %676 = vdwg.mxu0
    %v677 = vpack.c.bf16 %v275, %v275
    %v678 = vpack.c.bf16 %v277, %v277
    %v679 = vpack.c.bf16 %v279, %v279
    %v680 = vpack.c.bf16 %v281, %v281
    %v681 = vpack.c.bf16 %v283, %v283
    %v682 = vpack.c.bf16 %v285, %v285
    %v683 = vpack.c.bf16 %v287, %v287
    %v684 = vpack.c.bf16 %v289, %v289
    %v685 = vld [vmem:[#allocation9] sm:$0xf]
    %v686 = vld [vmem:[#allocation9 + $0x4] sm:$0xf]
    %v687 = vld [vmem:[#allocation9 + $0x8] sm:$0xf]
    %v688 = vld [vmem:[#allocation9 + $0xc] sm:$0xf]
    %v689 = vld [vmem:[#allocation9 + $0x10] sm:$0xf]
    %v690 = vld [vmem:[#allocation9 + $0x14] sm:$0xf]
    %v691 = vld [vmem:[#allocation9 + $0x18] sm:$0xf]
    %v692 = vld [vmem:[#allocation9 + $0x1c] sm:$0xf]
    %v693 = vld [vmem:[#allocation9 + $0x20] sm:$0xf]
    %v694 = vld [vmem:[#allocation9 + $0x24] sm:$0xf]
    %v695 = vld [vmem:[#allocation9 + $0x28] sm:$0xf]
    %v696 = vld [vmem:[#allocation9 + $0x2c] sm:$0xf]
    %v697 = vld [vmem:[#allocation9 + $0x30] sm:$0xf]
    %v698 = vld [vmem:[#allocation9 + $0x34] sm:$0xf]
    %v699 = vld [vmem:[#allocation9 + $0x38] sm:$0xf]
    %v700 = vld [vmem:[#allocation9 + $0x3c] sm:$0xf]
    %v709 = vunpack.c.l.b16 %v677
    %v710 = vunpack.c.l.b16 %v678
    %v711 = vunpack.c.l.b16 %v679
    %v712 = vunpack.c.l.b16 %v680
    %v713 = vunpack.c.l.b16 %v681
    %v714 = vunpack.c.l.b16 %v682
    %v715 = vunpack.c.l.b16 %v683
    %v716 = vunpack.c.l.b16 %v684
    %vm717 = vcmask 1041409
    %v718 = vsel %vm717, %v710, %v709
    %vm719 = vcmask 1042434
    %v720 = vsel %vm719, %v711, %v718
    %vm721 = vcmask 1043459
    %v722 = vsel %vm721, %v712, %v720
    %vm723 = vcmask 1044484
    %v724 = vsel %vm723, %v713, %v722
    %vm725 = vcmask 1045509
    %v726 = vsel %vm725, %v714, %v724
    %vm727 = vcmask 1046534
    %v728 = vsel %vm727, %v715, %v726
    %vm729 = vcmask 1047559
    %v730 = vsel %vm729, %v716, %v728
    %v731 = vpack.c.b16 %v730, %v730
    %v749 = vunpack.c.l.b16 %v685
    %v750 = vunpack.c.l.b16 %v686
    %v751 = vunpack.c.l.b16 %v687
    %v752 = vunpack.c.l.b16 %v688
    %v753 = vunpack.c.l.b16 %v689
    %v754 = vunpack.c.l.b16 %v690
    %v755 = vunpack.c.l.b16 %v691
    %v756 = vunpack.c.l.b16 %v692
    %v757 = vunpack.c.l.b16 %v693
    %v758 = vunpack.c.l.b16 %v694
    %v759 = vunpack.c.l.b16 %v695
    %v760 = vunpack.c.l.b16 %v696
    %v761 = vunpack.c.l.b16 %v697
    %v762 = vunpack.c.l.b16 %v698
    %v763 = vunpack.c.l.b16 %v699
    %v764 = vunpack.c.l.b16 %v700
    %v765 = vpack.c.b16 %v750, %v749
    %v766 = vpack.c.b16 %v752, %v751
    %v767 = vpack.c.b16 %v754, %v753
    %v768 = vpack.c.b16 %v756, %v755
    %v769 = vpack.c.b16 %v758, %v757
    %v770 = vpack.c.b16 %v760, %v759
    %v771 = vpack.c.b16 %v762, %v761
    %v772 = vpack.c.b16 %v764, %v763
    %781 = vmatprep.subr.bf16.mxu0 0
    %782 = vmatpush1.bf16.msra.mxu0 %v765
    %783 = vmatprep.subr.bf16.mxu0 0
    %784 = vmatpush1.bf16.msra.mxu0 %v766
    %785 = vmatprep.subr.bf16.mxu0 0
    %786 = vmatpush1.bf16.msra.mxu0 %v767
    %787 = vmatprep.subr.bf16.mxu0 0
    %788 = vmatpush1.bf16.msra.mxu0 %v768
    %789 = vmatprep.subr.bf16.mxu0 0
    %790 = vmatpush1.bf16.msra.mxu0 %v769
    %791 = vmatprep.subr.bf16.mxu0 0
    %792 = vmatpush1.bf16.msra.mxu0 %v770
    %793 = vmatprep.subr.bf16.mxu0 0
    %794 = vmatpush1.bf16.msra.mxu0 %v771
    %795 = vmatprep.subr.bf16.mxu0 0
    %796 = vmatpush1.bf16.msra.mxu0 %v772
    %797 = vmatprep.subr.bf16.mxu0 0
    %798 = vmatpush1.bf16.msra.mxu0 0
    %799 = vmatprep.subr.bf16.mxu0 0
    %800 = vmatpush1.bf16.msra.mxu0 0
    %801 = vmatprep.subr.bf16.mxu0 0
    %802 = vmatpush1.bf16.msra.mxu0 0
    %803 = vmatprep.subr.bf16.mxu0 0
    %804 = vmatpush1.bf16.msra.mxu0 0
    %805 = vmatprep.subr.bf16.mxu0 0
    %806 = vmatpush1.bf16.msra.mxu0 0
    %807 = vmatprep.subr.bf16.mxu0 0
    %808 = vmatpush1.bf16.msra.mxu0 0
    %809 = vmatprep.subr.bf16.mxu0 0
    %810 = vmatpush1.bf16.msra.mxu0 0
    %811 = vmatprep.subr.bf16.mxu0 0
    %812 = vmatpush1.bf16.msra.mxu0 0
    %813 = vmatprep.mubr.bf16.mxu0 0
    %814 = vmatmul.mubr.bf16.gmra.mrb[0].mxu0 %v731
    %v815 = vpop.f32.mrb[0].mxu0
    %v816 = vadd.f32 0.0, %v815
    %v817 = vpop.f32.mrb[0].mxu0
    %v818 = vpop.f32.mrb[0].mxu0
    %v819 = vpop.f32.mrb[0].mxu0
    %820 = vdwg.mxu0
    %v821 = vld [vmem:[#allocation7] sm:$0x1]
    %v823 = vlaneseq
    %v824 = vshrl.u32 %v823, 7
    %v825 = vsub.s32 0, %v824
    %v826 = vrot.slane %v821, %v825
    %v828 = vadd.f32 %v647, %v826
    %v829 = vadd.f32 %v650, %v826
    %v830 = vadd.f32 %v655, %v826
    %v831 = vadd.f32 %v658, %v826
    %v832 = vadd.f32 %v663, %v826
    %v833 = vadd.f32 %v666, %v826
    %v834 = vadd.f32 %v671, %v826
    %v835 = vadd.f32 %v674, %v826
    %v837 = vcombine.high %v816, %v816
    %v839 = vunpack.c.l.s4 1966171168
    %v840 = vunpack.c.0.s8 %v839
    %v841 = vlaneseq
    %v842 = vshrl.u32 %v841, 7
    %v843 = vsub.s32 %v840, %v842
    %v844 = vrot.slane %v816, %v843
    %v846 = vunpack.c.l.s4 1966171168
    %v847 = vunpack.c.0.s8 %v846
    %v848 = vlaneseq
    %v849 = vshrl.u32 %v848, 7
    %v850 = vsub.s32 %v847, %v849
    %v851 = vrot.slane %v837, %v850
    %v852 = vcombine.high %v844, %v844
    %v853 = vcombine.high %v851, %v851
    %v855 = vunpack.c.l.s4 1966171168
    %v856 = vunpack.c.0.s8 %v855
    %v857 = vlaneseq
    %v858 = vshrl.u32 %v857, 7
    %v859 = vsub.s32 %v856, %v858
    %v860 = vrot.slane %v844, %v859
    %v862 = vunpack.c.l.s4 1966171168
    %v863 = vunpack.c.0.s8 %v862
    %v864 = vlaneseq
    %v865 = vshrl.u32 %v864, 7
    %v866 = vsub.s32 %v863, %v865
    %v867 = vrot.slane %v851, %v866
    %v869 = vunpack.c.l.s4 1966171168
    %v870 = vunpack.c.0.s8 %v869
    %v871 = vlaneseq
    %v872 = vshrl.u32 %v871, 7
    %v873 = vsub.s32 %v870, %v872
    %v874 = vrot.slane %v852, %v873
    %v876 = vunpack.c.l.s4 1966171168
    %v877 = vunpack.c.0.s8 %v876
    %v878 = vlaneseq
    %v879 = vshrl.u32 %v878, 7
    %v880 = vsub.s32 %v877, %v879
    %v881 = vrot.slane %v853, %v880
    %v882 = vcombine.high %v860, %v860
    %v883 = vcombine.high %v867, %v867
    %v884 = vcombine.high %v874, %v874
    %v885 = vcombine.high %v881, %v881
    %v886 = vlaneseq
    %v887 = vshrl.u32 %v886, 7
    %v888 = vsub.s32 0, %v887
    %v889 = vrot.slane %v860, %v888
    %v890 = vlaneseq
    %v891 = vshrl.u32 %v890, 7
    %v892 = vsub.s32 0, %v891
    %v893 = vrot.slane %v874, %v892
    %v894 = vlaneseq
    %v895 = vshrl.u32 %v894, 7
    %v896 = vsub.s32 0, %v895
    %v897 = vrot.slane %v882, %v896
    %v898 = vlaneseq
    %v899 = vshrl.u32 %v898, 7
    %v900 = vsub.s32 0, %v899
    %v901 = vrot.slane %v884, %v900
    %v902 = vlaneseq
    %v903 = vshrl.u32 %v902, 7
    %v904 = vsub.s32 0, %v903
    %v905 = vrot.slane %v867, %v904
    %v906 = vlaneseq
    %v907 = vshrl.u32 %v906, 7
    %v908 = vsub.s32 0, %v907
    %v909 = vrot.slane %v881, %v908
    %v910 = vlaneseq
    %v911 = vshrl.u32 %v910, 7
    %v912 = vsub.s32 0, %v911
    %v913 = vrot.slane %v883, %v912
    %v914 = vlaneseq
    %v915 = vshrl.u32 %v914, 7
    %v916 = vsub.s32 0, %v915
    %v917 = vrot.slane %v885, %v916
    %v926 = vadd.f32 %v828, %v889
    %v927 = vadd.f32 %v829, %v893
    %v928 = vadd.f32 %v830, %v897
    %v929 = vadd.f32 %v831, %v901
    %v930 = vadd.f32 %v832, %v905
    %v931 = vadd.f32 %v833, %v909
    %v932 = vadd.f32 %v834, %v913
    %v933 = vadd.f32 %v835, %v917
    %v934 = vxor.u32 %v926, 2147483648
    %v935 = vxor.u32 %v927, 2147483648
    %v936 = vxor.u32 %v928, 2147483648
    %v937 = vxor.u32 %v929, 2147483648
    %v938 = vxor.u32 %v930, 2147483648
    %v939 = vxor.u32 %v931, 2147483648
    %v940 = vxor.u32 %v932, 2147483648
    %v941 = vxor.u32 %v933, 2147483648
    %v942 = vmul.f32 %v934, 1.442695
    %v943 = vpow.pop %v942
    %v944 = vmul.f32 %v935, 1.442695
    %v945 = vpow.pop %v944
    %v946 = vmul.f32 %v936, 1.442695
    %v947 = vpow.pop %v946
    %v948 = vmul.f32 %v937, 1.442695
    %v949 = vpow.pop %v948
    %v950 = vmul.f32 %v938, 1.442695
    %v951 = vpow.pop %v950
    %v952 = vmul.f32 %v939, 1.442695
    %v953 = vpow.pop %v952
    %v954 = vmul.f32 %v940, 1.442695
    %v955 = vpow.pop %v954
    %v956 = vmul.f32 %v941, 1.442695
    %v957 = vpow.pop %v956
    %v958 = vadd.f32 %v943, 1.0
    %v959 = vadd.f32 %v945, 1.0
    %v960 = vadd.f32 %v947, 1.0
    %v961 = vadd.f32 %v949, 1.0
    %v962 = vadd.f32 %v951, 1.0
    %v963 = vadd.f32 %v953, 1.0
    %v964 = vadd.f32 %v955, 1.0
    %v965 = vadd.f32 %v957, 1.0
    %v966 = vrcp.pop %v958
    %v967 = vmul.f32 1.0, %v966
    %v968 = vrcp.pop %v959
    %v969 = vmul.f32 1.0, %v968
    %v970 = vrcp.pop %v960
    %v971 = vmul.f32 1.0, %v970
    %v972 = vrcp.pop %v961
    %v973 = vmul.f32 1.0, %v972
    %v974 = vrcp.pop %v962
    %v975 = vmul.f32 1.0, %v974
    %v976 = vrcp.pop %v963
    %v977 = vmul.f32 1.0, %v976
    %v978 = vrcp.pop %v964
    %v979 = vmul.f32 1.0, %v978
    %v980 = vrcp.pop %v965
    %v981 = vmul.f32 1.0, %v980
    %v982 = vld [vmem:[#allocation4] sm:$0x1]
    %v984 = vlaneseq
    %v985 = vshrl.u32 %v984, 7
    %v986 = vsub.s32 0, %v985
    %v987 = vrot.slane %v982, %v986
    %v989 = vmul.f32 %v967, %v987
    %v990 = vmul.f32 %v969, %v987
    %v991 = vmul.f32 %v971, %v987
    %v992 = vmul.f32 %v973, %v987
    %v993 = vmul.f32 %v975, %v987
    %v994 = vmul.f32 %v977, %v987
    %v995 = vmul.f32 %v979, %v987
    %v996 = vmul.f32 %v981, %v987
    %997 = vadd.xlane.f32.xlu0 %v989
    %v998 = vpop.xlane.xlu0 %997
    %999 = vadd.xlane.f32.xlu0 %v990
    %v1000 = vpop.xlane.xlu0 %999
    %1001 = vadd.xlane.f32.xlu0 %v991
    %v1002 = vpop.xlane.xlu0 %1001
    %1003 = vadd.xlane.f32.xlu0 %v992
    %v1004 = vpop.xlane.xlu0 %1003
    %1005 = vadd.xlane.f32.xlu0 %v993
    %v1006 = vpop.xlane.xlu0 %1005
    %1007 = vadd.xlane.f32.xlu0 %v994
    %v1008 = vpop.xlane.xlu0 %1007
    %1009 = vadd.xlane.f32.xlu0 %v995
    %v1010 = vpop.xlane.xlu0 %1009
    %1011 = vadd.xlane.f32.xlu0 %v996
    %v1012 = vpop.xlane.xlu0 %1011
    %v1013 = vmul.f32 %v998, %v112
    %v1014 = vmul.f32 %v1000, %v119
    %v1015 = vmul.f32 %v1002, %v126
    %v1016 = vmul.f32 %v1004, %v133
    %v1017 = vmul.f32 %v1006, %v140
    %v1018 = vmul.f32 %v1008, %v147
    %v1019 = vmul.f32 %v1010, %v154
    %v1020 = vmul.f32 %v1012, %v161
    %v1021 = vmul.f32 %v1013, %v97
    %v1022 = vmul.f32 %v1014, %v98
    %v1023 = vmul.f32 %v1015, %v99
    %v1024 = vmul.f32 %v1016, %v100
    %v1025 = vmul.f32 %v1017, %v101
    %v1026 = vmul.f32 %v1018, %v102
    %v1027 = vmul.f32 %v1019, %v103
    %v1028 = vmul.f32 %v1020, %v104
    %v1029 = vrot.slane %v1021, 4
    %v1030 = vadd.f32 %v1021, %v1029
    %v1031 = vrot.slane %v1030, 2
    %v1032 = vadd.f32 %v1030, %v1031
    %v1033 = vrot.slane %v1032, 1
    %v1034 = vadd.f32 %v1032, %v1033
    %v1035 = vrot.slane %v1022, 4
    %v1036 = vadd.f32 %v1022, %v1035
    %v1037 = vrot.slane %v1036, 2
    %v1038 = vadd.f32 %v1036, %v1037
    %v1039 = vrot.slane %v1038, 1
    %v1040 = vadd.f32 %v1038, %v1039
    %v1041 = vrot.slane %v1023, 4
    %v1042 = vadd.f32 %v1023, %v1041
    %v1043 = vrot.slane %v1042, 2
    %v1044 = vadd.f32 %v1042, %v1043
    %v1045 = vrot.slane %v1044, 1
    %v1046 = vadd.f32 %v1044, %v1045
    %v1047 = vrot.slane %v1024, 4
    %v1048 = vadd.f32 %v1024, %v1047
    %v1049 = vrot.slane %v1048, 2
    %v1050 = vadd.f32 %v1048, %v1049
    %v1051 = vrot.slane %v1050, 1
    %v1052 = vadd.f32 %v1050, %v1051
    %v1053 = vrot.slane %v1025, 4
    %v1054 = vadd.f32 %v1025, %v1053
    %v1055 = vrot.slane %v1054, 2
    %v1056 = vadd.f32 %v1054, %v1055
    %v1057 = vrot.slane %v1056, 1
    %v1058 = vadd.f32 %v1056, %v1057
    %v1059 = vrot.slane %v1026, 4
    %v1060 = vadd.f32 %v1026, %v1059
    %v1061 = vrot.slane %v1060, 2
    %v1062 = vadd.f32 %v1060, %v1061
    %v1063 = vrot.slane %v1062, 1
    %v1064 = vadd.f32 %v1062, %v1063
    %v1065 = vrot.slane %v1027, 4
    %v1066 = vadd.f32 %v1027, %v1065
    %v1067 = vrot.slane %v1066, 2
    %v1068 = vadd.f32 %v1066, %v1067
    %v1069 = vrot.slane %v1068, 1
    %v1070 = vadd.f32 %v1068, %v1069
    %v1071 = vrot.slane %v1028, 4
    %v1072 = vadd.f32 %v1028, %v1071
    %v1073 = vrot.slane %v1072, 2
    %v1074 = vadd.f32 %v1072, %v1073
    %v1075 = vrot.slane %v1074, 1
    %v1076 = vadd.f32 %v1074, %v1075
    %v1077 = vmul.f32 %v1034, %v1034
    %v1078 = vmul.f32 %v1040, %v1040
    %v1079 = vmul.f32 %v1046, %v1046
    %v1080 = vmul.f32 %v1052, %v1052
    %v1081 = vmul.f32 %v1058, %v1058
    %v1082 = vmul.f32 %v1064, %v1064
    %v1083 = vmul.f32 %v1070, %v1070
    %v1084 = vmul.f32 %v1076, %v1076
    %v1093 = vsel %vm717, %v1078, %v1077
    %v1094 = vsel %vm719, %v1079, %v1093
    %v1095 = vsel %vm721, %v1080, %v1094
    %v1096 = vsel %vm723, %v1081, %v1095
    %v1097 = vsel %vm725, %v1082, %v1096
    %v1098 = vsel %vm727, %v1083, %v1097
    %v1099 = vsel %vm729, %v1084, %v1098
    %1101 = vadd.xlane.f32.xlu0 %v1099
    %v1102 = vpop.xlane.xlu0 %1101
    %v1103 = vmax.f32 %v1102, 1e-24
    %v1104 = vrsqrt.pop %v1103
    %v1106 = vrot.slane %v1104, 1
    %v1107 = vrot.slane %v1104, 2
    %v1108 = vrot.slane %v1104, 3
    %v1109 = vrot.slane %v1104, 4
    %v1110 = vrot.slane %v1104, 5
    %v1111 = vrot.slane %v1104, 6
    %v1112 = vrot.slane %v1104, 7
    %v1121 = vmul.f32 %v1034, %v1104
    %v1122 = vmul.f32 %v1040, %v1106
    %v1123 = vmul.f32 %v1046, %v1107
    %v1124 = vmul.f32 %v1052, %v1108
    %v1125 = vmul.f32 %v1058, %v1109
    %v1126 = vmul.f32 %v1064, %v1110
    %v1127 = vmul.f32 %v1070, %v1111
    %v1128 = vmul.f32 %v1076, %v1112
    %v1129 = vpack.c.bf16 %v1121, %v1121
    %v1130 = vpack.c.bf16 %v1122, %v1122
    %v1131 = vpack.c.bf16 %v1123, %v1123
    %v1132 = vpack.c.bf16 %v1124, %v1124
    %v1133 = vpack.c.bf16 %v1125, %v1125
    %v1134 = vpack.c.bf16 %v1126, %v1126
    %v1135 = vpack.c.bf16 %v1127, %v1127
    %v1136 = vpack.c.bf16 %v1128, %v1128
    %v1137 = vld [vmem:[%s8] sm:$0xf]
    %v1138 = vld [vmem:[%s8 + $0x4] sm:$0xf]
    %v1139 = vld [vmem:[%s8 + $0x8] sm:$0xf]
    %v1140 = vld [vmem:[%s8 + $0xc] sm:$0xf]
    %v1141 = vld [vmem:[%s8 + $0x10] sm:$0xf]
    %v1142 = vld [vmem:[%s8 + $0x14] sm:$0xf]
    %v1143 = vld [vmem:[%s8 + $0x18] sm:$0xf]
    %v1144 = vld [vmem:[%s8 + $0x1c] sm:$0xf]
    %v1145 = vld [vmem:[%s8 + $0x20] sm:$0xf]
    %v1146 = vld [vmem:[%s8 + $0x24] sm:$0xf]
    %v1147 = vld [vmem:[%s8 + $0x28] sm:$0xf]
    %v1148 = vld [vmem:[%s8 + $0x2c] sm:$0xf]
    %v1149 = vld [vmem:[%s8 + $0x30] sm:$0xf]
    %v1150 = vld [vmem:[%s8 + $0x34] sm:$0xf]
    %v1151 = vld [vmem:[%s8 + $0x38] sm:$0xf]
    %v1152 = vld [vmem:[%s8 + $0x3c] sm:$0xf]
    %v1161 = vunpack.c.l.b16 %v1129
    %v1162 = vunpack.c.l.b16 %v1130
    %v1163 = vunpack.c.l.b16 %v1131
    %v1164 = vunpack.c.l.b16 %v1132
    %v1165 = vunpack.c.l.b16 %v1133
    %v1166 = vunpack.c.l.b16 %v1134
    %v1167 = vunpack.c.l.b16 %v1135
    %v1168 = vunpack.c.l.b16 %v1136
    %v1169 = vrot.slane %v1162, 7
    %v1170 = vsel %vm717, %v1169, %v1161
    %v1171 = vrot.slane %v1163, 6
    %v1172 = vsel %vm719, %v1171, %v1170
    %v1173 = vrot.slane %v1164, 5
    %v1174 = vsel %vm721, %v1173, %v1172
    %v1175 = vrot.slane %v1165, 4
    %v1176 = vsel %vm723, %v1175, %v1174
    %v1177 = vrot.slane %v1166, 3
    %v1178 = vsel %vm725, %v1177, %v1176
    %v1179 = vrot.slane %v1167, 2
    %v1180 = vsel %vm727, %v1179, %v1178
    %v1181 = vrot.slane %v1168, 1
    %v1182 = vsel %vm729, %v1181, %v1180
    %v1183 = vpack.c.b16 %v1182, %v1182
    %v1201 = vunpack.c.l.b16 %v1137
    %v1202 = vunpack.c.l.b16 %v1138
    %v1203 = vunpack.c.l.b16 %v1139
    %v1204 = vunpack.c.l.b16 %v1140
    %v1205 = vunpack.c.l.b16 %v1141
    %v1206 = vunpack.c.l.b16 %v1142
    %v1207 = vunpack.c.l.b16 %v1143
    %v1208 = vunpack.c.l.b16 %v1144
    %v1209 = vunpack.c.l.b16 %v1145
    %v1210 = vunpack.c.l.b16 %v1146
    %v1211 = vunpack.c.l.b16 %v1147
    %v1212 = vunpack.c.l.b16 %v1148
    %v1213 = vunpack.c.l.b16 %v1149
    %v1214 = vunpack.c.l.b16 %v1150
    %v1215 = vunpack.c.l.b16 %v1151
    %v1216 = vunpack.c.l.b16 %v1152
    %v1217 = vpack.c.b16 %v1202, %v1201
    %v1218 = vpack.c.b16 %v1204, %v1203
    %v1219 = vpack.c.b16 %v1206, %v1205
    %v1220 = vpack.c.b16 %v1208, %v1207
    %v1221 = vpack.c.b16 %v1210, %v1209
    %v1222 = vpack.c.b16 %v1212, %v1211
    %v1223 = vpack.c.b16 %v1214, %v1213
    %v1224 = vpack.c.b16 %v1216, %v1215
    %1233 = vmatprep.subr.bf16.mxu0 0
    %1234 = vmatpush1.bf16.msra.mxu0 %v1217
    %1235 = vmatprep.subr.bf16.mxu0 0
    %1236 = vmatpush1.bf16.msra.mxu0 %v1218
    %1237 = vmatprep.subr.bf16.mxu0 0
    %1238 = vmatpush1.bf16.msra.mxu0 %v1219
    %1239 = vmatprep.subr.bf16.mxu0 0
    %1240 = vmatpush1.bf16.msra.mxu0 %v1220
    %1241 = vmatprep.subr.bf16.mxu0 0
    %1242 = vmatpush1.bf16.msra.mxu0 %v1221
    %1243 = vmatprep.subr.bf16.mxu0 0
    %1244 = vmatpush1.bf16.msra.mxu0 %v1222
    %1245 = vmatprep.subr.bf16.mxu0 0
    %1246 = vmatpush1.bf16.msra.mxu0 %v1223
    %1247 = vmatprep.subr.bf16.mxu0 0
    %1248 = vmatpush1.bf16.msra.mxu0 %v1224
    %1249 = vmatprep.subr.bf16.mxu0 0
    %1250 = vmatpush1.bf16.msra.mxu0 0
    %1251 = vmatprep.subr.bf16.mxu0 0
    %1252 = vmatpush1.bf16.msra.mxu0 0
    %1253 = vmatprep.subr.bf16.mxu0 0
    %1254 = vmatpush1.bf16.msra.mxu0 0
    %1255 = vmatprep.subr.bf16.mxu0 0
    %1256 = vmatpush1.bf16.msra.mxu0 0
    %1257 = vmatprep.subr.bf16.mxu0 0
    %1258 = vmatpush1.bf16.msra.mxu0 0
    %1259 = vmatprep.subr.bf16.mxu0 0
    %1260 = vmatpush1.bf16.msra.mxu0 0
    %1261 = vmatprep.subr.bf16.mxu0 0
    %1262 = vmatpush1.bf16.msra.mxu0 0
    %1263 = vmatprep.subr.bf16.mxu0 0
    %1264 = vmatpush1.bf16.msra.mxu0 0
    %1265 = vmatprep.mubr.bf16.mxu0 0
    %1266 = vmatmul.mubr.bf16.gmra.mrb[0].mxu0 %v1183
    %v1267 = vpop.f32.mrb[0].mxu0
    %v1268 = vadd.f32 0.0, %v1267
    %v1269 = vpop.f32.mrb[0].mxu0
    %v1270 = vpop.f32.mrb[0].mxu0
    %v1271 = vpop.f32.mrb[0].mxu0
    %1272 = vdwg.mxu0
    %v1273 = vmul.f32 %v1268, 10.0
    %1274 = vst [vmem:[%s9] sm:$0xff] %v1273
    // Predicated region
    $region58: #{forward.2} parent=1 // pred_check
      _
    $region59: #{forward.2} parent=1 // pred_check_branch
      %1276 = sbr.rel (0) target = $region61
    $region60: #{forward.2} parent=1 // pred_region
      _
    $region61: #{forward.2} parent=1 // pred_fallthru
      _
    // Predicated region
    $region62: #{forward.2} parent=1 // pred_check
      _
    $region63: #{forward.2} parent=1 // pred_check_branch
      %1278 = sbr.rel (0) target = $region65
    $region64: #{forward.2} parent=1 // pred_region
      _
    $region65: #{forward.2} parent=1 // pred_fallthru
      _
    %1279 = vsyncpa [#allocation3], 1
    %1280 = vsyncpa [#allocation5], 1
    %1281 = vsyncpa [#allocation8], 1

// kernel: forward.3
$region0: #{forward.3}
  #allocation0 [shape = 'u32[]', space=smem, size = 0x4, offset = 0x4, fixed_abs, tag = 'smem constant byte address 0x4 - core index']
  #allocation1 [shape = 'u32[144,128]{1,0:T(1,128)}', space=vmem, size = 0x12000, scoped, tag = 'internal scratch']
  %s0 = inlined_call_operand.vmem [shape: bf16[2,1344,128], index: 0, kind: input, shape index: {}]
  %s1 = inlined_call_operand.vmem [shape: bf16[128,128], index: 1, kind: input, shape index: {}]
  %s2 = inlined_call_operand.vmem [shape: bf16[2,128,384], index: 2, kind: input, shape index: {}]
  %s3 = inlined_call_operand.vmem [shape: bf16[2,128,128], index: 3, kind: input, shape index: {}]
  %s4 = inlined_call_operand.vmem [shape: bf16[2,128,128], index: 4, kind: input, shape index: {}]
  %s5 = inlined_call_operand.vmem [shape: f32[2,3,128], index: 5, kind: input, shape index: {}]
  %s6 = inlined_call_operand.vmem [shape: f32[2,1344,128], index: 6, kind: output, shape index: {}]
  %s7 = sld [smem:[#allocation0]]
  $region57: #{forward.3} parent=0
    _
  %s9 = ssub.s32 1, %s7
  %s10 = scalar_select 0, %s9, %s7
  loop: start=0, step=1, limit=4
  $region2: #{forward.3} parent=0 // loop_pre_header
    _
  $region3: #{forward.3} parent=0 // loop_header
    %s12 = sphi 0, %s16
    %p13 = scmp.ge.s32.totalorder %s12, 4
    %s22 = sphi 0, %s24
    %s25 = sphi 0, %s22
    %s26 = sphi 0, %s25
    %s42 = sphi 0, %s26
    %s46 = sphi 0, %s46
    %s48 = sphi 0, %s46
    %s49 = sphi 0, %s48
    %s63 = sphi 0, %s49
    %s69 = sphi 0, %s71
    %s72 = sphi 0, %s69
    %s73 = sphi 0, %s72
    %s89 = sphi 0, %s73
    %s95 = sphi 0, %s97
    %s98 = sphi 0, %s95
    %s99 = sphi 0, %s98
    %s115 = sphi 0, %s99
    %s121 = sphi 0, %s123
    %s124 = sphi 0, %s121
    %s125 = sphi 0, %s124
    %s141 = sphi 0, %s125
    %s147 = sphi 0, %s149
    %s150 = sphi 0, %s147
    %s151 = sphi 0, %s150
    %s167 = sphi 0, %s151
    %s173 = sphi 0, %s175
    %s176 = sphi 0, %s173
    %s177 = sphi 0, %s176
    %s193 = sphi 0, %s177
  $region4: #{forward.3} parent=0 // loop_header_branch
    %15 = sbr.rel (%p13) target = $region8
  $region5: #{forward.3} parent=0 // loop_body
    %s17 = ssub.s32 %s12, 1
    %s18 = ssub.s32 %s12, 2
    %s19 = sadd.s32 %s12, 1
    %s20 = ssub.s32 %s12, %s19
    %p21 = scmp.eq.s32.totalorder %s20, 0
    %s23 = sadd.s32 %s22, 1
    %s24 = scalar_select %p21, %s22, %s23
    %p27 = pneg %p21
    %p28 = scmp.eq.s32.totalorder %s12, 1
    %p29 = por %p27, %p28
    %p30 = scmp.ne.s32.totalorder %s22, %s25
    %p31 = scmp.eq.s32.totalorder %s12, 0
    %p32 = por %p30, %p31
    %p33 = scmp.ne.s32.totalorder %s22, %s25
    %p34 = scmp.eq.s32.totalorder %s17, 1
    %p35 = por %p33, %p34
    %p36 = scmp.ne.s32.totalorder %s25, %s26
    %p37 = scmp.eq.s32.totalorder %s17, 0
    %p38 = por %p36, %p37
    %p39 = scmp.ne.s32.totalorder %s25, %s26
    %p40 = scmp.eq.s32.totalorder %s18, 1
    %p41 = por %p39, %p40
    %p43 = scmp.ne.s32.totalorder %s26, %s42
    %p44 = scmp.eq.s32.totalorder %s18, 0
    %p45 = por %p43, %p44
    %s47 = sadd.s32 %s46, 1
    %p50 = scmp.eq.s32.totalorder %s12, 1
    %p51 = scmp.ne.s32.totalorder %s46, %s48
    %p52 = scmp.eq.s32.totalorder %s12, 0
    %p53 = por %p51, %p52
    %p54 = scmp.ne.s32.totalorder %s46, %s48
    %p55 = scmp.eq.s32.totalorder %s17, 1
    %p56 = por %p54, %p55
    %p57 = scmp.ne.s32.totalorder %s48, %s49
    %p58 = scmp.eq.s32.totalorder %s17, 0
    %p59 = por %p57, %p58
    %p60 = scmp.ne.s32.totalorder %s48, %s49
    %p61 = scmp.eq.s32.totalorder %s18, 1
    %p62 = por %p60, %p61
    %p64 = scmp.ne.s32.totalorder %s49, %s63
    %p65 = scmp.eq.s32.totalorder %s18, 0
    %p66 = por %p64, %p65
    %s67 = ssub.s32 %s12, %s19
    %p68 = scmp.eq.s32.totalorder %s67, 0
    %s70 = sadd.s32 %s69, 1
    %s71 = scalar_select %p68, %s69, %s70
    %p74 = pneg %p68
    %p75 = scmp.eq.s32.totalorder %s12, 1
    %p76 = por %p74, %p75
    %p77 = scmp.ne.s32.totalorder %s69, %s72
    %p78 = scmp.eq.s32.totalorder %s12, 0
    %p79 = por %p77, %p78
    %p80 = scmp.ne.s32.totalorder %s69, %s72
    %p81 = scmp.eq.s32.totalorder %s17, 1
    %p82 = por %p80, %p81
    %p83 = scmp.ne.s32.totalorder %s72, %s73
    %p84 = scmp.eq.s32.totalorder %s17, 0
    %p85 = por %p83, %p84
    %p86 = scmp.ne.s32.totalorder %s72, %s73
    %p87 = scmp.eq.s32.totalorder %s18, 1
    %p88 = por %p86, %p87
    %p90 = scmp.ne.s32.totalorder %s73, %s89
    %p91 = scmp.eq.s32.totalorder %s18, 0
    %p92 = por %p90, %p91
    %s93 = ssub.s32 %s12, %s19
    %p94 = scmp.eq.s32.totalorder %s93, 0
    %s96 = sadd.s32 %s95, 1
    %s97 = scalar_select %p94, %s95, %s96
    %p100 = pneg %p94
    %p101 = scmp.eq.s32.totalorder %s12, 1
    %p102 = por %p100, %p101
    %p103 = scmp.ne.s32.totalorder %s95, %s98
    %p104 = scmp.eq.s32.totalorder %s12, 0
    %p105 = por %p103, %p104
    %p106 = scmp.ne.s32.totalorder %s95, %s98
    %p107 = scmp.eq.s32.totalorder %s17, 1
    %p108 = por %p106, %p107
    %p109 = scmp.ne.s32.totalorder %s98, %s99
    %p110 = scmp.eq.s32.totalorder %s17, 0
    %p111 = por %p109, %p110
    %p112 = scmp.ne.s32.totalorder %s98, %s99
    %p113 = scmp.eq.s32.totalorder %s18, 1
    %p114 = por %p112, %p113
    %p116 = scmp.ne.s32.totalorder %s99, %s115
    %p117 = scmp.eq.s32.totalorder %s18, 0
    %p118 = por %p116, %p117
    %s119 = ssub.s32 %s12, %s19
    %p120 = scmp.eq.s32.totalorder %s119, 0
    %s122 = sadd.s32 %s121, 1
    %s123 = scalar_select %p120, %s121, %s122
    %p126 = pneg %p120
    %p127 = scmp.eq.s32.totalorder %s12, 1
    %p128 = por %p126, %p127
    %p129 = scmp.ne.s32.totalorder %s121, %s124
    %p130 = scmp.eq.s32.totalorder %s12, 0
    %p131 = por %p129, %p130
    %p132 = scmp.ne.s32.totalorder %s121, %s124
    %p133 = scmp.eq.s32.totalorder %s17, 1
    %p134 = por %p132, %p133
    %p135 = scmp.ne.s32.totalorder %s124, %s125
    %p136 = scmp.eq.s32.totalorder %s17, 0
    %p137 = por %p135, %p136
    %p138 = scmp.ne.s32.totalorder %s124, %s125
    %p139 = scmp.eq.s32.totalorder %s18, 1
    %p140 = por %p138, %p139
    %p142 = scmp.ne.s32.totalorder %s125, %s141
    %p143 = scmp.eq.s32.totalorder %s18, 0
    %p144 = por %p142, %p143
    %s145 = ssub.s32 %s12, %s19
    %p146 = scmp.eq.s32.totalorder %s145, 0
    %s148 = sadd.s32 %s147, 1
    %s149 = scalar_select %p146, %s147, %s148
    %p152 = pneg %p146
    %p153 = scmp.eq.s32.totalorder %s12, 1
    %p154 = por %p152, %p153
    %p155 = scmp.ne.s32.totalorder %s147, %s150
    %p156 = scmp.eq.s32.totalorder %s12, 0
    %p157 = por %p155, %p156
    %p158 = scmp.ne.s32.totalorder %s147, %s150
    %p159 = scmp.eq.s32.totalorder %s17, 1
    %p160 = por %p158, %p159
    %p161 = scmp.ne.s32.totalorder %s150, %s151
    %p162 = scmp.eq.s32.totalorder %s17, 0
    %p163 = por %p161, %p162
    %p164 = scmp.ne.s32.totalorder %s150, %s151
    %p165 = scmp.eq.s32.totalorder %s18, 1
    %p166 = por %p164, %p165
    %p168 = scmp.ne.s32.totalorder %s151, %s167
    %p169 = scmp.eq.s32.totalorder %s18, 0
    %p170 = por %p168, %p169
    %s171 = ssub.s32 %s12, %s19
    %p172 = scmp.eq.s32.totalorder %s171, 0
    %s174 = sadd.s32 %s173, 1
    %s175 = scalar_select %p172, %s173, %s174
    %p178 = pneg %p172
    %p179 = scmp.eq.s32.totalorder %s12, 1
    %p180 = por %p178, %p179
    %p181 = scmp.ne.s32.totalorder %s173, %s176
    %p182 = scmp.eq.s32.totalorder %s12, 0
    %p183 = por %p181, %p182
    %p184 = scmp.ne.s32.totalorder %s173, %s176
    %p185 = scmp.eq.s32.totalorder %s17, 1
    %p186 = por %p184, %p185
    %p187 = scmp.ne.s32.totalorder %s176, %s177
    %p188 = scmp.eq.s32.totalorder %s17, 0
    %p189 = por %p187, %p188
    %p190 = scmp.ne.s32.totalorder %s176, %s177
    %p191 = scmp.eq.s32.totalorder %s18, 1
    %p192 = por %p190, %p191
    %p194 = scmp.ne.s32.totalorder %s177, %s193
    %p195 = scmp.eq.s32.totalorder %s18, 0
    %p196 = por %p194, %p195
    %p197 = scmp.le.s32.totalorder 1, %s12
    %p198 = scmp.lt.s32.totalorder %s12, 3
    %p199 = pnand %p197, %p198
    %p200 = pneg %p199
    // Predicated region
    $region9: #{forward.3} parent=5 // pred_check
      _
    $region10: #{forward.3} parent=5 // pred_check_branch
      %202 = sbr.rel (%p199) target = $region12
    $region11: #{forward.3} parent=5 // pred_region
      %s203 = ssub.s32 %s12, 1
      // Predicated region
      $region13: #{forward.3} parent=11 // pred_check
        %p204 = pneg %p59
      $region14: #{forward.3} parent=11 // pred_check_branch
        %206 = sbr.rel (%p204) target = $region16
      $region15: #{forward.3} parent=11 // pred_region
        _
      $region16: #{forward.3} parent=11 // pred_fallthru
        _
    $region12: #{forward.3} parent=5 // pred_fallthru
      _
    %p207 = scmp.lt.s32.totalorder %s12, 2
    // Predicated region
    $region17: #{forward.3} parent=5 // pred_check
      %p208 = pneg %p207
    $region18: #{forward.3} parent=5 // pred_check_branch
      %210 = sbr.rel (%p208) target = $region20
    $region19: #{forward.3} parent=5 // pred_region
      // Predicated region
      $region21: #{forward.3} parent=19 // pred_check
        %p211 = pneg %p32
      $region22: #{forward.3} parent=19 // pred_check_branch
        %213 = sbr.rel (%p211) target = $region24
      $region23: #{forward.3} parent=19 // pred_region
        %p214 = scmp.lt.s32.totalorder %s12, 1
        %s215 = scalar_select %p214, %s12, 1
        %s216 = smul.addr %s215, 168
        %s217 = smul.addr %s216, 4
        %s218 = scalar_lea.vmem %s0, %s217
      $region24: #{forward.3} parent=19 // pred_fallthru
        _
      // Predicated region
      $region25: #{forward.3} parent=19 // pred_check
        %p219 = pneg %p79
      $region26: #{forward.3} parent=19 // pred_check_branch
        %221 = sbr.rel (%p219) target = $region28
      $region27: #{forward.3} parent=19 // pred_region
        %p222 = scmp.lt.s32.totalorder %s12, 1
        %s223 = scalar_select %p222, %s12, 1
        %s224 = smul.addr %s223, 48
        %s225 = smul.addr %s224, 4
        %s226 = scalar_lea.vmem %s2, %s225
      $region28: #{forward.3} parent=19 // pred_fallthru
        _
      // Predicated region
      $region29: #{forward.3} parent=19 // pred_check
        %p227 = pneg %p105
      $region30: #{forward.3} parent=19 // pred_check_branch
        %229 = sbr.rel (%p227) target = $region32
      $region31: #{forward.3} parent=19 // pred_region
        %p230 = scmp.lt.s32.totalorder %s12, 1
        %s231 = scalar_select %p230, %s12, 1
        %s232 = smul.addr %s231, 16
        %s233 = smul.addr %s232, 4
        %s234 = scalar_lea.vmem %s3, %s233
      $region32: #{forward.3} parent=19 // pred_fallthru
        _
      // Predicated region
      $region33: #{forward.3} parent=19 // pred_check
        %p235 = pneg %p131
      $region34: #{forward.3} parent=19 // pred_check_branch
        %237 = sbr.rel (%p235) target = $region36
      $region35: #{forward.3} parent=19 // pred_region
        %p238 = scmp.lt.s32.totalorder %s12, 1
        %s239 = scalar_select %p238, %s12, 1
        %s240 = smul.addr %s239, 16
        %s241 = smul.addr %s240, 4
        %s242 = scalar_lea.vmem %s4, %s241
      $region36: #{forward.3} parent=19 // pred_fallthru
        _
      // Predicated region
      $region37: #{forward.3} parent=19 // pred_check
        %p243 = pneg %p157
      $region38: #{forward.3} parent=19 // pred_check_branch
        %245 = sbr.rel (%p243) target = $region40
      $region39: #{forward.3} parent=19 // pred_region
        %p246 = scmp.lt.s32.totalorder %s12, 1
        %s247 = scalar_select %p246, %s12, 1
        %s248 = smul.addr %s247, 4
        %s249 = scalar_lea.vmem %s5, %s248
      $region40: #{forward.3} parent=19 // pred_fallthru
        _
    $region20: #{forward.3} parent=5 // pred_fallthru
      _
    %p250 = scmp.le.s32.totalorder 1, %s12
    %p251 = scmp.lt.s32.totalorder %s12, 3
    %p252 = pnand %p250, %p251
    %p253 = pneg %p252
    // Predicated region
    $region41: #{forward.3} parent=5 // pred_check
      _
    $region42: #{forward.3} parent=5 // pred_check_branch
      %255 = sbr.rel (%p252) target = $region44
    $region43: #{forward.3} parent=5 // pred_region
      %s256 = ssub.s32 %s12, 1
      %p257 = scmp.lt.s32.totalorder %s17, 1
      %s258 = scalar_select %p257, %s17, 1
      %s259 = smul.addr %s258, 168
      %s260 = smul.addr %s259, 4
      %s261 = scalar_lea.vmem %s0, %s260
      %p262 = pneg %p38
      %p263 = pneg %p35
      %p264 = pneg %p59
      %p265 = pneg %p56
      %p266 = scmp.lt.s32.totalorder %s17, 1
      %s267 = scalar_select %p266, %s17, 1
      %s268 = smul.addr %s267, 48
      %s269 = smul.addr %s268, 4
      %s270 = scalar_lea.vmem %s2, %s269
      %p271 = pneg %p85
      %p272 = pneg %p82
      %p273 = scmp.lt.s32.totalorder %s17, 1
      %s274 = scalar_select %p273, %s17, 1
      %s275 = smul.addr %s274, 16
      %s276 = smul.addr %s275, 4
      %s277 = scalar_lea.vmem %s3, %s276
      %p278 = pneg %p111
      %p279 = pneg %p108
      %p280 = scmp.lt.s32.totalorder %s17, 1
      %s281 = scalar_select %p280, %s17, 1
      %s282 = smul.addr %s281, 16
      %s283 = smul.addr %s282, 4
      %s284 = scalar_lea.vmem %s4, %s283
      %p285 = pneg %p137
      %p286 = pneg %p134
      %p287 = scmp.lt.s32.totalorder %s17, 1
      %s288 = scalar_select %p287, %s17, 1
      %s289 = smul.addr %s288, 4
      %s290 = scalar_lea.vmem %s5, %s289
      %p291 = pneg %p163
      %p292 = pneg %p160
      %p293 = pneg %p189
      %p294 = pneg %p186
      %p295 = scmp.lt.s32.totalorder %s17, 1
      %s296 = scalar_select %p295, %s17, 1
      %s297 = smul.addr %s296, 168
      %s298 = smul.addr %s297, 8
      %s299 = scalar_lea.vmem %s6, %s298
      %p300 = scmp.lt.s32.totalorder %s17, 1
      %s301 = scalar_select %p300, %s17, 1
      %s302 = smul.addr %s301, 168
      %s303 = smul.addr %s302, 4
      %s304 = scalar_lea.vmem %s0, %s303
      %p305 = scmp.lt.s32.totalorder %s17, 1
      %s306 = scalar_select %p305, %s17, 1
      %s307 = smul.addr %s306, 48
      %s308 = smul.addr %s307, 4
      %s309 = scalar_lea.vmem %s2, %s308
      %p310 = scmp.lt.s32.totalorder %s17, 1
      %s311 = scalar_select %p310, %s17, 1
      %s312 = smul.addr %s311, 16
      %s313 = smul.addr %s312, 4
      %s314 = scalar_lea.vmem %s3, %s313
      %p315 = scmp.lt.s32.totalorder %s17, 1
      %s316 = scalar_select %p315, %s17, 1
      %s317 = smul.addr %s316, 16
      %s318 = smul.addr %s317, 4
      %s319 = scalar_lea.vmem %s4, %s318
      %p320 = scmp.lt.s32.totalorder %s17, 1
      %s321 = scalar_select %p320, %s17, 1
      %s322 = smul.addr %s321, 4
      %s323 = scalar_lea.vmem %s5, %s322
      %p324 = scmp.lt.s32.totalorder %s17, 1
      %s325 = scalar_select %p324, %s17, 1
      %s326 = smul.addr %s325, 168
      %s327 = smul.addr %s326, 8
      %s328 = scalar_lea.vmem %s6, %s327
      %v330 = vld [vmem:[%s304] sm:$0xf]
      %v331 = vld [vmem:[%s304 + $0x4] sm:$0xf]
      %v332 = vld [vmem:[%s304 + $0x8] sm:$0xf]
      %v333 = vld [vmem:[%s304 + $0xc] sm:$0xf]
      %v334 = vld [vmem:[%s304 + $0x10] sm:$0xf]
      %v335 = vld [vmem:[%s304 + $0x14] sm:$0xf]
      %v336 = vld [vmem:[%s304 + $0x18] sm:$0xf]
      %v337 = vld [vmem:[%s304 + $0x1c] sm:$0xf]
      %v338 = vld [vmem:[%s304 + $0x20] sm:$0xf]
      %v339 = vld [vmem:[%s304 + $0x24] sm:$0xf]
      %v340 = vld [vmem:[%s304 + $0x28] sm:$0xf]
      %v341 = vld [vmem:[%s304 + $0x2c] sm:$0xf]
      %v342 = vld [vmem:[%s304 + $0x30] sm:$0xf]
      %v343 = vld [vmem:[%s304 + $0x34] sm:$0xf]
      %v344 = vld [vmem:[%s304 + $0x38] sm:$0xf]
      %v345 = vld [vmem:[%s304 + $0x3c] sm:$0xf]
      %v346 = vld [vmem:[%s304 + $0x40] sm:$0xf]
      %v347 = vld [vmem:[%s304 + $0x44] sm:$0xf]
      %v348 = vld [vmem:[%s304 + $0x48] sm:$0xf]
      %v349 = vld [vmem:[%s304 + $0x4c] sm:$0xf]
      %v350 = vld [vmem:[%s304 + $0x50] sm:$0xf]
      %v351 = vld [vmem:[%s304 + $0x54] sm:$0xf]
      %v352 = vld [vmem:[%s304 + $0x58] sm:$0xf]
      %v353 = vld [vmem:[%s304 + $0x5c] sm:$0xf]
      %v354 = vld [vmem:[%s304 + $0x60] sm:$0xf]
      %v355 = vld [vmem:[%s304 + $0x64] sm:$0xf]
      %v356 = vld [vmem:[%s304 + $0x68] sm:$0xf]
      %v357 = vld [vmem:[%s304 + $0x6c] sm:$0xf]
      %v358 = vld [vmem:[%s304 + $0x70] sm:$0xf]
      %v359 = vld [vmem:[%s304 + $0x74] sm:$0xf]
      %v360 = vld [vmem:[%s304 + $0x78] sm:$0xf]
      %v361 = vld [vmem:[%s304 + $0x7c] sm:$0xf]
      %v362 = vld [vmem:[%s304 + $0x80] sm:$0xf]
      %v363 = vld [vmem:[%s304 + $0x84] sm:$0xf]
      %v364 = vld [vmem:[%s304 + $0x88] sm:$0xf]
      %v365 = vld [vmem:[%s304 + $0x8c] sm:$0xf]
      %v366 = vld [vmem:[%s304 + $0x90] sm:$0xf]
      %v367 = vld [vmem:[%s304 + $0x94] sm:$0xf]
      %v368 = vld [vmem:[%s304 + $0x98] sm:$0xf]
      %v369 = vld [vmem:[%s304 + $0x9c] sm:$0xf]
      %v370 = vld [vmem:[%s304 + $0xa0] sm:$0xf]
      %v371 = vld [vmem:[%s304 + $0xa4] sm:$0xf]
      %v372 = vld [vmem:[%s304 + $0xa8] sm:$0xf]
      %v373 = vld [vmem:[%s304 + $0xac] sm:$0xf]
      %v374 = vld [vmem:[%s304 + $0xb0] sm:$0xf]
      %v375 = vld [vmem:[%s304 + $0xb4] sm:$0xf]
      %v376 = vld [vmem:[%s304 + $0xb8] sm:$0xf]
      %v377 = vld [vmem:[%s304 + $0xbc] sm:$0xf]
      %v378 = vld [vmem:[%s304 + $0xc0] sm:$0xf]
      %v379 = vld [vmem:[%s304 + $0xc4] sm:$0xf]
      %v380 = vld [vmem:[%s304 + $0xc8] sm:$0xf]
      %v381 = vld [vmem:[%s304 + $0xcc] sm:$0xf]
      %v382 = vld [vmem:[%s304 + $0xd0] sm:$0xf]
      %v383 = vld [vmem:[%s304 + $0xd4] sm:$0xf]
      %v384 = vld [vmem:[%s304 + $0xd8] sm:$0xf]
      %v385 = vld [vmem:[%s304 + $0xdc] sm:$0xf]
      %v386 = vld [vmem:[%s304 + $0xe0] sm:$0xf]
      %v387 = vld [vmem:[%s304 + $0xe4] sm:$0xf]
      %v388 = vld [vmem:[%s304 + $0xe8] sm:$0xf]
      %v389 = vld [vmem:[%s304 + $0xec] sm:$0xf]
      %v390 = vld [vmem:[%s304 + $0xf0] sm:$0xf]
      %v391 = vld [vmem:[%s304 + $0xf4] sm:$0xf]
      %v392 = vld [vmem:[%s304 + $0xf8] sm:$0xf]
      %v393 = vld [vmem:[%s304 + $0xfc] sm:$0xf]
      %v394 = vld [vmem:[%s304 + $0x100] sm:$0xf]
      %v395 = vld [vmem:[%s304 + $0x104] sm:$0xf]
      %v396 = vld [vmem:[%s304 + $0x108] sm:$0xf]
      %v397 = vld [vmem:[%s304 + $0x10c] sm:$0xf]
      %v398 = vld [vmem:[%s304 + $0x110] sm:$0xf]
      %v399 = vld [vmem:[%s304 + $0x114] sm:$0xf]
      %v400 = vld [vmem:[%s304 + $0x118] sm:$0xf]
      %v401 = vld [vmem:[%s304 + $0x11c] sm:$0xf]
      %v402 = vld [vmem:[%s304 + $0x120] sm:$0xf]
      %v403 = vld [vmem:[%s304 + $0x124] sm:$0xf]
      %v404 = vld [vmem:[%s304 + $0x128] sm:$0xf]
      %v405 = vld [vmem:[%s304 + $0x12c] sm:$0xf]
      %v406 = vld [vmem:[%s304 + $0x130] sm:$0xf]
      %v407 = vld [vmem:[%s304 + $0x134] sm:$0xf]
      %v408 = vld [vmem:[%s304 + $0x138] sm:$0xf]
      %v409 = vld [vmem:[%s304 + $0x13c] sm:$0xf]
      %v410 = vld [vmem:[%s304 + $0x140] sm:$0xf]
      %v411 = vld [vmem:[%s304 + $0x144] sm:$0xf]
      %v412 = vld [vmem:[%s304 + $0x148] sm:$0xf]
      %v413 = vld [vmem:[%s304 + $0x14c] sm:$0xf]
      %v414 = vld [vmem:[%s304 + $0x150] sm:$0xf]
      %v415 = vld [vmem:[%s304 + $0x154] sm:$0xf]
      %v416 = vld [vmem:[%s304 + $0x158] sm:$0xf]
      %v417 = vld [vmem:[%s304 + $0x15c] sm:$0xf]
      %v418 = vld [vmem:[%s304 + $0x160] sm:$0xf]
      %v419 = vld [vmem:[%s304 + $0x164] sm:$0xf]
      %v420 = vld [vmem:[%s304 + $0x168] sm:$0xf]
      %v421 = vld [vmem:[%s304 + $0x16c] sm:$0xf]
      %v422 = vld [vmem:[%s304 + $0x170] sm:$0xf]
      %v423 = vld [vmem:[%s304 + $0x174] sm:$0xf]
      %v424 = vld [vmem:[%s304 + $0x178] sm:$0xf]
      %v425 = vld [vmem:[%s304 + $0x17c] sm:$0xf]
      %v426 = vld [vmem:[%s304 + $0x180] sm:$0xf]
      %v427 = vld [vmem:[%s304 + $0x184] sm:$0xf]
      %v428 = vld [vmem:[%s304 + $0x188] sm:$0xf]
      %v429 = vld [vmem:[%s304 + $0x18c] sm:$0xf]
      %v430 = vld [vmem:[%s304 + $0x190] sm:$0xf]
      %v431 = vld [vmem:[%s304 + $0x194] sm:$0xf]
      %v432 = vld [vmem:[%s304 + $0x198] sm:$0xf]
      %v433 = vld [vmem:[%s304 + $0x19c] sm:$0xf]
      %v434 = vld [vmem:[%s304 + $0x1a0] sm:$0xf]
      %v435 = vld [vmem:[%s304 + $0x1a4] sm:$0xf]
      %v436 = vld [vmem:[%s304 + $0x1a8] sm:$0xf]
      %v437 = vld [vmem:[%s304 + $0x1ac] sm:$0xf]
      %v438 = vld [vmem:[%s304 + $0x1b0] sm:$0xf]
      %v439 = vld [vmem:[%s304 + $0x1b4] sm:$0xf]
      %v440 = vld [vmem:[%s304 + $0x1b8] sm:$0xf]
      %v441 = vld [vmem:[%s304 + $0x1bc] sm:$0xf]
      %v442 = vld [vmem:[%s304 + $0x1c0] sm:$0xf]
      %v443 = vld [vmem:[%s304 + $0x1c4] sm:$0xf]
      %v444 = vld [vmem:[%s304 + $0x1c8] sm:$0xf]
      %v445 = vld [vmem:[%s304 + $0x1cc] sm:$0xf]
      %v446 = vld [vmem:[%s304 + $0x1d0] sm:$0xf]
      %v447 = vld [vmem:[%s304 + $0x1d4] sm:$0xf]
      %v448 = vld [vmem:[%s304 + $0x1d8] sm:$0xf]
      %v449 = vld [vmem:[%s304 + $0x1dc] sm:$0xf]
      %v450 = vld [vmem:[%s304 + $0x1e0] sm:$0xf]
      %v451 = vld [vmem:[%s304 + $0x1e4] sm:$0xf]
      %v452 = vld [vmem:[%s304 + $0x1e8] sm:$0xf]
      %v453 = vld [vmem:[%s304 + $0x1ec] sm:$0xf]
      %v454 = vld [vmem:[%s304 + $0x1f0] sm:$0xf]
      %v455 = vld [vmem:[%s304 + $0x1f4] sm:$0xf]
      %v456 = vld [vmem:[%s304 + $0x1f8] sm:$0xf]
      %v457 = vld [vmem:[%s304 + $0x1fc] sm:$0xf]
      %v458 = vld [vmem:[%s304 + $0x200] sm:$0xf]
      %v459 = vld [vmem:[%s304 + $0x204] sm:$0xf]
      %v460 = vld [vmem:[%s304 + $0x208] sm:$0xf]
      %v461 = vld [vmem:[%s304 + $0x20c] sm:$0xf]
      %v462 = vld [vmem:[%s304 + $0x210] sm:$0xf]
      %v463 = vld [vmem:[%s304 + $0x214] sm:$0xf]
      %v464 = vld [vmem:[%s304 + $0x218] sm:$0xf]
      %v465 = vld [vmem:[%s304 + $0x21c] sm:$0xf]
      %v466 = vld [vmem:[%s304 + $0x220] sm:$0xf]
      %v467 = vld [vmem:[%s304 + $0x224] sm:$0xf]
      %v468 = vld [vmem:[%s304 + $0x228] sm:$0xf]
      %v469 = vld [vmem:[%s304 + $0x22c] sm:$0xf]
      %v470 = vld [vmem:[%s304 + $0x230] sm:$0xf]
      %v471 = vld [vmem:[%s304 + $0x234] sm:$0xf]
      %v472 = vld [vmem:[%s304 + $0x238] sm:$0xf]
      %v473 = vld [vmem:[%s304 + $0x23c] sm:$0xf]
      %v474 = vld [vmem:[%s304 + $0x240] sm:$0xf]
      %v475 = vld [vmem:[%s304 + $0x244] sm:$0xf]
      %v476 = vld [vmem:[%s304 + $0x248] sm:$0xf]
      %v477 = vld [vmem:[%s304 + $0x24c] sm:$0xf]
      %v478 = vld [vmem:[%s304 + $0x250] sm:$0xf]
      %v479 = vld [vmem:[%s304 + $0x254] sm:$0xf]
      %v480 = vld [vmem:[%s304 + $0x258] sm:$0xf]
      %v481 = vld [vmem:[%s304 + $0x25c] sm:$0xf]
      %v482 = vld [vmem:[%s304 + $0x260] sm:$0xf]
      %v483 = vld [vmem:[%s304 + $0x264] sm:$0xf]
      %v484 = vld [vmem:[%s304 + $0x268] sm:$0xf]
      %v485 = vld [vmem:[%s304 + $0x26c] sm:$0xf]
      %v486 = vld [vmem:[%s304 + $0x270] sm:$0xf]
      %v487 = vld [vmem:[%s304 + $0x274] sm:$0xf]
      %v488 = vld [vmem:[%s304 + $0x278] sm:$0xf]
      %v489 = vld [vmem:[%s304 + $0x27c] sm:$0xf]
      %v490 = vld [vmem:[%s304 + $0x280] sm:$0xf]
      %v491 = vld [vmem:[%s304 + $0x284] sm:$0xf]
      %v492 = vld [vmem:[%s304 + $0x288] sm:$0xf]
      %v493 = vld [vmem:[%s304 + $0x28c] sm:$0xf]
      %v494 = vld [vmem:[%s304 + $0x290] sm:$0xf]
      %v495 = vld [vmem:[%s304 + $0x294] sm:$0xf]
      %v496 = vld [vmem:[%s304 + $0x298] sm:$0xf]
      %v497 = vld [vmem:[%s304 + $0x29c] sm:$0xf]
      %v498 = vld [vmem:[%s1] sm:$0xf]
      %v499 = vld [vmem:[%s1 + $0x4] sm:$0xf]
      %v500 = vld [vmem:[%s1 + $0x8] sm:$0xf]
      %v501 = vld [vmem:[%s1 + $0xc] sm:$0xf]
      %v502 = vld [vmem:[%s1 + $0x10] sm:$0xf]
      %v503 = vld [vmem:[%s1 + $0x14] sm:$0xf]
      %v504 = vld [vmem:[%s1 + $0x18] sm:$0xf]
      %v505 = vld [vmem:[%s1 + $0x1c] sm:$0xf]
      %v506 = vld [vmem:[%s1 + $0x20] sm:$0xf]
      %v507 = vld [vmem:[%s1 + $0x24] sm:$0xf]
      %v508 = vld [vmem:[%s1 + $0x28] sm:$0xf]
      %v509 = vld [vmem:[%s1 + $0x2c] sm:$0xf]
      %v510 = vld [vmem:[%s1 + $0x30] sm:$0xf]
      %v511 = vld [vmem:[%s1 + $0x34] sm:$0xf]
      %v512 = vld [vmem:[%s1 + $0x38] sm:$0xf]
      %v513 = vld [vmem:[%s1 + $0x3c] sm:$0xf]
      %v682 = vunpack.c.l.b16 %v330
      %v683 = vunpack.c.l.b16 %v331
      %v684 = vunpack.c.l.b16 %v332
      %v685 = vunpack.c.l.b16 %v333
      %v686 = vunpack.c.l.b16 %v334
      %v687 = vunpack.c.l.b16 %v335
      %v688 = vunpack.c.l.b16 %v336
      %v689 = vunpack.c.l.b16 %v337
      %v690 = vunpack.c.l.b16 %v338
      %v691 = vunpack.c.l.b16 %v339
      %v692 = vunpack.c.l.b16 %v340
      %v693 = vunpack.c.l.b16 %v341
      %v694 = vunpack.c.l.b16 %v342
      %v695 = vunpack.c.l.b16 %v343
      %v696 = vunpack.c.l.b16 %v344
      %v697 = vunpack.c.l.b16 %v345
      %v698 = vunpack.c.l.b16 %v346
      %v699 = vunpack.c.l.b16 %v347
      %v700 = vunpack.c.l.b16 %v348
      %v701 = vunpack.c.l.b16 %v349
      %v702 = vunpack.c.l.b16 %v350
      %v703 = vunpack.c.l.b16 %v351
      %v704 = vunpack.c.l.b16 %v352
      %v705 = vunpack.c.l.b16 %v353
      %v706 = vunpack.c.l.b16 %v354
      %v707 = vunpack.c.l.b16 %v355
      %v708 = vunpack.c.l.b16 %v356
      %v709 = vunpack.c.l.b16 %v357
      %v710 = vunpack.c.l.b16 %v358
      %v711 = vunpack.c.l.b16 %v359
      %v712 = vunpack.c.l.b16 %v360
      %v713 = vunpack.c.l.b16 %v361
      %v714 = vunpack.c.l.b16 %v362
      %v715 = vunpack.c.l.b16 %v363
      %v716 = vunpack.c.l.b16 %v364
      %v717 = vunpack.c.l.b16 %v365
      %v718 = vunpack.c.l.b16 %v366
      %v719 = vunpack.c.l.b16 %v367
      %v720 = vunpack.c.l.b16 %v368
      %v721 = vunpack.c.l.b16 %v369
      %v722 = vunpack.c.l.b16 %v370
      %v723 = vunpack.c.l.b16 %v371
      %v724 = vunpack.c.l.b16 %v372
      %v725 = vunpack.c.l.b16 %v373
      %v726 = vunpack.c.l.b16 %v374
      %v727 = vunpack.c.l.b16 %v375
      %v728 = vunpack.c.l.b16 %v376
      %v729 = vunpack.c.l.b16 %v377
      %v730 = vunpack.c.l.b16 %v378
      %v731 = vunpack.c.l.b16 %v379
      %v732 = vunpack.c.l.b16 %v380
      %v733 = vunpack.c.l.b16 %v381
      %v734 = vunpack.c.l.b16 %v382
      %v735 = vunpack.c.l.b16 %v383
      %v736 = vunpack.c.l.b16 %v384
      %v737 = vunpack.c.l.b16 %v385
      %v738 = vunpack.c.l.b16 %v386
      %v739 = vunpack.c.l.b16 %v387
      %v740 = vunpack.c.l.b16 %v388
      %v741 = vunpack.c.l.b16 %v389
      %v742 = vunpack.c.l.b16 %v390
      %v743 = vunpack.c.l.b16 %v391
      %v744 = vunpack.c.l.b16 %v392
      %v745 = vunpack.c.l.b16 %v393
      %v746 = vunpack.c.l.b16 %v394
      %v747 = vunpack.c.l.b16 %v395
      %v748 = vunpack.c.l.b16 %v396
      %v749 = vunpack.c.l.b16 %v397
      %v750 = vunpack.c.l.b16 %v398
      %v751 = vunpack.c.l.b16 %v399
      %v752 = vunpack.c.l.b16 %v400
      %v753 = vunpack.c.l.b16 %v401
      %v754 = vunpack.c.l.b16 %v402
      %v755 = vunpack.c.l.b16 %v403
      %v756 = vunpack.c.l.b16 %v404
      %v757 = vunpack.c.l.b16 %v405
      %v758 = vunpack.c.l.b16 %v406
      %v759 = vunpack.c.l.b16 %v407
      %v760 = vunpack.c.l.b16 %v408
      %v761 = vunpack.c.l.b16 %v409
      %v762 = vunpack.c.l.b16 %v410
      %v763 = vunpack.c.l.b16 %v411
      %v764 = vunpack.c.l.b16 %v412
      %v765 = vunpack.c.l.b16 %v413
      %v766 = vunpack.c.l.b16 %v414
      %v767 = vunpack.c.l.b16 %v415
      %v768 = vunpack.c.l.b16 %v416
      %v769 = vunpack.c.l.b16 %v417
      %v770 = vunpack.c.l.b16 %v418
      %v771 = vunpack.c.l.b16 %v419
      %v772 = vunpack.c.l.b16 %v420
      %v773 = vunpack.c.l.b16 %v421
      %v774 = vunpack.c.l.b16 %v422
      %v775 = vunpack.c.l.b16 %v423
      %v776 = vunpack.c.l.b16 %v424
      %v777 = vunpack.c.l.b16 %v425
      %v778 = vunpack.c.l.b16 %v426
      %v779 = vunpack.c.l.b16 %v427
      %v780 = vunpack.c.l.b16 %v428
      %v781 = vunpack.c.l.b16 %v429
      %v782 = vunpack.c.l.b16 %v430
      %v783 = vunpack.c.l.b16 %v431
      %v784 = vunpack.c.l.b16 %v432
      %v785 = vunpack.c.l.b16 %v433
      %v786 = vunpack.c.l.b16 %v434
      %v787 = vunpack.c.l.b16 %v435
      %v788 = vunpack.c.l.b16 %v436
      %v789 = vunpack.c.l.b16 %v437
      %v790 = vunpack.c.l.b16 %v438
      %v791 = vunpack.c.l.b16 %v439
      %v792 = vunpack.c.l.b16 %v440
      %v793 = vunpack.c.l.b16 %v441
      %v794 = vunpack.c.l.b16 %v442
      %v795 = vunpack.c.l.b16 %v443
      %v796 = vunpack.c.l.b16 %v444
      %v797 = vunpack.c.l.b16 %v445
      %v798 = vunpack.c.l.b16 %v446
      %v799 = vunpack.c.l.b16 %v447
      %v800 = vunpack.c.l.b16 %v448
      %v801 = vunpack.c.l.b16 %v449
      %v802 = vunpack.c.l.b16 %v450
      %v803 = vunpack.c.l.b16 %v451
      %v804 = vunpack.c.l.b16 %v452
      %v805 = vunpack.c.l.b16 %v453
      %v806 = vunpack.c.l.b16 %v454
      %v807 = vunpack.c.l.b16 %v455
      %v808 = vunpack.c.l.b16 %v456
      %v809 = vunpack.c.l.b16 %v457
      %v810 = vunpack.c.l.b16 %v458
      %v811 = vunpack.c.l.b16 %v459
      %v812 = vunpack.c.l.b16 %v460
      %v813 = vunpack.c.l.b16 %v461
      %v814 = vunpack.c.l.b16 %v462
      %v815 = vunpack.c.l.b16 %v463
      %v816 = vunpack.c.l.b16 %v464
      %v817 = vunpack.c.l.b16 %v465
      %v818 = vunpack.c.l.b16 %v466
      %v819 = vunpack.c.l.b16 %v467
      %v820 = vunpack.c.l.b16 %v468
      %v821 = vunpack.c.l.b16 %v469
      %v822 = vunpack.c.l.b16 %v470
      %v823 = vunpack.c.l.b16 %v471
      %v824 = vunpack.c.l.b16 %v472
      %v825 = vunpack.c.l.b16 %v473
      %v826 = vunpack.c.l.b16 %v474
      %v827 = vunpack.c.l.b16 %v475
      %v828 = vunpack.c.l.b16 %v476
      %v829 = vunpack.c.l.b16 %v477
      %v830 = vunpack.c.l.b16 %v478
      %v831 = vunpack.c.l.b16 %v479
      %v832 = vunpack.c.l.b16 %v480
      %v833 = vunpack.c.l.b16 %v481
      %v834 = vunpack.c.l.b16 %v482
      %v835 = vunpack.c.l.b16 %v483
      %v836 = vunpack.c.l.b16 %v484
      %v837 = vunpack.c.l.b16 %v485
      %v838 = vunpack.c.l.b16 %v486
      %v839 = vunpack.c.l.b16 %v487
      %v840 = vunpack.c.l.b16 %v488
      %v841 = vunpack.c.l.b16 %v489
      %v842 = vunpack.c.l.b16 %v490
      %v843 = vunpack.c.l.b16 %v491
      %v844 = vunpack.c.l.b16 %v492
      %v845 = vunpack.c.l.b16 %v493
      %v846 = vunpack.c.l.b16 %v494
      %v847 = vunpack.c.l.b16 %v495
      %v848 = vunpack.c.l.b16 %v496
      %v849 = vunpack.c.l.b16 %v497
      %v850 = vpack.c.b16 %v683, %v682
      %v851 = vpack.c.b16 %v685, %v684
      %v852 = vpack.c.b16 %v687, %v686
      %v853 = vpack.c.b16 %v689, %v688
      %v854 = vpack.c.b16 %v691, %v690
      %v855 = vpack.c.b16 %v693, %v692
      %v856 = vpack.c.b16 %v695, %v694
      %v857 = vpack.c.b16 %v697, %v696
      %v858 = vpack.c.b16 %v699, %v698
      %v859 = vpack.c.b16 %v701, %v700
      %v860 = vpack.c.b16 %v703, %v702
      %v861 = vpack.c.b16 %v705, %v704
      %v862 = vpack.c.b16 %v707, %v706
      %v863 = vpack.c.b16 %v709, %v708
      %v864 = vpack.c.b16 %v711, %v710
      %v865 = vpack.c.b16 %v713, %v712
      %v866 = vpack.c.b16 %v715, %v714
      %v867 = vpack.c.b16 %v717, %v716
      %v868 = vpack.c.b16 %v719, %v718
      %v869 = vpack.c.b16 %v721, %v720
      %v870 = vpack.c.b16 %v723, %v722
      %v871 = vpack.c.b16 %v725, %v724
      %v872 = vpack.c.b16 %v727, %v726
      %v873 = vpack.c.b16 %v729, %v728
      %v874 = vpack.c.b16 %v731, %v730
      %v875 = vpack.c.b16 %v733, %v732
      %v876 = vpack.c.b16 %v735, %v734
      %v877 = vpack.c.b16 %v737, %v736
      %v878 = vpack.c.b16 %v739, %v738
      %v879 = vpack.c.b16 %v741, %v740
      %v880 = vpack.c.b16 %v743, %v742
      %v881 = vpack.c.b16 %v745, %v744
      %v882 = vpack.c.b16 %v747, %v746
      %v883 = vpack.c.b16 %v749, %v748
      %v884 = vpack.c.b16 %v751, %v750
      %v885 = vpack.c.b16 %v753, %v752
      %v886 = vpack.c.b16 %v755, %v754
      %v887 = vpack.c.b16 %v757, %v756
      %v888 = vpack.c.b16 %v759, %v758
      %v889 = vpack.c.b16 %v761, %v760
      %v890 = vpack.c.b16 %v763, %v762
      %v891 = vpack.c.b16 %v765, %v764
      %v892 = vpack.c.b16 %v767, %v766
      %v893 = vpack.c.b16 %v769, %v768
      %v894 = vpack.c.b16 %v771, %v770
      %v895 = vpack.c.b16 %v773, %v772
      %v896 = vpack.c.b16 %v775, %v774
      %v897 = vpack.c.b16 %v777, %v776
      %v898 = vpack.c.b16 %v779, %v778
      %v899 = vpack.c.b16 %v781, %v780
      %v900 = vpack.c.b16 %v783, %v782
      %v901 = vpack.c.b16 %v785, %v784
      %v902 = vpack.c.b16 %v787, %v786
      %v903 = vpack.c.b16 %v789, %v788
      %v904 = vpack.c.b16 %v791, %v790
      %v905 = vpack.c.b16 %v793, %v792
      %v906 = vpack.c.b16 %v795, %v794
      %v907 = vpack.c.b16 %v797, %v796
      %v908 = vpack.c.b16 %v799, %v798
      %v909 = vpack.c.b16 %v801, %v800
      %v910 = vpack.c.b16 %v803, %v802
      %v911 = vpack.c.b16 %v805, %v804
      %v912 = vpack.c.b16 %v807, %v806
      %v913 = vpack.c.b16 %v809, %v808
      %v914 = vpack.c.b16 %v811, %v810
      %v915 = vpack.c.b16 %v813, %v812
      %v916 = vpack.c.b16 %v815, %v814
      %v917 = vpack.c.b16 %v817, %v816
      %v918 = vpack.c.b16 %v819, %v818
      %v919 = vpack.c.b16 %v821, %v820
      %v920 = vpack.c.b16 %v823, %v822
      %v921 = vpack.c.b16 %v825, %v824
      %v922 = vpack.c.b16 %v827, %v826
      %v923 = vpack.c.b16 %v829, %v828
      %v924 = vpack.c.b16 %v831, %v830
      %v925 = vpack.c.b16 %v833, %v832
      %v926 = vpack.c.b16 %v835, %v834
      %v927 = vpack.c.b16 %v837, %v836
      %v928 = vpack.c.b16 %v839, %v838
      %v929 = vpack.c.b16 %v841, %v840
      %v930 = vpack.c.b16 %v843, %v842
      %v931 = vpack.c.b16 %v845, %v844
      %v932 = vpack.c.b16 %v847, %v846
      %v933 = vpack.c.b16 %v849, %v848
      %v1034 = vunpack.c.l.b16 %v498
      %v1035 = vunpack.c.l.b16 %v499
      %v1036 = vunpack.c.l.b16 %v500
      %v1037 = vunpack.c.l.b16 %v501
      %v1038 = vunpack.c.l.b16 %v502
      %v1039 = vunpack.c.l.b16 %v503
      %v1040 = vunpack.c.l.b16 %v504
      %v1041 = vunpack.c.l.b16 %v505
      %v1042 = vunpack.c.l.b16 %v506
      %v1043 = vunpack.c.l.b16 %v507
      %v1044 = vunpack.c.l.b16 %v508
      %v1045 = vunpack.c.l.b16 %v509
      %v1046 = vunpack.c.l.b16 %v510
      %v1047 = vunpack.c.l.b16 %v511
      %v1048 = vunpack.c.l.b16 %v512
      %v1049 = vunpack.c.l.b16 %v513
      %v1050 = vpack.c.b16 %v1035, %v1034
      %v1051 = vpack.c.b16 %v1037, %v1036
      %v1052 = vpack.c.b16 %v1039, %v1038
      %v1053 = vpack.c.b16 %v1041, %v1040
      %v1054 = vpack.c.b16 %v1043, %v1042
      %v1055 = vpack.c.b16 %v1045, %v1044
      %v1056 = vpack.c.b16 %v1047, %v1046
      %v1057 = vpack.c.b16 %v1049, %v1048
      %1066 = vmatprep.subr.bf16.mxu0 0
      %1067 = vmatpush1.bf16.msra.mxu0 %v1050
      %1068 = vmatprep.subr.bf16.mxu0 0
      %1069 = vmatpush1.bf16.msra.mxu0 %v1051
      %1070 = vmatprep.subr.bf16.mxu0 0
      %1071 = vmatpush1.bf16.msra.mxu0 %v1052
      %1072 = vmatprep.subr.bf16.mxu0 0
      %1073 = vmatpush1.bf16.msra.mxu0 %v1053
      %1074 = vmatprep.subr.bf16.mxu0 0
      %1075 = vmatpush1.bf16.msra.mxu0 %v1054
      %1076 = vmatprep.subr.bf16.mxu0 0
      %1077 = vmatpush1.bf16.msra.mxu0 %v1055
      %1078 = vmatprep.subr.bf16.mxu0 0
      %1079 = vmatpush1.bf16.msra.mxu0 %v1056
      %1080 = vmatprep.subr.bf16.mxu0 0
      %1081 = vmatpush1.bf16.msra.mxu0 %v1057
      %1082 = vmatprep.subr.bf16.mxu0 0
      %1083 = vmatpush1.bf16.msra.mxu0 0
      %1084 = vmatprep.subr.bf16.mxu0 0
      %1085 = vmatpush1.bf16.msra.mxu0 0
      %1086 = vmatprep.subr.bf16.mxu0 0
      %1087 = vmatpush1.bf16.msra.mxu0 0
      %1088 = vmatprep.subr.bf16.mxu0 0
      %1089 = vmatpush1.bf16.msra.mxu0 0
      %1090 = vmatprep.subr.bf16.mxu0 0
      %1091 = vmatpush1.bf16.msra.mxu0 0
      %1092 = vmatprep.subr.bf16.mxu0 0
      %1093 = vmatpush1.bf16.msra.mxu0 0
      %1094 = vmatprep.subr.bf16.mxu0 0
      %1095 = vmatpush1.bf16.msra.mxu0 0
      %1096 = vmatprep.subr.bf16.mxu0 0
      %1097 = vmatpush1.bf16.msra.mxu0 0
      %1098 = vmatprep.mubr.bf16.mxu0 0
      %1099 = vmatmul.mubr.bf16.gmra.mrb[0].mxu0 %v850
      %v1100 = vpop.f32.mrb[0].mxu0
      %v1101 = vadd.f32 0.0, %v1100
      %v1102 = vpop.f32.mrb[0].mxu0
      %v1103 = vpop.f32.mrb[0].mxu0
      %v1104 = vadd.f32 0.0, %v1103
      %v1105 = vpop.f32.mrb[0].mxu0
      %1106 = vmatprep.mubr.bf16.mxu0 0
      %1107 = vmatmul.mubr.bf16.gmra.mrb[0].mxu0 %v851
      %v1108 = vpop.f32.mrb[0].mxu0
      %v1109 = vadd.f32 0.0, %v1108
      %v1110 = vpop.f32.mrb[0].mxu0
      %v1111 = vpop.f32.mrb[0].mxu0
      %v1112 = vadd.f32 0.0, %v1111
      %v1113 = vpop.f32.mrb[0].mxu0
      %1114 = vmatprep.mubr.bf16.mxu0 0
      %1115 = vmatmul.mubr.bf16.gmra.mrb[0].mxu0 %v852
      %v1116 = vpop.f32.mrb[0].mxu0
      %v1117 = vadd.f32 0.0, %v1116
      %v1118 = vpop.f32.mrb[0].mxu0
      %v1119 = vpop.f32.mrb[0].mxu0
      %v1120 = vadd.f32 0.0, %v1119
      %v1121 = vpop.f32.mrb[0].mxu0
      %1122 = vmatprep.mubr.bf16.mxu0 0
      %1123 = vmatmul.mubr.bf16.gmra.mrb[0].mxu0 %v853
      %v1124 = vpop.f32.mrb[0].mxu0
      %v1125 = vadd.f32 0.0, %v1124
      %v1126 = vpop.f32.mrb[0].mxu0
      %v1127 = vpop.f32.mrb[0].mxu0
      %v1128 = vadd.f32 0.0, %v1127
      %v1129 = vpop.f32.mrb[0].mxu0
      %1130 = vmatprep.mubr.bf16.mxu0 0
      %1131 = vmatmul.mubr.bf16.gmra.mrb[0].mxu0 %v854
      %v1132 = vpop.f32.mrb[0].mxu0
      %v1133 = vadd.f32 0.0, %v1132
      %v1134 = vpop.f32.mrb[0].mxu0
      %v1135 = vpop.f32.mrb[0].mxu0
      %v1136 = vadd.f32 0.0, %v1135
      %v1137 = vpop.f32.mrb[0].mxu0
      %1138 = vmatprep.mubr.bf16.mxu0 0
      %1139 = vmatmul.mubr.bf16.gmra.mrb[0].mxu0 %v855
      %v1140 = vpop.f32.mrb[0].mxu0
      %v1141 = vadd.f32 0.0, %v1140
      %v1142 = vpop.f32.mrb[0].mxu0
      %v1143 = vpop.f32.mrb[0].mxu0
      %v1144 = vadd.f32 0.0, %v1143
      %v1145 = vpop.f32.mrb[0].mxu0
      %1146 = vmatprep.mubr.bf16.mxu0 0
      %1147 = vmatmul.mubr.bf16.gmra.mrb[0].mxu0 %v856
      %v1148 = vpop.f32.mrb[0].mxu0
      %v1149 = vadd.f32 0.0, %v1148
      %v1150 = vpop.f32.mrb[0].mxu0
      %v1151 = vpop.f32.mrb[0].mxu0
      %v1152 = vadd.f32 0.0, %v1151
      %v1153 = vpop.f32.mrb[0].mxu0
      %1154 = vmatprep.mubr.bf16.mxu0 0
      %1155 = vmatmul.mubr.bf16.gmra.mrb[0].mxu0 %v857
      %v1156 = vpop.f32.mrb[0].mxu0
      %v1157 = vadd.f32 0.0, %v1156
      %v1158 = vpop.f32.mrb[0].mxu0
      %v1159 = vpop.f32.mrb[0].mxu0
      %v1160 = vadd.f32 0.0, %v1159
      %v1161 = vpop.f32.mrb[0].mxu0
      %1162 = vmatprep.mubr.bf16.mxu0 0
      %1163 = vmatmul.mubr.bf16.gmra.mrb[0].mxu0 %v858
      %v1164 = vpop.f32.mrb[0].mxu0
      %v1165 = vadd.f32 0.0, %v1164
      %v1166 = vpop.f32.mrb[0].mxu0
      %v1167 = vpop.f32.mrb[0].mxu0
      %v1168 = vadd.f32 0.0, %v1167
      %v1169 = vpop.f32.mrb[0].mxu0
      %1170 = vmatprep.mubr.bf16.mxu0 0
      %1171 = vmatmul.mubr.bf16.gmra.mrb[0].mxu0 %v859
      %v1172 = vpop.f32.mrb[0].mxu0
      %v1173 = vadd.f32 0.0, %v1172
      %v1174 = vpop.f32.mrb[0].mxu0
      %v1175 = vpop.f32.mrb[0].mxu0
      %v1176 = vadd.f32 0.0, %v1175
      %v1177 = vpop.f32.mrb[0].mxu0
      %1178 = vmatprep.mubr.bf16.mxu0 0
      %1179 = vmatmul.mubr.bf16.gmra.mrb[0].mxu0 %v860
      %v1180 = vpop.f32.mrb[0].mxu0
      %v1181 = vadd.f32 0.0, %v1180
      %v1182 = vpop.f32.mrb[0].mxu0
      %v1183 = vpop.f32.mrb[0].mxu0
      %v1184 = vadd.f32 0.0, %v1183
      %v1185 = vpop.f32.mrb[0].mxu0
      %1186 = vmatprep.mubr.bf16.mxu0 0
      %1187 = vmatmul.mubr.bf16.gmra.mrb[0].mxu0 %v861
      %v1188 = vpop.f32.mrb[0].mxu0
      %v1189 = vadd.f32 0.0, %v1188
      %v1190 = vpop.f32.mrb[0].mxu0
      %v1191 = vpop.f32.mrb[0].mxu0
      %v1192 = vadd.f32 0.0, %v1191
      %v1193 = vpop.f32.mrb[0].mxu0
      %1194 = vmatprep.mubr.bf16.mxu0 0
      %1195 = vmatmul.mubr.bf16.gmra.mrb[0].mxu0 %v862
      %v1196 = vpop.f32.mrb[0].mxu0
      %v1197 = vadd.f32 0.0, %v1196
      %v1198 = vpop.f32.mrb[0].mxu0
      %v1199 = vpop.f32.mrb[0].mxu0
      %v1200 = vadd.f32 0.0, %v1199
      %v1201 = vpop.f32.mrb[0].mxu0
      %1202 = vmatprep.mubr.bf16.mxu0 0
      %1203 = vmatmul.mubr.bf16.gmra.mrb[0].mxu0 %v863
      %v1204 = vpop.f32.mrb[0].mxu0
      %v1205 = vadd.f32 0.0, %v1204
      %v1206 = vpop.f32.mrb[0].mxu0
      %v1207 = vpop.f32.mrb[0].mxu0
      %v1208 = vadd.f32 0.0, %v1207
      %v1209 = vpop.f32.mrb[0].mxu0
      %1210 = vmatprep.mubr.bf16.mxu0 0
      %1211 = vmatmul.mubr.bf16.gmra.mrb[0].mxu0 %v864
      %v1212 = vpop.f32.mrb[0].mxu0
      %v1213 = vadd.f32 0.0, %v1212
      %v1214 = vpop.f32.mrb[0].mxu0
      %v1215 = vpop.f32.mrb[0].mxu0
      %v1216 = vadd.f32 0.0, %v1215
      %v1217 = vpop.f32.mrb[0].mxu0
      %1218 = vmatprep.mubr.bf16.mxu0 0
      %1219 = vmatmul.mubr.bf16.gmra.mrb[0].mxu0 %v865
      %v1220 = vpop.f32.mrb[0].mxu0
      %v1221 = vadd.f32 0.0, %v1220
      %v1222 = vpop.f32.mrb[0].mxu0
      %v1223 = vpop.f32.mrb[0].mxu0
      %v1224 = vadd.f32 0.0, %v1223
      %v1225 = vpop.f32.mrb[0].mxu0
      %1226 = vmatprep.mubr.bf16.mxu0 0
      %1227 = vmatmul.mubr.bf16.gmra.mrb[0].mxu0 %v866
      %v1228 = vpop.f32.mrb[0].mxu0
      %v1229 = vadd.f32 0.0, %v1228
      %v1230 = vpop.f32.mrb[0].mxu0
      %v1231 = vpop.f32.mrb[0].mxu0
      %v1232 = vadd.f32 0.0, %v1231
      %v1233 = vpop.f32.mrb[0].mxu0
      %1234 = vmatprep.mubr.bf16.mxu0 0
      %1235 = vmatmul.mubr.bf16.gmra.mrb[0].mxu0 %v867
      %v1236 = vpop.f32.mrb[0].mxu0
      %v1237 = vadd.f32 0.0, %v1236
      %v1238 = vpop.f32.mrb[0].mxu0
      %v1239 = vpop.f32.mrb[0].mxu0
      %v1240 = vadd.f32 0.0, %v1239
      %v1241 = vpop.f32.mrb[0].mxu0
      %1242 = vmatprep.mubr.bf16.mxu0 0
      %1243 = vmatmul.mubr.bf16.gmra.mrb[0].mxu0 %v868
      %v1244 = vpop.f32.mrb[0].mxu0
      %v1245 = vadd.f32 0.0, %v1244
      %v1246 = vpop.f32.mrb[0].mxu0
      %v1247 = vpop.f32.mrb[0].mxu0
      %v1248 = vadd.f32 0.0, %v1247
      %v1249 = vpop.f32.mrb[0].mxu0
      %1250 = vmatprep.mubr.bf16.mxu0 0
      %1251 = vmatmul.mubr.bf16.gmra.mrb[0].mxu0 %v869
      %v1252 = vpop.f32.mrb[0].mxu0
      %v1253 = vadd.f32 0.0, %v1252
      %v1254 = vpop.f32.mrb[0].mxu0
      %v1255 = vpop.f32.mrb[0].mxu0
      %v1256 = vadd.f32 0.0, %v1255
      %v1257 = vpop.f32.mrb[0].mxu0
      %1258 = vmatprep.mubr.bf16.mxu0 0
      %1259 = vmatmul.mubr.bf16.gmra.mrb[0].mxu0 %v870
      %v1260 = vpop.f32.mrb[0].mxu0
      %v1261 = vadd.f32 0.0, %v1260
      %v1262 = vpop.f32.mrb[0].mxu0
      %v1263 = vpop.f32.mrb[0].mxu0
      %v1264 = vadd.f32 0.0, %v1263
      %v1265 = vpop.f32.mrb[0].mxu0
      %1266 = vmatprep.mubr.bf16.mxu0 0
      %1267 = vmatmul.mubr.bf16.gmra.mrb[0].mxu0 %v871
      %v1268 = vpop.f32.mrb[0].mxu0
      %v1269 = vadd.f32 0.0, %v1268
      %v1270 = vpop.f32.mrb[0].mxu0
      %v1271 = vpop.f32.mrb[0].mxu0
      %v1272 = vadd.f32 0.0, %v1271
      %v1273 = vpop.f32.mrb[0].mxu0
      %1274 = vmatprep.mubr.bf16.mxu0 0
      %1275 = vmatmul.mubr.bf16.gmra.mrb[0].mxu0 %v872
      %v1276 = vpop.f32.mrb[0].mxu0
      %v1277 = vadd.f32 0.0, %v1276
      %v1278 = vpop.f32.mrb[0].mxu0
      %v1279 = vpop.f32.mrb[0].mxu0
      %v1280 = vadd.f32 0.0, %v1279
      %v1281 = vpop.f32.mrb[0].mxu0
      %1282 = vmatprep.mubr.bf16.mxu0 0
      %1283 = vmatmul.mubr.bf16.gmra.mrb[0].mxu0 %v873
      %v1284 = vpop.f32.mrb[0].mxu0
      %v1285 = vadd.f32 0.0, %v1284
      %v1286 = vpop.f32.mrb[0].mxu0
      %v1287 = vpop.f32.mrb[0].mxu0
      %v1288 = vadd.f32 0.0, %v1287
      %v1289 = vpop.f32.mrb[0].mxu0
      %1290 = vmatprep.mubr.bf16.mxu0 0
      %1291 = vmatmul.mubr.bf16.gmra.mrb[0].mxu0 %v874
      %v1292 = vpop.f32.mrb[0].mxu0
      %v1293 = vadd.f32 0.0, %v1292
      %v1294 = vpop.f32.mrb[0].mxu0
      %v1295 = vpop.f32.mrb[0].mxu0
      %v1296 = vadd.f32 0.0, %v1295
      %v1297 = vpop.f32.mrb[0].mxu0
      %1298 = vmatprep.mubr.bf16.mxu0 0
      %1299 = vmatmul.mubr.bf16.gmra.mrb[0].mxu0 %v875
      %v1300 = vpop.f32.mrb[0].mxu0
      %v1301 = vadd.f32 0.0, %v1300
      %v1302 = vpop.f32.mrb[0].mxu0
      %v1303 = vpop.f32.mrb[0].mxu0
      %v1304 = vadd.f32 0.0, %v1303
      %v1305 = vpop.f32.mrb[0].mxu0
      %1306 = vmatprep.mubr.bf16.mxu0 0
      %1307 = vmatmul.mubr.bf16.gmra.mrb[0].mxu0 %v876
      %v1308 = vpop.f32.mrb[0].mxu0
      %v1309 = vadd.f32 0.0, %v1308
      %v1310 = vpop.f32.mrb[0].mxu0
      %v1311 = vpop.f32.mrb[0].mxu0
      %v1312 = vadd.f32 0.0, %v1311
      %v1313 = vpop.f32.mrb[0].mxu0
      %1314 = vmatprep.mubr.bf16.mxu0 0
      %1315 = vmatmul.mubr.bf16.gmra.mrb[0].mxu0 %v877
      %v1316 = vpop.f32.mrb[0].mxu0
      %v1317 = vadd.f32 0.0, %v1316
      %v1318 = vpop.f32.mrb[0].mxu0
      %v1319 = vpop.f32.mrb[0].mxu0
      %v1320 = vadd.f32 0.0, %v1319
      %v1321 = vpop.f32.mrb[0].mxu0
      %1322 = vmatprep.mubr.bf16.mxu0 0
      %1323 = vmatmul.mubr.bf16.gmra.mrb[0].mxu0 %v878
      %v1324 = vpop.f32.mrb[0].mxu0
      %v1325 = vadd.f32 0.0, %v1324
      %v1326 = vpop.f32.mrb[0].mxu0
      %v1327 = vpop.f32.mrb[0].mxu0
      %v1328 = vadd.f32 0.0, %v1327
      %v1329 = vpop.f32.mrb[0].mxu0
      %1330 = vmatprep.mubr.bf16.mxu0 0
      %1331 = vmatmul.mubr.bf16.gmra.mrb[0].mxu0 %v879
      %v1332 = vpop.f32.mrb[0].mxu0
      %v1333 = vadd.f32 0.0, %v1332
      %v1334 = vpop.f32.mrb[0].mxu0
      %v1335 = vpop.f32.mrb[0].mxu0
      %v1336 = vadd.f32 0.0, %v1335
      %v1337 = vpop.f32.mrb[0].mxu0
      %1338 = vmatprep.mubr.bf16.mxu0 0
      %1339 = vmatmul.mubr.bf16.gmra.mrb[0].mxu0 %v880
      %v1340 = vpop.f32.mrb[0].mxu0
      %v1341 = vadd.f32 0.0, %v1340
      %v1342 = vpop.f32.mrb[0].mxu0
      %v1343 = vpop.f32.mrb[0].mxu0
      %v1344 = vadd.f32 0.0, %v1343
      %v1345 = vpop.f32.mrb[0].mxu0
      %1346 = vmatprep.mubr.bf16.mxu0 0
      %1347 = vmatmul.mubr.bf16.gmra.mrb[0].mxu0 %v881
      %v1348 = vpop.f32.mrb[0].mxu0
      %v1349 = vadd.f32 0.0, %v1348
      %v1350 = vpop.f32.mrb[0].mxu0
      %v1351 = vpop.f32.mrb[0].mxu0
      %v1352 = vadd.f32 0.0, %v1351
      %v1353 = vpop.f32.mrb[0].mxu0
      %1354 = vmatprep.mubr.bf16.mxu0 0
      %1355 = vmatmul.mubr.bf16.gmra.mrb[0].mxu0 %v882
      %v1356 = vpop.f32.mrb[0].mxu0
      %v1357 = vadd.f32 0.0, %v1356
      %v1358 = vpop.f32.mrb[0].mxu0
      %v1359 = vpop.f32.mrb[0].mxu0
      %v1360 = vadd.f32 0.0, %v1359
      %v1361 = vpop.f32.mrb[0].mxu0
      %1362 = vmatprep.mubr.bf16.mxu0 0
      %1363 = vmatmul.mubr.bf16.gmra.mrb[0].mxu0 %v883
      %v1364 = vpop.f32.mrb[0].mxu0
      %v1365 = vadd.f32 0.0, %v1364
      %v1366 = vpop.f32.mrb[0].mxu0
      %v1367 = vpop.f32.mrb[0].mxu0
      %v1368 = vadd.f32 0.0, %v1367
      %v1369 = vpop.f32.mrb[0].mxu0
      %1370 = vmatprep.mubr.bf16.mxu0 0
      %1371 = vmatmul.mubr.bf16.gmra.mrb[0].mxu0 %v884
      %v1372 = vpop.f32.mrb[0].mxu0
      %v1373 = vadd.f32 0.0, %v1372
      %v1374 = vpop.f32.mrb[0].mxu0
      %v1375 = vpop.f32.mrb[0].mxu0
      %v1376 = vadd.f32 0.0, %v1375
      %v1377 = vpop.f32.mrb[0].mxu0
      %1378 = vmatprep.mubr.bf16.mxu0 0
      %1379 = vmatmul.mubr.bf16.gmra.mrb[0].mxu0 %v885
      %v1380 = vpop.f32.mrb[0].mxu0
      %v1381 = vadd.f32 0.0, %v1380
      %v1382 = vpop.f32.mrb[0].mxu0
      %v1383 = vpop.f32.mrb[0].mxu0
      %v1384 = vadd.f32 0.0, %v1383
      %v1385 = vpop.f32.mrb[0].mxu0
      %1386 = vmatprep.mubr.bf16.mxu0 0
      %1387 = vmatmul.mubr.bf16.gmra.mrb[0].mxu0 %v886
      %v1388 = vpop.f32.mrb[0].mxu0
      %v1389 = vadd.f32 0.0, %v1388
      %v1390 = vpop.f32.mrb[0].mxu0
      %v1391 = vpop.f32.mrb[0].mxu0
      %v1392 = vadd.f32 0.0, %v1391
      %v1393 = vpop.f32.mrb[0].mxu0
      %1394 = vmatprep.mubr.bf16.mxu0 0
      %1395 = vmatmul.mubr.bf16.gmra.mrb[0].mxu0 %v887
      %v1396 = vpop.f32.mrb[0].mxu0
      %v1397 = vadd.f32 0.0, %v1396
      %v1398 = vpop.f32.mrb[0].mxu0
      %v1399 = vpop.f32.mrb[0].mxu0
      %v1400 = vadd.f32 0.0, %v1399
      %v1401 = vpop.f32.mrb[0].mxu0
      %1402 = vmatprep.mubr.bf16.mxu0 0
      %1403 = vmatmul.mubr.bf16.gmra.mrb[0].mxu0 %v888
      %v1404 = vpop.f32.mrb[0].mxu0
      %v1405 = vadd.f32 0.0, %v1404
      %v1406 = vpop.f32.mrb[0].mxu0
      %v1407 = vpop.f32.mrb[0].mxu0
      %v1408 = vadd.f32 0.0, %v1407
      %v1409 = vpop.f32.mrb[0].mxu0
      %1410 = vmatprep.mubr.bf16.mxu0 0
      %1411 = vmatmul.mubr.bf16.gmra.mrb[0].mxu0 %v889
      %v1412 = vpop.f32.mrb[0].mxu0
      %v1413 = vadd.f32 0.0, %v1412
      %v1414 = vpop.f32.mrb[0].mxu0
      %v1415 = vpop.f32.mrb[0].mxu0
      %v1416 = vadd.f32 0.0, %v1415
      %v1417 = vpop.f32.mrb[0].mxu0
      %1418 = vmatprep.mubr.bf16.mxu0 0
      %1419 = vmatmul.mubr.bf16.gmra.mrb[0].mxu0 %v890
      %v1420 = vpop.f32.mrb[0].mxu0
      %v1421 = vadd.f32 0.0, %v1420
      %v1422 = vpop.f32.mrb[0].mxu0
      %v1423 = vpop.f32.mrb[0].mxu0
      %v1424 = vadd.f32 0.0, %v1423
      %v1425 = vpop.f32.mrb[0].mxu0
      %1426 = vmatprep.mubr.bf16.mxu0 0
      %1427 = vmatmul.mubr.bf16.gmra.mrb[0].mxu0 %v891
      %v1428 = vpop.f32.mrb[0].mxu0
      %v1429 = vadd.f32 0.0, %v1428
      %v1430 = vpop.f32.mrb[0].mxu0
      %v1431 = vpop.f32.mrb[0].mxu0
      %v1432 = vadd.f32 0.0, %v1431
      %v1433 = vpop.f32.mrb[0].mxu0
      %1434 = vmatprep.mubr.bf16.mxu0 0
      %1435 = vmatmul.mubr.bf16.gmra.mrb[0].mxu0 %v892
      %v1436 = vpop.f32.mrb[0].mxu0
      %v1437 = vadd.f32 0.0, %v1436
      %v1438 = vpop.f32.mrb[0].mxu0
      %v1439 = vpop.f32.mrb[0].mxu0
      %v1440 = vadd.f32 0.0, %v1439
      %v1441 = vpop.f32.mrb[0].mxu0
      %1442 = vmatprep.mubr.bf16.mxu0 0
      %1443 = vmatmul.mubr.bf16.gmra.mrb[0].mxu0 %v893
      %v1444 = vpop.f32.mrb[0].mxu0
      %v1445 = vadd.f32 0.0, %v1444
      %v1446 = vpop.f32.mrb[0].mxu0
      %v1447 = vpop.f32.mrb[0].mxu0
      %v1448 = vadd.f32 0.0, %v1447
      %v1449 = vpop.f32.mrb[0].mxu0
      %1450 = vmatprep.mubr.bf16.mxu0 0
      %1451 = vmatmul.mubr.bf16.gmra.mrb[0].mxu0 %v894
      %v1452 = vpop.f32.mrb[0].mxu0
      %v1453 = vadd.f32 0.0, %v1452
      %v1454 = vpop.f32.mrb[0].mxu0
      %v1455 = vpop.f32.mrb[0].mxu0
      %v1456 = vadd.f32 0.0, %v1455
      %v1457 = vpop.f32.mrb[0].mxu0
      %1458 = vmatprep.mubr.bf16.mxu0 0
      %1459 = vmatmul.mubr.bf16.gmra.mrb[0].mxu0 %v895
      %v1460 = vpop.f32.mrb[0].mxu0
      %v1461 = vadd.f32 0.0, %v1460
      %v1462 = vpop.f32.mrb[0].mxu0
      %v1463 = vpop.f32.mrb[0].mxu0
      %v1464 = vadd.f32 0.0, %v1463
      %v1465 = vpop.f32.mrb[0].mxu0
      %1466 = vmatprep.mubr.bf16.mxu0 0
      %1467 = vmatmul.mubr.bf16.gmra.mrb[0].mxu0 %v896
      %v1468 = vpop.f32.mrb[0].mxu0
      %v1469 = vadd.f32 0.0, %v1468
      %v1470 = vpop.f32.mrb[0].mxu0
      %v1471 = vpop.f32.mrb[0].mxu0
      %v1472 = vadd.f32 0.0, %v1471
      %v1473 = vpop.f32.mrb[0].mxu0
      %1474 = vmatprep.mubr.bf16.mxu0 0
      %1475 = vmatmul.mubr.bf16.gmra.mrb[0].mxu0 %v897
      %v1476 = vpop.f32.mrb[0].mxu0
      %v1477 = vadd.f32 0.0, %v1476
      %v1478 = vpop.f32.mrb[0].mxu0
      %v1479 = vpop.f32.mrb[0].mxu0
      %v1480 = vadd.f32 0.0, %v1479
      %v1481 = vpop.f32.mrb[0].mxu0
      %1482 = vmatprep.mubr.bf16.mxu0 0
      %1483 = vmatmul.mubr.bf16.gmra.mrb[0].mxu0 %v898
      %v1484 = vpop.f32.mrb[0].mxu0
      %v1485 = vadd.f32 0.0, %v1484
      %v1486 = vpop.f32.mrb[0].mxu0
      %v1487 = vpop.f32.mrb[0].mxu0
      %v1488 = vadd.f32 0.0, %v1487
      %v1489 = vpop.f32.mrb[0].mxu0
      %1490 = vmatprep.mubr.bf16.mxu0 0
      %1491 = vmatmul.mubr.bf16.gmra.mrb[0].mxu0 %v899
      %v1492 = vpop.f32.mrb[0].mxu0
      %v1493 = vadd.f32 0.0, %v1492
      %v1494 = vpop.f32.mrb[0].mxu0
      %v1495 = vpop.f32.mrb[0].mxu0
      %v1496 = vadd.f32 0.0, %v1495
      %v1497 = vpop.f32.mrb[0].mxu0
      %1498 = vmatprep.mubr.bf16.mxu0 0
      %1499 = vmatmul.mubr.bf16.gmra.mrb[0].mxu0 %v900
      %v1500 = vpop.f32.mrb[0].mxu0
      %v1501 = vadd.f32 0.0, %v1500
      %v1502 = vpop.f32.mrb[0].mxu0
      %v1503 = vpop.f32.mrb[0].mxu0
      %v1504 = vadd.f32 0.0, %v1503
      %v1505 = vpop.f32.mrb[0].mxu0
      %1506 = vmatprep.mubr.bf16.mxu0 0
      %1507 = vmatmul.mubr.bf16.gmra.mrb[0].mxu0 %v901
      %v1508 = vpop.f32.mrb[0].mxu0
      %v1509 = vadd.f32 0.0, %v1508
      %v1510 = vpop.f32.mrb[0].mxu0
      %v1511 = vpop.f32.mrb[0].mxu0
      %v1512 = vadd.f32 0.0, %v1511
      %v1513 = vpop.f32.mrb[0].mxu0
      %1514 = vmatprep.mubr.bf16.mxu0 0
      %1515 = vmatmul.mubr.bf16.gmra.mrb[0].mxu0 %v902
      %v1516 = vpop.f32.mrb[0].mxu0
      %v1517 = vadd.f32 0.0, %v1516
      %v1518 = vpop.f32.mrb[0].mxu0
      %v1519 = vpop.f32.mrb[0].mxu0
      %v1520 = vadd.f32 0.0, %v1519
      %v1521 = vpop.f32.mrb[0].mxu0
      %1522 = vmatprep.mubr.bf16.mxu0 0
      %1523 = vmatmul.mubr.bf16.gmra.mrb[0].mxu0 %v903
      %v1524 = vpop.f32.mrb[0].mxu0
      %v1525 = vadd.f32 0.0, %v1524
      %v1526 = vpop.f32.mrb[0].mxu0
      %v1527 = vpop.f32.mrb[0].mxu0
      %v1528 = vadd.f32 0.0, %v1527
      %v1529 = vpop.f32.mrb[0].mxu0
      %1530 = vmatprep.mubr.bf16.mxu0 0
      %1531 = vmatmul.mubr.bf16.gmra.mrb[0].mxu0 %v904
      %v1532 = vpop.f32.mrb[0].mxu0
      %v1533 = vadd.f32 0.0, %v1532
      %v1534 = vpop.f32.mrb[0].mxu0
      %v1535 = vpop.f32.mrb[0].mxu0
      %v1536 = vadd.f32 0.0, %v1535
      %v1537 = vpop.f32.mrb[0].mxu0
      %1538 = vmatprep.mubr.bf16.mxu0 0
      %1539 = vmatmul.mubr.bf16.gmra.mrb[0].mxu0 %v905
      %v1540 = vpop.f32.mrb[0].mxu0
      %v1541 = vadd.f32 0.0, %v1540
      %v1542 = vpop.f32.mrb[0].mxu0
      %v1543 = vpop.f32.mrb[0].mxu0
      %v1544 = vadd.f32 0.0, %v1543
      %v1545 = vpop.f32.mrb[0].mxu0
      %1546 = vmatprep.mubr.bf16.mxu0 0
      %1547 = vmatmul.mubr.bf16.gmra.mrb[0].mxu0 %v906
      %v1548 = vpop.f32.mrb[0].mxu0
      %v1549 = vadd.f32 0.0, %v1548
      %v1550 = vpop.f32.mrb[0].mxu0
      %v1551 = vpop.f32.mrb[0].mxu0
      %v1552 = vadd.f32 0.0, %v1551
      %v1553 = vpop.f32.mrb[0].mxu0
      %1554 = vmatprep.mubr.bf16.mxu0 0
      %1555 = vmatmul.mubr.bf16.gmra.mrb[0].mxu0 %v907
      %v1556 = vpop.f32.mrb[0].mxu0
      %v1557 = vadd.f32 0.0, %v1556
      %v1558 = vpop.f32.mrb[0].mxu0
      %v1559 = vpop.f32.mrb[0].mxu0
      %v1560 = vadd.f32 0.0, %v1559
      %v1561 = vpop.f32.mrb[0].mxu0
      %1562 = vmatprep.mubr.bf16.mxu0 0
      %1563 = vmatmul.mubr.bf16.gmra.mrb[0].mxu0 %v908
      %v1564 = vpop.f32.mrb[0].mxu0
      %v1565 = vadd.f32 0.0, %v1564
      %v1566 = vpop.f32.mrb[0].mxu0
      %v1567 = vpop.f32.mrb[0].mxu0
      %v1568 = vadd.f32 0.0, %v1567
      %v1569 = vpop.f32.mrb[0].mxu0
      %1570 = vmatprep.mubr.bf16.mxu0 0
      %1571 = vmatmul.mubr.bf16.gmra.mrb[0].mxu0 %v909
      %v1572 = vpop.f32.mrb[0].mxu0
      %v1573 = vadd.f32 0.0, %v1572
      %v1574 = vpop.f32.mrb[0].mxu0
      %v1575 = vpop.f32.mrb[0].mxu0
      %v1576 = vadd.f32 0.0, %v1575
      %v1577 = vpop.f32.mrb[0].mxu0
      %1578 = vmatprep.mubr.bf16.mxu0 0
      %1579 = vmatmul.mubr.bf16.gmra.mrb[0].mxu0 %v910
      %v1580 = vpop.f32.mrb[0].mxu0
      %v1581 = vadd.f32 0.0, %v1580
      %v1582 = vpop.f32.mrb[0].mxu0
      %v1583 = vpop.f32.mrb[0].mxu0
      %v1584 = vadd.f32 0.0, %v1583
      %v1585 = vpop.f32.mrb[0].mxu0
      %1586 = vmatprep.mubr.bf16.mxu0 0
      %1587 = vmatmul.mubr.bf16.gmra.mrb[0].mxu0 %v911
      %v1588 = vpop.f32.mrb[0].mxu0
      %v1589 = vadd.f32 0.0, %v1588
      %v1590 = vpop.f32.mrb[0].mxu0
      %v1591 = vpop.f32.mrb[0].mxu0
      %v1592 = vadd.f32 0.0, %v1591
      %v1593 = vpop.f32.mrb[0].mxu0
      %1594 = vmatprep.mubr.bf16.mxu0 0
      %1595 = vmatmul.mubr.bf16.gmra.mrb[0].mxu0 %v912
      %v1596 = vpop.f32.mrb[0].mxu0
      %v1597 = vadd.f32 0.0, %v1596
      %v1598 = vpop.f32.mrb[0].mxu0
      %v1599 = vpop.f32.mrb[0].mxu0
      %v1600 = vadd.f32 0.0, %v1599
      %v1601 = vpop.f32.mrb[0].mxu0
      %1602 = vmatprep.mubr.bf16.mxu0 0
      %1603 = vmatmul.mubr.bf16.gmra.mrb[0].mxu0 %v913
      %v1604 = vpop.f32.mrb[0].mxu0
      %v1605 = vadd.f32 0.0, %v1604
      %v1606 = vpop.f32.mrb[0].mxu0
      %v1607 = vpop.f32.mrb[0].mxu0
      %v1608 = vadd.f32 0.0, %v1607
      %v1609 = vpop.f32.mrb[0].mxu0
      %1610 = vmatprep.mubr.bf16.mxu0 0
      %1611 = vmatmul.mubr.bf16.gmra.mrb[0].mxu0 %v914
      %v1612 = vpop.f32.mrb[0].mxu0
      %v1613 = vadd.f32 0.0, %v1612
      %v1614 = vpop.f32.mrb[0].mxu0
      %v1615 = vpop.f32.mrb[0].mxu0
      %v1616 = vadd.f32 0.0, %v1615
      %v1617 = vpop.f32.mrb[0].mxu0
      %1618 = vmatprep.mubr.bf16.mxu0 0
      %1619 = vmatmul.mubr.bf16.gmra.mrb[0].mxu0 %v915
      %v1620 = vpop.f32.mrb[0].mxu0
      %v1621 = vadd.f32 0.0, %v1620
      %v1622 = vpop.f32.mrb[0].mxu0
      %v1623 = vpop.f32.mrb[0].mxu0
      %v1624 = vadd.f32 0.0, %v1623
      %v1625 = vpop.f32.mrb[0].mxu0
      %1626 = vmatprep.mubr.bf16.mxu0 0
      %1627 = vmatmul.mubr.bf16.gmra.mrb[0].mxu0 %v916
      %v1628 = vpop.f32.mrb[0].mxu0
      %v1629 = vadd.f32 0.0, %v1628
      %v1630 = vpop.f32.mrb[0].mxu0
      %v1631 = vpop.f32.mrb[0].mxu0
      %v1632 = vadd.f32 0.0, %v1631
      %v1633 = vpop.f32.mrb[0].mxu0
      %1634 = vmatprep.mubr.bf16.mxu0 0
      %1635 = vmatmul.mubr.bf16.gmra.mrb[0].mxu0 %v917
      %v1636 = vpop.f32.mrb[0].mxu0
      %v1637 = vadd.f32 0.0, %v1636
      %v1638 = vpop.f32.mrb[0].mxu0
      %v1639 = vpop.f32.mrb[0].mxu0
      %v1640 = vadd.f32 0.0, %v1639
      %v1641 = vpop.f32.mrb[0].mxu0
      %1642 = vmatprep.mubr.bf16.mxu0 0
      %1643 = vmatmul.mubr.bf16.gmra.mrb[0].mxu0 %v918
      %v1644 = vpop.f32.mrb[0].mxu0
      %v1645 = vadd.f32 0.0, %v1644
      %v1646 = vpop.f32.mrb[0].mxu0
      %v1647 = vpop.f32.mrb[0].mxu0
      %v1648 = vadd.f32 0.0, %v1647
      %v1649 = vpop.f32.mrb[0].mxu0
      %1650 = vmatprep.mubr.bf16.mxu0 0
      %1651 = vmatmul.mubr.bf16.gmra.mrb[0].mxu0 %v919
      %v1652 = vpop.f32.mrb[0].mxu0
      %v1653 = vadd.f32 0.0, %v1652
      %v1654 = vpop.f32.mrb[0].mxu0
      %v1655 = vpop.f32.mrb[0].mxu0
      %v1656 = vadd.f32 0.0, %v1655
      %v1657 = vpop.f32.mrb[0].mxu0
      %1658 = vmatprep.mubr.bf16.mxu0 0
      %1659 = vmatmul.mubr.bf16.gmra.mrb[0].mxu0 %v920
      %v1660 = vpop.f32.mrb[0].mxu0
      %v1661 = vadd.f32 0.0, %v1660
      %v1662 = vpop.f32.mrb[0].mxu0
      %v1663 = vpop.f32.mrb[0].mxu0
      %v1664 = vadd.f32 0.0, %v1663
      %v1665 = vpop.f32.mrb[0].mxu0
      %1666 = vmatprep.mubr.bf16.mxu0 0
      %1667 = vmatmul.mubr.bf16.gmra.mrb[0].mxu0 %v921
      %v1668 = vpop.f32.mrb[0].mxu0
      %v1669 = vadd.f32 0.0, %v1668
      %v1670 = vpop.f32.mrb[0].mxu0
      %v1671 = vpop.f32.mrb[0].mxu0
      %v1672 = vadd.f32 0.0, %v1671
      %v1673 = vpop.f32.mrb[0].mxu0
      %1674 = vmatprep.mubr.bf16.mxu0 0
      %1675 = vmatmul.mubr.bf16.gmra.mrb[0].mxu0 %v922
      %v1676 = vpop.f32.mrb[0].mxu0
      %v1677 = vadd.f32 0.0, %v1676
      %v1678 = vpop.f32.mrb[0].mxu0
      %v1679 = vpop.f32.mrb[0].mxu0
      %v1680 = vadd.f32 0.0, %v1679
      %v1681 = vpop.f32.mrb[0].mxu0
      %1682 = vmatprep.mubr.bf16.mxu0 0
      %1683 = vmatmul.mubr.bf16.gmra.mrb[0].mxu0 %v923
      %v1684 = vpop.f32.mrb[0].mxu0
      %v1685 = vadd.f32 0.0, %v1684
      %v1686 = vpop.f32.mrb[0].mxu0
      %v1687 = vpop.f32.mrb[0].mxu0
      %v1688 = vadd.f32 0.0, %v1687
      %v1689 = vpop.f32.mrb[0].mxu0
      %1690 = vmatprep.mubr.bf16.mxu0 0
      %1691 = vmatmul.mubr.bf16.gmra.mrb[0].mxu0 %v924
      %v1692 = vpop.f32.mrb[0].mxu0
      %v1693 = vadd.f32 0.0, %v1692
      %v1694 = vpop.f32.mrb[0].mxu0
      %v1695 = vpop.f32.mrb[0].mxu0
      %v1696 = vadd.f32 0.0, %v1695
      %v1697 = vpop.f32.mrb[0].mxu0
      %1698 = vmatprep.mubr.bf16.mxu0 0
      %1699 = vmatmul.mubr.bf16.gmra.mrb[0].mxu0 %v925
      %v1700 = vpop.f32.mrb[0].mxu0
      %v1701 = vadd.f32 0.0, %v1700
      %v1702 = vpop.f32.mrb[0].mxu0
      %v1703 = vpop.f32.mrb[0].mxu0
      %v1704 = vadd.f32 0.0, %v1703
      %v1705 = vpop.f32.mrb[0].mxu0
      %1706 = vmatprep.mubr.bf16.mxu0 0
      %1707 = vmatmul.mubr.bf16.gmra.mrb[0].mxu0 %v926
      %v1708 = vpop.f32.mrb[0].mxu0
      %v1709 = vadd.f32 0.0, %v1708
      %v1710 = vpop.f32.mrb[0].mxu0
      %v1711 = vpop.f32.mrb[0].mxu0
      %v1712 = vadd.f32 0.0, %v1711
      %v1713 = vpop.f32.mrb[0].mxu0
      %1714 = vmatprep.mubr.bf16.mxu0 0
      %1715 = vmatmul.mubr.bf16.gmra.mrb[0].mxu0 %v927
      %v1716 = vpop.f32.mrb[0].mxu0
      %v1717 = vadd.f32 0.0, %v1716
      %v1718 = vpop.f32.mrb[0].mxu0
      %v1719 = vpop.f32.mrb[0].mxu0
      %v1720 = vadd.f32 0.0, %v1719
      %v1721 = vpop.f32.mrb[0].mxu0
      %1722 = vmatprep.mubr.bf16.mxu0 0
      %1723 = vmatmul.mubr.bf16.gmra.mrb[0].mxu0 %v928
      %v1724 = vpop.f32.mrb[0].mxu0
      %v1725 = vadd.f32 0.0, %v1724
      %v1726 = vpop.f32.mrb[0].mxu0
      %v1727 = vpop.f32.mrb[0].mxu0
      %v1728 = vadd.f32 0.0, %v1727
      %v1729 = vpop.f32.mrb[0].mxu0
      %1730 = vmatprep.mubr.bf16.mxu0 0
      %1731 = vmatmul.mubr.bf16.gmra.mrb[0].mxu0 %v929
      %v1732 = vpop.f32.mrb[0].mxu0
      %v1733 = vadd.f32 0.0, %v1732
      %v1734 = vpop.f32.mrb[0].mxu0
      %v1735 = vpop.f32.mrb[0].mxu0
      %v1736 = vadd.f32 0.0, %v1735
      %v1737 = vpop.f32.mrb[0].mxu0
      %1738 = vmatprep.mubr.bf16.mxu0 0
      %1739 = vmatmul.mubr.bf16.gmra.mrb[0].mxu0 %v930
      %v1740 = vpop.f32.mrb[0].mxu0
      %v1741 = vadd.f32 0.0, %v1740
      %v1742 = vpop.f32.mrb[0].mxu0
      %v1743 = vpop.f32.mrb[0].mxu0
      %v1744 = vadd.f32 0.0, %v1743
      %v1745 = vpop.f32.mrb[0].mxu0
      %1746 = vmatprep.mubr.bf16.mxu0 0
      %1747 = vmatmul.mubr.bf16.gmra.mrb[0].mxu0 %v931
      %v1748 = vpop.f32.mrb[0].mxu0
      %v1749 = vadd.f32 0.0, %v1748
      %v1750 = vpop.f32.mrb[0].mxu0
      %v1751 = vpop.f32.mrb[0].mxu0
      %v1752 = vadd.f32 0.0, %v1751
      %v1753 = vpop.f32.mrb[0].mxu0
      %1754 = vmatprep.mubr.bf16.mxu0 0
      %1755 = vmatmul.mubr.bf16.gmra.mrb[0].mxu0 %v932
      %v1756 = vpop.f32.mrb[0].mxu0
      %v1757 = vadd.f32 0.0, %v1756
      %v1758 = vpop.f32.mrb[0].mxu0
      %v1759 = vpop.f32.mrb[0].mxu0
      %v1760 = vadd.f32 0.0, %v1759
      %v1761 = vpop.f32.mrb[0].mxu0
      %1762 = vmatprep.mubr.bf16.mxu0 0
      %1763 = vmatmul.mubr.bf16.gmra.mrb[0].mxu0 %v933
      %v1764 = vpop.f32.mrb[0].mxu0
      %v1765 = vadd.f32 0.0, %v1764
      %v1766 = vpop.f32.mrb[0].mxu0
      %v1767 = vpop.f32.mrb[0].mxu0
      %v1768 = vadd.f32 0.0, %v1767
      %v1769 = vpop.f32.mrb[0].mxu0
      %1770 = vdwg.mxu0
      %v1771 = vpack.c.bf16 %v1104, %v1101
      %v1772 = vpack.c.bf16 %v1112, %v1109
      %v1773 = vpack.c.bf16 %v1120, %v1117
      %v1774 = vpack.c.bf16 %v1128, %v1125
      %v1775 = vpack.c.bf16 %v1136, %v1133
      %v1776 = vpack.c.bf16 %v1144, %v1141
      %v1777 = vpack.c.bf16 %v1152, %v1149
      %v1778 = vpack.c.bf16 %v1160, %v1157
      %v1779 = vpack.c.bf16 %v1168, %v1165
      %v1780 = vpack.c.bf16 %v1176, %v1173
      %v1781 = vpack.c.bf16 %v1184, %v1181
      %v1782 = vpack.c.bf16 %v1192, %v1189
      %v1783 = vpack.c.bf16 %v1200, %v1197
      %v1784 = vpack.c.bf16 %v1208, %v1205
      %v1785 = vpack.c.bf16 %v1216, %v1213
      %v1786 = vpack.c.bf16 %v1224, %v1221
      %v1787 = vpack.c.bf16 %v1232, %v1229
      %v1788 = vpack.c.bf16 %v1240, %v1237
      %v1789 = vpack.c.bf16 %v1248, %v1245
      %v1790 = vpack.c.bf16 %v1256, %v1253
      %v1791 = vpack.c.bf16 %v1264, %v1261
      %v1792 = vpack.c.bf16 %v1272, %v1269
      %v1793 = vpack.c.bf16 %v1280, %v1277
      %v1794 = vpack.c.bf16 %v1288, %v1285
      %v1795 = vpack.c.bf16 %v1296, %v1293
      %v1796 = vpack.c.bf16 %v1304, %v1301
      %v1797 = vpack.c.bf16 %v1312, %v1309
      %v1798 = vpack.c.bf16 %v1320, %v1317
      %v1799 = vpack.c.bf16 %v1328, %v1325
      %v1800 = vpack.c.bf16 %v1336, %v1333
      %v1801 = vpack.c.bf16 %v1344, %v1341
      %v1802 = vpack.c.bf16 %v1352, %v1349
      %v1803 = vpack.c.bf16 %v1360, %v1357
      %v1804 = vpack.c.bf16 %v1368, %v1365
      %v1805 = vpack.c.bf16 %v1376, %v1373
      %v1806 = vpack.c.bf16 %v1384, %v1381
      %v1807 = vpack.c.bf16 %v1392, %v1389
      %v1808 = vpack.c.bf16 %v1400, %v1397
      %v1809 = vpack.c.bf16 %v1408, %v1405
      %v1810 = vpack.c.bf16 %v1416, %v1413
      %v1811 = vpack.c.bf16 %v1424, %v1421
      %v1812 = vpack.c.bf16 %v1432, %v1429
      %v1813 = vpack.c.bf16 %v1440, %v1437
      %v1814 = vpack.c.bf16 %v1448, %v1445
      %v1815 = vpack.c.bf16 %v1456, %v1453
      %v1816 = vpack.c.bf16 %v1464, %v1461
      %v1817 = vpack.c.bf16 %v1472, %v1469
      %v1818 = vpack.c.bf16 %v1480, %v1477
      %v1819 = vpack.c.bf16 %v1488, %v1485
      %v1820 = vpack.c.bf16 %v1496, %v1493
      %v1821 = vpack.c.bf16 %v1504, %v1501
      %v1822 = vpack.c.bf16 %v1512, %v1509
      %v1823 = vpack.c.bf16 %v1520, %v1517
      %v1824 = vpack.c.bf16 %v1528, %v1525
      %v1825 = vpack.c.bf16 %v1536, %v1533
      %v1826 = vpack.c.bf16 %v1544, %v1541
      %v1827 = vpack.c.bf16 %v1552, %v1549
      %v1828 = vpack.c.bf16 %v1560, %v1557
      %v1829 = vpack.c.bf16 %v1568, %v1565
      %v1830 = vpack.c.bf16 %v1576, %v1573
      %v1831 = vpack.c.bf16 %v1584, %v1581
      %v1832 = vpack.c.bf16 %v1592, %v1589
      %v1833 = vpack.c.bf16 %v1600, %v1597
      %v1834 = vpack.c.bf16 %v1608, %v1605
      %v1835 = vpack.c.bf16 %v1616, %v1613
      %v1836 = vpack.c.bf16 %v1624, %v1621
      %v1837 = vpack.c.bf16 %v1632, %v1629
      %v1838 = vpack.c.bf16 %v1640, %v1637
      %v1839 = vpack.c.bf16 %v1648, %v1645
      %v1840 = vpack.c.bf16 %v1656, %v1653
      %v1841 = vpack.c.bf16 %v1664, %v1661
      %v1842 = vpack.c.bf16 %v1672, %v1669
      %v1843 = vpack.c.bf16 %v1680, %v1677
      %v1844 = vpack.c.bf16 %v1688, %v1685
      %v1845 = vpack.c.bf16 %v1696, %v1693
      %v1846 = vpack.c.bf16 %v1704, %v1701
      %v1847 = vpack.c.bf16 %v1712, %v1709
      %v1848 = vpack.c.bf16 %v1720, %v1717
      %v1849 = vpack.c.bf16 %v1728, %v1725
      %v1850 = vpack.c.bf16 %v1736, %v1733
      %v1851 = vpack.c.bf16 %v1744, %v1741
      %v1852 = vpack.c.bf16 %v1752, %v1749
      %v1853 = vpack.c.bf16 %v1760, %v1757
      %v1854 = vpack.c.bf16 %v1768, %v1765
      %v1855 = vld [vmem:[%s309] sm:$0xff]
      %v1856 = vld [vmem:[%s309 + $0x8] sm:$0xf]
      %v1857 = vld [vmem:[%s309 + $0xc] sm:$0xff]
      %v1858 = vld [vmem:[%s309 + $0x14] sm:$0xf]
      %v1859 = vld [vmem:[%s309 + $0x18] sm:$0xff]
      %v1860 = vld [vmem:[%s309 + $0x20] sm:$0xf]
      %v1861 = vld [vmem:[%s309 + $0x24] sm:$0xff]
      %v1862 = vld [vmem:[%s309 + $0x2c] sm:$0xf]
      %v1863 = vld [vmem:[%s309 + $0x30] sm:$0xff]
      %v1864 = vld [vmem:[%s309 + $0x38] sm:$0xf]
      %v1865 = vld [vmem:[%s309 + $0x3c] sm:$0xff]
      %v1866 = vld [vmem:[%s309 + $0x44] sm:$0xf]
      %v1867 = vld [vmem:[%s309 + $0x48] sm:$0xff]
      %v1868 = vld [vmem:[%s309 + $0x50] sm:$0xf]
      %v1869 = vld [vmem:[%s309 + $0x54] sm:$0xff]
      %v1870 = vld [vmem:[%s309 + $0x5c] sm:$0xf]
      %v1871 = vld [vmem:[%s309 + $0x60] sm:$0xff]
      %v1872 = vld [vmem:[%s309 + $0x68] sm:$0xf]
      %v1873 = vld [vmem:[%s309 + $0x6c] sm:$0xff]
      %v1874 = vld [vmem:[%s309 + $0x74] sm:$0xf]
      %v1875 = vld [vmem:[%s309 + $0x78] sm:$0xff]
      %v1876 = vld [vmem:[%s309 + $0x80] sm:$0xf]
      %v1877 = vld [vmem:[%s309 + $0x84] sm:$0xff]
      %v1878 = vld [vmem:[%s309 + $0x8c] sm:$0xf]
      %v1879 = vld [vmem:[%s309 + $0x90] sm:$0xff]
      %v1880 = vld [vmem:[%s309 + $0x98] sm:$0xf]
      %v1881 = vld [vmem:[%s309 + $0x9c] sm:$0xff]
      %v1882 = vld [vmem:[%s309 + $0xa4] sm:$0xf]
      %v1883 = vld [vmem:[%s309 + $0xa8] sm:$0xff]
      %v1884 = vld [vmem:[%s309 + $0xb0] sm:$0xf]
      %v1885 = vld [vmem:[%s309 + $0xb4] sm:$0xff]
      %v1886 = vld [vmem:[%s309 + $0xbc] sm:$0xf]
      %v1919 = vunpack.c.l.b16 %v1855
      %v1920 = vunpack.c.h.b16 %v1855
      %v1921 = vunpack.c.l.b16 %v1856
      %v1922 = vunpack.c.l.b16 %v1857
      %v1923 = vunpack.c.h.b16 %v1857
      %v1924 = vunpack.c.l.b16 %v1858
      %v1925 = vunpack.c.l.b16 %v1859
      %v1926 = vunpack.c.h.b16 %v1859
      %v1927 = vunpack.c.l.b16 %v1860
      %v1928 = vunpack.c.l.b16 %v1861
      %v1929 = vunpack.c.h.b16 %v1861
      %v1930 = vunpack.c.l.b16 %v1862
      %v1931 = vunpack.c.l.b16 %v1863
      %v1932 = vunpack.c.h.b16 %v1863
      %v1933 = vunpack.c.l.b16 %v1864
      %v1934 = vunpack.c.l.b16 %v1865
      %v1935 = vunpack.c.h.b16 %v1865
      %v1936 = vunpack.c.l.b16 %v1866
      %v1937 = vunpack.c.l.b16 %v1867
      %v1938 = vunpack.c.h.b16 %v1867
      %v1939 = vunpack.c.l.b16 %v1868
      %v1940 = vunpack.c.l.b16 %v1869
      %v1941 = vunpack.c.h.b16 %v1869
      %v1942 = vunpack.c.l.b16 %v1870
      %v1943 = vunpack.c.l.b16 %v1871
      %v1944 = vunpack.c.h.b16 %v1871
      %v1945 = vunpack.c.l.b16 %v1872
      %v1946 = vunpack.c.l.b16 %v1873
      %v1947 = vunpack.c.h.b16 %v1873
      %v1948 = vunpack.c.l.b16 %v1874
      %v1949 = vunpack.c.l.b16 %v1875
      %v1950 = vunpack.c.h.b16 %v1875
      %v1951 = vunpack.c.l.b16 %v1876
      %v1952 = vunpack.c.l.b16 %v1877
      %v1953 = vunpack.c.h.b16 %v1877
      %v1954 = vunpack.c.l.b16 %v1878
      %v1955 = vunpack.c.l.b16 %v1879
      %v1956 = vunpack.c.h.b16 %v1879
      %v1957 = vunpack.c.l.b16 %v1880
      %v1958 = vunpack.c.l.b16 %v1881
      %v1959 = vunpack.c.h.b16 %v1881
      %v1960 = vunpack.c.l.b16 %v1882
      %v1961 = vunpack.c.l.b16 %v1883
      %v1962 = vunpack.c.h.b16 %v1883
      %v1963 = vunpack.c.l.b16 %v1884
      %v1964 = vunpack.c.l.b16 %v1885
      %v1965 = vunpack.c.h.b16 %v1885
      %v1966 = vunpack.c.l.b16 %v1886
      %v1967 = vpack.c.b16 %v1922, %v1919
      %v1968 = vpack.c.b16 %v1923, %v1920
      %v1969 = vpack.c.b16 %v1924, %v1921
      %v1970 = vpack.c.b16 %v1928, %v1925
      %v1971 = vpack.c.b16 %v1929, %v1926
      %v1972 = vpack.c.b16 %v1930, %v1927
      %v1973 = vpack.c.b16 %v1934, %v1931
      %v1974 = vpack.c.b16 %v1935, %v1932
      %v1975 = vpack.c.b16 %v1936, %v1933
      %v1976 = vpack.c.b16 %v1940, %v1937
      %v1977 = vpack.c.b16 %v1941, %v1938
      %v1978 = vpack.c.b16 %v1942, %v1939
      %v1979 = vpack.c.b16 %v1946, %v1943
      %v1980 = vpack.c.b16 %v1947, %v1944
      %v1981 = vpack.c.b16 %v1948, %v1945
      %v1982 = vpack.c.b16 %v1952, %v1949
      %v1983 = vpack.c.b16 %v1953, %v1950
      %v1984 = vpack.c.b16 %v1954, %v1951
      %v1985 = vpack.c.b16 %v1958, %v1955
      %v1986 = vpack.c.b16 %v1959, %v1956
      %v1987 = vpack.c.b16 %v1960, %v1957
      %v1988 = vpack.c.b16 %v1964, %v1961
      %v1989 = vpack.c.b16 %v1965, %v1962
      %v1990 = vpack.c.b16 %v1966, %v1963
      %2015 = vmatprep.subr.bf16.mxu0 %v1968
      %2016 = vmatpush1.bf16.msra.mxu0 %v1967
      %2017 = vmatprep.subr.bf16.mxu0 %v1971
      %2018 = vmatpush1.bf16.msra.mxu0 %v1970
      %2019 = vmatprep.subr.bf16.mxu0 %v1974
      %2020 = vmatpush1.bf16.msra.mxu0 %v1973
      %2021 = vmatprep.subr.bf16.mxu0 %v1977
      %2022 = vmatpush1.bf16.msra.mxu0 %v1976
      %2023 = vmatprep.subr.bf16.mxu0 %v1980
      %2024 = vmatpush1.bf16.msra.mxu0 %v1979
      %2025 = vmatprep.subr.bf16.mxu0 %v1983
      %2026 = vmatpush1.bf16.msra.mxu0 %v1982
      %2027 = vmatprep.subr.bf16.mxu0 %v1986
      %2028 = vmatpush1.bf16.msra.mxu0 %v1985
      %2029 = vmatprep.subr.bf16.mxu0 %v1989
      %2030 = vmatpush1.bf16.msra.mxu0 %v1988
      %2031 = vmatprep.subr.bf16.mxu0 0
      %2032 = vmatpush1.bf16.msra.mxu0 0
      %2033 = vmatprep.subr.bf16.mxu0 0
      %2034 = vmatpush1.bf16.msra.mxu0 0
      %2035 = vmatprep.subr.bf16.mxu0 0
      %2036 = vmatpush1.bf16.msra.mxu0 0
      %2037 = vmatprep.subr.bf16.mxu0 0
      %2038 = vmatpush1.bf16.msra.mxu0 0
      %2039 = vmatprep.subr.bf16.mxu0 0
      %2040 = vmatpush1.bf16.msra.mxu0 0
      %2041 = vmatprep.subr.bf16.mxu0 0
      %2042 = vmatpush1.bf16.msra.mxu0 0
      %2043 = vmatprep.subr.bf16.mxu0 0
      %2044 = vmatpush1.bf16.msra.mxu0 0
      %2045 = vmatprep.subr.bf16.mxu0 0
      %2046 = vmatpush1.bf16.msra.mxu0 0
      %2047 = vmatprep.mubr.bf16.mxu0 0
      %2048 = vmatmul.mubr.bf16.gmra.mrb[0].mxu0 %v1771
      %v2049 = vpop.f32.mrb[0].mxu0
      %v2050 = vadd.f32 0.0, %v2049
      %v2051 = vpop.f32.mrb[0].mxu0
      %v2052 = vadd.f32 0.0, %v2051
      %v2053 = vpop.f32.mrb[0].mxu0
      %v2054 = vadd.f32 0.0, %v2053
      %v2055 = vpop.f32.mrb[0].mxu0
      %v2056 = vadd.f32 0.0, %v2055
      %2057 = vmatprep.mubr.bf16.mxu0 0
      %2058 = vmatmul.mubr.bf16.gmra.mrb[0].mxu0 %v1772
      %v2059 = vpop.f32.mrb[0].mxu0
      %v2060 = vadd.f32 0.0, %v2059
      %v2061 = vpop.f32.mrb[0].mxu0
      %v2062 = vadd.f32 0.0, %v2061
      %v2063 = vpop.f32.mrb[0].mxu0
      %v2064 = vadd.f32 0.0, %v2063
      %v2065 = vpop.f32.mrb[0].mxu0
      %v2066 = vadd.f32 0.0, %v2065
      %2067 = vmatprep.mubr.bf16.mxu0 0
      %2068 = vmatmul.mubr.bf16.gmra.mrb[0].mxu0 %v1773
      %v2069 = vpop.f32.mrb[0].mxu0
      %v2070 = vadd.f32 0.0, %v2069
      %v2071 = vpop.f32.mrb[0].mxu0
      %v2072 = vadd.f32 0.0, %v2071
      %v2073 = vpop.f32.mrb[0].mxu0
      %v2074 = vadd.f32 0.0, %v2073
      %v2075 = vpop.f32.mrb[0].mxu0
      %v2076 = vadd.f32 0.0, %v2075
      %2077 = vmatprep.mubr.bf16.mxu0 0
      %2078 = vmatmul.mubr.bf16.gmra.mrb[0].mxu0 %v1774
      %v2079 = vpop.f32.mrb[0].mxu0
      %v2080 = vadd.f32 0.0, %v2079
      %v2081 = vpop.f32.mrb[0].mxu0
      %v2082 = vadd.f32 0.0, %v2081
      %v2083 = vpop.f32.mrb[0].mxu0
      %v2084 = vadd.f32 0.0, %v2083
      %v2085 = vpop.f32.mrb[0].mxu0
      %v2086 = vadd.f32 0.0, %v2085
      %2087 = vmatprep.mubr.bf16.mxu0 0
      %2088 = vmatmul.mubr.bf16.gmra.mrb[0].mxu0 %v1775
      %v2089 = vpop.f32.mrb[0].mxu0
      %v2090 = vadd.f32 0.0, %v2089
      %v2091 = vpop.f32.mrb[0].mxu0
      %v2092 = vadd.f32 0.0, %v2091
      %v2093 = vpop.f32.mrb[0].mxu0
      %v2094 = vadd.f32 0.0, %v2093
      %v2095 = vpop.f32.mrb[0].mxu0
      %v2096 = vadd.f32 0.0, %v2095
      %2097 = vmatprep.mubr.bf16.mxu0 0
      %2098 = vmatmul.mubr.bf16.gmra.mrb[0].mxu0 %v1776
      %v2099 = vpop.f32.mrb[0].mxu0
      %v2100 = vadd.f32 0.0, %v2099
      %v2101 = vpop.f32.mrb[0].mxu0
      %v2102 = vadd.f32 0.0, %v2101
      %v2103 = vpop.f32.mrb[0].mxu0
      %v2104 = vadd.f32 0.0, %v2103
      %v2105 = vpop.f32.mrb[0].mxu0
      %v2106 = vadd.f32 0.0, %v2105
      %2107 = vmatprep.mubr.bf16.mxu0 0
      %2108 = vmatmul.mubr.bf16.gmra.mrb[0].mxu0 %v1777
      %v2109 = vpop.f32.mrb[0].mxu0
      %v2110 = vadd.f32 0.0, %v2109
      %v2111 = vpop.f32.mrb[0].mxu0
      %v2112 = vadd.f32 0.0, %v2111
      %v2113 = vpop.f32.mrb[0].mxu0
      %v2114 = vadd.f32 0.0, %v2113
      %v2115 = vpop.f32.mrb[0].mxu0
      %v2116 = vadd.f32 0.0, %v2115
      %2117 = vmatprep.mubr.bf16.mxu0 0
      %2118 = vmatmul.mubr.bf16.gmra.mrb[0].mxu0 %v1778
      %v2119 = vpop.f32.mrb[0].mxu0
      %v2120 = vadd.f32 0.0, %v2119
      %v2121 = vpop.f32.mrb[0].mxu0
      %v2122 = vadd.f32 0.0, %v2121
      %v2123 = vpop.f32.mrb[0].mxu0
      %v2124 = vadd.f32 0.0, %v2123
      %v2125 = vpop.f32.mrb[0].mxu0
      %v2126 = vadd.f32 0.0, %v2125
      %2127 = vmatprep.mubr.bf16.mxu0 0
      %2128 = vmatmul.mubr.bf16.gmra.mrb[0].mxu0 %v1779
      %v2129 = vpop.f32.mrb[0].mxu0
      %v2130 = vadd.f32 0.0, %v2129
      %v2131 = vpop.f32.mrb[0].mxu0
      %v2132 = vadd.f32 0.0, %v2131
      %v2133 = vpop.f32.mrb[0].mxu0
      %v2134 = vadd.f32 0.0, %v2133
      %v2135 = vpop.f32.mrb[0].mxu0
      %v2136 = vadd.f32 0.0, %v2135
      %2137 = vmatprep.mubr.bf16.mxu0 0
      %2138 = vmatmul.mubr.bf16.gmra.mrb[0].mxu0 %v1780
      %v2139 = vpop.f32.mrb[0].mxu0
      %v2140 = vadd.f32 0.0, %v2139
      %v2141 = vpop.f32.mrb[0].mxu0
      %v2142 = vadd.f32 0.0, %v2141
      %v2143 = vpop.f32.mrb[0].mxu0
      %v2144 = vadd.f32 0.0, %v2143
      %v2145 = vpop.f32.mrb[0].mxu0
      %v2146 = vadd.f32 0.0, %v2145
      %2147 = vmatprep.mubr.bf16.mxu0 0
      %2148 = vmatmul.mubr.bf16.gmra.mrb[0].mxu0 %v1781
      %v2149 = vpop.f32.mrb[0].mxu0
      %v2150 = vadd.f32 0.0, %v2149
      %v2151 = vpop.f32.mrb[0].mxu0
      %v2152 = vadd.f32 0.0, %v2151
      %v2153 = vpop.f32.mrb[0].mxu0
      %v2154 = vadd.f32 0.0, %v2153
      %v2155 = vpop.f32.mrb[0].mxu0
      %v2156 = vadd.f32 0.0, %v2155
      %2157 = vmatprep.mubr.bf16.mxu0 0
      %2158 = vmatmul.mubr.bf16.gmra.mrb[0].mxu0 %v1782
      %v2159 = vpop.f32.mrb[0].mxu0
      %v2160 = vadd.f32 0.0, %v2159
      %v2161 = vpop.f32.mrb[0].mxu0
      %v2162 = vadd.f32 0.0, %v2161
      %v2163 = vpop.f32.mrb[0].mxu0
      %v2164 = vadd.f32 0.0, %v2163
      %v2165 = vpop.f32.mrb[0].mxu0
      %v2166 = vadd.f32 0.0, %v2165
      %2167 = vmatprep.mubr.bf16.mxu0 0
      %2168 = vmatmul.mubr.bf16.gmra.mrb[0].mxu0 %v1783
      %v2169 = vpop.f32.mrb[0].mxu0
      %v2170 = vadd.f32 0.0, %v2169
      %v2171 = vpop.f32.mrb[0].mxu0
      %v2172 = vadd.f32 0.0, %v2171
      %v2173 = vpop.f32.mrb[0].mxu0
      %v2174 = vadd.f32 0.0, %v2173
      %v2175 = vpop.f32.mrb[0].mxu0
      %v2176 = vadd.f32 0.0, %v2175
      %2177 = vmatprep.mubr.bf16.mxu0 0
      %2178 = vmatmul.mubr.bf16.gmra.mrb[0].mxu0 %v1784
      %v2179 = vpop.f32.mrb[0].mxu0
      %v2180 = vadd.f32 0.0, %v2179
      %v2181 = vpop.f32.mrb[0].mxu0
      %v2182 = vadd.f32 0.0, %v2181
      %v2183 = vpop.f32.mrb[0].mxu0
      %v2184 = vadd.f32 0.0, %v2183
      %v2185 = vpop.f32.mrb[0].mxu0
      %v2186 = vadd.f32 0.0, %v2185
      %2187 = vmatprep.mubr.bf16.mxu0 0
      %2188 = vmatmul.mubr.bf16.gmra.mrb[0].mxu0 %v1785
      %v2189 = vpop.f32.mrb[0].mxu0
      %v2190 = vadd.f32 0.0, %v2189
      %v2191 = vpop.f32.mrb[0].mxu0
      %v2192 = vadd.f32 0.0, %v2191
      %v2193 = vpop.f32.mrb[0].mxu0
      %v2194 = vadd.f32 0.0, %v2193
      %v2195 = vpop.f32.mrb[0].mxu0
      %v2196 = vadd.f32 0.0, %v2195
      %2197 = vmatprep.mubr.bf16.mxu0 0
      %2198 = vmatmul.mubr.bf16.gmra.mrb[0].mxu0 %v1786
      %v2199 = vpop.f32.mrb[0].mxu0
      %v2200 = vadd.f32 0.0, %v2199
      %v2201 = vpop.f32.mrb[0].mxu0
      %v2202 = vadd.f32 0.0, %v2201
      %v2203 = vpop.f32.mrb[0].mxu0
      %v2204 = vadd.f32 0.0, %v2203
      %v2205 = vpop.f32.mrb[0].mxu0
      %v2206 = vadd.f32 0.0, %v2205
      %2207 = vmatprep.mubr.bf16.mxu0 0
      %2208 = vmatmul.mubr.bf16.gmra.mrb[0].mxu0 %v1787
      %v2209 = vpop.f32.mrb[0].mxu0
      %v2210 = vadd.f32 0.0, %v2209
      %v2211 = vpop.f32.mrb[0].mxu0
      %v2212 = vadd.f32 0.0, %v2211
      %v2213 = vpop.f32.mrb[0].mxu0
      %v2214 = vadd.f32 0.0, %v2213
      %v2215 = vpop.f32.mrb[0].mxu0
      %v2216 = vadd.f32 0.0, %v2215
      %2217 = vmatprep.mubr.bf16.mxu0 0
      %2218 = vmatmul.mubr.bf16.gmra.mrb[0].mxu0 %v1788
      %v2219 = vpop.f32.mrb[0].mxu0
      %v2220 = vadd.f32 0.0, %v2219
      %v2221 = vpop.f32.mrb[0].mxu0
      %v2222 = vadd.f32 0.0, %v2221
      %v2223 = vpop.f32.mrb[0].mxu0
      %v2224 = vadd.f32 0.0, %v2223
      %v2225 = vpop.f32.mrb[0].mxu0
      %v2226 = vadd.f32 0.0, %v2225
      %2227 = vmatprep.mubr.bf16.mxu0 0
      %2228 = vmatmul.mubr.bf16.gmra.mrb[0].mxu0 %v1789
      %v2229 = vpop.f32.mrb[0].mxu0
      %v2230 = vadd.f32 0.0, %v2229
      %v2231 = vpop.f32.mrb[0].mxu0
      %v2232 = vadd.f32 0.0, %v2231
      %v2233 = vpop.f32.mrb[0].mxu0
      %v2234 = vadd.f32 0.0, %v2233
      %v2235 = vpop.f32.mrb[0].mxu0
      %v2236 = vadd.f32 0.0, %v2235
      %2237 = vmatprep.mubr.bf16.mxu0 0
      %2238 = vmatmul.mubr.bf16.gmra.mrb[0].mxu0 %v1790
      %v2239 = vpop.f32.mrb[0].mxu0
      %v2240 = vadd.f32 0.0, %v2239
      %v2241 = vpop.f32.mrb[0].mxu0
      %v2242 = vadd.f32 0.0, %v2241
      %v2243 = vpop.f32.mrb[0].mxu0
      %v2244 = vadd.f32 0.0, %v2243
      %v2245 = vpop.f32.mrb[0].mxu0
      %v2246 = vadd.f32 0.0, %v2245
      %2247 = vmatprep.mubr.bf16.mxu0 0
      %2248 = vmatmul.mubr.bf16.gmra.mrb[0].mxu0 %v1791
      %v2249 = vpop.f32.mrb[0].mxu0
      %v2250 = vadd.f32 0.0, %v2249
      %v2251 = vpop.f32.mrb[0].mxu0
      %v2252 = vadd.f32 0.0, %v2251
      %v2253 = vpop.f32.mrb[0].mxu0
      %v2254 = vadd.f32 0.0, %v2253
      %v2255 = vpop.f32.mrb[0].mxu0
      %v2256 = vadd.f32 0.0, %v2255
      %2257 = vmatprep.mubr.bf16.mxu0 0
      %2258 = vmatmul.mubr.bf16.gmra.mrb[0].mxu0 %v1792
      %v2259 = vpop.f32.mrb[0].mxu0
      %v2260 = vadd.f32 0.0, %v2259
      %v2261 = vpop.f32.mrb[0].mxu0
      %v2262 = vadd.f32 0.0, %v2261
      %v2263 = vpop.f32.mrb[0].mxu0
      %v2264 = vadd.f32 0.0, %v2263
      %v2265 = vpop.f32.mrb[0].mxu0
      %v2266 = vadd.f32 0.0, %v2265
      %2267 = vmatprep.mubr.bf16.mxu0 0
      %2268 = vmatmul.mubr.bf16.gmra.mrb[0].mxu0 %v1793
      %v2269 = vpop.f32.mrb[0].mxu0
      %v2270 = vadd.f32 0.0, %v2269
      %v2271 = vpop.f32.mrb[0].mxu0
      %v2272 = vadd.f32 0.0, %v2271
      %v2273 = vpop.f32.mrb[0].mxu0
      %v2274 = vadd.f32 0.0, %v2273
      %v2275 = vpop.f32.mrb[0].mxu0
      %v2276 = vadd.f32 0.0, %v2275
      %2277 = vmatprep.mubr.bf16.mxu0 0
      %2278 = vmatmul.mubr.bf16.gmra.mrb[0].mxu0 %v1794
      %v2279 = vpop.f32.mrb[0].mxu0
      %v2280 = vadd.f32 0.0, %v2279
      %v2281 = vpop.f32.mrb[0].mxu0
      %v2282 = vadd.f32 0.0, %v2281
      %v2283 = vpop.f32.mrb[0].mxu0
      %v2284 = vadd.f32 0.0, %v2283
      %v2285 = vpop.f32.mrb[0].mxu0
      %v2286 = vadd.f32 0.0, %v2285
      %2287 = vmatprep.mubr.bf16.mxu0 0
      %2288 = vmatmul.mubr.bf16.gmra.mrb[0].mxu0 %v1795
      %v2289 = vpop.f32.mrb[0].mxu0
      %v2290 = vadd.f32 0.0, %v2289
      %v2291 = vpop.f32.mrb[0].mxu0
      %v2292 = vadd.f32 0.0, %v2291
      %v2293 = vpop.f32.mrb[0].mxu0
      %v2294 = vadd.f32 0.0, %v2293
      %v2295 = vpop.f32.mrb[0].mxu0
      %v2296 = vadd.f32 0.0, %v2295
      %2297 = vmatprep.mubr.bf16.mxu0 0
      %2298 = vmatmul.mubr.bf16.gmra.mrb[0].mxu0 %v1796
      %v2299 = vpop.f32.mrb[0].mxu0
      %v2300 = vadd.f32 0.0, %v2299
      %v2301 = vpop.f32.mrb[0].mxu0
      %v2302 = vadd.f32 0.0, %v2301
      %v2303 = vpop.f32.mrb[0].mxu0
      %v2304 = vadd.f32 0.0, %v2303
      %v2305 = vpop.f32.mrb[0].mxu0
      %v2306 = vadd.f32 0.0, %v2305
      %2307 = vmatprep.mubr.bf16.mxu0 0
      %2308 = vmatmul.mubr.bf16.gmra.mrb[0].mxu0 %v1797
      %v2309 = vpop.f32.mrb[0].mxu0
      %v2310 = vadd.f32 0.0, %v2309
      %v2311 = vpop.f32.mrb[0].mxu0
      %v2312 = vadd.f32 0.0, %v2311
      %v2313 = vpop.f32.mrb[0].mxu0
      %v2314 = vadd.f32 0.0, %v2313
      %v2315 = vpop.f32.mrb[0].mxu0
      %v2316 = vadd.f32 0.0, %v2315
      %2317 = vmatprep.mubr.bf16.mxu0 0
      %2318 = vmatmul.mubr.bf16.gmra.mrb[0].mxu0 %v1798
      %v2319 = vpop.f32.mrb[0].mxu0
      %v2320 = vadd.f32 0.0, %v2319
      %v2321 = vpop.f32.mrb[0].mxu0
      %v2322 = vadd.f32 0.0, %v2321
      %v2323 = vpop.f32.mrb[0].mxu0
      %v2324 = vadd.f32 0.0, %v2323
      %v2325 = vpop.f32.mrb[0].mxu0
      %v2326 = vadd.f32 0.0, %v2325
      %2327 = vmatprep.mubr.bf16.mxu0 0
      %2328 = vmatmul.mubr.bf16.gmra.mrb[0].mxu0 %v1799
      %v2329 = vpop.f32.mrb[0].mxu0
      %v2330 = vadd.f32 0.0, %v2329
      %v2331 = vpop.f32.mrb[0].mxu0
      %v2332 = vadd.f32 0.0, %v2331
      %v2333 = vpop.f32.mrb[0].mxu0
      %v2334 = vadd.f32 0.0, %v2333
      %v2335 = vpop.f32.mrb[0].mxu0
      %v2336 = vadd.f32 0.0, %v2335
      %2337 = vmatprep.mubr.bf16.mxu0 0
      %2338 = vmatmul.mubr.bf16.gmra.mrb[0].mxu0 %v1800
      %v2339 = vpop.f32.mrb[0].mxu0
      %v2340 = vadd.f32 0.0, %v2339
      %v2341 = vpop.f32.mrb[0].mxu0
      %v2342 = vadd.f32 0.0, %v2341
      %v2343 = vpop.f32.mrb[0].mxu0
      %v2344 = vadd.f32 0.0, %v2343
      %v2345 = vpop.f32.mrb[0].mxu0
      %v2346 = vadd.f32 0.0, %v2345
      %2347 = vmatprep.mubr.bf16.mxu0 0
      %2348 = vmatmul.mubr.bf16.gmra.mrb[0].mxu0 %v1801
      %v2349 = vpop.f32.mrb[0].mxu0
      %v2350 = vadd.f32 0.0, %v2349
      %v2351 = vpop.f32.mrb[0].mxu0
      %v2352 = vadd.f32 0.0, %v2351
      %v2353 = vpop.f32.mrb[0].mxu0
      %v2354 = vadd.f32 0.0, %v2353
      %v2355 = vpop.f32.mrb[0].mxu0
      %v2356 = vadd.f32 0.0, %v2355
      %2357 = vmatprep.mubr.bf16.mxu0 0
      %2358 = vmatmul.mubr.bf16.gmra.mrb[0].mxu0 %v1802
      %v2359 = vpop.f32.mrb[0].mxu0
      %v2360 = vadd.f32 0.0, %v2359
      %v2361 = vpop.f32.mrb[0].mxu0
      %v2362 = vadd.f32 0.0, %v2361
      %v2363 = vpop.f32.mrb[0].mxu0
      %v2364 = vadd.f32 0.0, %v2363
      %v2365 = vpop.f32.mrb[0].mxu0
      %v2366 = vadd.f32 0.0, %v2365
      %2367 = vmatprep.mubr.bf16.mxu0 0
      %2368 = vmatmul.mubr.bf16.gmra.mrb[0].mxu0 %v1803
      %v2369 = vpop.f32.mrb[0].mxu0
      %v2370 = vadd.f32 0.0, %v2369
      %v2371 = vpop.f32.mrb[0].mxu0
      %v2372 = vadd.f32 0.0, %v2371
      %v2373 = vpop.f32.mrb[0].mxu0
      %v2374 = vadd.f32 0.0, %v2373
      %v2375 = vpop.f32.mrb[0].mxu0
      %v2376 = vadd.f32 0.0, %v2375
      %2377 = vmatprep.mubr.bf16.mxu0 0
      %2378 = vmatmul.mubr.bf16.gmra.mrb[0].mxu0 %v1804
      %v2379 = vpop.f32.mrb[0].mxu0
      %v2380 = vadd.f32 0.0, %v2379
      %v2381 = vpop.f32.mrb[0].mxu0
      %v2382 = vadd.f32 0.0, %v2381
      %v2383 = vpop.f32.mrb[0].mxu0
      %v2384 = vadd.f32 0.0, %v2383
      %v2385 = vpop.f32.mrb[0].mxu0
      %v2386 = vadd.f32 0.0, %v2385
      %2387 = vmatprep.mubr.bf16.mxu0 0
      %2388 = vmatmul.mubr.bf16.gmra.mrb[0].mxu0 %v1805
      %v2389 = vpop.f32.mrb[0].mxu0
      %v2390 = vadd.f32 0.0, %v2389
      %v2391 = vpop.f32.mrb[0].mxu0
      %v2392 = vadd.f32 0.0, %v2391
      %v2393 = vpop.f32.mrb[0].mxu0
      %v2394 = vadd.f32 0.0, %v2393
      %v2395 = vpop.f32.mrb[0].mxu0
      %v2396 = vadd.f32 0.0, %v2395
      %2397 = vmatprep.mubr.bf16.mxu0 0
      %2398 = vmatmul.mubr.bf16.gmra.mrb[0].mxu0 %v1806
      %v2399 = vpop.f32.mrb[0].mxu0
      %v2400 = vadd.f32 0.0, %v2399
      %v2401 = vpop.f32.mrb[0].mxu0
      %v2402 = vadd.f32 0.0, %v2401
      %v2403 = vpop.f32.mrb[0].mxu0
      %v2404 = vadd.f32 0.0, %v2403
      %v2405 = vpop.f32.mrb[0].mxu0
      %v2406 = vadd.f32 0.0, %v2405
      %2407 = vmatprep.mubr.bf16.mxu0 0
      %2408 = vmatmul.mubr.bf16.gmra.mrb[0].mxu0 %v1807
      %v2409 = vpop.f32.mrb[0].mxu0
      %v2410 = vadd.f32 0.0, %v2409
      %v2411 = vpop.f32.mrb[0].mxu0
      %v2412 = vadd.f32 0.0, %v2411
      %v2413 = vpop.f32.mrb[0].mxu0
      %v2414 = vadd.f32 0.0, %v2413
      %v2415 = vpop.f32.mrb[0].mxu0
      %v2416 = vadd.f32 0.0, %v2415
      %2417 = vmatprep.mubr.bf16.mxu0 0
      %2418 = vmatmul.mubr.bf16.gmra.mrb[0].mxu0 %v1808
      %v2419 = vpop.f32.mrb[0].mxu0
      %v2420 = vadd.f32 0.0, %v2419
      %v2421 = vpop.f32.mrb[0].mxu0
      %v2422 = vadd.f32 0.0, %v2421
      %v2423 = vpop.f32.mrb[0].mxu0
      %v2424 = vadd.f32 0.0, %v2423
      %v2425 = vpop.f32.mrb[0].mxu0
      %v2426 = vadd.f32 0.0, %v2425
      %2427 = vmatprep.mubr.bf16.mxu0 0
      %2428 = vmatmul.mubr.bf16.gmra.mrb[0].mxu0 %v1809
      %v2429 = vpop.f32.mrb[0].mxu0
      %v2430 = vadd.f32 0.0, %v2429
      %v2431 = vpop.f32.mrb[0].mxu0
      %v2432 = vadd.f32 0.0, %v2431
      %v2433 = vpop.f32.mrb[0].mxu0
      %v2434 = vadd.f32 0.0, %v2433
      %v2435 = vpop.f32.mrb[0].mxu0
      %v2436 = vadd.f32 0.0, %v2435
      %2437 = vmatprep.mubr.bf16.mxu0 0
      %2438 = vmatmul.mubr.bf16.gmra.mrb[0].mxu0 %v1810
      %v2439 = vpop.f32.mrb[0].mxu0
      %v2440 = vadd.f32 0.0, %v2439
      %v2441 = vpop.f32.mrb[0].mxu0
      %v2442 = vadd.f32 0.0, %v2441
      %v2443 = vpop.f32.mrb[0].mxu0
      %v2444 = vadd.f32 0.0, %v2443
      %v2445 = vpop.f32.mrb[0].mxu0
      %v2446 = vadd.f32 0.0, %v2445
      %2447 = vmatprep.mubr.bf16.mxu0 0
      %2448 = vmatmul.mubr.bf16.gmra.mrb[0].mxu0 %v1811
      %v2449 = vpop.f32.mrb[0].mxu0
      %v2450 = vadd.f32 0.0, %v2449
      %v2451 = vpop.f32.mrb[0].mxu0
      %v2452 = vadd.f32 0.0, %v2451
      %v2453 = vpop.f32.mrb[0].mxu0
      %v2454 = vadd.f32 0.0, %v2453
      %v2455 = vpop.f32.mrb[0].mxu0
      %v2456 = vadd.f32 0.0, %v2455
      %2457 = vmatprep.mubr.bf16.mxu0 0
      %2458 = vmatmul.mubr.bf16.gmra.mrb[0].mxu0 %v1812
      %v2459 = vpop.f32.mrb[0].mxu0
      %v2460 = vadd.f32 0.0, %v2459
      %v2461 = vpop.f32.mrb[0].mxu0
      %v2462 = vadd.f32 0.0, %v2461
      %v2463 = vpop.f32.mrb[0].mxu0
      %v2464 = vadd.f32 0.0, %v2463
      %v2465 = vpop.f32.mrb[0].mxu0
      %v2466 = vadd.f32 0.0, %v2465
      %2467 = vmatprep.mubr.bf16.mxu0 0
      %2468 = vmatmul.mubr.bf16.gmra.mrb[0].mxu0 %v1813
      %v2469 = vpop.f32.mrb[0].mxu0
      %v2470 = vadd.f32 0.0, %v2469
      %v2471 = vpop.f32.mrb[0].mxu0
      %v2472 = vadd.f32 0.0, %v2471
      %v2473 = vpop.f32.mrb[0].mxu0
      %v2474 = vadd.f32 0.0, %v2473
      %v2475 = vpop.f32.mrb[0].mxu0
      %v2476 = vadd.f32 0.0, %v2475
      %2477 = vmatprep.mubr.bf16.mxu0 0
      %2478 = vmatmul.mubr.bf16.gmra.mrb[0].mxu0 %v1814
      %v2479 = vpop.f32.mrb[0].mxu0
      %v2480 = vadd.f32 0.0, %v2479
      %v2481 = vpop.f32.mrb[0].mxu0
      %v2482 = vadd.f32 0.0, %v2481
      %v2483 = vpop.f32.mrb[0].mxu0
      %v2484 = vadd.f32 0.0, %v2483
      %v2485 = vpop.f32.mrb[0].mxu0
      %v2486 = vadd.f32 0.0, %v2485
      %2487 = vmatprep.mubr.bf16.mxu0 0
      %2488 = vmatmul.mubr.bf16.gmra.mrb[0].mxu0 %v1815
      %v2489 = vpop.f32.mrb[0].mxu0
      %v2490 = vadd.f32 0.0, %v2489
      %v2491 = vpop.f32.mrb[0].mxu0
      %v2492 = vadd.f32 0.0, %v2491
      %v2493 = vpop.f32.mrb[0].mxu0
      %v2494 = vadd.f32 0.0, %v2493
      %v2495 = vpop.f32.mrb[0].mxu0
      %v2496 = vadd.f32 0.0, %v2495
      %2497 = vmatprep.mubr.bf16.mxu0 0
      %2498 = vmatmul.mubr.bf16.gmra.mrb[0].mxu0 %v1816
      %v2499 = vpop.f32.mrb[0].mxu0
      %v2500 = vadd.f32 0.0, %v2499
      %v2501 = vpop.f32.mrb[0].mxu0
      %v2502 = vadd.f32 0.0, %v2501
      %v2503 = vpop.f32.mrb[0].mxu0
      %v2504 = vadd.f32 0.0, %v2503
      %v2505 = vpop.f32.mrb[0].mxu0
      %v2506 = vadd.f32 0.0, %v2505
      %2507 = vmatprep.mubr.bf16.mxu0 0
      %2508 = vmatmul.mubr.bf16.gmra.mrb[0].mxu0 %v1817
      %v2509 = vpop.f32.mrb[0].mxu0
      %v2510 = vadd.f32 0.0, %v2509
      %v2511 = vpop.f32.mrb[0].mxu0
      %v2512 = vadd.f32 0.0, %v2511
      %v2513 = vpop.f32.mrb[0].mxu0
      %v2514 = vadd.f32 0.0, %v2513
      %v2515 = vpop.f32.mrb[0].mxu0
      %v2516 = vadd.f32 0.0, %v2515
      %2517 = vmatprep.mubr.bf16.mxu0 0
      %2518 = vmatmul.mubr.bf16.gmra.mrb[0].mxu0 %v1818
      %v2519 = vpop.f32.mrb[0].mxu0
      %v2520 = vadd.f32 0.0, %v2519
      %v2521 = vpop.f32.mrb[0].mxu0
      %v2522 = vadd.f32 0.0, %v2521
      %v2523 = vpop.f32.mrb[0].mxu0
      %v2524 = vadd.f32 0.0, %v2523
      %v2525 = vpop.f32.mrb[0].mxu0
      %v2526 = vadd.f32 0.0, %v2525
      %2527 = vmatprep.mubr.bf16.mxu0 0
      %2528 = vmatmul.mubr.bf16.gmra.mrb[0].mxu0 %v1819
      %v2529 = vpop.f32.mrb[0].mxu0
      %v2530 = vadd.f32 0.0, %v2529
      %v2531 = vpop.f32.mrb[0].mxu0
      %v2532 = vadd.f32 0.0, %v2531
      %v2533 = vpop.f32.mrb[0].mxu0
      %v2534 = vadd.f32 0.0, %v2533
      %v2535 = vpop.f32.mrb[0].mxu0
      %v2536 = vadd.f32 0.0, %v2535
      %2537 = vmatprep.mubr.bf16.mxu0 0
      %2538 = vmatmul.mubr.bf16.gmra.mrb[0].mxu0 %v1820
      %v2539 = vpop.f32.mrb[0].mxu0
      %v2540 = vadd.f32 0.0, %v2539
      %v2541 = vpop.f32.mrb[0].mxu0
      %v2542 = vadd.f32 0.0, %v2541
      %v2543 = vpop.f32.mrb[0].mxu0
      %v2544 = vadd.f32 0.0, %v2543
      %v2545 = vpop.f32.mrb[0].mxu0
      %v2546 = vadd.f32 0.0, %v2545
      %2547 = vmatprep.mubr.bf16.mxu0 0
      %2548 = vmatmul.mubr.bf16.gmra.mrb[0].mxu0 %v1821
      %v2549 = vpop.f32.mrb[0].mxu0
      %v2550 = vadd.f32 0.0, %v2549
      %v2551 = vpop.f32.mrb[0].mxu0
      %v2552 = vadd.f32 0.0, %v2551
      %v2553 = vpop.f32.mrb[0].mxu0
      %v2554 = vadd.f32 0.0, %v2553
      %v2555 = vpop.f32.mrb[0].mxu0
      %v2556 = vadd.f32 0.0, %v2555
      %2557 = vmatprep.mubr.bf16.mxu0 0
      %2558 = vmatmul.mubr.bf16.gmra.mrb[0].mxu0 %v1822
      %v2559 = vpop.f32.mrb[0].mxu0
      %v2560 = vadd.f32 0.0, %v2559
      %v2561 = vpop.f32.mrb[0].mxu0
      %v2562 = vadd.f32 0.0, %v2561
      %v2563 = vpop.f32.mrb[0].mxu0
      %v2564 = vadd.f32 0.0, %v2563
      %v2565 = vpop.f32.mrb[0].mxu0
      %v2566 = vadd.f32 0.0, %v2565
      %2567 = vmatprep.mubr.bf16.mxu0 0
      %2568 = vmatmul.mubr.bf16.gmra.mrb[0].mxu0 %v1823
      %v2569 = vpop.f32.mrb[0].mxu0
      %v2570 = vadd.f32 0.0, %v2569
      %v2571 = vpop.f32.mrb[0].mxu0
      %v2572 = vadd.f32 0.0, %v2571
      %v2573 = vpop.f32.mrb[0].mxu0
      %v2574 = vadd.f32 0.0, %v2573
      %v2575 = vpop.f32.mrb[0].mxu0
      %v2576 = vadd.f32 0.0, %v2575
      %2577 = vmatprep.mubr.bf16.mxu0 0
      %2578 = vmatmul.mubr.bf16.gmra.mrb[0].mxu0 %v1824
      %v2579 = vpop.f32.mrb[0].mxu0
      %v2580 = vadd.f32 0.0, %v2579
      %v2581 = vpop.f32.mrb[0].mxu0
      %v2582 = vadd.f32 0.0, %v2581
      %v2583 = vpop.f32.mrb[0].mxu0
      %v2584 = vadd.f32 0.0, %v2583
      %v2585 = vpop.f32.mrb[0].mxu0
      %v2586 = vadd.f32 0.0, %v2585
      %2587 = vmatprep.mubr.bf16.mxu0 0
      %2588 = vmatmul.mubr.bf16.gmra.mrb[0].mxu0 %v1825
      %v2589 = vpop.f32.mrb[0].mxu0
      %v2590 = vadd.f32 0.0, %v2589
      %v2591 = vpop.f32.mrb[0].mxu0
      %v2592 = vadd.f32 0.0, %v2591
      %v2593 = vpop.f32.mrb[0].mxu0
      %v2594 = vadd.f32 0.0, %v2593
      %v2595 = vpop.f32.mrb[0].mxu0
      %v2596 = vadd.f32 0.0, %v2595
      %2597 = vmatprep.mubr.bf16.mxu0 0
      %2598 = vmatmul.mubr.bf16.gmra.mrb[0].mxu0 %v1826
      %v2599 = vpop.f32.mrb[0].mxu0
      %v2600 = vadd.f32 0.0, %v2599
      %v2601 = vpop.f32.mrb[0].mxu0
      %v2602 = vadd.f32 0.0, %v2601
      %v2603 = vpop.f32.mrb[0].mxu0
      %v2604 = vadd.f32 0.0, %v2603
      %v2605 = vpop.f32.mrb[0].mxu0
      %v2606 = vadd.f32 0.0, %v2605
      %2607 = vmatprep.mubr.bf16.mxu0 0
      %2608 = vmatmul.mubr.bf16.gmra.mrb[0].mxu0 %v1827
      %v2609 = vpop.f32.mrb[0].mxu0
      %v2610 = vadd.f32 0.0, %v2609
      %v2611 = vpop.f32.mrb[0].mxu0
      %v2612 = vadd.f32 0.0, %v2611
      %v2613 = vpop.f32.mrb[0].mxu0
      %v2614 = vadd.f32 0.0, %v2613
      %v2615 = vpop.f32.mrb[0].mxu0
      %v2616 = vadd.f32 0.0, %v2615
      %2617 = vmatprep.mubr.bf16.mxu0 0
      %2618 = vmatmul.mubr.bf16.gmra.mrb[0].mxu0 %v1828
      %v2619 = vpop.f32.mrb[0].mxu0
      %v2620 = vadd.f32 0.0, %v2619
      %v2621 = vpop.f32.mrb[0].mxu0
      %v2622 = vadd.f32 0.0, %v2621
      %v2623 = vpop.f32.mrb[0].mxu0
      %v2624 = vadd.f32 0.0, %v2623
      %v2625 = vpop.f32.mrb[0].mxu0
      %v2626 = vadd.f32 0.0, %v2625
      %2627 = vmatprep.mubr.bf16.mxu0 0
      %2628 = vmatmul.mubr.bf16.gmra.mrb[0].mxu0 %v1829
      %v2629 = vpop.f32.mrb[0].mxu0
      %v2630 = vadd.f32 0.0, %v2629
      %v2631 = vpop.f32.mrb[0].mxu0
      %v2632 = vadd.f32 0.0, %v2631
      %v2633 = vpop.f32.mrb[0].mxu0
      %v2634 = vadd.f32 0.0, %v2633
      %v2635 = vpop.f32.mrb[0].mxu0
      %v2636 = vadd.f32 0.0, %v2635
      %2637 = vmatprep.mubr.bf16.mxu0 0
      %2638 = vmatmul.mubr.bf16.gmra.mrb[0].mxu0 %v1830
      %v2639 = vpop.f32.mrb[0].mxu0
      %v2640 = vadd.f32 0.0, %v2639
      %v2641 = vpop.f32.mrb[0].mxu0
      %v2642 = vadd.f32 0.0, %v2641
      %v2643 = vpop.f32.mrb[0].mxu0
      %v2644 = vadd.f32 0.0, %v2643
      %v2645 = vpop.f32.mrb[0].mxu0
      %v2646 = vadd.f32 0.0, %v2645
      %2647 = vmatprep.mubr.bf16.mxu0 0
      %2648 = vmatmul.mubr.bf16.gmra.mrb[0].mxu0 %v1831
      %v2649 = vpop.f32.mrb[0].mxu0
      %v2650 = vadd.f32 0.0, %v2649
      %v2651 = vpop.f32.mrb[0].mxu0
      %v2652 = vadd.f32 0.0, %v2651
      %v2653 = vpop.f32.mrb[0].mxu0
      %v2654 = vadd.f32 0.0, %v2653
      %v2655 = vpop.f32.mrb[0].mxu0
      %v2656 = vadd.f32 0.0, %v2655
      %2657 = vmatprep.mubr.bf16.mxu0 0
      %2658 = vmatmul.mubr.bf16.gmra.mrb[0].mxu0 %v1832
      %v2659 = vpop.f32.mrb[0].mxu0
      %v2660 = vadd.f32 0.0, %v2659
      %v2661 = vpop.f32.mrb[0].mxu0
      %v2662 = vadd.f32 0.0, %v2661
      %v2663 = vpop.f32.mrb[0].mxu0
      %v2664 = vadd.f32 0.0, %v2663
      %v2665 = vpop.f32.mrb[0].mxu0
      %v2666 = vadd.f32 0.0, %v2665
      %2667 = vmatprep.mubr.bf16.mxu0 0
      %2668 = vmatmul.mubr.bf16.gmra.mrb[0].mxu0 %v1833
      %v2669 = vpop.f32.mrb[0].mxu0
      %v2670 = vadd.f32 0.0, %v2669
      %v2671 = vpop.f32.mrb[0].mxu0
      %v2672 = vadd.f32 0.0, %v2671
      %v2673 = vpop.f32.mrb[0].mxu0
      %v2674 = vadd.f32 0.0, %v2673
      %v2675 = vpop.f32.mrb[0].mxu0
      %v2676 = vadd.f32 0.0, %v2675
      %2677 = vmatprep.mubr.bf16.mxu0 0
      %2678 = vmatmul.mubr.bf16.gmra.mrb[0].mxu0 %v1834
      %v2679 = vpop.f32.mrb[0].mxu0
      %v2680 = vadd.f32 0.0, %v2679
      %v2681 = vpop.f32.mrb[0].mxu0
      %v2682 = vadd.f32 0.0, %v2681
      %v2683 = vpop.f32.mrb[0].mxu0
      %v2684 = vadd.f32 0.0, %v2683
      %v2685 = vpop.f32.mrb[0].mxu0
      %v2686 = vadd.f32 0.0, %v2685
      %2687 = vmatprep.mubr.bf16.mxu0 0
      %2688 = vmatmul.mubr.bf16.gmra.mrb[0].mxu0 %v1835
      %v2689 = vpop.f32.mrb[0].mxu0
      %v2690 = vadd.f32 0.0, %v2689
      %v2691 = vpop.f32.mrb[0].mxu0
      %v2692 = vadd.f32 0.0, %v2691
      %v2693 = vpop.f32.mrb[0].mxu0
      %v2694 = vadd.f32 0.0, %v2693
      %v2695 = vpop.f32.mrb[0].mxu0
      %v2696 = vadd.f32 0.0, %v2695
      %2697 = vmatprep.mubr.bf16.mxu0 0
      %2698 = vmatmul.mubr.bf16.gmra.mrb[0].mxu0 %v1836
      %v2699 = vpop.f32.mrb[0].mxu0
      %v2700 = vadd.f32 0.0, %v2699
      %v2701 = vpop.f32.mrb[0].mxu0
      %v2702 = vadd.f32 0.0, %v2701
      %v2703 = vpop.f32.mrb[0].mxu0
      %v2704 = vadd.f32 0.0, %v2703
      %v2705 = vpop.f32.mrb[0].mxu0
      %v2706 = vadd.f32 0.0, %v2705
      %2707 = vmatprep.mubr.bf16.mxu0 0
      %2708 = vmatmul.mubr.bf16.gmra.mrb[0].mxu0 %v1837
      %v2709 = vpop.f32.mrb[0].mxu0
      %v2710 = vadd.f32 0.0, %v2709
      %v2711 = vpop.f32.mrb[0].mxu0
      %v2712 = vadd.f32 0.0, %v2711
      %v2713 = vpop.f32.mrb[0].mxu0
      %v2714 = vadd.f32 0.0, %v2713
      %v2715 = vpop.f32.mrb[0].mxu0
      %v2716 = vadd.f32 0.0, %v2715
      %2717 = vmatprep.mubr.bf16.mxu0 0
      %2718 = vmatmul.mubr.bf16.gmra.mrb[0].mxu0 %v1838
      %v2719 = vpop.f32.mrb[0].mxu0
      %v2720 = vadd.f32 0.0, %v2719
      %v2721 = vpop.f32.mrb[0].mxu0
      %v2722 = vadd.f32 0.0, %v2721
      %v2723 = vpop.f32.mrb[0].mxu0
      %v2724 = vadd.f32 0.0, %v2723
      %v2725 = vpop.f32.mrb[0].mxu0
      %v2726 = vadd.f32 0.0, %v2725
      %2727 = vmatprep.mubr.bf16.mxu0 0
      %2728 = vmatmul.mubr.bf16.gmra.mrb[0].mxu0 %v1839
      %v2729 = vpop.f32.mrb[0].mxu0
      %v2730 = vadd.f32 0.0, %v2729
      %v2731 = vpop.f32.mrb[0].mxu0
      %v2732 = vadd.f32 0.0, %v2731
      %v2733 = vpop.f32.mrb[0].mxu0
      %v2734 = vadd.f32 0.0, %v2733
      %v2735 = vpop.f32.mrb[0].mxu0
      %v2736 = vadd.f32 0.0, %v2735
      %2737 = vmatprep.mubr.bf16.mxu0 0
      %2738 = vmatmul.mubr.bf16.gmra.mrb[0].mxu0 %v1840
      %v2739 = vpop.f32.mrb[0].mxu0
      %v2740 = vadd.f32 0.0, %v2739
      %v2741 = vpop.f32.mrb[0].mxu0
      %v2742 = vadd.f32 0.0, %v2741
      %v2743 = vpop.f32.mrb[0].mxu0
      %v2744 = vadd.f32 0.0, %v2743
      %v2745 = vpop.f32.mrb[0].mxu0
      %v2746 = vadd.f32 0.0, %v2745
      %2747 = vmatprep.mubr.bf16.mxu0 0
      %2748 = vmatmul.mubr.bf16.gmra.mrb[0].mxu0 %v1841
      %v2749 = vpop.f32.mrb[0].mxu0
      %v2750 = vadd.f32 0.0, %v2749
      %v2751 = vpop.f32.mrb[0].mxu0
      %v2752 = vadd.f32 0.0, %v2751
      %v2753 = vpop.f32.mrb[0].mxu0
      %v2754 = vadd.f32 0.0, %v2753
      %v2755 = vpop.f32.mrb[0].mxu0
      %v2756 = vadd.f32 0.0, %v2755
      %2757 = vmatprep.mubr.bf16.mxu0 0
      %2758 = vmatmul.mubr.bf16.gmra.mrb[0].mxu0 %v1842
      %v2759 = vpop.f32.mrb[0].mxu0
      %v2760 = vadd.f32 0.0, %v2759
      %v2761 = vpop.f32.mrb[0].mxu0
      %v2762 = vadd.f32 0.0, %v2761
      %v2763 = vpop.f32.mrb[0].mxu0
      %v2764 = vadd.f32 0.0, %v2763
      %v2765 = vpop.f32.mrb[0].mxu0
      %v2766 = vadd.f32 0.0, %v2765
      %2767 = vmatprep.mubr.bf16.mxu0 0
      %2768 = vmatmul.mubr.bf16.gmra.mrb[0].mxu0 %v1843
      %v2769 = vpop.f32.mrb[0].mxu0
      %v2770 = vadd.f32 0.0, %v2769
      %v2771 = vpop.f32.mrb[0].mxu0
      %v2772 = vadd.f32 0.0, %v2771
      %v2773 = vpop.f32.mrb[0].mxu0
      %v2774 = vadd.f32 0.0, %v2773
      %v2775 = vpop.f32.mrb[0].mxu0
      %v2776 = vadd.f32 0.0, %v2775
      %2777 = vmatprep.mubr.bf16.mxu0 0
      %2778 = vmatmul.mubr.bf16.gmra.mrb[0].mxu0 %v1844
      %v2779 = vpop.f32.mrb[0].mxu0
      %v2780 = vadd.f32 0.0, %v2779
      %v2781 = vpop.f32.mrb[0].mxu0
      %v2782 = vadd.f32 0.0, %v2781
      %v2783 = vpop.f32.mrb[0].mxu0
      %v2784 = vadd.f32 0.0, %v2783
      %v2785 = vpop.f32.mrb[0].mxu0
      %v2786 = vadd.f32 0.0, %v2785
      %2787 = vmatprep.mubr.bf16.mxu0 0
      %2788 = vmatmul.mubr.bf16.gmra.mrb[0].mxu0 %v1845
      %v2789 = vpop.f32.mrb[0].mxu0
      %v2790 = vadd.f32 0.0, %v2789
      %v2791 = vpop.f32.mrb[0].mxu0
      %v2792 = vadd.f32 0.0, %v2791
      %v2793 = vpop.f32.mrb[0].mxu0
      %v2794 = vadd.f32 0.0, %v2793
      %v2795 = vpop.f32.mrb[0].mxu0
      %v2796 = vadd.f32 0.0, %v2795
      %2797 = vmatprep.mubr.bf16.mxu0 0
      %2798 = vmatmul.mubr.bf16.gmra.mrb[0].mxu0 %v1846
      %v2799 = vpop.f32.mrb[0].mxu0
      %v2800 = vadd.f32 0.0, %v2799
      %v2801 = vpop.f32.mrb[0].mxu0
      %v2802 = vadd.f32 0.0, %v2801
      %v2803 = vpop.f32.mrb[0].mxu0
      %v2804 = vadd.f32 0.0, %v2803
      %v2805 = vpop.f32.mrb[0].mxu0
      %v2806 = vadd.f32 0.0, %v2805
      %2807 = vmatprep.mubr.bf16.mxu0 0
      %2808 = vmatmul.mubr.bf16.gmra.mrb[0].mxu0 %v1847
      %v2809 = vpop.f32.mrb[0].mxu0
      %v2810 = vadd.f32 0.0, %v2809
      %v2811 = vpop.f32.mrb[0].mxu0
      %v2812 = vadd.f32 0.0, %v2811
      %v2813 = vpop.f32.mrb[0].mxu0
      %v2814 = vadd.f32 0.0, %v2813
      %v2815 = vpop.f32.mrb[0].mxu0
      %v2816 = vadd.f32 0.0, %v2815
      %2817 = vmatprep.mubr.bf16.mxu0 0
      %2818 = vmatmul.mubr.bf16.gmra.mrb[0].mxu0 %v1848
      %v2819 = vpop.f32.mrb[0].mxu0
      %v2820 = vadd.f32 0.0, %v2819
      %v2821 = vpop.f32.mrb[0].mxu0
      %v2822 = vadd.f32 0.0, %v2821
      %v2823 = vpop.f32.mrb[0].mxu0
      %v2824 = vadd.f32 0.0, %v2823
      %v2825 = vpop.f32.mrb[0].mxu0
      %v2826 = vadd.f32 0.0, %v2825
      %2827 = vmatprep.mubr.bf16.mxu0 0
      %2828 = vmatmul.mubr.bf16.gmra.mrb[0].mxu0 %v1849
      %v2829 = vpop.f32.mrb[0].mxu0
      %v2830 = vadd.f32 0.0, %v2829
      %v2831 = vpop.f32.mrb[0].mxu0
      %v2832 = vadd.f32 0.0, %v2831
      %v2833 = vpop.f32.mrb[0].mxu0
      %v2834 = vadd.f32 0.0, %v2833
      %v2835 = vpop.f32.mrb[0].mxu0
      %v2836 = vadd.f32 0.0, %v2835
      %2837 = vmatprep.mubr.bf16.mxu0 0
      %2838 = vmatmul.mubr.bf16.gmra.mrb[0].mxu0 %v1850
      %v2839 = vpop.f32.mrb[0].mxu0
      %v2840 = vadd.f32 0.0, %v2839
      %v2841 = vpop.f32.mrb[0].mxu0
      %v2842 = vadd.f32 0.0, %v2841
      %v2843 = vpop.f32.mrb[0].mxu0
      %v2844 = vadd.f32 0.0, %v2843
      %v2845 = vpop.f32.mrb[0].mxu0
      %v2846 = vadd.f32 0.0, %v2845
      %2847 = vmatprep.mubr.bf16.mxu0 0
      %2848 = vmatmul.mubr.bf16.gmra.mrb[0].mxu0 %v1851
      %v2849 = vpop.f32.mrb[0].mxu0
      %v2850 = vadd.f32 0.0, %v2849
      %v2851 = vpop.f32.mrb[0].mxu0
      %v2852 = vadd.f32 0.0, %v2851
      %v2853 = vpop.f32.mrb[0].mxu0
      %v2854 = vadd.f32 0.0, %v2853
      %v2855 = vpop.f32.mrb[0].mxu0
      %v2856 = vadd.f32 0.0, %v2855
      %2857 = vmatprep.mubr.bf16.mxu0 0
      %2858 = vmatmul.mubr.bf16.gmra.mrb[0].mxu0 %v1852
      %v2859 = vpop.f32.mrb[0].mxu0
      %v2860 = vadd.f32 0.0, %v2859
      %v2861 = vpop.f32.mrb[0].mxu0
      %v2862 = vadd.f32 0.0, %v2861
      %v2863 = vpop.f32.mrb[0].mxu0
      %v2864 = vadd.f32 0.0, %v2863
      %v2865 = vpop.f32.mrb[0].mxu0
      %v2866 = vadd.f32 0.0, %v2865
      %2867 = vmatprep.mubr.bf16.mxu0 0
      %2868 = vmatmul.mubr.bf16.gmra.mrb[0].mxu0 %v1853
      %v2869 = vpop.f32.mrb[0].mxu0
      %v2870 = vadd.f32 0.0, %v2869
      %v2871 = vpop.f32.mrb[0].mxu0
      %v2872 = vadd.f32 0.0, %v2871
      %v2873 = vpop.f32.mrb[0].mxu0
      %v2874 = vadd.f32 0.0, %v2873
      %v2875 = vpop.f32.mrb[0].mxu0
      %v2876 = vadd.f32 0.0, %v2875
      %2877 = vmatprep.mubr.bf16.mxu0 0
      %2878 = vmatmul.mubr.bf16.gmra.mrb[0].mxu0 %v1854
      %v2879 = vpop.f32.mrb[0].mxu0
      %v2880 = vadd.f32 0.0, %v2879
      %v2881 = vpop.f32.mrb[0].mxu0
      %v2882 = vadd.f32 0.0, %v2881
      %v2883 = vpop.f32.mrb[0].mxu0
      %v2884 = vadd.f32 0.0, %v2883
      %v2885 = vpop.f32.mrb[0].mxu0
      %v2886 = vadd.f32 0.0, %v2885
      %2887 = vdwg.mxu0
      %2888 = vmatprep.subr.bf16.mxu0 0
      %2889 = vmatpush1.bf16.msra.mxu0 %v1969
      %2890 = vmatprep.subr.bf16.mxu0 0
      %2891 = vmatpush1.bf16.msra.mxu0 %v1972
      %2892 = vmatprep.subr.bf16.mxu0 0
      %2893 = vmatpush1.bf16.msra.mxu0 %v1975
      %2894 = vmatprep.subr.bf16.mxu0 0
      %2895 = vmatpush1.bf16.msra.mxu0 %v1978
      %2896 = vmatprep.subr.bf16.mxu0 0
      %2897 = vmatpush1.bf16.msra.mxu0 %v1981
      %2898 = vmatprep.subr.bf16.mxu0 0
      %2899 = vmatpush1.bf16.msra.mxu0 %v1984
      %2900 = vmatprep.subr.bf16.mxu0 0
      %2901 = vmatpush1.bf16.msra.mxu0 %v1987
      %2902 = vmatprep.subr.bf16.mxu0 0
      %2903 = vmatpush1.bf16.msra.mxu0 %v1990
      %2904 = vmatprep.subr.bf16.mxu0 0
      %2905 = vmatpush1.bf16.msra.mxu0 0
      %2906 = vmatprep.subr.bf16.mxu0 0
      %2907 = vmatpush1.bf16.msra.mxu0 0
      %2908 = vmatprep.subr.bf16.mxu0 0
      %2909 = vmatpush1.bf16.msra.mxu0 0
      %2910 = vmatprep.subr.bf16.mxu0 0
      %2911 = vmatpush1.bf16.msra.mxu0 0
      %2912 = vmatprep.subr.bf16.mxu0 0
      %2913 = vmatpush1.bf16.msra.mxu0 0
      %2914 = vmatprep.subr.bf16.mxu0 0
      %2915 = vmatpush1.bf16.msra.mxu0 0
      %2916 = vmatprep.subr.bf16.mxu0 0
      %2917 = vmatpush1.bf16.msra.mxu0 0
      %2918 = vmatprep.subr.bf16.mxu0 0
      %2919 = vmatpush1.bf16.msra.mxu0 0
      %2920 = vmatprep.mubr.bf16.mxu0 0
      %2921 = vmatmul.mubr.bf16.gmra.mrb[0].mxu0 %v1771
      %v2922 = vpop.f32.mrb[0].mxu0
      %v2923 = vadd.f32 0.0, %v2922
      %v2924 = vpop.f32.mrb[0].mxu0
      %v2925 = vpop.f32.mrb[0].mxu0
      %v2926 = vadd.f32 0.0, %v2925
      %v2927 = vpop.f32.mrb[0].mxu0
      %2928 = vmatprep.mubr.bf16.mxu0 0
      %2929 = vmatmul.mubr.bf16.gmra.mrb[0].mxu0 %v1772
      %v2930 = vpop.f32.mrb[0].mxu0
      %v2931 = vadd.f32 0.0, %v2930
      %v2932 = vpop.f32.mrb[0].mxu0
      %v2933 = vpop.f32.mrb[0].mxu0
      %v2934 = vadd.f32 0.0, %v2933
      %v2935 = vpop.f32.mrb[0].mxu0
      %2936 = vmatprep.mubr.bf16.mxu0 0
      %2937 = vmatmul.mubr.bf16.gmra.mrb[0].mxu0 %v1773
      %v2938 = vpop.f32.mrb[0].mxu0
      %v2939 = vadd.f32 0.0, %v2938
      %v2940 = vpop.f32.mrb[0].mxu0
      %v2941 = vpop.f32.mrb[0].mxu0
      %v2942 = vadd.f32 0.0, %v2941
      %v2943 = vpop.f32.mrb[0].mxu0
      %2944 = vmatprep.mubr.bf16.mxu0 0
      %2945 = vmatmul.mubr.bf16.gmra.mrb[0].mxu0 %v1774
      %v2946 = vpop.f32.mrb[0].mxu0
      %v2947 = vadd.f32 0.0, %v2946
      %v2948 = vpop.f32.mrb[0].mxu0
      %v2949 = vpop.f32.mrb[0].mxu0
      %v2950 = vadd.f32 0.0, %v2949
      %v2951 = vpop.f32.mrb[0].mxu0
      %2952 = vmatprep.mubr.bf16.mxu0 0
      %2953 = vmatmul.mubr.bf16.gmra.mrb[0].mxu0 %v1775
      %v2954 = vpop.f32.mrb[0].mxu0
      %v2955 = vadd.f32 0.0, %v2954
      %v2956 = vpop.f32.mrb[0].mxu0
      %v2957 = vpop.f32.mrb[0].mxu0
      %v2958 = vadd.f32 0.0, %v2957
      %v2959 = vpop.f32.mrb[0].mxu0
      %2960 = vmatprep.mubr.bf16.mxu0 0
      %2961 = vmatmul.mubr.bf16.gmra.mrb[0].mxu0 %v1776
      %v2962 = vpop.f32.mrb[0].mxu0
      %v2963 = vadd.f32 0.0, %v2962
      %v2964 = vpop.f32.mrb[0].mxu0
      %v2965 = vpop.f32.mrb[0].mxu0
      %v2966 = vadd.f32 0.0, %v2965
      %v2967 = vpop.f32.mrb[0].mxu0
      %2968 = vmatprep.mubr.bf16.mxu0 0
      %2969 = vmatmul.mubr.bf16.gmra.mrb[0].mxu0 %v1777
      %v2970 = vpop.f32.mrb[0].mxu0
      %v2971 = vadd.f32 0.0, %v2970
      %v2972 = vpop.f32.mrb[0].mxu0
      %v2973 = vpop.f32.mrb[0].mxu0
      %v2974 = vadd.f32 0.0, %v2973
      %v2975 = vpop.f32.mrb[0].mxu0
      %2976 = vmatprep.mubr.bf16.mxu0 0
      %2977 = vmatmul.mubr.bf16.gmra.mrb[0].mxu0 %v1778
      %v2978 = vpop.f32.mrb[0].mxu0
      %v2979 = vadd.f32 0.0, %v2978
      %v2980 = vpop.f32.mrb[0].mxu0
      %v2981 = vpop.f32.mrb[0].mxu0
      %v2982 = vadd.f32 0.0, %v2981
      %v2983 = vpop.f32.mrb[0].mxu0
      %2984 = vmatprep.mubr.bf16.mxu0 0
      %2985 = vmatmul.mubr.bf16.gmra.mrb[0].mxu0 %v1779
      %v2986 = vpop.f32.mrb[0].mxu0
      %v2987 = vadd.f32 0.0, %v2986
      %v2988 = vpop.f32.mrb[0].mxu0
      %v2989 = vpop.f32.mrb[0].mxu0
      %v2990 = vadd.f32 0.0, %v2989
      %v2991 = vpop.f32.mrb[0].mxu0
      %2992 = vmatprep.mubr.bf16.mxu0 0
      %2993 = vmatmul.mubr.bf16.gmra.mrb[0].mxu0 %v1780
      %v2994 = vpop.f32.mrb[0].mxu0
      %v2995 = vadd.f32 0.0, %v2994
      %v2996 = vpop.f32.mrb[0].mxu0
      %v2997 = vpop.f32.mrb[0].mxu0
      %v2998 = vadd.f32 0.0, %v2997
      %v2999 = vpop.f32.mrb[0].mxu0
      %3000 = vmatprep.mubr.bf16.mxu0 0
      %3001 = vmatmul.mubr.bf16.gmra.mrb[0].mxu0 %v1781
      %v3002 = vpop.f32.mrb[0].mxu0
      %v3003 = vadd.f32 0.0, %v3002
      %v3004 = vpop.f32.mrb[0].mxu0
      %v3005 = vpop.f32.mrb[0].mxu0
      %v3006 = vadd.f32 0.0, %v3005
      %v3007 = vpop.f32.mrb[0].mxu0
      %3008 = vmatprep.mubr.bf16.mxu0 0
      %3009 = vmatmul.mubr.bf16.gmra.mrb[0].mxu0 %v1782
      %v3010 = vpop.f32.mrb[0].mxu0
      %v3011 = vadd.f32 0.0, %v3010
      %v3012 = vpop.f32.mrb[0].mxu0
      %v3013 = vpop.f32.mrb[0].mxu0
      %v3014 = vadd.f32 0.0, %v3013
      %v3015 = vpop.f32.mrb[0].mxu0
      %3016 = vmatprep.mubr.bf16.mxu0 0
      %3017 = vmatmul.mubr.bf16.gmra.mrb[0].mxu0 %v1783
      %v3018 = vpop.f32.mrb[0].mxu0
      %v3019 = vadd.f32 0.0, %v3018
      %v3020 = vpop.f32.mrb[0].mxu0
      %v3021 = vpop.f32.mrb[0].mxu0
      %v3022 = vadd.f32 0.0, %v3021
      %v3023 = vpop.f32.mrb[0].mxu0
      %3024 = vmatprep.mubr.bf16.mxu0 0
      %3025 = vmatmul.mubr.bf16.gmra.mrb[0].mxu0 %v1784
      %v3026 = vpop.f32.mrb[0].mxu0
      %v3027 = vadd.f32 0.0, %v3026
      %v3028 = vpop.f32.mrb[0].mxu0
      %v3029 = vpop.f32.mrb[0].mxu0
      %v3030 = vadd.f32 0.0, %v3029
      %v3031 = vpop.f32.mrb[0].mxu0
      %3032 = vmatprep.mubr.bf16.mxu0 0
      %3033 = vmatmul.mubr.bf16.gmra.mrb[0].mxu0 %v1785
      %v3034 = vpop.f32.mrb[0].mxu0
      %v3035 = vadd.f32 0.0, %v3034
      %v3036 = vpop.f32.mrb[0].mxu0
      %v3037 = vpop.f32.mrb[0].mxu0
      %v3038 = vadd.f32 0.0, %v3037
      %v3039 = vpop.f32.mrb[0].mxu0
      %3040 = vmatprep.mubr.bf16.mxu0 0
      %3041 = vmatmul.mubr.bf16.gmra.mrb[0].mxu0 %v1786
      %v3042 = vpop.f32.mrb[0].mxu0
      %v3043 = vadd.f32 0.0, %v3042
      %v3044 = vpop.f32.mrb[0].mxu0
      %v3045 = vpop.f32.mrb[0].mxu0
      %v3046 = vadd.f32 0.0, %v3045
      %v3047 = vpop.f32.mrb[0].mxu0
      %3048 = vmatprep.mubr.bf16.mxu0 0
      %3049 = vmatmul.mubr.bf16.gmra.mrb[0].mxu0 %v1787
      %v3050 = vpop.f32.mrb[0].mxu0
      %v3051 = vadd.f32 0.0, %v3050
      %v3052 = vpop.f32.mrb[0].mxu0
      %v3053 = vpop.f32.mrb[0].mxu0
      %v3054 = vadd.f32 0.0, %v3053
      %v3055 = vpop.f32.mrb[0].mxu0
      %3056 = vmatprep.mubr.bf16.mxu0 0
      %3057 = vmatmul.mubr.bf16.gmra.mrb[0].mxu0 %v1788
      %v3058 = vpop.f32.mrb[0].mxu0
      %v3059 = vadd.f32 0.0, %v3058
      %v3060 = vpop.f32.mrb[0].mxu0
      %v3061 = vpop.f32.mrb[0].mxu0
      %v3062 = vadd.f32 0.0, %v3061
      %v3063 = vpop.f32.mrb[0].mxu0
      %3064 = vmatprep.mubr.bf16.mxu0 0
      %3065 = vmatmul.mubr.bf16.gmra.mrb[0].mxu0 %v1789
      %v3066 = vpop.f32.mrb[0].mxu0
      %v3067 = vadd.f32 0.0, %v3066
      %v3068 = vpop.f32.mrb[0].mxu0
      %v3069 = vpop.f32.mrb[0].mxu0
      %v3070 = vadd.f32 0.0, %v3069
      %v3071 = vpop.f32.mrb[0].mxu0
      %3072 = vmatprep.mubr.bf16.mxu0 0
      %3073 = vmatmul.mubr.bf16.gmra.mrb[0].mxu0 %v1790
      %v3074 = vpop.f32.mrb[0].mxu0
      %v3075 = vadd.f32 0.0, %v3074
      %v3076 = vpop.f32.mrb[0].mxu0
      %v3077 = vpop.f32.mrb[0].mxu0
      %v3078 = vadd.f32 0.0, %v3077
      %v3079 = vpop.f32.mrb[0].mxu0
      %3080 = vmatprep.mubr.bf16.mxu0 0
      %3081 = vmatmul.mubr.bf16.gmra.mrb[0].mxu0 %v1791
      %v3082 = vpop.f32.mrb[0].mxu0
      %v3083 = vadd.f32 0.0, %v3082
      %v3084 = vpop.f32.mrb[0].mxu0
      %v3085 = vpop.f32.mrb[0].mxu0
      %v3086 = vadd.f32 0.0, %v3085
      %v3087 = vpop.f32.mrb[0].mxu0
      %3088 = vmatprep.mubr.bf16.mxu0 0
      %3089 = vmatmul.mubr.bf16.gmra.mrb[0].mxu0 %v1792
      %v3090 = vpop.f32.mrb[0].mxu0
      %v3091 = vadd.f32 0.0, %v3090
      %v3092 = vpop.f32.mrb[0].mxu0
      %v3093 = vpop.f32.mrb[0].mxu0
      %v3094 = vadd.f32 0.0, %v3093
      %v3095 = vpop.f32.mrb[0].mxu0
      %3096 = vmatprep.mubr.bf16.mxu0 0
      %3097 = vmatmul.mubr.bf16.gmra.mrb[0].mxu0 %v1793
      %v3098 = vpop.f32.mrb[0].mxu0
      %v3099 = vadd.f32 0.0, %v3098
      %v3100 = vpop.f32.mrb[0].mxu0
      %v3101 = vpop.f32.mrb[0].mxu0
      %v3102 = vadd.f32 0.0, %v3101
      %v3103 = vpop.f32.mrb[0].mxu0
      %3104 = vmatprep.mubr.bf16.mxu0 0
      %3105 = vmatmul.mubr.bf16.gmra.mrb[0].mxu0 %v1794
      %v3106 = vpop.f32.mrb[0].mxu0
      %v3107 = vadd.f32 0.0, %v3106
      %v3108 = vpop.f32.mrb[0].mxu0
      %v3109 = vpop.f32.mrb[0].mxu0
      %v3110 = vadd.f32 0.0, %v3109
      %v3111 = vpop.f32.mrb[0].mxu0
      %3112 = vmatprep.mubr.bf16.mxu0 0
      %3113 = vmatmul.mubr.bf16.gmra.mrb[0].mxu0 %v1795
      %v3114 = vpop.f32.mrb[0].mxu0
      %v3115 = vadd.f32 0.0, %v3114
      %v3116 = vpop.f32.mrb[0].mxu0
      %v3117 = vpop.f32.mrb[0].mxu0
      %v3118 = vadd.f32 0.0, %v3117
      %v3119 = vpop.f32.mrb[0].mxu0
      %3120 = vmatprep.mubr.bf16.mxu0 0
      %3121 = vmatmul.mubr.bf16.gmra.mrb[0].mxu0 %v1796
      %v3122 = vpop.f32.mrb[0].mxu0
      %v3123 = vadd.f32 0.0, %v3122
      %v3124 = vpop.f32.mrb[0].mxu0
      %v3125 = vpop.f32.mrb[0].mxu0
      %v3126 = vadd.f32 0.0, %v3125
      %v3127 = vpop.f32.mrb[0].mxu0
      %3128 = vmatprep.mubr.bf16.mxu0 0
      %3129 = vmatmul.mubr.bf16.gmra.mrb[0].mxu0 %v1797
      %v3130 = vpop.f32.mrb[0].mxu0
      %v3131 = vadd.f32 0.0, %v3130
      %v3132 = vpop.f32.mrb[0].mxu0
      %v3133 = vpop.f32.mrb[0].mxu0
      %v3134 = vadd.f32 0.0, %v3133
      %v3135 = vpop.f32.mrb[0].mxu0
      %3136 = vmatprep.mubr.bf16.mxu0 0
      %3137 = vmatmul.mubr.bf16.gmra.mrb[0].mxu0 %v1798
      %v3138 = vpop.f32.mrb[0].mxu0
      %v3139 = vadd.f32 0.0, %v3138
      %v3140 = vpop.f32.mrb[0].mxu0
      %v3141 = vpop.f32.mrb[0].mxu0
      %v3142 = vadd.f32 0.0, %v3141
      %v3143 = vpop.f32.mrb[0].mxu0
      %3144 = vmatprep.mubr.bf16.mxu0 0
      %3145 = vmatmul.mubr.bf16.gmra.mrb[0].mxu0 %v1799
      %v3146 = vpop.f32.mrb[0].mxu0
      %v3147 = vadd.f32 0.0, %v3146
      %v3148 = vpop.f32.mrb[0].mxu0
      %v3149 = vpop.f32.mrb[0].mxu0
      %v3150 = vadd.f32 0.0, %v3149
      %v3151 = vpop.f32.mrb[0].mxu0
      %3152 = vmatprep.mubr.bf16.mxu0 0
      %3153 = vmatmul.mubr.bf16.gmra.mrb[0].mxu0 %v1800
      %v3154 = vpop.f32.mrb[0].mxu0
      %v3155 = vadd.f32 0.0, %v3154
      %v3156 = vpop.f32.mrb[0].mxu0
      %v3157 = vpop.f32.mrb[0].mxu0
      %v3158 = vadd.f32 0.0, %v3157
      %v3159 = vpop.f32.mrb[0].mxu0
      %3160 = vmatprep.mubr.bf16.mxu0 0
      %3161 = vmatmul.mubr.bf16.gmra.mrb[0].mxu0 %v1801
      %v3162 = vpop.f32.mrb[0].mxu0
      %v3163 = vadd.f32 0.0, %v3162
      %v3164 = vpop.f32.mrb[0].mxu0
      %v3165 = vpop.f32.mrb[0].mxu0
      %v3166 = vadd.f32 0.0, %v3165
      %v3167 = vpop.f32.mrb[0].mxu0
      %3168 = vmatprep.mubr.bf16.mxu0 0
      %3169 = vmatmul.mubr.bf16.gmra.mrb[0].mxu0 %v1802
      %v3170 = vpop.f32.mrb[0].mxu0
      %v3171 = vadd.f32 0.0, %v3170
      %v3172 = vpop.f32.mrb[0].mxu0
      %v3173 = vpop.f32.mrb[0].mxu0
      %v3174 = vadd.f32 0.0, %v3173
      %v3175 = vpop.f32.mrb[0].mxu0
      %3176 = vmatprep.mubr.bf16.mxu0 0
      %3177 = vmatmul.mubr.bf16.gmra.mrb[0].mxu0 %v1803
      %v3178 = vpop.f32.mrb[0].mxu0
      %v3179 = vadd.f32 0.0, %v3178
      %v3180 = vpop.f32.mrb[0].mxu0
      %v3181 = vpop.f32.mrb[0].mxu0
      %v3182 = vadd.f32 0.0, %v3181
      %v3183 = vpop.f32.mrb[0].mxu0
      %3184 = vmatprep.mubr.bf16.mxu0 0
      %3185 = vmatmul.mubr.bf16.gmra.mrb[0].mxu0 %v1804
      %v3186 = vpop.f32.mrb[0].mxu0
      %v3187 = vadd.f32 0.0, %v3186
      %v3188 = vpop.f32.mrb[0].mxu0
      %v3189 = vpop.f32.mrb[0].mxu0
      %v3190 = vadd.f32 0.0, %v3189
      %v3191 = vpop.f32.mrb[0].mxu0
      %3192 = vmatprep.mubr.bf16.mxu0 0
      %3193 = vmatmul.mubr.bf16.gmra.mrb[0].mxu0 %v1805
      %v3194 = vpop.f32.mrb[0].mxu0
      %v3195 = vadd.f32 0.0, %v3194
      %v3196 = vpop.f32.mrb[0].mxu0
      %v3197 = vpop.f32.mrb[0].mxu0
      %v3198 = vadd.f32 0.0, %v3197
      %v3199 = vpop.f32.mrb[0].mxu0
      %3200 = vmatprep.mubr.bf16.mxu0 0
      %3201 = vmatmul.mubr.bf16.gmra.mrb[0].mxu0 %v1806
      %v3202 = vpop.f32.mrb[0].mxu0
      %v3203 = vadd.f32 0.0, %v3202
      %v3204 = vpop.f32.mrb[0].mxu0
      %v3205 = vpop.f32.mrb[0].mxu0
      %v3206 = vadd.f32 0.0, %v3205
      %v3207 = vpop.f32.mrb[0].mxu0
      %3208 = vmatprep.mubr.bf16.mxu0 0
      %3209 = vmatmul.mubr.bf16.gmra.mrb[0].mxu0 %v1807
      %v3210 = vpop.f32.mrb[0].mxu0
      %v3211 = vadd.f32 0.0, %v3210
      %v3212 = vpop.f32.mrb[0].mxu0
      %v3213 = vpop.f32.mrb[0].mxu0
      %v3214 = vadd.f32 0.0, %v3213
      %v3215 = vpop.f32.mrb[0].mxu0
      %3216 = vmatprep.mubr.bf16.mxu0 0
      %3217 = vmatmul.mubr.bf16.gmra.mrb[0].mxu0 %v1808
      %v3218 = vpop.f32.mrb[0].mxu0
      %v3219 = vadd.f32 0.0, %v3218
      %v3220 = vpop.f32.mrb[0].mxu0
      %v3221 = vpop.f32.mrb[0].mxu0
      %v3222 = vadd.f32 0.0, %v3221
      %v3223 = vpop.f32.mrb[0].mxu0
      %3224 = vmatprep.mubr.bf16.mxu0 0
      %3225 = vmatmul.mubr.bf16.gmra.mrb[0].mxu0 %v1809
      %v3226 = vpop.f32.mrb[0].mxu0
      %v3227 = vadd.f32 0.0, %v3226
      %v3228 = vpop.f32.mrb[0].mxu0
      %v3229 = vpop.f32.mrb[0].mxu0
      %v3230 = vadd.f32 0.0, %v3229
      %v3231 = vpop.f32.mrb[0].mxu0
      %3232 = vmatprep.mubr.bf16.mxu0 0
      %3233 = vmatmul.mubr.bf16.gmra.mrb[0].mxu0 %v1810
      %v3234 = vpop.f32.mrb[0].mxu0
      %v3235 = vadd.f32 0.0, %v3234
      %v3236 = vpop.f32.mrb[0].mxu0
      %v3237 = vpop.f32.mrb[0].mxu0
      %v3238 = vadd.f32 0.0, %v3237
      %v3239 = vpop.f32.mrb[0].mxu0
      %3240 = vmatprep.mubr.bf16.mxu0 0
      %3241 = vmatmul.mubr.bf16.gmra.mrb[0].mxu0 %v1811
      %v3242 = vpop.f32.mrb[0].mxu0
      %v3243 = vadd.f32 0.0, %v3242
      %v3244 = vpop.f32.mrb[0].mxu0
      %v3245 = vpop.f32.mrb[0].mxu0
      %v3246 = vadd.f32 0.0, %v3245
      %v3247 = vpop.f32.mrb[0].mxu0
      %3248 = vmatprep.mubr.bf16.mxu0 0
      %3249 = vmatmul.mubr.bf16.gmra.mrb[0].mxu0 %v1812
      %v3250 = vpop.f32.mrb[0].mxu0
      %v3251 = vadd.f32 0.0, %v3250
      %v3252 = vpop.f32.mrb[0].mxu0
      %v3253 = vpop.f32.mrb[0].mxu0
      %v3254 = vadd.f32 0.0, %v3253
      %v3255 = vpop.f32.mrb[0].mxu0
      %3256 = vmatprep.mubr.bf16.mxu0 0
      %3257 = vmatmul.mubr.bf16.gmra.mrb[0].mxu0 %v1813
      %v3258 = vpop.f32.mrb[0].mxu0
      %v3259 = vadd.f32 0.0, %v3258
      %v3260 = vpop.f32.mrb[0].mxu0
      %v3261 = vpop.f32.mrb[0].mxu0
      %v3262 = vadd.f32 0.0, %v3261
      %v3263 = vpop.f32.mrb[0].mxu0
      %3264 = vmatprep.mubr.bf16.mxu0 0
      %3265 = vmatmul.mubr.bf16.gmra.mrb[0].mxu0 %v1814
      %v3266 = vpop.f32.mrb[0].mxu0
      %v3267 = vadd.f32 0.0, %v3266
      %v3268 = vpop.f32.mrb[0].mxu0
      %v3269 = vpop.f32.mrb[0].mxu0
      %v3270 = vadd.f32 0.0, %v3269
      %v3271 = vpop.f32.mrb[0].mxu0
      %3272 = vmatprep.mubr.bf16.mxu0 0
      %3273 = vmatmul.mubr.bf16.gmra.mrb[0].mxu0 %v1815
      %v3274 = vpop.f32.mrb[0].mxu0
      %v3275 = vadd.f32 0.0, %v3274
      %v3276 = vpop.f32.mrb[0].mxu0
      %v3277 = vpop.f32.mrb[0].mxu0
      %v3278 = vadd.f32 0.0, %v3277
      %v3279 = vpop.f32.mrb[0].mxu0
      %3280 = vmatprep.mubr.bf16.mxu0 0
      %3281 = vmatmul.mubr.bf16.gmra.mrb[0].mxu0 %v1816
      %v3282 = vpop.f32.mrb[0].mxu0
      %v3283 = vadd.f32 0.0, %v3282
      %v3284 = vpop.f32.mrb[0].mxu0
      %v3285 = vpop.f32.mrb[0].mxu0
      %v3286 = vadd.f32 0.0, %v3285
      %v3287 = vpop.f32.mrb[0].mxu0
      %3288 = vmatprep.mubr.bf16.mxu0 0
      %3289 = vmatmul.mubr.bf16.gmra.mrb[0].mxu0 %v1817
      %v3290 = vpop.f32.mrb[0].mxu0
      %v3291 = vadd.f32 0.0, %v3290
      %v3292 = vpop.f32.mrb[0].mxu0
      %v3293 = vpop.f32.mrb[0].mxu0
      %v3294 = vadd.f32 0.0, %v3293
      %v3295 = vpop.f32.mrb[0].mxu0
      %3296 = vmatprep.mubr.bf16.mxu0 0
      %3297 = vmatmul.mubr.bf16.gmra.mrb[0].mxu0 %v1818
      %v3298 = vpop.f32.mrb[0].mxu0
      %v3299 = vadd.f32 0.0, %v3298
      %v3300 = vpop.f32.mrb[0].mxu0
      %v3301 = vpop.f32.mrb[0].mxu0
      %v3302 = vadd.f32 0.0, %v3301
      %v3303 = vpop.f32.mrb[0].mxu0
      %3304 = vmatprep.mubr.bf16.mxu0 0
      %3305 = vmatmul.mubr.bf16.gmra.mrb[0].mxu0 %v1819
      %v3306 = vpop.f32.mrb[0].mxu0
      %v3307 = vadd.f32 0.0, %v3306
      %v3308 = vpop.f32.mrb[0].mxu0
      %v3309 = vpop.f32.mrb[0].mxu0
      %v3310 = vadd.f32 0.0, %v3309
      %v3311 = vpop.f32.mrb[0].mxu0
      %3312 = vmatprep.mubr.bf16.mxu0 0
      %3313 = vmatmul.mubr.bf16.gmra.mrb[0].mxu0 %v1820
      %v3314 = vpop.f32.mrb[0].mxu0
      %v3315 = vadd.f32 0.0, %v3314
      %v3316 = vpop.f32.mrb[0].mxu0
      %v3317 = vpop.f32.mrb[0].mxu0
      %v3318 = vadd.f32 0.0, %v3317
      %v3319 = vpop.f32.mrb[0].mxu0
      %3320 = vmatprep.mubr.bf16.mxu0 0
      %3321 = vmatmul.mubr.bf16.gmra.mrb[0].mxu0 %v1821
      %v3322 = vpop.f32.mrb[0].mxu0
      %v3323 = vadd.f32 0.0, %v3322
      %v3324 = vpop.f32.mrb[0].mxu0
      %v3325 = vpop.f32.mrb[0].mxu0
      %v3326 = vadd.f32 0.0, %v3325
      %v3327 = vpop.f32.mrb[0].mxu0
      %3328 = vmatprep.mubr.bf16.mxu0 0
      %3329 = vmatmul.mubr.bf16.gmra.mrb[0].mxu0 %v1822
      %v3330 = vpop.f32.mrb[0].mxu0
      %v3331 = vadd.f32 0.0, %v3330
      %v3332 = vpop.f32.mrb[0].mxu0
      %v3333 = vpop.f32.mrb[0].mxu0
      %v3334 = vadd.f32 0.0, %v3333
      %v3335 = vpop.f32.mrb[0].mxu0
      %3336 = vmatprep.mubr.bf16.mxu0 0
      %3337 = vmatmul.mubr.bf16.gmra.mrb[0].mxu0 %v1823
      %v3338 = vpop.f32.mrb[0].mxu0
      %v3339 = vadd.f32 0.0, %v3338
      %v3340 = vpop.f32.mrb[0].mxu0
      %v3341 = vpop.f32.mrb[0].mxu0
      %v3342 = vadd.f32 0.0, %v3341
      %v3343 = vpop.f32.mrb[0].mxu0
      %3344 = vmatprep.mubr.bf16.mxu0 0
      %3345 = vmatmul.mubr.bf16.gmra.mrb[0].mxu0 %v1824
      %v3346 = vpop.f32.mrb[0].mxu0
      %v3347 = vadd.f32 0.0, %v3346
      %v3348 = vpop.f32.mrb[0].mxu0
      %v3349 = vpop.f32.mrb[0].mxu0
      %v3350 = vadd.f32 0.0, %v3349
      %v3351 = vpop.f32.mrb[0].mxu0
      %3352 = vmatprep.mubr.bf16.mxu0 0
      %3353 = vmatmul.mubr.bf16.gmra.mrb[0].mxu0 %v1825
      %v3354 = vpop.f32.mrb[0].mxu0
      %v3355 = vadd.f32 0.0, %v3354
      %v3356 = vpop.f32.mrb[0].mxu0
      %v3357 = vpop.f32.mrb[0].mxu0
      %v3358 = vadd.f32 0.0, %v3357
      %v3359 = vpop.f32.mrb[0].mxu0
      %3360 = vmatprep.mubr.bf16.mxu0 0
      %3361 = vmatmul.mubr.bf16.gmra.mrb[0].mxu0 %v1826
      %v3362 = vpop.f32.mrb[0].mxu0
      %v3363 = vadd.f32 0.0, %v3362
      %v3364 = vpop.f32.mrb[0].mxu0
      %v3365 = vpop.f32.mrb[0].mxu0
      %v3366 = vadd.f32 0.0, %v3365
      %v3367 = vpop.f32.mrb[0].mxu0
      %3368 = vmatprep.mubr.bf16.mxu0 0
      %3369 = vmatmul.mubr.bf16.gmra.mrb[0].mxu0 %v1827
      %v3370 = vpop.f32.mrb[0].mxu0
      %v3371 = vadd.f32 0.0, %v3370
      %v3372 = vpop.f32.mrb[0].mxu0
      %v3373 = vpop.f32.mrb[0].mxu0
      %v3374 = vadd.f32 0.0, %v3373
      %v3375 = vpop.f32.mrb[0].mxu0
      %3376 = vmatprep.mubr.bf16.mxu0 0
      %3377 = vmatmul.mubr.bf16.gmra.mrb[0].mxu0 %v1828
      %v3378 = vpop.f32.mrb[0].mxu0
      %v3379 = vadd.f32 0.0, %v3378
      %v3380 = vpop.f32.mrb[0].mxu0
      %v3381 = vpop.f32.mrb[0].mxu0
      %v3382 = vadd.f32 0.0, %v3381
      %v3383 = vpop.f32.mrb[0].mxu0
      %3384 = vmatprep.mubr.bf16.mxu0 0
      %3385 = vmatmul.mubr.bf16.gmra.mrb[0].mxu0 %v1829
      %v3386 = vpop.f32.mrb[0].mxu0
      %v3387 = vadd.f32 0.0, %v3386
      %v3388 = vpop.f32.mrb[0].mxu0
      %v3389 = vpop.f32.mrb[0].mxu0
      %v3390 = vadd.f32 0.0, %v3389
      %v3391 = vpop.f32.mrb[0].mxu0
      %3392 = vmatprep.mubr.bf16.mxu0 0
      %3393 = vmatmul.mubr.bf16.gmra.mrb[0].mxu0 %v1830
      %v3394 = vpop.f32.mrb[0].mxu0
      %v3395 = vadd.f32 0.0, %v3394
      %v3396 = vpop.f32.mrb[0].mxu0
      %v3397 = vpop.f32.mrb[0].mxu0
      %v3398 = vadd.f32 0.0, %v3397
      %v3399 = vpop.f32.mrb[0].mxu0
      %3400 = vmatprep.mubr.bf16.mxu0 0
      %3401 = vmatmul.mubr.bf16.gmra.mrb[0].mxu0 %v1831
      %v3402 = vpop.f32.mrb[0].mxu0
      %v3403 = vadd.f32 0.0, %v3402
      %v3404 = vpop.f32.mrb[0].mxu0
      %v3405 = vpop.f32.mrb[0].mxu0
      %v3406 = vadd.f32 0.0, %v3405
      %v3407 = vpop.f32.mrb[0].mxu0
      %3408 = vmatprep.mubr.bf16.mxu0 0
      %3409 = vmatmul.mubr.bf16.gmra.mrb[0].mxu0 %v1832
      %v3410 = vpop.f32.mrb[0].mxu0
      %v3411 = vadd.f32 0.0, %v3410
      %v3412 = vpop.f32.mrb[0].mxu0
      %v3413 = vpop.f32.mrb[0].mxu0
      %v3414 = vadd.f32 0.0, %v3413
      %v3415 = vpop.f32.mrb[0].mxu0
      %3416 = vmatprep.mubr.bf16.mxu0 0
      %3417 = vmatmul.mubr.bf16.gmra.mrb[0].mxu0 %v1833
      %v3418 = vpop.f32.mrb[0].mxu0
      %v3419 = vadd.f32 0.0, %v3418
      %v3420 = vpop.f32.mrb[0].mxu0
      %v3421 = vpop.f32.mrb[0].mxu0
      %v3422 = vadd.f32 0.0, %v3421
      %v3423 = vpop.f32.mrb[0].mxu0
      %3424 = vmatprep.mubr.bf16.mxu0 0
      %3425 = vmatmul.mubr.bf16.gmra.mrb[0].mxu0 %v1834
      %v3426 = vpop.f32.mrb[0].mxu0
      %v3427 = vadd.f32 0.0, %v3426
      %v3428 = vpop.f32.mrb[0].mxu0
      %v3429 = vpop.f32.mrb[0].mxu0
      %v3430 = vadd.f32 0.0, %v3429
      %v3431 = vpop.f32.mrb[0].mxu0
      %3432 = vmatprep.mubr.bf16.mxu0 0
      %3433 = vmatmul.mubr.bf16.gmra.mrb[0].mxu0 %v1835
      %v3434 = vpop.f32.mrb[0].mxu0
      %v3435 = vadd.f32 0.0, %v3434
      %v3436 = vpop.f32.mrb[0].mxu0
      %v3437 = vpop.f32.mrb[0].mxu0
      %v3438 = vadd.f32 0.0, %v3437
      %v3439 = vpop.f32.mrb[0].mxu0
      %3440 = vmatprep.mubr.bf16.mxu0 0
      %3441 = vmatmul.mubr.bf16.gmra.mrb[0].mxu0 %v1836
      %v3442 = vpop.f32.mrb[0].mxu0
      %v3443 = vadd.f32 0.0, %v3442
      %v3444 = vpop.f32.mrb[0].mxu0
      %v3445 = vpop.f32.mrb[0].mxu0
      %v3446 = vadd.f32 0.0, %v3445
      %v3447 = vpop.f32.mrb[0].mxu0
      %3448 = vmatprep.mubr.bf16.mxu0 0
      %3449 = vmatmul.mubr.bf16.gmra.mrb[0].mxu0 %v1837
      %v3450 = vpop.f32.mrb[0].mxu0
      %v3451 = vadd.f32 0.0, %v3450
      %v3452 = vpop.f32.mrb[0].mxu0
      %v3453 = vpop.f32.mrb[0].mxu0
      %v3454 = vadd.f32 0.0, %v3453
      %v3455 = vpop.f32.mrb[0].mxu0
      %3456 = vmatprep.mubr.bf16.mxu0 0
      %3457 = vmatmul.mubr.bf16.gmra.mrb[0].mxu0 %v1838
      %v3458 = vpop.f32.mrb[0].mxu0
      %v3459 = vadd.f32 0.0, %v3458
      %v3460 = vpop.f32.mrb[0].mxu0
      %v3461 = vpop.f32.mrb[0].mxu0
      %v3462 = vadd.f32 0.0, %v3461
      %v3463 = vpop.f32.mrb[0].mxu0
      %3464 = vmatprep.mubr.bf16.mxu0 0
      %3465 = vmatmul.mubr.bf16.gmra.mrb[0].mxu0 %v1839
      %v3466 = vpop.f32.mrb[0].mxu0
      %v3467 = vadd.f32 0.0, %v3466
      %v3468 = vpop.f32.mrb[0].mxu0
      %v3469 = vpop.f32.mrb[0].mxu0
      %v3470 = vadd.f32 0.0, %v3469
      %v3471 = vpop.f32.mrb[0].mxu0
      %3472 = vmatprep.mubr.bf16.mxu0 0
      %3473 = vmatmul.mubr.bf16.gmra.mrb[0].mxu0 %v1840
      %v3474 = vpop.f32.mrb[0].mxu0
      %v3475 = vadd.f32 0.0, %v3474
      %v3476 = vpop.f32.mrb[0].mxu0
      %v3477 = vpop.f32.mrb[0].mxu0
      %v3478 = vadd.f32 0.0, %v3477
      %v3479 = vpop.f32.mrb[0].mxu0
      %3480 = vmatprep.mubr.bf16.mxu0 0
      %3481 = vmatmul.mubr.bf16.gmra.mrb[0].mxu0 %v1841
      %v3482 = vpop.f32.mrb[0].mxu0
      %v3483 = vadd.f32 0.0, %v3482
      %v3484 = vpop.f32.mrb[0].mxu0
      %v3485 = vpop.f32.mrb[0].mxu0
      %v3486 = vadd.f32 0.0, %v3485
      %v3487 = vpop.f32.mrb[0].mxu0
      %3488 = vmatprep.mubr.bf16.mxu0 0
      %3489 = vmatmul.mubr.bf16.gmra.mrb[0].mxu0 %v1842
      %v3490 = vpop.f32.mrb[0].mxu0
      %v3491 = vadd.f32 0.0, %v3490
      %v3492 = vpop.f32.mrb[0].mxu0
      %v3493 = vpop.f32.mrb[0].mxu0
      %v3494 = vadd.f32 0.0, %v3493
      %v3495 = vpop.f32.mrb[0].mxu0
      %3496 = vmatprep.mubr.bf16.mxu0 0
      %3497 = vmatmul.mubr.bf16.gmra.mrb[0].mxu0 %v1843
      %v3498 = vpop.f32.mrb[0].mxu0
      %v3499 = vadd.f32 0.0, %v3498
      %v3500 = vpop.f32.mrb[0].mxu0
      %v3501 = vpop.f32.mrb[0].mxu0
      %v3502 = vadd.f32 0.0, %v3501
      %v3503 = vpop.f32.mrb[0].mxu0
      %3504 = vmatprep.mubr.bf16.mxu0 0
      %3505 = vmatmul.mubr.bf16.gmra.mrb[0].mxu0 %v1844
      %v3506 = vpop.f32.mrb[0].mxu0
      %v3507 = vadd.f32 0.0, %v3506
      %v3508 = vpop.f32.mrb[0].mxu0
      %v3509 = vpop.f32.mrb[0].mxu0
      %v3510 = vadd.f32 0.0, %v3509
      %v3511 = vpop.f32.mrb[0].mxu0
      %3512 = vmatprep.mubr.bf16.mxu0 0
      %3513 = vmatmul.mubr.bf16.gmra.mrb[0].mxu0 %v1845
      %v3514 = vpop.f32.mrb[0].mxu0
      %v3515 = vadd.f32 0.0, %v3514
      %v3516 = vpop.f32.mrb[0].mxu0
      %v3517 = vpop.f32.mrb[0].mxu0
      %v3518 = vadd.f32 0.0, %v3517
      %v3519 = vpop.f32.mrb[0].mxu0
      %3520 = vmatprep.mubr.bf16.mxu0 0
      %3521 = vmatmul.mubr.bf16.gmra.mrb[0].mxu0 %v1846
      %v3522 = vpop.f32.mrb[0].mxu0
      %v3523 = vadd.f32 0.0, %v3522
      %v3524 = vpop.f32.mrb[0].mxu0
      %v3525 = vpop.f32.mrb[0].mxu0
      %v3526 = vadd.f32 0.0, %v3525
      %v3527 = vpop.f32.mrb[0].mxu0
      %3528 = vmatprep.mubr.bf16.mxu0 0
      %3529 = vmatmul.mubr.bf16.gmra.mrb[0].mxu0 %v1847
      %v3530 = vpop.f32.mrb[0].mxu0
      %v3531 = vadd.f32 0.0, %v3530
      %v3532 = vpop.f32.mrb[0].mxu0
      %v3533 = vpop.f32.mrb[0].mxu0
      %v3534 = vadd.f32 0.0, %v3533
      %v3535 = vpop.f32.mrb[0].mxu0
      %3536 = vmatprep.mubr.bf16.mxu0 0
      %3537 = vmatmul.mubr.bf16.gmra.mrb[0].mxu0 %v1848
      %v3538 = vpop.f32.mrb[0].mxu0
      %v3539 = vadd.f32 0.0, %v3538
      %v3540 = vpop.f32.mrb[0].mxu0
      %v3541 = vpop.f32.mrb[0].mxu0
      %v3542 = vadd.f32 0.0, %v3541
      %v3543 = vpop.f32.mrb[0].mxu0
      %3544 = vmatprep.mubr.bf16.mxu0 0
      %3545 = vmatmul.mubr.bf16.gmra.mrb[0].mxu0 %v1849
      %v3546 = vpop.f32.mrb[0].mxu0
      %v3547 = vadd.f32 0.0, %v3546
      %v3548 = vpop.f32.mrb[0].mxu0
      %v3549 = vpop.f32.mrb[0].mxu0
      %v3550 = vadd.f32 0.0, %v3549
      %v3551 = vpop.f32.mrb[0].mxu0
      %3552 = vmatprep.mubr.bf16.mxu0 0
      %3553 = vmatmul.mubr.bf16.gmra.mrb[0].mxu0 %v1850
      %v3554 = vpop.f32.mrb[0].mxu0
      %v3555 = vadd.f32 0.0, %v3554
      %v3556 = vpop.f32.mrb[0].mxu0
      %v3557 = vpop.f32.mrb[0].mxu0
      %v3558 = vadd.f32 0.0, %v3557
      %v3559 = vpop.f32.mrb[0].mxu0
      %3560 = vmatprep.mubr.bf16.mxu0 0
      %3561 = vmatmul.mubr.bf16.gmra.mrb[0].mxu0 %v1851
      %v3562 = vpop.f32.mrb[0].mxu0
      %v3563 = vadd.f32 0.0, %v3562
      %v3564 = vpop.f32.mrb[0].mxu0
      %v3565 = vpop.f32.mrb[0].mxu0
      %v3566 = vadd.f32 0.0, %v3565
      %v3567 = vpop.f32.mrb[0].mxu0
      %3568 = vmatprep.mubr.bf16.mxu0 0
      %3569 = vmatmul.mubr.bf16.gmra.mrb[0].mxu0 %v1852
      %v3570 = vpop.f32.mrb[0].mxu0
      %v3571 = vadd.f32 0.0, %v3570
      %v3572 = vpop.f32.mrb[0].mxu0
      %v3573 = vpop.f32.mrb[0].mxu0
      %v3574 = vadd.f32 0.0, %v3573
      %v3575 = vpop.f32.mrb[0].mxu0
      %3576 = vmatprep.mubr.bf16.mxu0 0
      %3577 = vmatmul.mubr.bf16.gmra.mrb[0].mxu0 %v1853
      %v3578 = vpop.f32.mrb[0].mxu0
      %v3579 = vadd.f32 0.0, %v3578
      %v3580 = vpop.f32.mrb[0].mxu0
      %v3581 = vpop.f32.mrb[0].mxu0
      %v3582 = vadd.f32 0.0, %v3581
      %v3583 = vpop.f32.mrb[0].mxu0
      %3584 = vmatprep.mubr.bf16.mxu0 0
      %3585 = vmatmul.mubr.bf16.gmra.mrb[0].mxu0 %v1854
      %v3586 = vpop.f32.mrb[0].mxu0
      %v3587 = vadd.f32 0.0, %v3586
      %v3588 = vpop.f32.mrb[0].mxu0
      %v3589 = vpop.f32.mrb[0].mxu0
      %v3590 = vadd.f32 0.0, %v3589
      %v3591 = vpop.f32.mrb[0].mxu0
      %3592 = vdwg.mxu0
      %v3593 = vld [vmem:[%s323] sm:$0x7]
      %v3594 = vlaneseq
      %v3595 = vshrl.u32 %v3594, 7
      %v3596 = vsub.s32 0, %v3595
      %v3597 = vrot.slane %v3593, %v3596
      %v3598 = vadd.f32 %v2050, %v3597
      %v3599 = vadd.f32 %v2054, %v3597
      %v3600 = vadd.f32 %v2060, %v3597
      %v3601 = vadd.f32 %v2064, %v3597
      %v3602 = vadd.f32 %v2070, %v3597
      %v3603 = vadd.f32 %v2074, %v3597
      %v3604 = vadd.f32 %v2080, %v3597
      %v3605 = vadd.f32 %v2084, %v3597
      %v3606 = vadd.f32 %v2090, %v3597
      %v3607 = vadd.f32 %v2094, %v3597
      %v3608 = vadd.f32 %v2100, %v3597
      %v3609 = vadd.f32 %v2104, %v3597
      %v3610 = vadd.f32 %v2110, %v3597
      %v3611 = vadd.f32 %v2114, %v3597
      %v3612 = vadd.f32 %v2120, %v3597
      %v3613 = vadd.f32 %v2124, %v3597
      %v3614 = vadd.f32 %v2130, %v3597
      %v3615 = vadd.f32 %v2134, %v3597
      %v3616 = vadd.f32 %v2140, %v3597
      %v3617 = vadd.f32 %v2144, %v3597
      %v3618 = vadd.f32 %v2150, %v3597
      %v3619 = vadd.f32 %v2154, %v3597
      %v3620 = vadd.f32 %v2160, %v3597
      %v3621 = vadd.f32 %v2164, %v3597
      %v3622 = vadd.f32 %v2170, %v3597
      %v3623 = vadd.f32 %v2174, %v3597
      %v3624 = vadd.f32 %v2180, %v3597
      %v3625 = vadd.f32 %v2184, %v3597
      %v3626 = vadd.f32 %v2190, %v3597
      %v3627 = vadd.f32 %v2194, %v3597
      %v3628 = vadd.f32 %v2200, %v3597
      %v3629 = vadd.f32 %v2204, %v3597
      %v3630 = vadd.f32 %v2210, %v3597
      %v3631 = vadd.f32 %v2214, %v3597
      %v3632 = vadd.f32 %v2220, %v3597
      %v3633 = vadd.f32 %v2224, %v3597
      %v3634 = vadd.f32 %v2230, %v3597
      %v3635 = vadd.f32 %v2234, %v3597
      %v3636 = vadd.f32 %v2240, %v3597
      %v3637 = vadd.f32 %v2244, %v3597
      %v3638 = vadd.f32 %v2250, %v3597
      %v3639 = vadd.f32 %v2254, %v3597
      %v3640 = vadd.f32 %v2260, %v3597
      %v3641 = vadd.f32 %v2264, %v3597
      %v3642 = vadd.f32 %v2270, %v3597
      %v3643 = vadd.f32 %v2274, %v3597
      %v3644 = vadd.f32 %v2280, %v3597
      %v3645 = vadd.f32 %v2284, %v3597
      %v3646 = vadd.f32 %v2290, %v3597
      %v3647 = vadd.f32 %v2294, %v3597
      %v3648 = vadd.f32 %v2300, %v3597
      %v3649 = vadd.f32 %v2304, %v3597
      %v3650 = vadd.f32 %v2310, %v3597
      %v3651 = vadd.f32 %v2314, %v3597
      %v3652 = vadd.f32 %v2320, %v3597
      %v3653 = vadd.f32 %v2324, %v3597
      %v3654 = vadd.f32 %v2330, %v3597
      %v3655 = vadd.f32 %v2334, %v3597
      %v3656 = vadd.f32 %v2340, %v3597
      %v3657 = vadd.f32 %v2344, %v3597
      %v3658 = vadd.f32 %v2350, %v3597
      %v3659 = vadd.f32 %v2354, %v3597
      %v3660 = vadd.f32 %v2360, %v3597
      %v3661 = vadd.f32 %v2364, %v3597
      %v3662 = vadd.f32 %v2370, %v3597
      %v3663 = vadd.f32 %v2374, %v3597
      %v3664 = vadd.f32 %v2380, %v3597
      %v3665 = vadd.f32 %v2384, %v3597
      %v3666 = vadd.f32 %v2390, %v3597
      %v3667 = vadd.f32 %v2394, %v3597
      %v3668 = vadd.f32 %v2400, %v3597
      %v3669 = vadd.f32 %v2404, %v3597
      %v3670 = vadd.f32 %v2410, %v3597
      %v3671 = vadd.f32 %v2414, %v3597
      %v3672 = vadd.f32 %v2420, %v3597
      %v3673 = vadd.f32 %v2424, %v3597
      %v3674 = vadd.f32 %v2430, %v3597
      %v3675 = vadd.f32 %v2434, %v3597
      %v3676 = vadd.f32 %v2440, %v3597
      %v3677 = vadd.f32 %v2444, %v3597
      %v3678 = vadd.f32 %v2450, %v3597
      %v3679 = vadd.f32 %v2454, %v3597
      %v3680 = vadd.f32 %v2460, %v3597
      %v3681 = vadd.f32 %v2464, %v3597
      %v3682 = vadd.f32 %v2470, %v3597
      %v3683 = vadd.f32 %v2474, %v3597
      %v3684 = vadd.f32 %v2480, %v3597
      %v3685 = vadd.f32 %v2484, %v3597
      %v3686 = vadd.f32 %v2490, %v3597
      %v3687 = vadd.f32 %v2494, %v3597
      %v3688 = vadd.f32 %v2500, %v3597
      %v3689 = vadd.f32 %v2504, %v3597
      %v3690 = vadd.f32 %v2510, %v3597
      %v3691 = vadd.f32 %v2514, %v3597
      %v3692 = vadd.f32 %v2520, %v3597
      %v3693 = vadd.f32 %v2524, %v3597
      %v3694 = vadd.f32 %v2530, %v3597
      %v3695 = vadd.f32 %v2534, %v3597
      %v3696 = vadd.f32 %v2540, %v3597
      %v3697 = vadd.f32 %v2544, %v3597
      %v3698 = vadd.f32 %v2550, %v3597
      %v3699 = vadd.f32 %v2554, %v3597
      %v3700 = vadd.f32 %v2560, %v3597
      %v3701 = vadd.f32 %v2564, %v3597
      %v3702 = vadd.f32 %v2570, %v3597
      %v3703 = vadd.f32 %v2574, %v3597
      %v3704 = vadd.f32 %v2580, %v3597
      %v3705 = vadd.f32 %v2584, %v3597
      %v3706 = vadd.f32 %v2590, %v3597
      %v3707 = vadd.f32 %v2594, %v3597
      %v3708 = vadd.f32 %v2600, %v3597
      %v3709 = vadd.f32 %v2604, %v3597
      %v3710 = vadd.f32 %v2610, %v3597
      %v3711 = vadd.f32 %v2614, %v3597
      %v3712 = vadd.f32 %v2620, %v3597
      %v3713 = vadd.f32 %v2624, %v3597
      %v3714 = vadd.f32 %v2630, %v3597
      %v3715 = vadd.f32 %v2634, %v3597
      %v3716 = vadd.f32 %v2640, %v3597
      %v3717 = vadd.f32 %v2644, %v3597
      %v3718 = vadd.f32 %v2650, %v3597
      %v3719 = vadd.f32 %v2654, %v3597
      %v3720 = vadd.f32 %v2660, %v3597
      %v3721 = vadd.f32 %v2664, %v3597
      %v3722 = vadd.f32 %v2670, %v3597
      %v3723 = vadd.f32 %v2674, %v3597
      %v3724 = vadd.f32 %v2680, %v3597
      %v3725 = vadd.f32 %v2684, %v3597
      %v3726 = vadd.f32 %v2690, %v3597
      %v3727 = vadd.f32 %v2694, %v3597
      %v3728 = vadd.f32 %v2700, %v3597
      %v3729 = vadd.f32 %v2704, %v3597
      %v3730 = vadd.f32 %v2710, %v3597
      %v3731 = vadd.f32 %v2714, %v3597
      %v3732 = vadd.f32 %v2720, %v3597
      %v3733 = vadd.f32 %v2724, %v3597
      %v3734 = vadd.f32 %v2730, %v3597
      %v3735 = vadd.f32 %v2734, %v3597
      %v3736 = vadd.f32 %v2740, %v3597
      %v3737 = vadd.f32 %v2744, %v3597
      %v3738 = vadd.f32 %v2750, %v3597
      %v3739 = vadd.f32 %v2754, %v3597
      %v3740 = vadd.f32 %v2760, %v3597
      %v3741 = vadd.f32 %v2764, %v3597
      %v3742 = vadd.f32 %v2770, %v3597
      %v3743 = vadd.f32 %v2774, %v3597
      %v3744 = vadd.f32 %v2780, %v3597
      %v3745 = vadd.f32 %v2784, %v3597
      %v3746 = vadd.f32 %v2790, %v3597
      %v3747 = vadd.f32 %v2794, %v3597
      %v3748 = vadd.f32 %v2800, %v3597
      %v3749 = vadd.f32 %v2804, %v3597
      %v3750 = vadd.f32 %v2810, %v3597
      %v3751 = vadd.f32 %v2814, %v3597
      %v3752 = vadd.f32 %v2820, %v3597
      %v3753 = vadd.f32 %v2824, %v3597
      %v3754 = vadd.f32 %v2830, %v3597
      %v3755 = vadd.f32 %v2834, %v3597
      %v3756 = vadd.f32 %v2840, %v3597
      %v3757 = vadd.f32 %v2844, %v3597
      %v3758 = vadd.f32 %v2850, %v3597
      %v3759 = vadd.f32 %v2854, %v3597
      %v3760 = vadd.f32 %v2860, %v3597
      %v3761 = vadd.f32 %v2864, %v3597
      %v3762 = vadd.f32 %v2870, %v3597
      %v3763 = vadd.f32 %v2874, %v3597
      %v3764 = vadd.f32 %v2880, %v3597
      %v3765 = vadd.f32 %v2884, %v3597
      %v3766 = vmul.f32 %v3598, 0.2
      %v3767 = vmul.f32 %v3599, 0.2
      %v3768 = vmul.f32 %v3600, 0.2
      %v3769 = vmul.f32 %v3601, 0.2
      %v3770 = vmul.f32 %v3602, 0.2
      %v3771 = vmul.f32 %v3603, 0.2
      %v3772 = vmul.f32 %v3604, 0.2
      %v3773 = vmul.f32 %v3605, 0.2
      %v3774 = vmul.f32 %v3606, 0.2
      %v3775 = vmul.f32 %v3607, 0.2
      %v3776 = vmul.f32 %v3608, 0.2
      %v3777 = vmul.f32 %v3609, 0.2
      %v3778 = vmul.f32 %v3610, 0.2
      %v3779 = vmul.f32 %v3611, 0.2
      %v3780 = vmul.f32 %v3612, 0.2
      %v3781 = vmul.f32 %v3613, 0.2
      %v3782 = vmul.f32 %v3614, 0.2
      %v3783 = vmul.f32 %v3615, 0.2
      %v3784 = vmul.f32 %v3616, 0.2
      %v3785 = vmul.f32 %v3617, 0.2
      %v3786 = vmul.f32 %v3618, 0.2
      %v3787 = vmul.f32 %v3619, 0.2
      %v3788 = vmul.f32 %v3620, 0.2
      %v3789 = vmul.f32 %v3621, 0.2
      %v3790 = vmul.f32 %v3622, 0.2
      %v3791 = vmul.f32 %v3623, 0.2
      %v3792 = vmul.f32 %v3624, 0.2
      %v3793 = vmul.f32 %v3625, 0.2
      %v3794 = vmul.f32 %v3626, 0.2
      %v3795 = vmul.f32 %v3627, 0.2
      %v3796 = vmul.f32 %v3628, 0.2
      %v3797 = vmul.f32 %v3629, 0.2
      %v3798 = vmul.f32 %v3630, 0.2
      %v3799 = vmul.f32 %v3631, 0.2
      %v3800 = vmul.f32 %v3632, 0.2
      %v3801 = vmul.f32 %v3633, 0.2
      %v3802 = vmul.f32 %v3634, 0.2
      %v3803 = vmul.f32 %v3635, 0.2
      %v3804 = vmul.f32 %v3636, 0.2
      %v3805 = vmul.f32 %v3637, 0.2
      %v3806 = vmul.f32 %v3638, 0.2
      %v3807 = vmul.f32 %v3639, 0.2
      %v3808 = vmul.f32 %v3640, 0.2
      %v3809 = vmul.f32 %v3641, 0.2
      %v3810 = vmul.f32 %v3642, 0.2
      %v3811 = vmul.f32 %v3643, 0.2
      %v3812 = vmul.f32 %v3644, 0.2
      %v3813 = vmul.f32 %v3645, 0.2
      %v3814 = vmul.f32 %v3646, 0.2
      %v3815 = vmul.f32 %v3647, 0.2
      %v3816 = vmul.f32 %v3648, 0.2
      %v3817 = vmul.f32 %v3649, 0.2
      %v3818 = vmul.f32 %v3650, 0.2
      %v3819 = vmul.f32 %v3651, 0.2
      %v3820 = vmul.f32 %v3652, 0.2
      %v3821 = vmul.f32 %v3653, 0.2
      %v3822 = vmul.f32 %v3654, 0.2
      %v3823 = vmul.f32 %v3655, 0.2
      %v3824 = vmul.f32 %v3656, 0.2
      %v3825 = vmul.f32 %v3657, 0.2
      %v3826 = vmul.f32 %v3658, 0.2
      %v3827 = vmul.f32 %v3659, 0.2
      %v3828 = vmul.f32 %v3660, 0.2
      %v3829 = vmul.f32 %v3661, 0.2
      %v3830 = vmul.f32 %v3662, 0.2
      %v3831 = vmul.f32 %v3663, 0.2
      %v3832 = vmul.f32 %v3664, 0.2
      %v3833 = vmul.f32 %v3665, 0.2
      %v3834 = vmul.f32 %v3666, 0.2
      %v3835 = vmul.f32 %v3667, 0.2
      %v3836 = vmul.f32 %v3668, 0.2
      %v3837 = vmul.f32 %v3669, 0.2
      %v3838 = vmul.f32 %v3670, 0.2
      %v3839 = vmul.f32 %v3671, 0.2
      %v3840 = vmul.f32 %v3672, 0.2
      %v3841 = vmul.f32 %v3673, 0.2
      %v3842 = vmul.f32 %v3674, 0.2
      %v3843 = vmul.f32 %v3675, 0.2
      %v3844 = vmul.f32 %v3676, 0.2
      %v3845 = vmul.f32 %v3677, 0.2
      %v3846 = vmul.f32 %v3678, 0.2
      %v3847 = vmul.f32 %v3679, 0.2
      %v3848 = vmul.f32 %v3680, 0.2
      %v3849 = vmul.f32 %v3681, 0.2
      %v3850 = vmul.f32 %v3682, 0.2
      %v3851 = vmul.f32 %v3683, 0.2
      %v3852 = vmul.f32 %v3684, 0.2
      %v3853 = vmul.f32 %v3685, 0.2
      %v3854 = vmul.f32 %v3686, 0.2
      %v3855 = vmul.f32 %v3687, 0.2
      %v3856 = vmul.f32 %v3688, 0.2
      %v3857 = vmul.f32 %v3689, 0.2
      %v3858 = vmul.f32 %v3690, 0.2
      %v3859 = vmul.f32 %v3691, 0.2
      %v3860 = vmul.f32 %v3692, 0.2
      %v3861 = vmul.f32 %v3693, 0.2
      %v3862 = vmul.f32 %v3694, 0.2
      %v3863 = vmul.f32 %v3695, 0.2
      %v3864 = vmul.f32 %v3696, 0.2
      %v3865 = vmul.f32 %v3697, 0.2
      %v3866 = vmul.f32 %v3698, 0.2
      %v3867 = vmul.f32 %v3699, 0.2
      %v3868 = vmul.f32 %v3700, 0.2
      %v3869 = vmul.f32 %v3701, 0.2
      %v3870 = vmul.f32 %v3702, 0.2
      %v3871 = vmul.f32 %v3703, 0.2
      %v3872 = vmul.f32 %v3704, 0.2
      %v3873 = vmul.f32 %v3705, 0.2
      %v3874 = vmul.f32 %v3706, 0.2
      %v3875 = vmul.f32 %v3707, 0.2
      %v3876 = vmul.f32 %v3708, 0.2
      %v3877 = vmul.f32 %v3709, 0.2
      %v3878 = vmul.f32 %v3710, 0.2
      %v3879 = vmul.f32 %v3711, 0.2
      %v3880 = vmul.f32 %v3712, 0.2
      %v3881 = vmul.f32 %v3713, 0.2
      %v3882 = vmul.f32 %v3714, 0.2
      %v3883 = vmul.f32 %v3715, 0.2
      %v3884 = vmul.f32 %v3716, 0.2
      %v3885 = vmul.f32 %v3717, 0.2
      %v3886 = vmul.f32 %v3718, 0.2
      %v3887 = vmul.f32 %v3719, 0.2
      %v3888 = vmul.f32 %v3720, 0.2
      %v3889 = vmul.f32 %v3721, 0.2
      %v3890 = vmul.f32 %v3722, 0.2
      %v3891 = vmul.f32 %v3723, 0.2
      %v3892 = vmul.f32 %v3724, 0.2
      %v3893 = vmul.f32 %v3725, 0.2
      %v3894 = vmul.f32 %v3726, 0.2
      %v3895 = vmul.f32 %v3727, 0.2
      %v3896 = vmul.f32 %v3728, 0.2
      %v3897 = vmul.f32 %v3729, 0.2
      %v3898 = vmul.f32 %v3730, 0.2
      %v3899 = vmul.f32 %v3731, 0.2
      %v3900 = vmul.f32 %v3732, 0.2
      %v3901 = vmul.f32 %v3733, 0.2
      %v3902 = vmul.f32 %v3734, 0.2
      %v3903 = vmul.f32 %v3735, 0.2
      %v3904 = vmul.f32 %v3736, 0.2
      %v3905 = vmul.f32 %v3737, 0.2
      %v3906 = vmul.f32 %v3738, 0.2
      %v3907 = vmul.f32 %v3739, 0.2
      %v3908 = vmul.f32 %v3740, 0.2
      %v3909 = vmul.f32 %v3741, 0.2
      %v3910 = vmul.f32 %v3742, 0.2
      %v3911 = vmul.f32 %v3743, 0.2
      %v3912 = vmul.f32 %v3744, 0.2
      %v3913 = vmul.f32 %v3745, 0.2
      %v3914 = vmul.f32 %v3746, 0.2
      %v3915 = vmul.f32 %v3747, 0.2
      %v3916 = vmul.f32 %v3748, 0.2
      %v3917 = vmul.f32 %v3749, 0.2
      %v3918 = vmul.f32 %v3750, 0.2
      %v3919 = vmul.f32 %v3751, 0.2
      %v3920 = vmul.f32 %v3752, 0.2
      %v3921 = vmul.f32 %v3753, 0.2
      %v3922 = vmul.f32 %v3754, 0.2
      %v3923 = vmul.f32 %v3755, 0.2
      %v3924 = vmul.f32 %v3756, 0.2
      %v3925 = vmul.f32 %v3757, 0.2
      %v3926 = vmul.f32 %v3758, 0.2
      %v3927 = vmul.f32 %v3759, 0.2
      %v3928 = vmul.f32 %v3760, 0.2
      %v3929 = vmul.f32 %v3761, 0.2
      %v3930 = vmul.f32 %v3762, 0.2
      %v3931 = vmul.f32 %v3763, 0.2
      %v3932 = vmul.f32 %v3764, 0.2
      %v3933 = vmul.f32 %v3765, 0.2
      %v3934 = vmax.f32 %v3598, %v3766
      %v3935 = vmax.f32 %v3599, %v3767
      %v3936 = vmax.f32 %v3600, %v3768
      %v3937 = vmax.f32 %v3601, %v3769
      %v3938 = vmax.f32 %v3602, %v3770
      %v3939 = vmax.f32 %v3603, %v3771
      %v3940 = vmax.f32 %v3604, %v3772
      %v3941 = vmax.f32 %v3605, %v3773
      %v3942 = vmax.f32 %v3606, %v3774
      %v3943 = vmax.f32 %v3607, %v3775
      %v3944 = vmax.f32 %v3608, %v3776
      %v3945 = vmax.f32 %v3609, %v3777
      %v3946 = vmax.f32 %v3610, %v3778
      %v3947 = vmax.f32 %v3611, %v3779
      %v3948 = vmax.f32 %v3612, %v3780
      %v3949 = vmax.f32 %v3613, %v3781
      %v3950 = vmax.f32 %v3614, %v3782
      %v3951 = vmax.f32 %v3615, %v3783
      %v3952 = vmax.f32 %v3616, %v3784
      %v3953 = vmax.f32 %v3617, %v3785
      %v3954 = vmax.f32 %v3618, %v3786
      %v3955 = vmax.f32 %v3619, %v3787
      %v3956 = vmax.f32 %v3620, %v3788
      %v3957 = vmax.f32 %v3621, %v3789
      %v3958 = vmax.f32 %v3622, %v3790
      %v3959 = vmax.f32 %v3623, %v3791
      %v3960 = vmax.f32 %v3624, %v3792
      %v3961 = vmax.f32 %v3625, %v3793
      %v3962 = vmax.f32 %v3626, %v3794
      %v3963 = vmax.f32 %v3627, %v3795
      %v3964 = vmax.f32 %v3628, %v3796
      %v3965 = vmax.f32 %v3629, %v3797
      %v3966 = vmax.f32 %v3630, %v3798
      %v3967 = vmax.f32 %v3631, %v3799
      %v3968 = vmax.f32 %v3632, %v3800
      %v3969 = vmax.f32 %v3633, %v3801
      %v3970 = vmax.f32 %v3634, %v3802
      %v3971 = vmax.f32 %v3635, %v3803
      %v3972 = vmax.f32 %v3636, %v3804
      %v3973 = vmax.f32 %v3637, %v3805
      %v3974 = vmax.f32 %v3638, %v3806
      %v3975 = vmax.f32 %v3639, %v3807
      %v3976 = vmax.f32 %v3640, %v3808
      %v3977 = vmax.f32 %v3641, %v3809
      %v3978 = vmax.f32 %v3642, %v3810
      %v3979 = vmax.f32 %v3643, %v3811
      %v3980 = vmax.f32 %v3644, %v3812
      %v3981 = vmax.f32 %v3645, %v3813
      %v3982 = vmax.f32 %v3646, %v3814
      %v3983 = vmax.f32 %v3647, %v3815
      %v3984 = vmax.f32 %v3648, %v3816
      %v3985 = vmax.f32 %v3649, %v3817
      %v3986 = vmax.f32 %v3650, %v3818
      %v3987 = vmax.f32 %v3651, %v3819
      %v3988 = vmax.f32 %v3652, %v3820
      %v3989 = vmax.f32 %v3653, %v3821
      %v3990 = vmax.f32 %v3654, %v3822
      %v3991 = vmax.f32 %v3655, %v3823
      %v3992 = vmax.f32 %v3656, %v3824
      %v3993 = vmax.f32 %v3657, %v3825
      %v3994 = vmax.f32 %v3658, %v3826
      %v3995 = vmax.f32 %v3659, %v3827
      %v3996 = vmax.f32 %v3660, %v3828
      %v3997 = vmax.f32 %v3661, %v3829
      %v3998 = vmax.f32 %v3662, %v3830
      %v3999 = vmax.f32 %v3663, %v3831
      %v4000 = vmax.f32 %v3664, %v3832
      %v4001 = vmax.f32 %v3665, %v3833
      %v4002 = vmax.f32 %v3666, %v3834
      %v4003 = vmax.f32 %v3667, %v3835
      %v4004 = vmax.f32 %v3668, %v3836
      %v4005 = vmax.f32 %v3669, %v3837
      %v4006 = vmax.f32 %v3670, %v3838
      %v4007 = vmax.f32 %v3671, %v3839
      %v4008 = vmax.f32 %v3672, %v3840
      %v4009 = vmax.f32 %v3673, %v3841
      %v4010 = vmax.f32 %v3674, %v3842
      %v4011 = vmax.f32 %v3675, %v3843
      %v4012 = vmax.f32 %v3676, %v3844
      %v4013 = vmax.f32 %v3677, %v3845
      %v4014 = vmax.f32 %v3678, %v3846
      %v4015 = vmax.f32 %v3679, %v3847
      %v4016 = vmax.f32 %v3680, %v3848
      %v4017 = vmax.f32 %v3681, %v3849
      %v4018 = vmax.f32 %v3682, %v3850
      %v4019 = vmax.f32 %v3683, %v3851
      %v4020 = vmax.f32 %v3684, %v3852
      %v4021 = vmax.f32 %v3685, %v3853
      %v4022 = vmax.f32 %v3686, %v3854
      %v4023 = vmax.f32 %v3687, %v3855
      %v4024 = vmax.f32 %v3688, %v3856
      %v4025 = vmax.f32 %v3689, %v3857
      %v4026 = vmax.f32 %v3690, %v3858
      %v4027 = vmax.f32 %v3691, %v3859
      %v4028 = vmax.f32 %v3692, %v3860
      %v4029 = vmax.f32 %v3693, %v3861
      %v4030 = vmax.f32 %v3694, %v3862
      %v4031 = vmax.f32 %v3695, %v3863
      %v4032 = vmax.f32 %v3696, %v3864
      %v4033 = vmax.f32 %v3697, %v3865
      %v4034 = vmax.f32 %v3698, %v3866
      %v4035 = vmax.f32 %v3699, %v3867
      %v4036 = vmax.f32 %v3700, %v3868
      %v4037 = vmax.f32 %v3701, %v3869
      %v4038 = vmax.f32 %v3702, %v3870
      %v4039 = vmax.f32 %v3703, %v3871
      %v4040 = vmax.f32 %v3704, %v3872
      %v4041 = vmax.f32 %v3705, %v3873
      %v4042 = vmax.f32 %v3706, %v3874
      %v4043 = vmax.f32 %v3707, %v3875
      %v4044 = vmax.f32 %v3708, %v3876
      %v4045 = vmax.f32 %v3709, %v3877
      %v4046 = vmax.f32 %v3710, %v3878
      %v4047 = vmax.f32 %v3711, %v3879
      %v4048 = vmax.f32 %v3712, %v3880
      %v4049 = vmax.f32 %v3713, %v3881
      %v4050 = vmax.f32 %v3714, %v3882
      %v4051 = vmax.f32 %v3715, %v3883
      %v4052 = vmax.f32 %v3716, %v3884
      %v4053 = vmax.f32 %v3717, %v3885
      %v4054 = vmax.f32 %v3718, %v3886
      %v4055 = vmax.f32 %v3719, %v3887
      %v4056 = vmax.f32 %v3720, %v3888
      %v4057 = vmax.f32 %v3721, %v3889
      %v4058 = vmax.f32 %v3722, %v3890
      %v4059 = vmax.f32 %v3723, %v3891
      %v4060 = vmax.f32 %v3724, %v3892
      %v4061 = vmax.f32 %v3725, %v3893
      %v4062 = vmax.f32 %v3726, %v3894
      %v4063 = vmax.f32 %v3727, %v3895
      %v4064 = vmax.f32 %v3728, %v3896
      %v4065 = vmax.f32 %v3729, %v3897
      %v4066 = vmax.f32 %v3730, %v3898
      %v4067 = vmax.f32 %v3731, %v3899
      %v4068 = vmax.f32 %v3732, %v3900
      %v4069 = vmax.f32 %v3733, %v3901
      %v4070 = vmax.f32 %v3734, %v3902
      %v4071 = vmax.f32 %v3735, %v3903
      %v4072 = vmax.f32 %v3736, %v3904
      %v4073 = vmax.f32 %v3737, %v3905
      %v4074 = vmax.f32 %v3738, %v3906
      %v4075 = vmax.f32 %v3739, %v3907
      %v4076 = vmax.f32 %v3740, %v3908
      %v4077 = vmax.f32 %v3741, %v3909
      %v4078 = vmax.f32 %v3742, %v3910
      %v4079 = vmax.f32 %v3743, %v3911
      %v4080 = vmax.f32 %v3744, %v3912
      %v4081 = vmax.f32 %v3745, %v3913
      %v4082 = vmax.f32 %v3746, %v3914
      %v4083 = vmax.f32 %v3747, %v3915
      %v4084 = vmax.f32 %v3748, %v3916
      %v4085 = vmax.f32 %v3749, %v3917
      %v4086 = vmax.f32 %v3750, %v3918
      %v4087 = vmax.f32 %v3751, %v3919
      %v4088 = vmax.f32 %v3752, %v3920
      %v4089 = vmax.f32 %v3753, %v3921
      %v4090 = vmax.f32 %v3754, %v3922
      %v4091 = vmax.f32 %v3755, %v3923
      %v4092 = vmax.f32 %v3756, %v3924
      %v4093 = vmax.f32 %v3757, %v3925
      %v4094 = vmax.f32 %v3758, %v3926
      %v4095 = vmax.f32 %v3759, %v3927
      %v4096 = vmax.f32 %v3760, %v3928
      %v4097 = vmax.f32 %v3761, %v3929
      %v4098 = vmax.f32 %v3762, %v3930
      %v4099 = vmax.f32 %v3763, %v3931
      %v4100 = vmax.f32 %v3764, %v3932
      %v4101 = vmax.f32 %v3765, %v3933
      %v4102 = vpack.c.bf16 %v3935, %v3934
      %v4103 = vpack.c.bf16 %v3937, %v3936
      %v4104 = vpack.c.bf16 %v3939, %v3938
      %v4105 = vpack.c.bf16 %v3941, %v3940
      %v4106 = vpack.c.bf16 %v3943, %v3942
      %v4107 = vpack.c.bf16 %v3945, %v3944
      %v4108 = vpack.c.bf16 %v3947, %v3946
      %v4109 = vpack.c.bf16 %v3949, %v3948
      %v4110 = vpack.c.bf16 %v3951, %v3950
      %v4111 = vpack.c.bf16 %v3953, %v3952
      %v4112 = vpack.c.bf16 %v3955, %v3954
      %v4113 = vpack.c.bf16 %v3957, %v3956
      %v4114 = vpack.c.bf16 %v3959, %v3958
      %v4115 = vpack.c.bf16 %v3961, %v3960
      %v4116 = vpack.c.bf16 %v3963, %v3962
      %v4117 = vpack.c.bf16 %v3965, %v3964
      %v4118 = vpack.c.bf16 %v3967, %v3966
      %v4119 = vpack.c.bf16 %v3969, %v3968
      %v4120 = vpack.c.bf16 %v3971, %v3970
      %v4121 = vpack.c.bf16 %v3973, %v3972
      %v4122 = vpack.c.bf16 %v3975, %v3974
      %v4123 = vpack.c.bf16 %v3977, %v3976
      %v4124 = vpack.c.bf16 %v3979, %v3978
      %v4125 = vpack.c.bf16 %v3981, %v3980
      %v4126 = vpack.c.bf16 %v3983, %v3982
      %v4127 = vpack.c.bf16 %v3985, %v3984
      %v4128 = vpack.c.bf16 %v3987, %v3986
      %v4129 = vpack.c.bf16 %v3989, %v3988
      %v4130 = vpack.c.bf16 %v3991, %v3990
      %v4131 = vpack.c.bf16 %v3993, %v3992
      %v4132 = vpack.c.bf16 %v3995, %v3994
      %v4133 = vpack.c.bf16 %v3997, %v3996
      %v4134 = vpack.c.bf16 %v3999, %v3998
      %v4135 = vpack.c.bf16 %v4001, %v4000
      %v4136 = vpack.c.bf16 %v4003, %v4002
      %v4137 = vpack.c.bf16 %v4005, %v4004
      %v4138 = vpack.c.bf16 %v4007, %v4006
      %v4139 = vpack.c.bf16 %v4009, %v4008
      %v4140 = vpack.c.bf16 %v4011, %v4010
      %v4141 = vpack.c.bf16 %v4013, %v4012
      %v4142 = vpack.c.bf16 %v4015, %v4014
      %v4143 = vpack.c.bf16 %v4017, %v4016
      %v4144 = vpack.c.bf16 %v4019, %v4018
      %v4145 = vpack.c.bf16 %v4021, %v4020
      %v4146 = vpack.c.bf16 %v4023, %v4022
      %v4147 = vpack.c.bf16 %v4025, %v4024
      %v4148 = vpack.c.bf16 %v4027, %v4026
      %v4149 = vpack.c.bf16 %v4029, %v4028
      %v4150 = vpack.c.bf16 %v4031, %v4030
      %v4151 = vpack.c.bf16 %v4033, %v4032
      %v4152 = vpack.c.bf16 %v4035, %v4034
      %v4153 = vpack.c.bf16 %v4037, %v4036
      %v4154 = vpack.c.bf16 %v4039, %v4038
      %v4155 = vpack.c.bf16 %v4041, %v4040
      %v4156 = vpack.c.bf16 %v4043, %v4042
      %v4157 = vpack.c.bf16 %v4045, %v4044
      %v4158 = vpack.c.bf16 %v4047, %v4046
      %v4159 = vpack.c.bf16 %v4049, %v4048
      %v4160 = vpack.c.bf16 %v4051, %v4050
      %v4161 = vpack.c.bf16 %v4053, %v4052
      %v4162 = vpack.c.bf16 %v4055, %v4054
      %v4163 = vpack.c.bf16 %v4057, %v4056
      %v4164 = vpack.c.bf16 %v4059, %v4058
      %v4165 = vpack.c.bf16 %v4061, %v4060
      %v4166 = vpack.c.bf16 %v4063, %v4062
      %v4167 = vpack.c.bf16 %v4065, %v4064
      %v4168 = vpack.c.bf16 %v4067, %v4066
      %v4169 = vpack.c.bf16 %v4069, %v4068
      %v4170 = vpack.c.bf16 %v4071, %v4070
      %v4171 = vpack.c.bf16 %v4073, %v4072
      %v4172 = vpack.c.bf16 %v4075, %v4074
      %v4173 = vpack.c.bf16 %v4077, %v4076
      %v4174 = vpack.c.bf16 %v4079, %v4078
      %v4175 = vpack.c.bf16 %v4081, %v4080
      %v4176 = vpack.c.bf16 %v4083, %v4082
      %v4177 = vpack.c.bf16 %v4085, %v4084
      %v4178 = vpack.c.bf16 %v4087, %v4086
      %v4179 = vpack.c.bf16 %v4089, %v4088
      %v4180 = vpack.c.bf16 %v4091, %v4090
      %v4181 = vpack.c.bf16 %v4093, %v4092
      %v4182 = vpack.c.bf16 %v4095, %v4094
      %v4183 = vpack.c.bf16 %v4097, %v4096
      %v4184 = vpack.c.bf16 %v4099, %v4098
      %v4185 = vpack.c.bf16 %v4101, %v4100
      %v4186 = vld [vmem:[%s314] sm:$0xf]
      %v4187 = vld [vmem:[%s314 + $0x4] sm:$0xf]
      %v4188 = vld [vmem:[%s314 + $0x8] sm:$0xf]
      %v4189 = vld [vmem:[%s314 + $0xc] sm:$0xf]
      %v4190 = vld [vmem:[%s314 + $0x10] sm:$0xf]
      %v4191 = vld [vmem:[%s314 + $0x14] sm:$0xf]
      %v4192 = vld [vmem:[%s314 + $0x18] sm:$0xf]
      %v4193 = vld [vmem:[%s314 + $0x1c] sm:$0xf]
      %v4194 = vld [vmem:[%s314 + $0x20] sm:$0xf]
      %v4195 = vld [vmem:[%s314 + $0x24] sm:$0xf]
      %v4196 = vld [vmem:[%s314 + $0x28] sm:$0xf]
      %v4197 = vld [vmem:[%s314 + $0x2c] sm:$0xf]
      %v4198 = vld [vmem:[%s314 + $0x30] sm:$0xf]
      %v4199 = vld [vmem:[%s314 + $0x34] sm:$0xf]
      %v4200 = vld [vmem:[%s314 + $0x38] sm:$0xf]
      %v4201 = vld [vmem:[%s314 + $0x3c] sm:$0xf]
      %v4218 = vunpack.c.l.b16 %v4186
      %v4219 = vunpack.c.l.b16 %v4187
      %v4220 = vunpack.c.l.b16 %v4188
      %v4221 = vunpack.c.l.b16 %v4189
      %v4222 = vunpack.c.l.b16 %v4190
      %v4223 = vunpack.c.l.b16 %v4191
      %v4224 = vunpack.c.l.b16 %v4192
      %v4225 = vunpack.c.l.b16 %v4193
      %v4226 = vunpack.c.l.b16 %v4194
      %v4227 = vunpack.c.l.b16 %v4195
      %v4228 = vunpack.c.l.b16 %v4196
      %v4229 = vunpack.c.l.b16 %v4197
      %v4230 = vunpack.c.l.b16 %v4198
      %v4231 = vunpack.c.l.b16 %v4199
      %v4232 = vunpack.c.l.b16 %v4200
      %v4233 = vunpack.c.l.b16 %v4201
      %v4234 = vpack.c.b16 %v4219, %v4218
      %v4235 = vpack.c.b16 %v4221, %v4220
      %v4236 = vpack.c.b16 %v4223, %v4222
      %v4237 = vpack.c.b16 %v4225, %v4224
      %v4238 = vpack.c.b16 %v4227, %v4226
      %v4239 = vpack.c.b16 %v4229, %v4228
      %v4240 = vpack.c.b16 %v4231, %v4230
      %v4241 = vpack.c.b16 %v4233, %v4232
      %4250 = vmatprep.subr.bf16.mxu0 0
      %4251 = vmatpush1.bf16.msra.mxu0 %v4234
      %4252 = vmatprep.subr.bf16.mxu0 0
      %4253 = vmatpush1.bf16.msra.mxu0 %v4235
      %4254 = vmatprep.subr.bf16.mxu0 0
      %4255 = vmatpush1.bf16.msra.mxu0 %v4236
      %4256 = vmatprep.subr.bf16.mxu0 0
      %4257 = vmatpush1.bf16.msra.mxu0 %v4237
      %4258 = vmatprep.subr.bf16.mxu0 0
      %4259 = vmatpush1.bf16.msra.mxu0 %v4238
      %4260 = vmatprep.subr.bf16.mxu0 0
      %4261 = vmatpush1.bf16.msra.mxu0 %v4239
      %4262 = vmatprep.subr.bf16.mxu0 0
      %4263 = vmatpush1.bf16.msra.mxu0 %v4240
      %4264 = vmatprep.subr.bf16.mxu0 0
      %4265 = vmatpush1.bf16.msra.mxu0 %v4241
      %4266 = vmatprep.subr.bf16.mxu0 0
      %4267 = vmatpush1.bf16.msra.mxu0 0
      %4268 = vmatprep.subr.bf16.mxu0 0
      %4269 = vmatpush1.bf16.msra.mxu0 0
      %4270 = vmatprep.subr.bf16.mxu0 0
      %4271 = vmatpush1.bf16.msra.mxu0 0
      %4272 = vmatprep.subr.bf16.mxu0 0
      %4273 = vmatpush1.bf16.msra.mxu0 0
      %4274 = vmatprep.subr.bf16.mxu0 0
      %4275 = vmatpush1.bf16.msra.mxu0 0
      %4276 = vmatprep.subr.bf16.mxu0 0
      %4277 = vmatpush1.bf16.msra.mxu0 0
      %4278 = vmatprep.subr.bf16.mxu0 0
      %4279 = vmatpush1.bf16.msra.mxu0 0
      %4280 = vmatprep.subr.bf16.mxu0 0
      %4281 = vmatpush1.bf16.msra.mxu0 0
      %4282 = vmatprep.mubr.bf16.mxu0 0
      %4283 = vmatmul.mubr.bf16.gmra.mrb[0].mxu0 %v4102
      %v4284 = vpop.f32.mrb[0].mxu0
      %v4285 = vadd.f32 %v2052, %v4284
      %v4286 = vpop.f32.mrb[0].mxu0
      %v4287 = vpop.f32.mrb[0].mxu0
      %v4288 = vadd.f32 %v2056, %v4287
      %v4289 = vpop.f32.mrb[0].mxu0
      %4290 = vmatprep.mubr.bf16.mxu0 0
      %4291 = vmatmul.mubr.bf16.gmra.mrb[0].mxu0 %v4103
      %v4292 = vpop.f32.mrb[0].mxu0
      %v4293 = vadd.f32 %v2062, %v4292
      %v4294 = vpop.f32.mrb[0].mxu0
      %v4295 = vpop.f32.mrb[0].mxu0
      %v4296 = vadd.f32 %v2066, %v4295
      %v4297 = vpop.f32.mrb[0].mxu0
      %4298 = vmatprep.mubr.bf16.mxu0 0
      %4299 = vmatmul.mubr.bf16.gmra.mrb[0].mxu0 %v4104
      %v4300 = vpop.f32.mrb[0].mxu0
      %v4301 = vadd.f32 %v2072, %v4300
      %v4302 = vpop.f32.mrb[0].mxu0
      %v4303 = vpop.f32.mrb[0].mxu0
      %v4304 = vadd.f32 %v2076, %v4303
      %v4305 = vpop.f32.mrb[0].mxu0
      %4306 = vmatprep.mubr.bf16.mxu0 0
      %4307 = vmatmul.mubr.bf16.gmra.mrb[0].mxu0 %v4105
      %v4308 = vpop.f32.mrb[0].mxu0
      %v4309 = vadd.f32 %v2082, %v4308
      %v4310 = vpop.f32.mrb[0].mxu0
      %v4311 = vpop.f32.mrb[0].mxu0
      %v4312 = vadd.f32 %v2086, %v4311
      %v4313 = vpop.f32.mrb[0].mxu0
      %4314 = vmatprep.mubr.bf16.mxu0 0
      %4315 = vmatmul.mubr.bf16.gmra.mrb[0].mxu0 %v4106
      %v4316 = vpop.f32.mrb[0].mxu0
      %v4317 = vadd.f32 %v2092, %v4316
      %v4318 = vpop.f32.mrb[0].mxu0
      %v4319 = vpop.f32.mrb[0].mxu0
      %v4320 = vadd.f32 %v2096, %v4319
      %v4321 = vpop.f32.mrb[0].mxu0
      %4322 = vmatprep.mubr.bf16.mxu0 0
      %4323 = vmatmul.mubr.bf16.gmra.mrb[0].mxu0 %v4107
      %v4324 = vpop.f32.mrb[0].mxu0
      %v4325 = vadd.f32 %v2102, %v4324
      %v4326 = vpop.f32.mrb[0].mxu0
      %v4327 = vpop.f32.mrb[0].mxu0
      %v4328 = vadd.f32 %v2106, %v4327
      %v4329 = vpop.f32.mrb[0].mxu0
      %4330 = vmatprep.mubr.bf16.mxu0 0
      %4331 = vmatmul.mubr.bf16.gmra.mrb[0].mxu0 %v4108
      %v4332 = vpop.f32.mrb[0].mxu0
      %v4333 = vadd.f32 %v2112, %v4332
      %v4334 = vpop.f32.mrb[0].mxu0
      %v4335 = vpop.f32.mrb[0].mxu0
      %v4336 = vadd.f32 %v2116, %v4335
      %v4337 = vpop.f32.mrb[0].mxu0
      %4338 = vmatprep.mubr.bf16.mxu0 0
      %4339 = vmatmul.mubr.bf16.gmra.mrb[0].mxu0 %v4109
      %v4340 = vpop.f32.mrb[0].mxu0
      %v4341 = vadd.f32 %v2122, %v4340
      %v4342 = vpop.f32.mrb[0].mxu0
      %v4343 = vpop.f32.mrb[0].mxu0
      %v4344 = vadd.f32 %v2126, %v4343
      %v4345 = vpop.f32.mrb[0].mxu0
      %4346 = vmatprep.mubr.bf16.mxu0 0
      %4347 = vmatmul.mubr.bf16.gmra.mrb[0].mxu0 %v4110
      %v4348 = vpop.f32.mrb[0].mxu0
      %v4349 = vadd.f32 %v2132, %v4348
      %v4350 = vpop.f32.mrb[0].mxu0
      %v4351 = vpop.f32.mrb[0].mxu0
      %v4352 = vadd.f32 %v2136, %v4351
      %v4353 = vpop.f32.mrb[0].mxu0
      %4354 = vmatprep.mubr.bf16.mxu0 0
      %4355 = vmatmul.mubr.bf16.gmra.mrb[0].mxu0 %v4111
      %v4356 = vpop.f32.mrb[0].mxu0
      %v4357 = vadd.f32 %v2142, %v4356
      %v4358 = vpop.f32.mrb[0].mxu0
      %v4359 = vpop.f32.mrb[0].mxu0
      %v4360 = vadd.f32 %v2146, %v4359
      %v4361 = vpop.f32.mrb[0].mxu0
      %4362 = vmatprep.mubr.bf16.mxu0 0
      %4363 = vmatmul.mubr.bf16.gmra.mrb[0].mxu0 %v4112
      %v4364 = vpop.f32.mrb[0].mxu0
      %v4365 = vadd.f32 %v2152, %v4364
      %v4366 = vpop.f32.mrb[0].mxu0
      %v4367 = vpop.f32.mrb[0].mxu0
      %v4368 = vadd.f32 %v2156, %v4367
      %v4369 = vpop.f32.mrb[0].mxu0
      %4370 = vmatprep.mubr.bf16.mxu0 0
      %4371 = vmatmul.mubr.bf16.gmra.mrb[0].mxu0 %v4113
      %v4372 = vpop.f32.mrb[0].mxu0
      %v4373 = vadd.f32 %v2162, %v4372
      %v4374 = vpop.f32.mrb[0].mxu0
      %v4375 = vpop.f32.mrb[0].mxu0
      %v4376 = vadd.f32 %v2166, %v4375
      %v4377 = vpop.f32.mrb[0].mxu0
      %4378 = vmatprep.mubr.bf16.mxu0 0
      %4379 = vmatmul.mubr.bf16.gmra.mrb[0].mxu0 %v4114
      %v4380 = vpop.f32.mrb[0].mxu0
      %v4381 = vadd.f32 %v2172, %v4380
      %v4382 = vpop.f32.mrb[0].mxu0
      %v4383 = vpop.f32.mrb[0].mxu0
      %v4384 = vadd.f32 %v2176, %v4383
      %v4385 = vpop.f32.mrb[0].mxu0
      %4386 = vmatprep.mubr.bf16.mxu0 0
      %4387 = vmatmul.mubr.bf16.gmra.mrb[0].mxu0 %v4115
      %v4388 = vpop.f32.mrb[0].mxu0
      %v4389 = vadd.f32 %v2182, %v4388
      %v4390 = vpop.f32.mrb[0].mxu0
      %v4391 = vpop.f32.mrb[0].mxu0
      %v4392 = vadd.f32 %v2186, %v4391
      %v4393 = vpop.f32.mrb[0].mxu0
      %4394 = vmatprep.mubr.bf16.mxu0 0
      %4395 = vmatmul.mubr.bf16.gmra.mrb[0].mxu0 %v4116
      %v4396 = vpop.f32.mrb[0].mxu0
      %v4397 = vadd.f32 %v2192, %v4396
      %v4398 = vpop.f32.mrb[0].mxu0
      %v4399 = vpop.f32.mrb[0].mxu0
      %v4400 = vadd.f32 %v2196, %v4399
      %v4401 = vpop.f32.mrb[0].mxu0
      %4402 = vmatprep.mubr.bf16.mxu0 0
      %4403 = vmatmul.mubr.bf16.gmra.mrb[0].mxu0 %v4117
      %v4404 = vpop.f32.mrb[0].mxu0
      %v4405 = vadd.f32 %v2202, %v4404
      %v4406 = vpop.f32.mrb[0].mxu0
      %v4407 = vpop.f32.mrb[0].mxu0
      %v4408 = vadd.f32 %v2206, %v4407
      %v4409 = vpop.f32.mrb[0].mxu0
      %4410 = vmatprep.mubr.bf16.mxu0 0
      %4411 = vmatmul.mubr.bf16.gmra.mrb[0].mxu0 %v4118
      %v4412 = vpop.f32.mrb[0].mxu0
      %v4413 = vadd.f32 %v2212, %v4412
      %v4414 = vpop.f32.mrb[0].mxu0
      %v4415 = vpop.f32.mrb[0].mxu0
      %v4416 = vadd.f32 %v2216, %v4415
      %v4417 = vpop.f32.mrb[0].mxu0
      %4418 = vmatprep.mubr.bf16.mxu0 0
      %4419 = vmatmul.mubr.bf16.gmra.mrb[0].mxu0 %v4119
      %v4420 = vpop.f32.mrb[0].mxu0
      %v4421 = vadd.f32 %v2222, %v4420
      %v4422 = vpop.f32.mrb[0].mxu0
      %v4423 = vpop.f32.mrb[0].mxu0
      %v4424 = vadd.f32 %v2226, %v4423
      %v4425 = vpop.f32.mrb[0].mxu0
      %4426 = vmatprep.mubr.bf16.mxu0 0
      %4427 = vmatmul.mubr.bf16.gmra.mrb[0].mxu0 %v4120
      %v4428 = vpop.f32.mrb[0].mxu0
      %v4429 = vadd.f32 %v2232, %v4428
      %v4430 = vpop.f32.mrb[0].mxu0
      %v4431 = vpop.f32.mrb[0].mxu0
      %v4432 = vadd.f32 %v2236, %v4431
      %v4433 = vpop.f32.mrb[0].mxu0
      %4434 = vmatprep.mubr.bf16.mxu0 0
      %4435 = vmatmul.mubr.bf16.gmra.mrb[0].mxu0 %v4121
      %v4436 = vpop.f32.mrb[0].mxu0
      %v4437 = vadd.f32 %v2242, %v4436
      %v4438 = vpop.f32.mrb[0].mxu0
      %v4439 = vpop.f32.mrb[0].mxu0
      %v4440 = vadd.f32 %v2246, %v4439
      %v4441 = vpop.f32.mrb[0].mxu0
      %4442 = vmatprep.mubr.bf16.mxu0 0
      %4443 = vmatmul.mubr.bf16.gmra.mrb[0].mxu0 %v4122
      %v4444 = vpop.f32.mrb[0].mxu0
      %v4445 = vadd.f32 %v2252, %v4444
      %v4446 = vpop.f32.mrb[0].mxu0
      %v4447 = vpop.f32.mrb[0].mxu0
      %v4448 = vadd.f32 %v2256, %v4447
      %v4449 = vpop.f32.mrb[0].mxu0
      %4450 = vmatprep.mubr.bf16.mxu0 0
      %4451 = vmatmul.mubr.bf16.gmra.mrb[0].mxu0 %v4123
      %v4452 = vpop.f32.mrb[0].mxu0
      %v4453 = vadd.f32 %v2262, %v4452
      %v4454 = vpop.f32.mrb[0].mxu0
      %v4455 = vpop.f32.mrb[0].mxu0
      %v4456 = vadd.f32 %v2266, %v4455
      %v4457 = vpop.f32.mrb[0].mxu0
      %4458 = vmatprep.mubr.bf16.mxu0 0
      %4459 = vmatmul.mubr.bf16.gmra.mrb[0].mxu0 %v4124
      %v4460 = vpop.f32.mrb[0].mxu0
      %v4461 = vadd.f32 %v2272, %v4460
      %v4462 = vpop.f32.mrb[0].mxu0
      %v4463 = vpop.f32.mrb[0].mxu0
      %v4464 = vadd.f32 %v2276, %v4463
      %v4465 = vpop.f32.mrb[0].mxu0
      %4466 = vmatprep.mubr.bf16.mxu0 0
      %4467 = vmatmul.mubr.bf16.gmra.mrb[0].mxu0 %v4125
      %v4468 = vpop.f32.mrb[0].mxu0
      %v4469 = vadd.f32 %v2282, %v4468
      %v4470 = vpop.f32.mrb[0].mxu0
      %v4471 = vpop.f32.mrb[0].mxu0
      %v4472 = vadd.f32 %v2286, %v4471
      %v4473 = vpop.f32.mrb[0].mxu0
      %4474 = vmatprep.mubr.bf16.mxu0 0
      %4475 = vmatmul.mubr.bf16.gmra.mrb[0].mxu0 %v4126
      %v4476 = vpop.f32.mrb[0].mxu0
      %v4477 = vadd.f32 %v2292, %v4476
      %v4478 = vpop.f32.mrb[0].mxu0
      %v4479 = vpop.f32.mrb[0].mxu0
      %v4480 = vadd.f32 %v2296, %v4479
      %v4481 = vpop.f32.mrb[0].mxu0
      %4482 = vmatprep.mubr.bf16.mxu0 0
      %4483 = vmatmul.mubr.bf16.gmra.mrb[0].mxu0 %v4127
      %v4484 = vpop.f32.mrb[0].mxu0
      %v4485 = vadd.f32 %v2302, %v4484
      %v4486 = vpop.f32.mrb[0].mxu0
      %v4487 = vpop.f32.mrb[0].mxu0
      %v4488 = vadd.f32 %v2306, %v4487
      %v4489 = vpop.f32.mrb[0].mxu0
      %4490 = vmatprep.mubr.bf16.mxu0 0
      %4491 = vmatmul.mubr.bf16.gmra.mrb[0].mxu0 %v4128
      %v4492 = vpop.f32.mrb[0].mxu0
      %v4493 = vadd.f32 %v2312, %v4492
      %v4494 = vpop.f32.mrb[0].mxu0
      %v4495 = vpop.f32.mrb[0].mxu0
      %v4496 = vadd.f32 %v2316, %v4495
      %v4497 = vpop.f32.mrb[0].mxu0
      %4498 = vmatprep.mubr.bf16.mxu0 0
      %4499 = vmatmul.mubr.bf16.gmra.mrb[0].mxu0 %v4129
      %v4500 = vpop.f32.mrb[0].mxu0
      %v4501 = vadd.f32 %v2322, %v4500
      %v4502 = vpop.f32.mrb[0].mxu0
      %v4503 = vpop.f32.mrb[0].mxu0
      %v4504 = vadd.f32 %v2326, %v4503
      %v4505 = vpop.f32.mrb[0].mxu0
      %4506 = vmatprep.mubr.bf16.mxu0 0
      %4507 = vmatmul.mubr.bf16.gmra.mrb[0].mxu0 %v4130
      %v4508 = vpop.f32.mrb[0].mxu0
      %v4509 = vadd.f32 %v2332, %v4508
      %v4510 = vpop.f32.mrb[0].mxu0
      %v4511 = vpop.f32.mrb[0].mxu0
      %v4512 = vadd.f32 %v2336, %v4511
      %v4513 = vpop.f32.mrb[0].mxu0
      %4514 = vmatprep.mubr.bf16.mxu0 0
      %4515 = vmatmul.mubr.bf16.gmra.mrb[0].mxu0 %v4131
      %v4516 = vpop.f32.mrb[0].mxu0
      %v4517 = vadd.f32 %v2342, %v4516
      %v4518 = vpop.f32.mrb[0].mxu0
      %v4519 = vpop.f32.mrb[0].mxu0
      %v4520 = vadd.f32 %v2346, %v4519
      %v4521 = vpop.f32.mrb[0].mxu0
      %4522 = vmatprep.mubr.bf16.mxu0 0
      %4523 = vmatmul.mubr.bf16.gmra.mrb[0].mxu0 %v4132
      %v4524 = vpop.f32.mrb[0].mxu0
      %v4525 = vadd.f32 %v2352, %v4524
      %v4526 = vpop.f32.mrb[0].mxu0
      %v4527 = vpop.f32.mrb[0].mxu0
      %v4528 = vadd.f32 %v2356, %v4527
      %v4529 = vpop.f32.mrb[0].mxu0
      %4530 = vmatprep.mubr.bf16.mxu0 0
      %4531 = vmatmul.mubr.bf16.gmra.mrb[0].mxu0 %v4133
      %v4532 = vpop.f32.mrb[0].mxu0
      %v4533 = vadd.f32 %v2362, %v4532
      %v4534 = vpop.f32.mrb[0].mxu0
      %v4535 = vpop.f32.mrb[0].mxu0
      %v4536 = vadd.f32 %v2366, %v4535
      %v4537 = vpop.f32.mrb[0].mxu0
      %4538 = vmatprep.mubr.bf16.mxu0 0
      %4539 = vmatmul.mubr.bf16.gmra.mrb[0].mxu0 %v4134
      %v4540 = vpop.f32.mrb[0].mxu0
      %v4541 = vadd.f32 %v2372, %v4540
      %v4542 = vpop.f32.mrb[0].mxu0
      %v4543 = vpop.f32.mrb[0].mxu0
      %v4544 = vadd.f32 %v2376, %v4543
      %v4545 = vpop.f32.mrb[0].mxu0
      %4546 = vmatprep.mubr.bf16.mxu0 0
      %4547 = vmatmul.mubr.bf16.gmra.mrb[0].mxu0 %v4135
      %v4548 = vpop.f32.mrb[0].mxu0
      %v4549 = vadd.f32 %v2382, %v4548
      %v4550 = vpop.f32.mrb[0].mxu0
      %v4551 = vpop.f32.mrb[0].mxu0
      %v4552 = vadd.f32 %v2386, %v4551
      %v4553 = vpop.f32.mrb[0].mxu0
      %4554 = vmatprep.mubr.bf16.mxu0 0
      %4555 = vmatmul.mubr.bf16.gmra.mrb[0].mxu0 %v4136
      %v4556 = vpop.f32.mrb[0].mxu0
      %v4557 = vadd.f32 %v2392, %v4556
      %v4558 = vpop.f32.mrb[0].mxu0
      %v4559 = vpop.f32.mrb[0].mxu0
      %v4560 = vadd.f32 %v2396, %v4559
      %v4561 = vpop.f32.mrb[0].mxu0
      %4562 = vmatprep.mubr.bf16.mxu0 0
      %4563 = vmatmul.mubr.bf16.gmra.mrb[0].mxu0 %v4137
      %v4564 = vpop.f32.mrb[0].mxu0
      %v4565 = vadd.f32 %v2402, %v4564
      %v4566 = vpop.f32.mrb[0].mxu0
      %v4567 = vpop.f32.mrb[0].mxu0
      %v4568 = vadd.f32 %v2406, %v4567
      %v4569 = vpop.f32.mrb[0].mxu0
      %4570 = vmatprep.mubr.bf16.mxu0 0
      %4571 = vmatmul.mubr.bf16.gmra.mrb[0].mxu0 %v4138
      %v4572 = vpop.f32.mrb[0].mxu0
      %v4573 = vadd.f32 %v2412, %v4572
      %v4574 = vpop.f32.mrb[0].mxu0
      %v4575 = vpop.f32.mrb[0].mxu0
      %v4576 = vadd.f32 %v2416, %v4575
      %v4577 = vpop.f32.mrb[0].mxu0
      %4578 = vmatprep.mubr.bf16.mxu0 0
      %4579 = vmatmul.mubr.bf16.gmra.mrb[0].mxu0 %v4139
      %v4580 = vpop.f32.mrb[0].mxu0
      %v4581 = vadd.f32 %v2422, %v4580
      %v4582 = vpop.f32.mrb[0].mxu0
      %v4583 = vpop.f32.mrb[0].mxu0
      %v4584 = vadd.f32 %v2426, %v4583
      %v4585 = vpop.f32.mrb[0].mxu0
      %4586 = vmatprep.mubr.bf16.mxu0 0
      %4587 = vmatmul.mubr.bf16.gmra.mrb[0].mxu0 %v4140
      %v4588 = vpop.f32.mrb[0].mxu0
      %v4589 = vadd.f32 %v2432, %v4588
      %v4590 = vpop.f32.mrb[0].mxu0
      %v4591 = vpop.f32.mrb[0].mxu0
      %v4592 = vadd.f32 %v2436, %v4591
      %v4593 = vpop.f32.mrb[0].mxu0
      %4594 = vmatprep.mubr.bf16.mxu0 0
      %4595 = vmatmul.mubr.bf16.gmra.mrb[0].mxu0 %v4141
      %v4596 = vpop.f32.mrb[0].mxu0
      %v4597 = vadd.f32 %v2442, %v4596
      %v4598 = vpop.f32.mrb[0].mxu0
      %v4599 = vpop.f32.mrb[0].mxu0
      %v4600 = vadd.f32 %v2446, %v4599
      %v4601 = vpop.f32.mrb[0].mxu0
      %4602 = vmatprep.mubr.bf16.mxu0 0
      %4603 = vmatmul.mubr.bf16.gmra.mrb[0].mxu0 %v4142
      %v4604 = vpop.f32.mrb[0].mxu0
      %v4605 = vadd.f32 %v2452, %v4604
      %v4606 = vpop.f32.mrb[0].mxu0
      %v4607 = vpop.f32.mrb[0].mxu0
      %v4608 = vadd.f32 %v2456, %v4607
      %v4609 = vpop.f32.mrb[0].mxu0
      %4610 = vmatprep.mubr.bf16.mxu0 0
      %4611 = vmatmul.mubr.bf16.gmra.mrb[0].mxu0 %v4143
      %v4612 = vpop.f32.mrb[0].mxu0
      %v4613 = vadd.f32 %v2462, %v4612
      %v4614 = vpop.f32.mrb[0].mxu0
      %v4615 = vpop.f32.mrb[0].mxu0
      %v4616 = vadd.f32 %v2466, %v4615
      %v4617 = vpop.f32.mrb[0].mxu0
      %4618 = vmatprep.mubr.bf16.mxu0 0
      %4619 = vmatmul.mubr.bf16.gmra.mrb[0].mxu0 %v4144
      %v4620 = vpop.f32.mrb[0].mxu0
      %v4621 = vadd.f32 %v2472, %v4620
      %v4622 = vpop.f32.mrb[0].mxu0
      %v4623 = vpop.f32.mrb[0].mxu0
      %v4624 = vadd.f32 %v2476, %v4623
      %v4625 = vpop.f32.mrb[0].mxu0
      %4626 = vmatprep.mubr.bf16.mxu0 0
      %4627 = vmatmul.mubr.bf16.gmra.mrb[0].mxu0 %v4145
      %v4628 = vpop.f32.mrb[0].mxu0
      %v4629 = vadd.f32 %v2482, %v4628
      %v4630 = vpop.f32.mrb[0].mxu0
      %v4631 = vpop.f32.mrb[0].mxu0
      %v4632 = vadd.f32 %v2486, %v4631
      %v4633 = vpop.f32.mrb[0].mxu0
      %4634 = vmatprep.mubr.bf16.mxu0 0
      %4635 = vmatmul.mubr.bf16.gmra.mrb[0].mxu0 %v4146
      %v4636 = vpop.f32.mrb[0].mxu0
      %v4637 = vadd.f32 %v2492, %v4636
      %v4638 = vpop.f32.mrb[0].mxu0
      %v4639 = vpop.f32.mrb[0].mxu0
      %v4640 = vadd.f32 %v2496, %v4639
      %v4641 = vpop.f32.mrb[0].mxu0
      %4642 = vmatprep.mubr.bf16.mxu0 0
      %4643 = vmatmul.mubr.bf16.gmra.mrb[0].mxu0 %v4147
      %v4644 = vpop.f32.mrb[0].mxu0
      %v4645 = vadd.f32 %v2502, %v4644
      %v4646 = vpop.f32.mrb[0].mxu0
      %v4647 = vpop.f32.mrb[0].mxu0
      %v4648 = vadd.f32 %v2506, %v4647
      %v4649 = vpop.f32.mrb[0].mxu0
      %4650 = vmatprep.mubr.bf16.mxu0 0
      %4651 = vmatmul.mubr.bf16.gmra.mrb[0].mxu0 %v4148
      %v4652 = vpop.f32.mrb[0].mxu0
      %v4653 = vadd.f32 %v2512, %v4652
      %v4654 = vpop.f32.mrb[0].mxu0
      %v4655 = vpop.f32.mrb[0].mxu0
      %v4656 = vadd.f32 %v2516, %v4655
      %v4657 = vpop.f32.mrb[0].mxu0
      %4658 = vmatprep.mubr.bf16.mxu0 0
      %4659 = vmatmul.mubr.bf16.gmra.mrb[0].mxu0 %v4149
      %v4660 = vpop.f32.mrb[0].mxu0
      %v4661 = vadd.f32 %v2522, %v4660
      %v4662 = vpop.f32.mrb[0].mxu0
      %v4663 = vpop.f32.mrb[0].mxu0
      %v4664 = vadd.f32 %v2526, %v4663
      %v4665 = vpop.f32.mrb[0].mxu0
      %4666 = vmatprep.mubr.bf16.mxu0 0
      %4667 = vmatmul.mubr.bf16.gmra.mrb[0].mxu0 %v4150
      %v4668 = vpop.f32.mrb[0].mxu0
      %v4669 = vadd.f32 %v2532, %v4668
      %v4670 = vpop.f32.mrb[0].mxu0
      %v4671 = vpop.f32.mrb[0].mxu0
      %v4672 = vadd.f32 %v2536, %v4671
      %v4673 = vpop.f32.mrb[0].mxu0
      %4674 = vmatprep.mubr.bf16.mxu0 0
      %4675 = vmatmul.mubr.bf16.gmra.mrb[0].mxu0 %v4151
      %v4676 = vpop.f32.mrb[0].mxu0
      %v4677 = vadd.f32 %v2542, %v4676
      %v4678 = vpop.f32.mrb[0].mxu0
      %v4679 = vpop.f32.mrb[0].mxu0
      %v4680 = vadd.f32 %v2546, %v4679
      %v4681 = vpop.f32.mrb[0].mxu0
      %4682 = vmatprep.mubr.bf16.mxu0 0
      %4683 = vmatmul.mubr.bf16.gmra.mrb[0].mxu0 %v4152
      %v4684 = vpop.f32.mrb[0].mxu0
      %v4685 = vadd.f32 %v2552, %v4684
      %v4686 = vpop.f32.mrb[0].mxu0
      %v4687 = vpop.f32.mrb[0].mxu0
      %v4688 = vadd.f32 %v2556, %v4687
      %v4689 = vpop.f32.mrb[0].mxu0
      %4690 = vmatprep.mubr.bf16.mxu0 0
      %4691 = vmatmul.mubr.bf16.gmra.mrb[0].mxu0 %v4153
      %v4692 = vpop.f32.mrb[0].mxu0
      %v4693 = vadd.f32 %v2562, %v4692
      %v4694 = vpop.f32.mrb[0].mxu0
      %v4695 = vpop.f32.mrb[0].mxu0
      %v4696 = vadd.f32 %v2566, %v4695
      %v4697 = vpop.f32.mrb[0].mxu0
      %4698 = vmatprep.mubr.bf16.mxu0 0
      %4699 = vmatmul.mubr.bf16.gmra.mrb[0].mxu0 %v4154
      %v4700 = vpop.f32.mrb[0].mxu0
      %v4701 = vadd.f32 %v2572, %v4700
      %v4702 = vpop.f32.mrb[0].mxu0
      %v4703 = vpop.f32.mrb[0].mxu0
      %v4704 = vadd.f32 %v2576, %v4703
      %v4705 = vpop.f32.mrb[0].mxu0
      %4706 = vmatprep.mubr.bf16.mxu0 0
      %4707 = vmatmul.mubr.bf16.gmra.mrb[0].mxu0 %v4155
      %v4708 = vpop.f32.mrb[0].mxu0
      %v4709 = vadd.f32 %v2582, %v4708
      %v4710 = vpop.f32.mrb[0].mxu0
      %v4711 = vpop.f32.mrb[0].mxu0
      %v4712 = vadd.f32 %v2586, %v4711
      %v4713 = vpop.f32.mrb[0].mxu0
      %4714 = vmatprep.mubr.bf16.mxu0 0
      %4715 = vmatmul.mubr.bf16.gmra.mrb[0].mxu0 %v4156
      %v4716 = vpop.f32.mrb[0].mxu0
      %v4717 = vadd.f32 %v2592, %v4716
      %v4718 = vpop.f32.mrb[0].mxu0
      %v4719 = vpop.f32.mrb[0].mxu0
      %v4720 = vadd.f32 %v2596, %v4719
      %v4721 = vpop.f32.mrb[0].mxu0
      %4722 = vmatprep.mubr.bf16.mxu0 0
      %4723 = vmatmul.mubr.bf16.gmra.mrb[0].mxu0 %v4157
      %v4724 = vpop.f32.mrb[0].mxu0
      %v4725 = vadd.f32 %v2602, %v4724
      %v4726 = vpop.f32.mrb[0].mxu0
      %v4727 = vpop.f32.mrb[0].mxu0
      %v4728 = vadd.f32 %v2606, %v4727
      %v4729 = vpop.f32.mrb[0].mxu0
      %4730 = vmatprep.mubr.bf16.mxu0 0
      %4731 = vmatmul.mubr.bf16.gmra.mrb[0].mxu0 %v4158
      %v4732 = vpop.f32.mrb[0].mxu0
      %v4733 = vadd.f32 %v2612, %v4732
      %v4734 = vpop.f32.mrb[0].mxu0
      %v4735 = vpop.f32.mrb[0].mxu0
      %v4736 = vadd.f32 %v2616, %v4735
      %v4737 = vpop.f32.mrb[0].mxu0
      %4738 = vmatprep.mubr.bf16.mxu0 0
      %4739 = vmatmul.mubr.bf16.gmra.mrb[0].mxu0 %v4159
      %v4740 = vpop.f32.mrb[0].mxu0
      %v4741 = vadd.f32 %v2622, %v4740
      %v4742 = vpop.f32.mrb[0].mxu0
      %v4743 = vpop.f32.mrb[0].mxu0
      %v4744 = vadd.f32 %v2626, %v4743
      %v4745 = vpop.f32.mrb[0].mxu0
      %4746 = vmatprep.mubr.bf16.mxu0 0
      %4747 = vmatmul.mubr.bf16.gmra.mrb[0].mxu0 %v4160
      %v4748 = vpop.f32.mrb[0].mxu0
      %v4749 = vadd.f32 %v2632, %v4748
      %v4750 = vpop.f32.mrb[0].mxu0
      %v4751 = vpop.f32.mrb[0].mxu0
      %v4752 = vadd.f32 %v2636, %v4751
      %v4753 = vpop.f32.mrb[0].mxu0
      %4754 = vmatprep.mubr.bf16.mxu0 0
      %4755 = vmatmul.mubr.bf16.gmra.mrb[0].mxu0 %v4161
      %v4756 = vpop.f32.mrb[0].mxu0
      %v4757 = vadd.f32 %v2642, %v4756
      %v4758 = vpop.f32.mrb[0].mxu0
      %v4759 = vpop.f32.mrb[0].mxu0
      %v4760 = vadd.f32 %v2646, %v4759
      %v4761 = vpop.f32.mrb[0].mxu0
      %4762 = vmatprep.mubr.bf16.mxu0 0
      %4763 = vmatmul.mubr.bf16.gmra.mrb[0].mxu0 %v4162
      %v4764 = vpop.f32.mrb[0].mxu0
      %v4765 = vadd.f32 %v2652, %v4764
      %v4766 = vpop.f32.mrb[0].mxu0
      %v4767 = vpop.f32.mrb[0].mxu0
      %v4768 = vadd.f32 %v2656, %v4767
      %v4769 = vpop.f32.mrb[0].mxu0
      %4770 = vmatprep.mubr.bf16.mxu0 0
      %4771 = vmatmul.mubr.bf16.gmra.mrb[0].mxu0 %v4163
      %v4772 = vpop.f32.mrb[0].mxu0
      %v4773 = vadd.f32 %v2662, %v4772
      %v4774 = vpop.f32.mrb[0].mxu0
      %v4775 = vpop.f32.mrb[0].mxu0
      %v4776 = vadd.f32 %v2666, %v4775
      %v4777 = vpop.f32.mrb[0].mxu0
      %4778 = vmatprep.mubr.bf16.mxu0 0
      %4779 = vmatmul.mubr.bf16.gmra.mrb[0].mxu0 %v4164
      %v4780 = vpop.f32.mrb[0].mxu0
      %v4781 = vadd.f32 %v2672, %v4780
      %v4782 = vpop.f32.mrb[0].mxu0
      %v4783 = vpop.f32.mrb[0].mxu0
      %v4784 = vadd.f32 %v2676, %v4783
      %v4785 = vpop.f32.mrb[0].mxu0
      %4786 = vmatprep.mubr.bf16.mxu0 0
      %4787 = vmatmul.mubr.bf16.gmra.mrb[0].mxu0 %v4165
      %v4788 = vpop.f32.mrb[0].mxu0
      %v4789 = vadd.f32 %v2682, %v4788
      %v4790 = vpop.f32.mrb[0].mxu0
      %v4791 = vpop.f32.mrb[0].mxu0
      %v4792 = vadd.f32 %v2686, %v4791
      %v4793 = vpop.f32.mrb[0].mxu0
      %4794 = vmatprep.mubr.bf16.mxu0 0
      %4795 = vmatmul.mubr.bf16.gmra.mrb[0].mxu0 %v4166
      %v4796 = vpop.f32.mrb[0].mxu0
      %v4797 = vadd.f32 %v2692, %v4796
      %v4798 = vpop.f32.mrb[0].mxu0
      %v4799 = vpop.f32.mrb[0].mxu0
      %v4800 = vadd.f32 %v2696, %v4799
      %v4801 = vpop.f32.mrb[0].mxu0
      %4802 = vmatprep.mubr.bf16.mxu0 0
      %4803 = vmatmul.mubr.bf16.gmra.mrb[0].mxu0 %v4167
      %v4804 = vpop.f32.mrb[0].mxu0
      %v4805 = vadd.f32 %v2702, %v4804
      %v4806 = vpop.f32.mrb[0].mxu0
      %v4807 = vpop.f32.mrb[0].mxu0
      %v4808 = vadd.f32 %v2706, %v4807
      %v4809 = vpop.f32.mrb[0].mxu0
      %4810 = vmatprep.mubr.bf16.mxu0 0
      %4811 = vmatmul.mubr.bf16.gmra.mrb[0].mxu0 %v4168
      %v4812 = vpop.f32.mrb[0].mxu0
      %v4813 = vadd.f32 %v2712, %v4812
      %v4814 = vpop.f32.mrb[0].mxu0
      %v4815 = vpop.f32.mrb[0].mxu0
      %v4816 = vadd.f32 %v2716, %v4815
      %v4817 = vpop.f32.mrb[0].mxu0
      %4818 = vmatprep.mubr.bf16.mxu0 0
      %4819 = vmatmul.mubr.bf16.gmra.mrb[0].mxu0 %v4169
      %v4820 = vpop.f32.mrb[0].mxu0
      %v4821 = vadd.f32 %v2722, %v4820
      %v4822 = vpop.f32.mrb[0].mxu0
      %v4823 = vpop.f32.mrb[0].mxu0
      %v4824 = vadd.f32 %v2726, %v4823
      %v4825 = vpop.f32.mrb[0].mxu0
      %4826 = vmatprep.mubr.bf16.mxu0 0
      %4827 = vmatmul.mubr.bf16.gmra.mrb[0].mxu0 %v4170
      %v4828 = vpop.f32.mrb[0].mxu0
      %v4829 = vadd.f32 %v2732, %v4828
      %v4830 = vpop.f32.mrb[0].mxu0
      %v4831 = vpop.f32.mrb[0].mxu0
      %v4832 = vadd.f32 %v2736, %v4831
      %v4833 = vpop.f32.mrb[0].mxu0
      %4834 = vmatprep.mubr.bf16.mxu0 0
      %4835 = vmatmul.mubr.bf16.gmra.mrb[0].mxu0 %v4171
      %v4836 = vpop.f32.mrb[0].mxu0
      %v4837 = vadd.f32 %v2742, %v4836
      %v4838 = vpop.f32.mrb[0].mxu0
      %v4839 = vpop.f32.mrb[0].mxu0
      %v4840 = vadd.f32 %v2746, %v4839
      %v4841 = vpop.f32.mrb[0].mxu0
      %4842 = vmatprep.mubr.bf16.mxu0 0
      %4843 = vmatmul.mubr.bf16.gmra.mrb[0].mxu0 %v4172
      %v4844 = vpop.f32.mrb[0].mxu0
      %v4845 = vadd.f32 %v2752, %v4844
      %v4846 = vpop.f32.mrb[0].mxu0
      %v4847 = vpop.f32.mrb[0].mxu0
      %v4848 = vadd.f32 %v2756, %v4847
      %v4849 = vpop.f32.mrb[0].mxu0
      %4850 = vmatprep.mubr.bf16.mxu0 0
      %4851 = vmatmul.mubr.bf16.gmra.mrb[0].mxu0 %v4173
      %v4852 = vpop.f32.mrb[0].mxu0
      %v4853 = vadd.f32 %v2762, %v4852
      %v4854 = vpop.f32.mrb[0].mxu0
      %v4855 = vpop.f32.mrb[0].mxu0
      %v4856 = vadd.f32 %v2766, %v4855
      %v4857 = vpop.f32.mrb[0].mxu0
      %4858 = vmatprep.mubr.bf16.mxu0 0
      %4859 = vmatmul.mubr.bf16.gmra.mrb[0].mxu0 %v4174
      %v4860 = vpop.f32.mrb[0].mxu0
      %v4861 = vadd.f32 %v2772, %v4860
      %v4862 = vpop.f32.mrb[0].mxu0
      %v4863 = vpop.f32.mrb[0].mxu0
      %v4864 = vadd.f32 %v2776, %v4863
      %v4865 = vpop.f32.mrb[0].mxu0
      %4866 = vmatprep.mubr.bf16.mxu0 0
      %4867 = vmatmul.mubr.bf16.gmra.mrb[0].mxu0 %v4175
      %v4868 = vpop.f32.mrb[0].mxu0
      %v4869 = vadd.f32 %v2782, %v4868
      %v4870 = vpop.f32.mrb[0].mxu0
      %v4871 = vpop.f32.mrb[0].mxu0
      %v4872 = vadd.f32 %v2786, %v4871
      %v4873 = vpop.f32.mrb[0].mxu0
      %4874 = vmatprep.mubr.bf16.mxu0 0
      %4875 = vmatmul.mubr.bf16.gmra.mrb[0].mxu0 %v4176
      %v4876 = vpop.f32.mrb[0].mxu0
      %v4877 = vadd.f32 %v2792, %v4876
      %v4878 = vpop.f32.mrb[0].mxu0
      %v4879 = vpop.f32.mrb[0].mxu0
      %v4880 = vadd.f32 %v2796, %v4879
      %v4881 = vpop.f32.mrb[0].mxu0
      %4882 = vmatprep.mubr.bf16.mxu0 0
      %4883 = vmatmul.mubr.bf16.gmra.mrb[0].mxu0 %v4177
      %v4884 = vpop.f32.mrb[0].mxu0
      %v4885 = vadd.f32 %v2802, %v4884
      %v4886 = vpop.f32.mrb[0].mxu0
      %v4887 = vpop.f32.mrb[0].mxu0
      %v4888 = vadd.f32 %v2806, %v4887
      %v4889 = vpop.f32.mrb[0].mxu0
      %4890 = vmatprep.mubr.bf16.mxu0 0
      %4891 = vmatmul.mubr.bf16.gmra.mrb[0].mxu0 %v4178
      %v4892 = vpop.f32.mrb[0].mxu0
      %v4893 = vadd.f32 %v2812, %v4892
      %v4894 = vpop.f32.mrb[0].mxu0
      %v4895 = vpop.f32.mrb[0].mxu0
      %v4896 = vadd.f32 %v2816, %v4895
      %v4897 = vpop.f32.mrb[0].mxu0
      %4898 = vmatprep.mubr.bf16.mxu0 0
      %4899 = vmatmul.mubr.bf16.gmra.mrb[0].mxu0 %v4179
      %v4900 = vpop.f32.mrb[0].mxu0
      %v4901 = vadd.f32 %v2822, %v4900
      %v4902 = vpop.f32.mrb[0].mxu0
      %v4903 = vpop.f32.mrb[0].mxu0
      %v4904 = vadd.f32 %v2826, %v4903
      %v4905 = vpop.f32.mrb[0].mxu0
      %4906 = vmatprep.mubr.bf16.mxu0 0
      %4907 = vmatmul.mubr.bf16.gmra.mrb[0].mxu0 %v4180
      %v4908 = vpop.f32.mrb[0].mxu0
      %v4909 = vadd.f32 %v2832, %v4908
      %v4910 = vpop.f32.mrb[0].mxu0
      %v4911 = vpop.f32.mrb[0].mxu0
      %v4912 = vadd.f32 %v2836, %v4911
      %v4913 = vpop.f32.mrb[0].mxu0
      %4914 = vmatprep.mubr.bf16.mxu0 0
      %4915 = vmatmul.mubr.bf16.gmra.mrb[0].mxu0 %v4181
      %v4916 = vpop.f32.mrb[0].mxu0
      %v4917 = vadd.f32 %v2842, %v4916
      %v4918 = vpop.f32.mrb[0].mxu0
      %v4919 = vpop.f32.mrb[0].mxu0
      %v4920 = vadd.f32 %v2846, %v4919
      %v4921 = vpop.f32.mrb[0].mxu0
      %4922 = vmatprep.mubr.bf16.mxu0 0
      %4923 = vmatmul.mubr.bf16.gmra.mrb[0].mxu0 %v4182
      %v4924 = vpop.f32.mrb[0].mxu0
      %v4925 = vadd.f32 %v2852, %v4924
      %v4926 = vpop.f32.mrb[0].mxu0
      %v4927 = vpop.f32.mrb[0].mxu0
      %v4928 = vadd.f32 %v2856, %v4927
      %v4929 = vpop.f32.mrb[0].mxu0
      %4930 = vmatprep.mubr.bf16.mxu0 0
      %4931 = vmatmul.mubr.bf16.gmra.mrb[0].mxu0 %v4183
      %v4932 = vpop.f32.mrb[0].mxu0
      %v4933 = vadd.f32 %v2862, %v4932
      %v4934 = vpop.f32.mrb[0].mxu0
      %v4935 = vpop.f32.mrb[0].mxu0
      %v4936 = vadd.f32 %v2866, %v4935
      %v4937 = vpop.f32.mrb[0].mxu0
      %4938 = vmatprep.mubr.bf16.mxu0 0
      %4939 = vmatmul.mubr.bf16.gmra.mrb[0].mxu0 %v4184
      %v4940 = vpop.f32.mrb[0].mxu0
      %v4941 = vadd.f32 %v2872, %v4940
      %v4942 = vpop.f32.mrb[0].mxu0
      %v4943 = vpop.f32.mrb[0].mxu0
      %v4944 = vadd.f32 %v2876, %v4943
      %v4945 = vpop.f32.mrb[0].mxu0
      %4946 = vmatprep.mubr.bf16.mxu0 0
      %4947 = vmatmul.mubr.bf16.gmra.mrb[0].mxu0 %v4185
      %v4948 = vpop.f32.mrb[0].mxu0
      %v4949 = vadd.f32 %v2882, %v4948
      %v4950 = vpop.f32.mrb[0].mxu0
      %v4951 = vpop.f32.mrb[0].mxu0
      %v4952 = vadd.f32 %v2886, %v4951
      %v4953 = vpop.f32.mrb[0].mxu0
      %4954 = vdwg.mxu0
      %v4955 = vlaneseq
      %v4956 = vshrl.u32 %v4955, 7
      %v4957 = vsub.s32 1, %v4956
      %v4958 = vrot.slane %v3593, %v4957
      %v4959 = vadd.f32 %v4285, %v4958
      %v4960 = vadd.f32 %v4288, %v4958
      %v4961 = vadd.f32 %v4293, %v4958
      %v4962 = vadd.f32 %v4296, %v4958
      %v4963 = vadd.f32 %v4301, %v4958
      %v4964 = vadd.f32 %v4304, %v4958
      %v4965 = vadd.f32 %v4309, %v4958
      %v4966 = vadd.f32 %v4312, %v4958
      %v4967 = vadd.f32 %v4317, %v4958
      %v4968 = vadd.f32 %v4320, %v4958
      %v4969 = vadd.f32 %v4325, %v4958
      %v4970 = vadd.f32 %v4328, %v4958
      %v4971 = vadd.f32 %v4333, %v4958
      %v4972 = vadd.f32 %v4336, %v4958
      %v4973 = vadd.f32 %v4341, %v4958
      %v4974 = vadd.f32 %v4344, %v4958
      %v4975 = vadd.f32 %v4349, %v4958
      %v4976 = vadd.f32 %v4352, %v4958
      %v4977 = vadd.f32 %v4357, %v4958
      %v4978 = vadd.f32 %v4360, %v4958
      %v4979 = vadd.f32 %v4365, %v4958
      %v4980 = vadd.f32 %v4368, %v4958
      %v4981 = vadd.f32 %v4373, %v4958
      %v4982 = vadd.f32 %v4376, %v4958
      %v4983 = vadd.f32 %v4381, %v4958
      %v4984 = vadd.f32 %v4384, %v4958
      %v4985 = vadd.f32 %v4389, %v4958
      %v4986 = vadd.f32 %v4392, %v4958
      %v4987 = vadd.f32 %v4397, %v4958
      %v4988 = vadd.f32 %v4400, %v4958
      %v4989 = vadd.f32 %v4405, %v4958
      %v4990 = vadd.f32 %v4408, %v4958
      %v4991 = vadd.f32 %v4413, %v4958
      %v4992 = vadd.f32 %v4416, %v4958
      %v4993 = vadd.f32 %v4421, %v4958
      %v4994 = vadd.f32 %v4424, %v4958
      %v4995 = vadd.f32 %v4429, %v4958
      %v4996 = vadd.f32 %v4432, %v4958
      %v4997 = vadd.f32 %v4437, %v4958
      %v4998 = vadd.f32 %v4440, %v4958
      %v4999 = vadd.f32 %v4445, %v4958
      %v5000 = vadd.f32 %v4448, %v4958
      %v5001 = vadd.f32 %v4453, %v4958
      %v5002 = vadd.f32 %v4456, %v4958
      %v5003 = vadd.f32 %v4461, %v4958
      %v5004 = vadd.f32 %v4464, %v4958
      %v5005 = vadd.f32 %v4469, %v4958
      %v5006 = vadd.f32 %v4472, %v4958
      %v5007 = vadd.f32 %v4477, %v4958
      %v5008 = vadd.f32 %v4480, %v4958
      %v5009 = vadd.f32 %v4485, %v4958
      %v5010 = vadd.f32 %v4488, %v4958
      %v5011 = vadd.f32 %v4493, %v4958
      %v5012 = vadd.f32 %v4496, %v4958
      %v5013 = vadd.f32 %v4501, %v4958
      %v5014 = vadd.f32 %v4504, %v4958
      %v5015 = vadd.f32 %v4509, %v4958
      %v5016 = vadd.f32 %v4512, %v4958
      %v5017 = vadd.f32 %v4517, %v4958
      %v5018 = vadd.f32 %v4520, %v4958
      %v5019 = vadd.f32 %v4525, %v4958
      %v5020 = vadd.f32 %v4528, %v4958
      %v5021 = vadd.f32 %v4533, %v4958
      %v5022 = vadd.f32 %v4536, %v4958
      %v5023 = vadd.f32 %v4541, %v4958
      %v5024 = vadd.f32 %v4544, %v4958
      %v5025 = vadd.f32 %v4549, %v4958
      %v5026 = vadd.f32 %v4552, %v4958
      %v5027 = vadd.f32 %v4557, %v4958
      %v5028 = vadd.f32 %v4560, %v4958
      %v5029 = vadd.f32 %v4565, %v4958
      %v5030 = vadd.f32 %v4568, %v4958
      %v5031 = vadd.f32 %v4573, %v4958
      %v5032 = vadd.f32 %v4576, %v4958
      %v5033 = vadd.f32 %v4581, %v4958
      %v5034 = vadd.f32 %v4584, %v4958
      %v5035 = vadd.f32 %v4589, %v4958
      %v5036 = vadd.f32 %v4592, %v4958
      %v5037 = vadd.f32 %v4597, %v4958
      %v5038 = vadd.f32 %v4600, %v4958
      %v5039 = vadd.f32 %v4605, %v4958
      %v5040 = vadd.f32 %v4608, %v4958
      %v5041 = vadd.f32 %v4613, %v4958
      %v5042 = vadd.f32 %v4616, %v4958
      %v5043 = vadd.f32 %v4621, %v4958
      %v5044 = vadd.f32 %v4624, %v4958
      %v5045 = vadd.f32 %v4629, %v4958
      %v5046 = vadd.f32 %v4632, %v4958
      %v5047 = vadd.f32 %v4637, %v4958
      %v5048 = vadd.f32 %v4640, %v4958
      %v5049 = vadd.f32 %v4645, %v4958
      %v5050 = vadd.f32 %v4648, %v4958
      %v5051 = vadd.f32 %v4653, %v4958
      %v5052 = vadd.f32 %v4656, %v4958
      %v5053 = vadd.f32 %v4661, %v4958
      %v5054 = vadd.f32 %v4664, %v4958
      %v5055 = vadd.f32 %v4669, %v4958
      %v5056 = vadd.f32 %v4672, %v4958
      %v5057 = vadd.f32 %v4677, %v4958
      %v5058 = vadd.f32 %v4680, %v4958
      %v5059 = vadd.f32 %v4685, %v4958
      %v5060 = vadd.f32 %v4688, %v4958
      %v5061 = vadd.f32 %v4693, %v4958
      %v5062 = vadd.f32 %v4696, %v4958
      %v5063 = vadd.f32 %v4701, %v4958
      %v5064 = vadd.f32 %v4704, %v4958
      %v5065 = vadd.f32 %v4709, %v4958
      %v5066 = vadd.f32 %v4712, %v4958
      %v5067 = vadd.f32 %v4717, %v4958
      %v5068 = vadd.f32 %v4720, %v4958
      %v5069 = vadd.f32 %v4725, %v4958
      %v5070 = vadd.f32 %v4728, %v4958
      %v5071 = vadd.f32 %v4733, %v4958
      %v5072 = vadd.f32 %v4736, %v4958
      %v5073 = vadd.f32 %v4741, %v4958
      %v5074 = vadd.f32 %v4744, %v4958
      %v5075 = vadd.f32 %v4749, %v4958
      %v5076 = vadd.f32 %v4752, %v4958
      %v5077 = vadd.f32 %v4757, %v4958
      %v5078 = vadd.f32 %v4760, %v4958
      %v5079 = vadd.f32 %v4765, %v4958
      %v5080 = vadd.f32 %v4768, %v4958
      %v5081 = vadd.f32 %v4773, %v4958
      %v5082 = vadd.f32 %v4776, %v4958
      %v5083 = vadd.f32 %v4781, %v4958
      %v5084 = vadd.f32 %v4784, %v4958
      %v5085 = vadd.f32 %v4789, %v4958
      %v5086 = vadd.f32 %v4792, %v4958
      %v5087 = vadd.f32 %v4797, %v4958
      %v5088 = vadd.f32 %v4800, %v4958
      %v5089 = vadd.f32 %v4805, %v4958
      %v5090 = vadd.f32 %v4808, %v4958
      %v5091 = vadd.f32 %v4813, %v4958
      %v5092 = vadd.f32 %v4816, %v4958
      %v5093 = vadd.f32 %v4821, %v4958
      %v5094 = vadd.f32 %v4824, %v4958
      %v5095 = vadd.f32 %v4829, %v4958
      %v5096 = vadd.f32 %v4832, %v4958
      %v5097 = vadd.f32 %v4837, %v4958
      %v5098 = vadd.f32 %v4840, %v4958
      %v5099 = vadd.f32 %v4845, %v4958
      %v5100 = vadd.f32 %v4848, %v4958
      %v5101 = vadd.f32 %v4853, %v4958
      %v5102 = vadd.f32 %v4856, %v4958
      %v5103 = vadd.f32 %v4861, %v4958
      %v5104 = vadd.f32 %v4864, %v4958
      %v5105 = vadd.f32 %v4869, %v4958
      %v5106 = vadd.f32 %v4872, %v4958
      %v5107 = vadd.f32 %v4877, %v4958
      %v5108 = vadd.f32 %v4880, %v4958
      %v5109 = vadd.f32 %v4885, %v4958
      %v5110 = vadd.f32 %v4888, %v4958
      %v5111 = vadd.f32 %v4893, %v4958
      %v5112 = vadd.f32 %v4896, %v4958
      %v5113 = vadd.f32 %v4901, %v4958
      %v5114 = vadd.f32 %v4904, %v4958
      %v5115 = vadd.f32 %v4909, %v4958
      %v5116 = vadd.f32 %v4912, %v4958
      %v5117 = vadd.f32 %v4917, %v4958
      %v5118 = vadd.f32 %v4920, %v4958
      %v5119 = vadd.f32 %v4925, %v4958
      %v5120 = vadd.f32 %v4928, %v4958
      %v5121 = vadd.f32 %v4933, %v4958
      %v5122 = vadd.f32 %v4936, %v4958
      %v5123 = vadd.f32 %v4941, %v4958
      %v5124 = vadd.f32 %v4944, %v4958
      %v5125 = vadd.f32 %v4949, %v4958
      %v5126 = vadd.f32 %v4952, %v4958
      %v5127 = vmul.f32 %v4959, 0.2
      %v5128 = vmul.f32 %v4960, 0.2
      %v5129 = vmul.f32 %v4961, 0.2
      %v5130 = vmul.f32 %v4962, 0.2
      %v5131 = vmul.f32 %v4963, 0.2
      %v5132 = vmul.f32 %v4964, 0.2
      %v5133 = vmul.f32 %v4965, 0.2
      %v5134 = vmul.f32 %v4966, 0.2
      %v5135 = vmul.f32 %v4967, 0.2
      %v5136 = vmul.f32 %v4968, 0.2
      %v5137 = vmul.f32 %v4969, 0.2
      %v5138 = vmul.f32 %v4970, 0.2
      %v5139 = vmul.f32 %v4971, 0.2
      %v5140 = vmul.f32 %v4972, 0.2
      %v5141 = vmul.f32 %v4973, 0.2
      %v5142 = vmul.f32 %v4974, 0.2
      %v5143 = vmul.f32 %v4975, 0.2
      %v5144 = vmul.f32 %v4976, 0.2
      %v5145 = vmul.f32 %v4977, 0.2
      %v5146 = vmul.f32 %v4978, 0.2
      %v5147 = vmul.f32 %v4979, 0.2
      %v5148 = vmul.f32 %v4980, 0.2
      %v5149 = vmul.f32 %v4981, 0.2
      %v5150 = vmul.f32 %v4982, 0.2
      %v5151 = vmul.f32 %v4983, 0.2
      %v5152 = vmul.f32 %v4984, 0.2
      %v5153 = vmul.f32 %v4985, 0.2
      %v5154 = vmul.f32 %v4986, 0.2
      %v5155 = vmul.f32 %v4987, 0.2
      %v5156 = vmul.f32 %v4988, 0.2
      %v5157 = vmul.f32 %v4989, 0.2
      %v5158 = vmul.f32 %v4990, 0.2
      %v5159 = vmul.f32 %v4991, 0.2
      %v5160 = vmul.f32 %v4992, 0.2
      %v5161 = vmul.f32 %v4993, 0.2
      %v5162 = vmul.f32 %v4994, 0.2
      %v5163 = vmul.f32 %v4995, 0.2
      %v5164 = vmul.f32 %v4996, 0.2
      %v5165 = vmul.f32 %v4997, 0.2
      %v5166 = vmul.f32 %v4998, 0.2
      %v5167 = vmul.f32 %v4999, 0.2
      %v5168 = vmul.f32 %v5000, 0.2
      %v5169 = vmul.f32 %v5001, 0.2
      %v5170 = vmul.f32 %v5002, 0.2
      %v5171 = vmul.f32 %v5003, 0.2
      %v5172 = vmul.f32 %v5004, 0.2
      %v5173 = vmul.f32 %v5005, 0.2
      %v5174 = vmul.f32 %v5006, 0.2
      %v5175 = vmul.f32 %v5007, 0.2
      %v5176 = vmul.f32 %v5008, 0.2
      %v5177 = vmul.f32 %v5009, 0.2
      %v5178 = vmul.f32 %v5010, 0.2
      %v5179 = vmul.f32 %v5011, 0.2
      %v5180 = vmul.f32 %v5012, 0.2
      %v5181 = vmul.f32 %v5013, 0.2
      %v5182 = vmul.f32 %v5014, 0.2
      %v5183 = vmul.f32 %v5015, 0.2
      %v5184 = vmul.f32 %v5016, 0.2
      %v5185 = vmul.f32 %v5017, 0.2
      %v5186 = vmul.f32 %v5018, 0.2
      %v5187 = vmul.f32 %v5019, 0.2
      %v5188 = vmul.f32 %v5020, 0.2
      %v5189 = vmul.f32 %v5021, 0.2
      %v5190 = vmul.f32 %v5022, 0.2
      %v5191 = vmul.f32 %v5023, 0.2
      %v5192 = vmul.f32 %v5024, 0.2
      %v5193 = vmul.f32 %v5025, 0.2
      %v5194 = vmul.f32 %v5026, 0.2
      %v5195 = vmul.f32 %v5027, 0.2
      %v5196 = vmul.f32 %v5028, 0.2
      %v5197 = vmul.f32 %v5029, 0.2
      %v5198 = vmul.f32 %v5030, 0.2
      %v5199 = vmul.f32 %v5031, 0.2
      %v5200 = vmul.f32 %v5032, 0.2
      %v5201 = vmul.f32 %v5033, 0.2
      %v5202 = vmul.f32 %v5034, 0.2
      %v5203 = vmul.f32 %v5035, 0.2
      %v5204 = vmul.f32 %v5036, 0.2
      %v5205 = vmul.f32 %v5037, 0.2
      %v5206 = vmul.f32 %v5038, 0.2
      %v5207 = vmul.f32 %v5039, 0.2
      %v5208 = vmul.f32 %v5040, 0.2
      %v5209 = vmul.f32 %v5041, 0.2
      %v5210 = vmul.f32 %v5042, 0.2
      %v5211 = vmul.f32 %v5043, 0.2
      %v5212 = vmul.f32 %v5044, 0.2
      %v5213 = vmul.f32 %v5045, 0.2
      %v5214 = vmul.f32 %v5046, 0.2
      %v5215 = vmul.f32 %v5047, 0.2
      %v5216 = vmul.f32 %v5048, 0.2
      %v5217 = vmul.f32 %v5049, 0.2
      %v5218 = vmul.f32 %v5050, 0.2
      %v5219 = vmul.f32 %v5051, 0.2
      %v5220 = vmul.f32 %v5052, 0.2
      %v5221 = vmul.f32 %v5053, 0.2
      %v5222 = vmul.f32 %v5054, 0.2
      %v5223 = vmul.f32 %v5055, 0.2
      %v5224 = vmul.f32 %v5056, 0.2
      %v5225 = vmul.f32 %v5057, 0.2
      %v5226 = vmul.f32 %v5058, 0.2
      %v5227 = vmul.f32 %v5059, 0.2
      %v5228 = vmul.f32 %v5060, 0.2
      %v5229 = vmul.f32 %v5061, 0.2
      %v5230 = vmul.f32 %v5062, 0.2
      %v5231 = vmul.f32 %v5063, 0.2
      %v5232 = vmul.f32 %v5064, 0.2
      %v5233 = vmul.f32 %v5065, 0.2
      %v5234 = vmul.f32 %v5066, 0.2
      %v5235 = vmul.f32 %v5067, 0.2
      %v5236 = vmul.f32 %v5068, 0.2
      %v5237 = vmul.f32 %v5069, 0.2
      %v5238 = vmul.f32 %v5070, 0.2
      %v5239 = vmul.f32 %v5071, 0.2
      %v5240 = vmul.f32 %v5072, 0.2
      %v5241 = vmul.f32 %v5073, 0.2
      %v5242 = vmul.f32 %v5074, 0.2
      %v5243 = vmul.f32 %v5075, 0.2
      %v5244 = vmul.f32 %v5076, 0.2
      %v5245 = vmul.f32 %v5077, 0.2
      %v5246 = vmul.f32 %v5078, 0.2
      %v5247 = vmul.f32 %v5079, 0.2
      %v5248 = vmul.f32 %v5080, 0.2
      %v5249 = vmul.f32 %v5081, 0.2
      %v5250 = vmul.f32 %v5082, 0.2
      %v5251 = vmul.f32 %v5083, 0.2
      %v5252 = vmul.f32 %v5084, 0.2
      %v5253 = vmul.f32 %v5085, 0.2
      %v5254 = vmul.f32 %v5086, 0.2
      %v5255 = vmul.f32 %v5087, 0.2
      %v5256 = vmul.f32 %v5088, 0.2
      %v5257 = vmul.f32 %v5089, 0.2
      %v5258 = vmul.f32 %v5090, 0.2
      %v5259 = vmul.f32 %v5091, 0.2
      %v5260 = vmul.f32 %v5092, 0.2
      %v5261 = vmul.f32 %v5093, 0.2
      %v5262 = vmul.f32 %v5094, 0.2
      %v5263 = vmul.f32 %v5095, 0.2
      %v5264 = vmul.f32 %v5096, 0.2
      %v5265 = vmul.f32 %v5097, 0.2
      %v5266 = vmul.f32 %v5098, 0.2
      %v5267 = vmul.f32 %v5099, 0.2
      %v5268 = vmul.f32 %v5100, 0.2
      %v5269 = vmul.f32 %v5101, 0.2
      %v5270 = vmul.f32 %v5102, 0.2
      %v5271 = vmul.f32 %v5103, 0.2
      %v5272 = vmul.f32 %v5104, 0.2
      %v5273 = vmul.f32 %v5105, 0.2
      %v5274 = vmul.f32 %v5106, 0.2
      %v5275 = vmul.f32 %v5107, 0.2
      %v5276 = vmul.f32 %v5108, 0.2
      %v5277 = vmul.f32 %v5109, 0.2
      %v5278 = vmul.f32 %v5110, 0.2
      %v5279 = vmul.f32 %v5111, 0.2
      %v5280 = vmul.f32 %v5112, 0.2
      %v5281 = vmul.f32 %v5113, 0.2
      %v5282 = vmul.f32 %v5114, 0.2
      %v5283 = vmul.f32 %v5115, 0.2
      %v5284 = vmul.f32 %v5116, 0.2
      %v5285 = vmul.f32 %v5117, 0.2
      %v5286 = vmul.f32 %v5118, 0.2
      %v5287 = vmul.f32 %v5119, 0.2
      %v5288 = vmul.f32 %v5120, 0.2
      %v5289 = vmul.f32 %v5121, 0.2
      %v5290 = vmul.f32 %v5122, 0.2
      %v5291 = vmul.f32 %v5123, 0.2
      %v5292 = vmul.f32 %v5124, 0.2
      %v5293 = vmul.f32 %v5125, 0.2
      %v5294 = vmul.f32 %v5126, 0.2
      %v5295 = vmax.f32 %v4959, %v5127
      %v5296 = vmax.f32 %v4960, %v5128
      %v5297 = vmax.f32 %v4961, %v5129
      %v5298 = vmax.f32 %v4962, %v5130
      %v5299 = vmax.f32 %v4963, %v5131
      %v5300 = vmax.f32 %v4964, %v5132
      %v5301 = vmax.f32 %v4965, %v5133
      %v5302 = vmax.f32 %v4966, %v5134
      %v5303 = vmax.f32 %v4967, %v5135
      %v5304 = vmax.f32 %v4968, %v5136
      %v5305 = vmax.f32 %v4969, %v5137
      %v5306 = vmax.f32 %v4970, %v5138
      %v5307 = vmax.f32 %v4971, %v5139
      %v5308 = vmax.f32 %v4972, %v5140
      %v5309 = vmax.f32 %v4973, %v5141
      %v5310 = vmax.f32 %v4974, %v5142
      %v5311 = vmax.f32 %v4975, %v5143
      %v5312 = vmax.f32 %v4976, %v5144
      %v5313 = vmax.f32 %v4977, %v5145
      %v5314 = vmax.f32 %v4978, %v5146
      %v5315 = vmax.f32 %v4979, %v5147
      %v5316 = vmax.f32 %v4980, %v5148
      %v5317 = vmax.f32 %v4981, %v5149
      %v5318 = vmax.f32 %v4982, %v5150
      %v5319 = vmax.f32 %v4983, %v5151
      %v5320 = vmax.f32 %v4984, %v5152
      %v5321 = vmax.f32 %v4985, %v5153
      %v5322 = vmax.f32 %v4986, %v5154
      %v5323 = vmax.f32 %v4987, %v5155
      %v5324 = vmax.f32 %v4988, %v5156
      %v5325 = vmax.f32 %v4989, %v5157
      %v5326 = vmax.f32 %v4990, %v5158
      %v5327 = vmax.f32 %v4991, %v5159
      %v5328 = vmax.f32 %v4992, %v5160
      %v5329 = vmax.f32 %v4993, %v5161
      %v5330 = vmax.f32 %v4994, %v5162
      %v5331 = vmax.f32 %v4995, %v5163
      %v5332 = vmax.f32 %v4996, %v5164
      %v5333 = vmax.f32 %v4997, %v5165
      %v5334 = vmax.f32 %v4998, %v5166
      %v5335 = vmax.f32 %v4999, %v5167
      %v5336 = vmax.f32 %v5000, %v5168
      %v5337 = vmax.f32 %v5001, %v5169
      %v5338 = vmax.f32 %v5002, %v5170
      %v5339 = vmax.f32 %v5003, %v5171
      %v5340 = vmax.f32 %v5004, %v5172
      %v5341 = vmax.f32 %v5005, %v5173
      %v5342 = vmax.f32 %v5006, %v5174
      %v5343 = vmax.f32 %v5007, %v5175
      %v5344 = vmax.f32 %v5008, %v5176
      %v5345 = vmax.f32 %v5009, %v5177
      %v5346 = vmax.f32 %v5010, %v5178
      %v5347 = vmax.f32 %v5011, %v5179
      %v5348 = vmax.f32 %v5012, %v5180
      %v5349 = vmax.f32 %v5013, %v5181
      %v5350 = vmax.f32 %v5014, %v5182
      %v5351 = vmax.f32 %v5015, %v5183
      %v5352 = vmax.f32 %v5016, %v5184
      %v5353 = vmax.f32 %v5017, %v5185
      %v5354 = vmax.f32 %v5018, %v5186
      %v5355 = vmax.f32 %v5019, %v5187
      %v5356 = vmax.f32 %v5020, %v5188
      %v5357 = vmax.f32 %v5021, %v5189
      %v5358 = vmax.f32 %v5022, %v5190
      %v5359 = vmax.f32 %v5023, %v5191
      %v5360 = vmax.f32 %v5024, %v5192
      %v5361 = vmax.f32 %v5025, %v5193
      %v5362 = vmax.f32 %v5026, %v5194
      %v5363 = vmax.f32 %v5027, %v5195
      %v5364 = vmax.f32 %v5028, %v5196
      %v5365 = vmax.f32 %v5029, %v5197
      %v5366 = vmax.f32 %v5030, %v5198
      %v5367 = vmax.f32 %v5031, %v5199
      %v5368 = vmax.f32 %v5032, %v5200
      %v5369 = vmax.f32 %v5033, %v5201
      %v5370 = vmax.f32 %v5034, %v5202
      %v5371 = vmax.f32 %v5035, %v5203
      %v5372 = vmax.f32 %v5036, %v5204
      %v5373 = vmax.f32 %v5037, %v5205
      %v5374 = vmax.f32 %v5038, %v5206
      %v5375 = vmax.f32 %v5039, %v5207
      %v5376 = vmax.f32 %v5040, %v5208
      %v5377 = vmax.f32 %v5041, %v5209
      %v5378 = vmax.f32 %v5042, %v5210
      %v5379 = vmax.f32 %v5043, %v5211
      %v5380 = vmax.f32 %v5044, %v5212
      %v5381 = vmax.f32 %v5045, %v5213
      %v5382 = vmax.f32 %v5046, %v5214
      %v5383 = vmax.f32 %v5047, %v5215
      %v5384 = vmax.f32 %v5048, %v5216
      %v5385 = vmax.f32 %v5049, %v5217
      %v5386 = vmax.f32 %v5050, %v5218
      %v5387 = vmax.f32 %v5051, %v5219
      %v5388 = vmax.f32 %v5052, %v5220
      %v5389 = vmax.f32 %v5053, %v5221
      %v5390 = vmax.f32 %v5054, %v5222
      %v5391 = vmax.f32 %v5055, %v5223
      %v5392 = vmax.f32 %v5056, %v5224
      %v5393 = vmax.f32 %v5057, %v5225
      %v5394 = vmax.f32 %v5058, %v5226
      %v5395 = vmax.f32 %v5059, %v5227
      %v5396 = vmax.f32 %v5060, %v5228
      %v5397 = vmax.f32 %v5061, %v5229
      %v5398 = vmax.f32 %v5062, %v5230
      %v5399 = vmax.f32 %v5063, %v5231
      %v5400 = vmax.f32 %v5064, %v5232
      %v5401 = vmax.f32 %v5065, %v5233
      %v5402 = vmax.f32 %v5066, %v5234
      %v5403 = vmax.f32 %v5067, %v5235
      %v5404 = vmax.f32 %v5068, %v5236
      %v5405 = vmax.f32 %v5069, %v5237
      %v5406 = vmax.f32 %v5070, %v5238
      %v5407 = vmax.f32 %v5071, %v5239
      %v5408 = vmax.f32 %v5072, %v5240
      %v5409 = vmax.f32 %v5073, %v5241
      %v5410 = vmax.f32 %v5074, %v5242
      %v5411 = vmax.f32 %v5075, %v5243
      %v5412 = vmax.f32 %v5076, %v5244
      %v5413 = vmax.f32 %v5077, %v5245
      %v5414 = vmax.f32 %v5078, %v5246
      %v5415 = vmax.f32 %v5079, %v5247
      %v5416 = vmax.f32 %v5080, %v5248
      %v5417 = vmax.f32 %v5081, %v5249
      %v5418 = vmax.f32 %v5082, %v5250
      %v5419 = vmax.f32 %v5083, %v5251
      %v5420 = vmax.f32 %v5084, %v5252
      %v5421 = vmax.f32 %v5085, %v5253
      %v5422 = vmax.f32 %v5086, %v5254
      %v5423 = vmax.f32 %v5087, %v5255
      %v5424 = vmax.f32 %v5088, %v5256
      %v5425 = vmax.f32 %v5089, %v5257
      %v5426 = vmax.f32 %v5090, %v5258
      %v5427 = vmax.f32 %v5091, %v5259
      %v5428 = vmax.f32 %v5092, %v5260
      %v5429 = vmax.f32 %v5093, %v5261
      %v5430 = vmax.f32 %v5094, %v5262
      %v5431 = vmax.f32 %v5095, %v5263
      %v5432 = vmax.f32 %v5096, %v5264
      %v5433 = vmax.f32 %v5097, %v5265
      %v5434 = vmax.f32 %v5098, %v5266
      %v5435 = vmax.f32 %v5099, %v5267
      %v5436 = vmax.f32 %v5100, %v5268
      %v5437 = vmax.f32 %v5101, %v5269
      %v5438 = vmax.f32 %v5102, %v5270
      %v5439 = vmax.f32 %v5103, %v5271
      %v5440 = vmax.f32 %v5104, %v5272
      %v5441 = vmax.f32 %v5105, %v5273
      %v5442 = vmax.f32 %v5106, %v5274
      %v5443 = vmax.f32 %v5107, %v5275
      %v5444 = vmax.f32 %v5108, %v5276
      %v5445 = vmax.f32 %v5109, %v5277
      %v5446 = vmax.f32 %v5110, %v5278
      %v5447 = vmax.f32 %v5111, %v5279
      %v5448 = vmax.f32 %v5112, %v5280
      %v5449 = vmax.f32 %v5113, %v5281
      %v5450 = vmax.f32 %v5114, %v5282
      %v5451 = vmax.f32 %v5115, %v5283
      %v5452 = vmax.f32 %v5116, %v5284
      %v5453 = vmax.f32 %v5117, %v5285
      %v5454 = vmax.f32 %v5118, %v5286
      %v5455 = vmax.f32 %v5119, %v5287
      %v5456 = vmax.f32 %v5120, %v5288
      %v5457 = vmax.f32 %v5121, %v5289
      %v5458 = vmax.f32 %v5122, %v5290
      %v5459 = vmax.f32 %v5123, %v5291
      %v5460 = vmax.f32 %v5124, %v5292
      %v5461 = vmax.f32 %v5125, %v5293
      %v5462 = vmax.f32 %v5126, %v5294
      %v5463 = vpack.c.bf16 %v5296, %v5295
      %v5464 = vpack.c.bf16 %v5298, %v5297
      %v5465 = vpack.c.bf16 %v5300, %v5299
      %v5466 = vpack.c.bf16 %v5302, %v5301
      %v5467 = vpack.c.bf16 %v5304, %v5303
      %v5468 = vpack.c.bf16 %v5306, %v5305
      %v5469 = vpack.c.bf16 %v5308, %v5307
      %v5470 = vpack.c.bf16 %v5310, %v5309
      %v5471 = vpack.c.bf16 %v5312, %v5311
      %v5472 = vpack.c.bf16 %v5314, %v5313
      %v5473 = vpack.c.bf16 %v5316, %v5315
      %v5474 = vpack.c.bf16 %v5318, %v5317
      %v5475 = vpack.c.bf16 %v5320, %v5319
      %v5476 = vpack.c.bf16 %v5322, %v5321
      %v5477 = vpack.c.bf16 %v5324, %v5323
      %v5478 = vpack.c.bf16 %v5326, %v5325
      %v5479 = vpack.c.bf16 %v5328, %v5327
      %v5480 = vpack.c.bf16 %v5330, %v5329
      %v5481 = vpack.c.bf16 %v5332, %v5331
      %v5482 = vpack.c.bf16 %v5334, %v5333
      %v5483 = vpack.c.bf16 %v5336, %v5335
      %v5484 = vpack.c.bf16 %v5338, %v5337
      %v5485 = vpack.c.bf16 %v5340, %v5339
      %v5486 = vpack.c.bf16 %v5342, %v5341
      %v5487 = vpack.c.bf16 %v5344, %v5343
      %v5488 = vpack.c.bf16 %v5346, %v5345
      %v5489 = vpack.c.bf16 %v5348, %v5347
      %v5490 = vpack.c.bf16 %v5350, %v5349
      %v5491 = vpack.c.bf16 %v5352, %v5351
      %v5492 = vpack.c.bf16 %v5354, %v5353
      %v5493 = vpack.c.bf16 %v5356, %v5355
      %v5494 = vpack.c.bf16 %v5358, %v5357
      %v5495 = vpack.c.bf16 %v5360, %v5359
      %v5496 = vpack.c.bf16 %v5362, %v5361
      %v5497 = vpack.c.bf16 %v5364, %v5363
      %v5498 = vpack.c.bf16 %v5366, %v5365
      %v5499 = vpack.c.bf16 %v5368, %v5367
      %v5500 = vpack.c.bf16 %v5370, %v5369
      %v5501 = vpack.c.bf16 %v5372, %v5371
      %v5502 = vpack.c.bf16 %v5374, %v5373
      %v5503 = vpack.c.bf16 %v5376, %v5375
      %v5504 = vpack.c.bf16 %v5378, %v5377
      %v5505 = vpack.c.bf16 %v5380, %v5379
      %v5506 = vpack.c.bf16 %v5382, %v5381
      %v5507 = vpack.c.bf16 %v5384, %v5383
      %v5508 = vpack.c.bf16 %v5386, %v5385
      %v5509 = vpack.c.bf16 %v5388, %v5387
      %v5510 = vpack.c.bf16 %v5390, %v5389
      %v5511 = vpack.c.bf16 %v5392, %v5391
      %v5512 = vpack.c.bf16 %v5394, %v5393
      %v5513 = vpack.c.bf16 %v5396, %v5395
      %v5514 = vpack.c.bf16 %v5398, %v5397
      %v5515 = vpack.c.bf16 %v5400, %v5399
      %v5516 = vpack.c.bf16 %v5402, %v5401
      %v5517 = vpack.c.bf16 %v5404, %v5403
      %v5518 = vpack.c.bf16 %v5406, %v5405
      %v5519 = vpack.c.bf16 %v5408, %v5407
      %v5520 = vpack.c.bf16 %v5410, %v5409
      %v5521 = vpack.c.bf16 %v5412, %v5411
      %v5522 = vpack.c.bf16 %v5414, %v5413
      %v5523 = vpack.c.bf16 %v5416, %v5415
      %v5524 = vpack.c.bf16 %v5418, %v5417
      %v5525 = vpack.c.bf16 %v5420, %v5419
      %v5526 = vpack.c.bf16 %v5422, %v5421
      %v5527 = vpack.c.bf16 %v5424, %v5423
      %v5528 = vpack.c.bf16 %v5426, %v5425
      %v5529 = vpack.c.bf16 %v5428, %v5427
      %v5530 = vpack.c.bf16 %v5430, %v5429
      %v5531 = vpack.c.bf16 %v5432, %v5431
      %v5532 = vpack.c.bf16 %v5434, %v5433
      %v5533 = vpack.c.bf16 %v5436, %v5435
      %v5534 = vpack.c.bf16 %v5438, %v5437
      %v5535 = vpack.c.bf16 %v5440, %v5439
      %v5536 = vpack.c.bf16 %v5442, %v5441
      %v5537 = vpack.c.bf16 %v5444, %v5443
      %v5538 = vpack.c.bf16 %v5446, %v5445
      %v5539 = vpack.c.bf16 %v5448, %v5447
      %v5540 = vpack.c.bf16 %v5450, %v5449
      %v5541 = vpack.c.bf16 %v5452, %v5451
      %v5542 = vpack.c.bf16 %v5454, %v5453
      %v5543 = vpack.c.bf16 %v5456, %v5455
      %v5544 = vpack.c.bf16 %v5458, %v5457
      %v5545 = vpack.c.bf16 %v5460, %v5459
      %v5546 = vpack.c.bf16 %v5462, %v5461
      %v5547 = vld [vmem:[%s319] sm:$0xf]
      %v5548 = vld [vmem:[%s319 + $0x4] sm:$0xf]
      %v5549 = vld [vmem:[%s319 + $0x8] sm:$0xf]
      %v5550 = vld [vmem:[%s319 + $0xc] sm:$0xf]
      %v5551 = vld [vmem:[%s319 + $0x10] sm:$0xf]
      %v5552 = vld [vmem:[%s319 + $0x14] sm:$0xf]
      %v5553 = vld [vmem:[%s319 + $0x18] sm:$0xf]
      %v5554 = vld [vmem:[%s319 + $0x1c] sm:$0xf]
      %v5555 = vld [vmem:[%s319 + $0x20] sm:$0xf]
      %v5556 = vld [vmem:[%s319 + $0x24] sm:$0xf]
      %v5557 = vld [vmem:[%s319 + $0x28] sm:$0xf]
      %v5558 = vld [vmem:[%s319 + $0x2c] sm:$0xf]
      %v5559 = vld [vmem:[%s319 + $0x30] sm:$0xf]
      %v5560 = vld [vmem:[%s319 + $0x34] sm:$0xf]
      %v5561 = vld [vmem:[%s319 + $0x38] sm:$0xf]
      %v5562 = vld [vmem:[%s319 + $0x3c] sm:$0xf]
      %v5579 = vunpack.c.l.b16 %v5547
      %v5580 = vunpack.c.l.b16 %v5548
      %v5581 = vunpack.c.l.b16 %v5549
      %v5582 = vunpack.c.l.b16 %v5550
      %v5583 = vunpack.c.l.b16 %v5551
      %v5584 = vunpack.c.l.b16 %v5552
      %v5585 = vunpack.c.l.b16 %v5553
      %v5586 = vunpack.c.l.b16 %v5554
      %v5587 = vunpack.c.l.b16 %v5555
      %v5588 = vunpack.c.l.b16 %v5556
      %v5589 = vunpack.c.l.b16 %v5557
      %v5590 = vunpack.c.l.b16 %v5558
      %v5591 = vunpack.c.l.b16 %v5559
      %v5592 = vunpack.c.l.b16 %v5560
      %v5593 = vunpack.c.l.b16 %v5561
      %v5594 = vunpack.c.l.b16 %v5562
      %v5595 = vpack.c.b16 %v5580, %v5579
      %v5596 = vpack.c.b16 %v5582, %v5581
      %v5597 = vpack.c.b16 %v5584, %v5583
      %v5598 = vpack.c.b16 %v5586, %v5585
      %v5599 = vpack.c.b16 %v5588, %v5587
      %v5600 = vpack.c.b16 %v5590, %v5589
      %v5601 = vpack.c.b16 %v5592, %v5591
      %v5602 = vpack.c.b16 %v5594, %v5593
      %5611 = vmatprep.subr.bf16.mxu0 0
      %5612 = vmatpush1.bf16.msra.mxu0 %v5595
      %5613 = vmatprep.subr.bf16.mxu0 0
      %5614 = vmatpush1.bf16.msra.mxu0 %v5596
      %5615 = vmatprep.subr.bf16.mxu0 0
      %5616 = vmatpush1.bf16.msra.mxu0 %v5597
      %5617 = vmatprep.subr.bf16.mxu0 0
      %5618 = vmatpush1.bf16.msra.mxu0 %v5598
      %5619 = vmatprep.subr.bf16.mxu0 0
      %5620 = vmatpush1.bf16.msra.mxu0 %v5599
      %5621 = vmatprep.subr.bf16.mxu0 0
      %5622 = vmatpush1.bf16.msra.mxu0 %v5600
      %5623 = vmatprep.subr.bf16.mxu0 0
      %5624 = vmatpush1.bf16.msra.mxu0 %v5601
      %5625 = vmatprep.subr.bf16.mxu0 0
      %5626 = vmatpush1.bf16.msra.mxu0 %v5602
      %5627 = vmatprep.subr.bf16.mxu0 0
      %5628 = vmatpush1.bf16.msra.mxu0 0
      %5629 = vmatprep.subr.bf16.mxu0 0
      %5630 = vmatpush1.bf16.msra.mxu0 0
      %5631 = vmatprep.subr.bf16.mxu0 0
      %5632 = vmatpush1.bf16.msra.mxu0 0
      %5633 = vmatprep.subr.bf16.mxu0 0
      %5634 = vmatpush1.bf16.msra.mxu0 0
      %5635 = vmatprep.subr.bf16.mxu0 0
      %5636 = vmatpush1.bf16.msra.mxu0 0
      %5637 = vmatprep.subr.bf16.mxu0 0
      %5638 = vmatpush1.bf16.msra.mxu0 0
      %5639 = vmatprep.subr.bf16.mxu0 0
      %5640 = vmatpush1.bf16.msra.mxu0 0
      %5641 = vmatprep.subr.bf16.mxu0 0
      %5642 = vmatpush1.bf16.msra.mxu0 0
      %5643 = vmatprep.mubr.bf16.mxu0 0
      %5644 = vmatmul.mubr.bf16.gmra.mrb[0].mxu0 %v5463
      %v5645 = vpop.f32.mrb[0].mxu0
      %v5646 = vadd.f32 %v2923, %v5645
      %v5647 = vpop.f32.mrb[0].mxu0
      %v5648 = vpop.f32.mrb[0].mxu0
      %v5649 = vadd.f32 %v2926, %v5648
      %v5650 = vpop.f32.mrb[0].mxu0
      %5651 = vmatprep.mubr.bf16.mxu0 0
      %5652 = vmatmul.mubr.bf16.gmra.mrb[0].mxu0 %v5464
      %v5653 = vpop.f32.mrb[0].mxu0
      %v5654 = vadd.f32 %v2931, %v5653
      %v5655 = vpop.f32.mrb[0].mxu0
      %v5656 = vpop.f32.mrb[0].mxu0
      %v5657 = vadd.f32 %v2934, %v5656
      %v5658 = vpop.f32.mrb[0].mxu0
      %5659 = vmatprep.mubr.bf16.mxu0 0
      %5660 = vmatmul.mubr.bf16.gmra.mrb[0].mxu0 %v5465
      %v5661 = vpop.f32.mrb[0].mxu0
      %v5662 = vadd.f32 %v2939, %v5661
      %v5663 = vpop.f32.mrb[0].mxu0
      %v5664 = vpop.f32.mrb[0].mxu0
      %v5665 = vadd.f32 %v2942, %v5664
      %v5666 = vpop.f32.mrb[0].mxu0
      %5667 = vmatprep.mubr.bf16.mxu0 0
      %5668 = vmatmul.mubr.bf16.gmra.mrb[0].mxu0 %v5466
      %v5669 = vpop.f32.mrb[0].mxu0
      %v5670 = vadd.f32 %v2947, %v5669
      %v5671 = vpop.f32.mrb[0].mxu0
      %v5672 = vpop.f32.mrb[0].mxu0
      %v5673 = vadd.f32 %v2950, %v5672
      %v5674 = vpop.f32.mrb[0].mxu0
      %5675 = vmatprep.mubr.bf16.mxu0 0
      %5676 = vmatmul.mubr.bf16.gmra.mrb[0].mxu0 %v5467
      %v5677 = vpop.f32.mrb[0].mxu0
      %v5678 = vadd.f32 %v2955, %v5677
      %v5679 = vpop.f32.mrb[0].mxu0
      %v5680 = vpop.f32.mrb[0].mxu0
      %v5681 = vadd.f32 %v2958, %v5680
      %v5682 = vpop.f32.mrb[0].mxu0
      %5683 = vmatprep.mubr.bf16.mxu0 0
      %5684 = vmatmul.mubr.bf16.gmra.mrb[0].mxu0 %v5468
      %v5685 = vpop.f32.mrb[0].mxu0
      %v5686 = vadd.f32 %v2963, %v5685
      %v5687 = vpop.f32.mrb[0].mxu0
      %v5688 = vpop.f32.mrb[0].mxu0
      %v5689 = vadd.f32 %v2966, %v5688
      %v5690 = vpop.f32.mrb[0].mxu0
      %5691 = vmatprep.mubr.bf16.mxu0 0
      %5692 = vmatmul.mubr.bf16.gmra.mrb[0].mxu0 %v5469
      %v5693 = vpop.f32.mrb[0].mxu0
      %v5694 = vadd.f32 %v2971, %v5693
      %v5695 = vpop.f32.mrb[0].mxu0
      %v5696 = vpop.f32.mrb[0].mxu0
      %v5697 = vadd.f32 %v2974, %v5696
      %v5698 = vpop.f32.mrb[0].mxu0
      %5699 = vmatprep.mubr.bf16.mxu0 0
      %5700 = vmatmul.mubr.bf16.gmra.mrb[0].mxu0 %v5470
      %v5701 = vpop.f32.mrb[0].mxu0
      %v5702 = vadd.f32 %v2979, %v5701
      %v5703 = vpop.f32.mrb[0].mxu0
      %v5704 = vpop.f32.mrb[0].mxu0
      %v5705 = vadd.f32 %v2982, %v5704
      %v5706 = vpop.f32.mrb[0].mxu0
      %5707 = vmatprep.mubr.bf16.mxu0 0
      %5708 = vmatmul.mubr.bf16.gmra.mrb[0].mxu0 %v5471
      %v5709 = vpop.f32.mrb[0].mxu0
      %v5710 = vadd.f32 %v2987, %v5709
      %v5711 = vpop.f32.mrb[0].mxu0
      %v5712 = vpop.f32.mrb[0].mxu0
      %v5713 = vadd.f32 %v2990, %v5712
      %v5714 = vpop.f32.mrb[0].mxu0
      %5715 = vmatprep.mubr.bf16.mxu0 0
      %5716 = vmatmul.mubr.bf16.gmra.mrb[0].mxu0 %v5472
      %v5717 = vpop.f32.mrb[0].mxu0
      %v5718 = vadd.f32 %v2995, %v5717
      %v5719 = vpop.f32.mrb[0].mxu0
      %v5720 = vpop.f32.mrb[0].mxu0
      %v5721 = vadd.f32 %v2998, %v5720
      %v5722 = vpop.f32.mrb[0].mxu0
      %5723 = vmatprep.mubr.bf16.mxu0 0
      %5724 = vmatmul.mubr.bf16.gmra.mrb[0].mxu0 %v5473
      %v5725 = vpop.f32.mrb[0].mxu0
      %v5726 = vadd.f32 %v3003, %v5725
      %v5727 = vpop.f32.mrb[0].mxu0
      %v5728 = vpop.f32.mrb[0].mxu0
      %v5729 = vadd.f32 %v3006, %v5728
      %v5730 = vpop.f32.mrb[0].mxu0
      %5731 = vmatprep.mubr.bf16.mxu0 0
      %5732 = vmatmul.mubr.bf16.gmra.mrb[0].mxu0 %v5474
      %v5733 = vpop.f32.mrb[0].mxu0
      %v5734 = vadd.f32 %v3011, %v5733
      %v5735 = vpop.f32.mrb[0].mxu0
      %v5736 = vpop.f32.mrb[0].mxu0
      %v5737 = vadd.f32 %v3014, %v5736
      %v5738 = vpop.f32.mrb[0].mxu0
      %5739 = vmatprep.mubr.bf16.mxu0 0
      %5740 = vmatmul.mubr.bf16.gmra.mrb[0].mxu0 %v5475
      %v5741 = vpop.f32.mrb[0].mxu0
      %v5742 = vadd.f32 %v3019, %v5741
      %v5743 = vpop.f32.mrb[0].mxu0
      %v5744 = vpop.f32.mrb[0].mxu0
      %v5745 = vadd.f32 %v3022, %v5744
      %v5746 = vpop.f32.mrb[0].mxu0
      %5747 = vmatprep.mubr.bf16.mxu0 0
      %5748 = vmatmul.mubr.bf16.gmra.mrb[0].mxu0 %v5476
      %v5749 = vpop.f32.mrb[0].mxu0
      %v5750 = vadd.f32 %v3027, %v5749
      %v5751 = vpop.f32.mrb[0].mxu0
      %v5752 = vpop.f32.mrb[0].mxu0
      %v5753 = vadd.f32 %v3030, %v5752
      %v5754 = vpop.f32.mrb[0].mxu0
      %5755 = vmatprep.mubr.bf16.mxu0 0
      %5756 = vmatmul.mubr.bf16.gmra.mrb[0].mxu0 %v5477
      %v5757 = vpop.f32.mrb[0].mxu0
      %v5758 = vadd.f32 %v3035, %v5757
      %v5759 = vpop.f32.mrb[0].mxu0
      %v5760 = vpop.f32.mrb[0].mxu0
      %v5761 = vadd.f32 %v3038, %v5760
      %v5762 = vpop.f32.mrb[0].mxu0
      %5763 = vmatprep.mubr.bf16.mxu0 0
      %5764 = vmatmul.mubr.bf16.gmra.mrb[0].mxu0 %v5478
      %v5765 = vpop.f32.mrb[0].mxu0
      %v5766 = vadd.f32 %v3043, %v5765
      %v5767 = vpop.f32.mrb[0].mxu0
      %v5768 = vpop.f32.mrb[0].mxu0
      %v5769 = vadd.f32 %v3046, %v5768
      %v5770 = vpop.f32.mrb[0].mxu0
      %5771 = vmatprep.mubr.bf16.mxu0 0
      %5772 = vmatmul.mubr.bf16.gmra.mrb[0].mxu0 %v5479
      %v5773 = vpop.f32.mrb[0].mxu0
      %v5774 = vadd.f32 %v3051, %v5773
      %v5775 = vpop.f32.mrb[0].mxu0
      %v5776 = vpop.f32.mrb[0].mxu0
      %v5777 = vadd.f32 %v3054, %v5776
      %v5778 = vpop.f32.mrb[0].mxu0
      %5779 = vmatprep.mubr.bf16.mxu0 0
      %5780 = vmatmul.mubr.bf16.gmra.mrb[0].mxu0 %v5480
      %v5781 = vpop.f32.mrb[0].mxu0
      %v5782 = vadd.f32 %v3059, %v5781
      %v5783 = vpop.f32.mrb[0].mxu0
      %v5784 = vpop.f32.mrb[0].mxu0
      %v5785 = vadd.f32 %v3062, %v5784
      %v5786 = vpop.f32.mrb[0].mxu0
      %5787 = vmatprep.mubr.bf16.mxu0 0
      %5788 = vmatmul.mubr.bf16.gmra.mrb[0].mxu0 %v5481
      %v5789 = vpop.f32.mrb[0].mxu0
      %v5790 = vadd.f32 %v3067, %v5789
      %v5791 = vpop.f32.mrb[0].mxu0
      %v5792 = vpop.f32.mrb[0].mxu0
      %v5793 = vadd.f32 %v3070, %v5792
      %v5794 = vpop.f32.mrb[0].mxu0
      %5795 = vmatprep.mubr.bf16.mxu0 0
      %5796 = vmatmul.mubr.bf16.gmra.mrb[0].mxu0 %v5482
      %v5797 = vpop.f32.mrb[0].mxu0
      %v5798 = vadd.f32 %v3075, %v5797
      %v5799 = vpop.f32.mrb[0].mxu0
      %v5800 = vpop.f32.mrb[0].mxu0
      %v5801 = vadd.f32 %v3078, %v5800
      %v5802 = vpop.f32.mrb[0].mxu0
      %5803 = vmatprep.mubr.bf16.mxu0 0
      %5804 = vmatmul.mubr.bf16.gmra.mrb[0].mxu0 %v5483
      %v5805 = vpop.f32.mrb[0].mxu0
      %v5806 = vadd.f32 %v3083, %v5805
      %v5807 = vpop.f32.mrb[0].mxu0
      %v5808 = vpop.f32.mrb[0].mxu0
      %v5809 = vadd.f32 %v3086, %v5808
      %v5810 = vpop.f32.mrb[0].mxu0
      %5811 = vmatprep.mubr.bf16.mxu0 0
      %5812 = vmatmul.mubr.bf16.gmra.mrb[0].mxu0 %v5484
      %v5813 = vpop.f32.mrb[0].mxu0
      %v5814 = vadd.f32 %v3091, %v5813
      %v5815 = vpop.f32.mrb[0].mxu0
      %v5816 = vpop.f32.mrb[0].mxu0
      %v5817 = vadd.f32 %v3094, %v5816
      %v5818 = vpop.f32.mrb[0].mxu0
      %5819 = vmatprep.mubr.bf16.mxu0 0
      %5820 = vmatmul.mubr.bf16.gmra.mrb[0].mxu0 %v5485
      %v5821 = vpop.f32.mrb[0].mxu0
      %v5822 = vadd.f32 %v3099, %v5821
      %v5823 = vpop.f32.mrb[0].mxu0
      %v5824 = vpop.f32.mrb[0].mxu0
      %v5825 = vadd.f32 %v3102, %v5824
      %v5826 = vpop.f32.mrb[0].mxu0
      %5827 = vmatprep.mubr.bf16.mxu0 0
      %5828 = vmatmul.mubr.bf16.gmra.mrb[0].mxu0 %v5486
      %v5829 = vpop.f32.mrb[0].mxu0
      %v5830 = vadd.f32 %v3107, %v5829
      %v5831 = vpop.f32.mrb[0].mxu0
      %v5832 = vpop.f32.mrb[0].mxu0
      %v5833 = vadd.f32 %v3110, %v5832
      %v5834 = vpop.f32.mrb[0].mxu0
      %5835 = vmatprep.mubr.bf16.mxu0 0
      %5836 = vmatmul.mubr.bf16.gmra.mrb[0].mxu0 %v5487
      %v5837 = vpop.f32.mrb[0].mxu0
      %v5838 = vadd.f32 %v3115, %v5837
      %v5839 = vpop.f32.mrb[0].mxu0
      %v5840 = vpop.f32.mrb[0].mxu0
      %v5841 = vadd.f32 %v3118, %v5840
      %v5842 = vpop.f32.mrb[0].mxu0
      %5843 = vmatprep.mubr.bf16.mxu0 0
      %5844 = vmatmul.mubr.bf16.gmra.mrb[0].mxu0 %v5488
      %v5845 = vpop.f32.mrb[0].mxu0
      %v5846 = vadd.f32 %v3123, %v5845
      %v5847 = vpop.f32.mrb[0].mxu0
      %v5848 = vpop.f32.mrb[0].mxu0
      %v5849 = vadd.f32 %v3126, %v5848
      %v5850 = vpop.f32.mrb[0].mxu0
      %5851 = vmatprep.mubr.bf16.mxu0 0
      %5852 = vmatmul.mubr.bf16.gmra.mrb[0].mxu0 %v5489
      %v5853 = vpop.f32.mrb[0].mxu0
      %v5854 = vadd.f32 %v3131, %v5853
      %v5855 = vpop.f32.mrb[0].mxu0
      %v5856 = vpop.f32.mrb[0].mxu0
      %v5857 = vadd.f32 %v3134, %v5856
      %v5858 = vpop.f32.mrb[0].mxu0
      %5859 = vmatprep.mubr.bf16.mxu0 0
      %5860 = vmatmul.mubr.bf16.gmra.mrb[0].mxu0 %v5490
      %v5861 = vpop.f32.mrb[0].mxu0
      %v5862 = vadd.f32 %v3139, %v5861
      %v5863 = vpop.f32.mrb[0].mxu0
      %v5864 = vpop.f32.mrb[0].mxu0
      %v5865 = vadd.f32 %v3142, %v5864
      %v5866 = vpop.f32.mrb[0].mxu0
      %5867 = vmatprep.mubr.bf16.mxu0 0
      %5868 = vmatmul.mubr.bf16.gmra.mrb[0].mxu0 %v5491
      %v5869 = vpop.f32.mrb[0].mxu0
      %v5870 = vadd.f32 %v3147, %v5869
      %v5871 = vpop.f32.mrb[0].mxu0
      %v5872 = vpop.f32.mrb[0].mxu0
      %v5873 = vadd.f32 %v3150, %v5872
      %v5874 = vpop.f32.mrb[0].mxu0
      %5875 = vmatprep.mubr.bf16.mxu0 0
      %5876 = vmatmul.mubr.bf16.gmra.mrb[0].mxu0 %v5492
      %v5877 = vpop.f32.mrb[0].mxu0
      %v5878 = vadd.f32 %v3155, %v5877
      %v5879 = vpop.f32.mrb[0].mxu0
      %v5880 = vpop.f32.mrb[0].mxu0
      %v5881 = vadd.f32 %v3158, %v5880
      %v5882 = vpop.f32.mrb[0].mxu0
      %5883 = vmatprep.mubr.bf16.mxu0 0
      %5884 = vmatmul.mubr.bf16.gmra.mrb[0].mxu0 %v5493
      %v5885 = vpop.f32.mrb[0].mxu0
      %v5886 = vadd.f32 %v3163, %v5885
      %v5887 = vpop.f32.mrb[0].mxu0
      %v5888 = vpop.f32.mrb[0].mxu0
      %v5889 = vadd.f32 %v3166, %v5888
      %v5890 = vpop.f32.mrb[0].mxu0
      %5891 = vmatprep.mubr.bf16.mxu0 0
      %5892 = vmatmul.mubr.bf16.gmra.mrb[0].mxu0 %v5494
      %v5893 = vpop.f32.mrb[0].mxu0
      %v5894 = vadd.f32 %v3171, %v5893
      %v5895 = vpop.f32.mrb[0].mxu0
      %v5896 = vpop.f32.mrb[0].mxu0
      %v5897 = vadd.f32 %v3174, %v5896
      %v5898 = vpop.f32.mrb[0].mxu0
      %5899 = vmatprep.mubr.bf16.mxu0 0
      %5900 = vmatmul.mubr.bf16.gmra.mrb[0].mxu0 %v5495
      %v5901 = vpop.f32.mrb[0].mxu0
      %v5902 = vadd.f32 %v3179, %v5901
      %v5903 = vpop.f32.mrb[0].mxu0
      %v5904 = vpop.f32.mrb[0].mxu0
      %v5905 = vadd.f32 %v3182, %v5904
      %v5906 = vpop.f32.mrb[0].mxu0
      %5907 = vmatprep.mubr.bf16.mxu0 0
      %5908 = vmatmul.mubr.bf16.gmra.mrb[0].mxu0 %v5496
      %v5909 = vpop.f32.mrb[0].mxu0
      %v5910 = vadd.f32 %v3187, %v5909
      %v5911 = vpop.f32.mrb[0].mxu0
      %v5912 = vpop.f32.mrb[0].mxu0
      %v5913 = vadd.f32 %v3190, %v5912
      %v5914 = vpop.f32.mrb[0].mxu0
      %5915 = vmatprep.mubr.bf16.mxu0 0
      %5916 = vmatmul.mubr.bf16.gmra.mrb[0].mxu0 %v5497
      %v5917 = vpop.f32.mrb[0].mxu0
      %v5918 = vadd.f32 %v3195, %v5917
      %v5919 = vpop.f32.mrb[0].mxu0
      %v5920 = vpop.f32.mrb[0].mxu0
      %v5921 = vadd.f32 %v3198, %v5920
      %v5922 = vpop.f32.mrb[0].mxu0
      %5923 = vmatprep.mubr.bf16.mxu0 0
      %5924 = vmatmul.mubr.bf16.gmra.mrb[0].mxu0 %v5498
      %v5925 = vpop.f32.mrb[0].mxu0
      %v5926 = vadd.f32 %v3203, %v5925
      %v5927 = vpop.f32.mrb[0].mxu0
      %v5928 = vpop.f32.mrb[0].mxu0
      %v5929 = vadd.f32 %v3206, %v5928
      %v5930 = vpop.f32.mrb[0].mxu0
      %5931 = vmatprep.mubr.bf16.mxu0 0
      %5932 = vmatmul.mubr.bf16.gmra.mrb[0].mxu0 %v5499
      %v5933 = vpop.f32.mrb[0].mxu0
      %v5934 = vadd.f32 %v3211, %v5933
      %v5935 = vpop.f32.mrb[0].mxu0
      %v5936 = vpop.f32.mrb[0].mxu0
      %v5937 = vadd.f32 %v3214, %v5936
      %v5938 = vpop.f32.mrb[0].mxu0
      %5939 = vmatprep.mubr.bf16.mxu0 0
      %5940 = vmatmul.mubr.bf16.gmra.mrb[0].mxu0 %v5500
      %v5941 = vpop.f32.mrb[0].mxu0
      %v5942 = vadd.f32 %v3219, %v5941
      %v5943 = vpop.f32.mrb[0].mxu0
      %v5944 = vpop.f32.mrb[0].mxu0
      %v5945 = vadd.f32 %v3222, %v5944
      %v5946 = vpop.f32.mrb[0].mxu0
      %5947 = vmatprep.mubr.bf16.mxu0 0
      %5948 = vmatmul.mubr.bf16.gmra.mrb[0].mxu0 %v5501
      %v5949 = vpop.f32.mrb[0].mxu0
      %v5950 = vadd.f32 %v3227, %v5949
      %v5951 = vpop.f32.mrb[0].mxu0
      %v5952 = vpop.f32.mrb[0].mxu0
      %v5953 = vadd.f32 %v3230, %v5952
      %v5954 = vpop.f32.mrb[0].mxu0
      %5955 = vmatprep.mubr.bf16.mxu0 0
      %5956 = vmatmul.mubr.bf16.gmra.mrb[0].mxu0 %v5502
      %v5957 = vpop.f32.mrb[0].mxu0
      %v5958 = vadd.f32 %v3235, %v5957
      %v5959 = vpop.f32.mrb[0].mxu0
      %v5960 = vpop.f32.mrb[0].mxu0
      %v5961 = vadd.f32 %v3238, %v5960
      %v5962 = vpop.f32.mrb[0].mxu0
      %5963 = vmatprep.mubr.bf16.mxu0 0
      %5964 = vmatmul.mubr.bf16.gmra.mrb[0].mxu0 %v5503
      %v5965 = vpop.f32.mrb[0].mxu0
      %v5966 = vadd.f32 %v3243, %v5965
      %v5967 = vpop.f32.mrb[0].mxu0
      %v5968 = vpop.f32.mrb[0].mxu0
      %v5969 = vadd.f32 %v3246, %v5968
      %v5970 = vpop.f32.mrb[0].mxu0
      %5971 = vmatprep.mubr.bf16.mxu0 0
      %5972 = vmatmul.mubr.bf16.gmra.mrb[0].mxu0 %v5504
      %v5973 = vpop.f32.mrb[0].mxu0
      %v5974 = vadd.f32 %v3251, %v5973
      %v5975 = vpop.f32.mrb[0].mxu0
      %v5976 = vpop.f32.mrb[0].mxu0
      %v5977 = vadd.f32 %v3254, %v5976
      %v5978 = vpop.f32.mrb[0].mxu0
      %5979 = vmatprep.mubr.bf16.mxu0 0
      %5980 = vmatmul.mubr.bf16.gmra.mrb[0].mxu0 %v5505
      %v5981 = vpop.f32.mrb[0].mxu0
      %v5982 = vadd.f32 %v3259, %v5981
      %v5983 = vpop.f32.mrb[0].mxu0
      %v5984 = vpop.f32.mrb[0].mxu0
      %v5985 = vadd.f32 %v3262, %v5984
      %v5986 = vpop.f32.mrb[0].mxu0
      %5987 = vmatprep.mubr.bf16.mxu0 0
      %5988 = vmatmul.mubr.bf16.gmra.mrb[0].mxu0 %v5506
      %v5989 = vpop.f32.mrb[0].mxu0
      %v5990 = vadd.f32 %v3267, %v5989
      %v5991 = vpop.f32.mrb[0].mxu0
      %v5992 = vpop.f32.mrb[0].mxu0
      %v5993 = vadd.f32 %v3270, %v5992
      %v5994 = vpop.f32.mrb[0].mxu0
      %5995 = vmatprep.mubr.bf16.mxu0 0
      %5996 = vmatmul.mubr.bf16.gmra.mrb[0].mxu0 %v5507
      %v5997 = vpop.f32.mrb[0].mxu0
      %v5998 = vadd.f32 %v3275, %v5997
      %v5999 = vpop.f32.mrb[0].mxu0
      %v6000 = vpop.f32.mrb[0].mxu0
      %v6001 = vadd.f32 %v3278, %v6000
      %v6002 = vpop.f32.mrb[0].mxu0
      %6003 = vmatprep.mubr.bf16.mxu0 0
      %6004 = vmatmul.mubr.bf16.gmra.mrb[0].mxu0 %v5508
      %v6005 = vpop.f32.mrb[0].mxu0
      %v6006 = vadd.f32 %v3283, %v6005
      %v6007 = vpop.f32.mrb[0].mxu0
      %v6008 = vpop.f32.mrb[0].mxu0
      %v6009 = vadd.f32 %v3286, %v6008
      %v6010 = vpop.f32.mrb[0].mxu0
      %6011 = vmatprep.mubr.bf16.mxu0 0
      %6012 = vmatmul.mubr.bf16.gmra.mrb[0].mxu0 %v5509
      %v6013 = vpop.f32.mrb[0].mxu0
      %v6014 = vadd.f32 %v3291, %v6013
      %v6015 = vpop.f32.mrb[0].mxu0
      %v6016 = vpop.f32.mrb[0].mxu0
      %v6017 = vadd.f32 %v3294, %v6016
      %v6018 = vpop.f32.mrb[0].mxu0
      %6019 = vmatprep.mubr.bf16.mxu0 0
      %6020 = vmatmul.mubr.bf16.gmra.mrb[0].mxu0 %v5510
      %v6021 = vpop.f32.mrb[0].mxu0
      %v6022 = vadd.f32 %v3299, %v6021
      %v6023 = vpop.f32.mrb[0].mxu0
      %v6024 = vpop.f32.mrb[0].mxu0
      %v6025 = vadd.f32 %v3302, %v6024
      %v6026 = vpop.f32.mrb[0].mxu0
      %6027 = vmatprep.mubr.bf16.mxu0 0
      %6028 = vmatmul.mubr.bf16.gmra.mrb[0].mxu0 %v5511
      %v6029 = vpop.f32.mrb[0].mxu0
      %v6030 = vadd.f32 %v3307, %v6029
      %v6031 = vpop.f32.mrb[0].mxu0
      %v6032 = vpop.f32.mrb[0].mxu0
      %v6033 = vadd.f32 %v3310, %v6032
      %v6034 = vpop.f32.mrb[0].mxu0
      %6035 = vmatprep.mubr.bf16.mxu0 0
      %6036 = vmatmul.mubr.bf16.gmra.mrb[0].mxu0 %v5512
      %v6037 = vpop.f32.mrb[0].mxu0
      %v6038 = vadd.f32 %v3315, %v6037
      %v6039 = vpop.f32.mrb[0].mxu0
      %v6040 = vpop.f32.mrb[0].mxu0
      %v6041 = vadd.f32 %v3318, %v6040
      %v6042 = vpop.f32.mrb[0].mxu0
      %6043 = vmatprep.mubr.bf16.mxu0 0
      %6044 = vmatmul.mubr.bf16.gmra.mrb[0].mxu0 %v5513
      %v6045 = vpop.f32.mrb[0].mxu0
      %v6046 = vadd.f32 %v3323, %v6045
      %v6047 = vpop.f32.mrb[0].mxu0
      %v6048 = vpop.f32.mrb[0].mxu0
      %v6049 = vadd.f32 %v3326, %v6048
      %v6050 = vpop.f32.mrb[0].mxu0
      %6051 = vmatprep.mubr.bf16.mxu0 0
      %6052 = vmatmul.mubr.bf16.gmra.mrb[0].mxu0 %v5514
      %v6053 = vpop.f32.mrb[0].mxu0
      %v6054 = vadd.f32 %v3331, %v6053
      %v6055 = vpop.f32.mrb[0].mxu0
      %v6056 = vpop.f32.mrb[0].mxu0
      %v6057 = vadd.f32 %v3334, %v6056
      %v6058 = vpop.f32.mrb[0].mxu0
      %6059 = vmatprep.mubr.bf16.mxu0 0
      %6060 = vmatmul.mubr.bf16.gmra.mrb[0].mxu0 %v5515
      %v6061 = vpop.f32.mrb[0].mxu0
      %v6062 = vadd.f32 %v3339, %v6061
      %v6063 = vpop.f32.mrb[0].mxu0
      %v6064 = vpop.f32.mrb[0].mxu0
      %v6065 = vadd.f32 %v3342, %v6064
      %v6066 = vpop.f32.mrb[0].mxu0
      %6067 = vmatprep.mubr.bf16.mxu0 0
      %6068 = vmatmul.mubr.bf16.gmra.mrb[0].mxu0 %v5516
      %v6069 = vpop.f32.mrb[0].mxu0
      %v6070 = vadd.f32 %v3347, %v6069
      %v6071 = vpop.f32.mrb[0].mxu0
      %v6072 = vpop.f32.mrb[0].mxu0
      %v6073 = vadd.f32 %v3350, %v6072
      %v6074 = vpop.f32.mrb[0].mxu0
      %6075 = vmatprep.mubr.bf16.mxu0 0
      %6076 = vmatmul.mubr.bf16.gmra.mrb[0].mxu0 %v5517
      %v6077 = vpop.f32.mrb[0].mxu0
      %v6078 = vadd.f32 %v3355, %v6077
      %v6079 = vpop.f32.mrb[0].mxu0
      %v6080 = vpop.f32.mrb[0].mxu0
      %v6081 = vadd.f32 %v3358, %v6080
      %v6082 = vpop.f32.mrb[0].mxu0
      %6083 = vmatprep.mubr.bf16.mxu0 0
      %6084 = vmatmul.mubr.bf16.gmra.mrb[0].mxu0 %v5518
      %v6085 = vpop.f32.mrb[0].mxu0
      %v6086 = vadd.f32 %v3363, %v6085
      %v6087 = vpop.f32.mrb[0].mxu0
      %v6088 = vpop.f32.mrb[0].mxu0
      %v6089 = vadd.f32 %v3366, %v6088
      %v6090 = vpop.f32.mrb[0].mxu0
      %6091 = vmatprep.mubr.bf16.mxu0 0
      %6092 = vmatmul.mubr.bf16.gmra.mrb[0].mxu0 %v5519
      %v6093 = vpop.f32.mrb[0].mxu0
      %v6094 = vadd.f32 %v3371, %v6093
      %v6095 = vpop.f32.mrb[0].mxu0
      %v6096 = vpop.f32.mrb[0].mxu0
      %v6097 = vadd.f32 %v3374, %v6096
      %v6098 = vpop.f32.mrb[0].mxu0
      %6099 = vmatprep.mubr.bf16.mxu0 0
      %6100 = vmatmul.mubr.bf16.gmra.mrb[0].mxu0 %v5520
      %v6101 = vpop.f32.mrb[0].mxu0
      %v6102 = vadd.f32 %v3379, %v6101
      %v6103 = vpop.f32.mrb[0].mxu0
      %v6104 = vpop.f32.mrb[0].mxu0
      %v6105 = vadd.f32 %v3382, %v6104
      %v6106 = vpop.f32.mrb[0].mxu0
      %6107 = vmatprep.mubr.bf16.mxu0 0
      %6108 = vmatmul.mubr.bf16.gmra.mrb[0].mxu0 %v5521
      %v6109 = vpop.f32.mrb[0].mxu0
      %v6110 = vadd.f32 %v3387, %v6109
      %v6111 = vpop.f32.mrb[0].mxu0
      %v6112 = vpop.f32.mrb[0].mxu0
      %v6113 = vadd.f32 %v3390, %v6112
      %v6114 = vpop.f32.mrb[0].mxu0
      %6115 = vmatprep.mubr.bf16.mxu0 0
      %6116 = vmatmul.mubr.bf16.gmra.mrb[0].mxu0 %v5522
      %v6117 = vpop.f32.mrb[0].mxu0
      %v6118 = vadd.f32 %v3395, %v6117
      %v6119 = vpop.f32.mrb[0].mxu0
      %v6120 = vpop.f32.mrb[0].mxu0
      %v6121 = vadd.f32 %v3398, %v6120
      %v6122 = vpop.f32.mrb[0].mxu0
      %6123 = vmatprep.mubr.bf16.mxu0 0
      %6124 = vmatmul.mubr.bf16.gmra.mrb[0].mxu0 %v5523
      %v6125 = vpop.f32.mrb[0].mxu0
      %v6126 = vadd.f32 %v3403, %v6125
      %v6127 = vpop.f32.mrb[0].mxu0
      %v6128 = vpop.f32.mrb[0].mxu0
      %v6129 = vadd.f32 %v3406, %v6128
      %v6130 = vpop.f32.mrb[0].mxu0
      %6131 = vmatprep.mubr.bf16.mxu0 0
      %6132 = vmatmul.mubr.bf16.gmra.mrb[0].mxu0 %v5524
      %v6133 = vpop.f32.mrb[0].mxu0
      %v6134 = vadd.f32 %v3411, %v6133
      %v6135 = vpop.f32.mrb[0].mxu0
      %v6136 = vpop.f32.mrb[0].mxu0
      %v6137 = vadd.f32 %v3414, %v6136
      %v6138 = vpop.f32.mrb[0].mxu0
      %6139 = vmatprep.mubr.bf16.mxu0 0
      %6140 = vmatmul.mubr.bf16.gmra.mrb[0].mxu0 %v5525
      %v6141 = vpop.f32.mrb[0].mxu0
      %v6142 = vadd.f32 %v3419, %v6141
      %v6143 = vpop.f32.mrb[0].mxu0
      %v6144 = vpop.f32.mrb[0].mxu0
      %v6145 = vadd.f32 %v3422, %v6144
      %v6146 = vpop.f32.mrb[0].mxu0
      %6147 = vmatprep.mubr.bf16.mxu0 0
      %6148 = vmatmul.mubr.bf16.gmra.mrb[0].mxu0 %v5526
      %v6149 = vpop.f32.mrb[0].mxu0
      %v6150 = vadd.f32 %v3427, %v6149
      %v6151 = vpop.f32.mrb[0].mxu0
      %v6152 = vpop.f32.mrb[0].mxu0
      %v6153 = vadd.f32 %v3430, %v6152
      %v6154 = vpop.f32.mrb[0].mxu0
      %6155 = vmatprep.mubr.bf16.mxu0 0
      %6156 = vmatmul.mubr.bf16.gmra.mrb[0].mxu0 %v5527
      %v6157 = vpop.f32.mrb[0].mxu0
      %v6158 = vadd.f32 %v3435, %v6157
      %v6159 = vpop.f32.mrb[0].mxu0
      %v6160 = vpop.f32.mrb[0].mxu0
      %v6161 = vadd.f32 %v3438, %v6160
      %v6162 = vpop.f32.mrb[0].mxu0
      %6163 = vmatprep.mubr.bf16.mxu0 0
      %6164 = vmatmul.mubr.bf16.gmra.mrb[0].mxu0 %v5528
      %v6165 = vpop.f32.mrb[0].mxu0
      %v6166 = vadd.f32 %v3443, %v6165
      %v6167 = vpop.f32.mrb[0].mxu0
      %v6168 = vpop.f32.mrb[0].mxu0
      %v6169 = vadd.f32 %v3446, %v6168
      %v6170 = vpop.f32.mrb[0].mxu0
      %6171 = vmatprep.mubr.bf16.mxu0 0
      %6172 = vmatmul.mubr.bf16.gmra.mrb[0].mxu0 %v5529
      %v6173 = vpop.f32.mrb[0].mxu0
      %v6174 = vadd.f32 %v3451, %v6173
      %v6175 = vpop.f32.mrb[0].mxu0
      %v6176 = vpop.f32.mrb[0].mxu0
      %v6177 = vadd.f32 %v3454, %v6176
      %v6178 = vpop.f32.mrb[0].mxu0
      %6179 = vmatprep.mubr.bf16.mxu0 0
      %6180 = vmatmul.mubr.bf16.gmra.mrb[0].mxu0 %v5530
      %v6181 = vpop.f32.mrb[0].mxu0
      %v6182 = vadd.f32 %v3459, %v6181
      %v6183 = vpop.f32.mrb[0].mxu0
      %v6184 = vpop.f32.mrb[0].mxu0
      %v6185 = vadd.f32 %v3462, %v6184
      %v6186 = vpop.f32.mrb[0].mxu0
      %6187 = vmatprep.mubr.bf16.mxu0 0
      %6188 = vmatmul.mubr.bf16.gmra.mrb[0].mxu0 %v5531
      %v6189 = vpop.f32.mrb[0].mxu0
      %v6190 = vadd.f32 %v3467, %v6189
      %v6191 = vpop.f32.mrb[0].mxu0
      %v6192 = vpop.f32.mrb[0].mxu0
      %v6193 = vadd.f32 %v3470, %v6192
      %v6194 = vpop.f32.mrb[0].mxu0
      %6195 = vmatprep.mubr.bf16.mxu0 0
      %6196 = vmatmul.mubr.bf16.gmra.mrb[0].mxu0 %v5532
      %v6197 = vpop.f32.mrb[0].mxu0
      %v6198 = vadd.f32 %v3475, %v6197
      %v6199 = vpop.f32.mrb[0].mxu0
      %v6200 = vpop.f32.mrb[0].mxu0
      %v6201 = vadd.f32 %v3478, %v6200
      %v6202 = vpop.f32.mrb[0].mxu0
      %6203 = vmatprep.mubr.bf16.mxu0 0
      %6204 = vmatmul.mubr.bf16.gmra.mrb[0].mxu0 %v5533
      %v6205 = vpop.f32.mrb[0].mxu0
      %v6206 = vadd.f32 %v3483, %v6205
      %v6207 = vpop.f32.mrb[0].mxu0
      %v6208 = vpop.f32.mrb[0].mxu0
      %v6209 = vadd.f32 %v3486, %v6208
      %v6210 = vpop.f32.mrb[0].mxu0
      %6211 = vmatprep.mubr.bf16.mxu0 0
      %6212 = vmatmul.mubr.bf16.gmra.mrb[0].mxu0 %v5534
      %v6213 = vpop.f32.mrb[0].mxu0
      %v6214 = vadd.f32 %v3491, %v6213
      %v6215 = vpop.f32.mrb[0].mxu0
      %v6216 = vpop.f32.mrb[0].mxu0
      %v6217 = vadd.f32 %v3494, %v6216
      %v6218 = vpop.f32.mrb[0].mxu0
      %6219 = vmatprep.mubr.bf16.mxu0 0
      %6220 = vmatmul.mubr.bf16.gmra.mrb[0].mxu0 %v5535
      %v6221 = vpop.f32.mrb[0].mxu0
      %v6222 = vadd.f32 %v3499, %v6221
      %v6223 = vpop.f32.mrb[0].mxu0
      %v6224 = vpop.f32.mrb[0].mxu0
      %v6225 = vadd.f32 %v3502, %v6224
      %v6226 = vpop.f32.mrb[0].mxu0
      %6227 = vmatprep.mubr.bf16.mxu0 0
      %6228 = vmatmul.mubr.bf16.gmra.mrb[0].mxu0 %v5536
      %v6229 = vpop.f32.mrb[0].mxu0
      %v6230 = vadd.f32 %v3507, %v6229
      %v6231 = vpop.f32.mrb[0].mxu0
      %v6232 = vpop.f32.mrb[0].mxu0
      %v6233 = vadd.f32 %v3510, %v6232
      %v6234 = vpop.f32.mrb[0].mxu0
      %6235 = vmatprep.mubr.bf16.mxu0 0
      %6236 = vmatmul.mubr.bf16.gmra.mrb[0].mxu0 %v5537
      %v6237 = vpop.f32.mrb[0].mxu0
      %v6238 = vadd.f32 %v3515, %v6237
      %v6239 = vpop.f32.mrb[0].mxu0
      %v6240 = vpop.f32.mrb[0].mxu0
      %v6241 = vadd.f32 %v3518, %v6240
      %v6242 = vpop.f32.mrb[0].mxu0
      %6243 = vmatprep.mubr.bf16.mxu0 0
      %6244 = vmatmul.mubr.bf16.gmra.mrb[0].mxu0 %v5538
      %v6245 = vpop.f32.mrb[0].mxu0
      %v6246 = vadd.f32 %v3523, %v6245
      %v6247 = vpop.f32.mrb[0].mxu0
      %v6248 = vpop.f32.mrb[0].mxu0
      %v6249 = vadd.f32 %v3526, %v6248
      %v6250 = vpop.f32.mrb[0].mxu0
      %6251 = vmatprep.mubr.bf16.mxu0 0
      %6252 = vmatmul.mubr.bf16.gmra.mrb[0].mxu0 %v5539
      %v6253 = vpop.f32.mrb[0].mxu0
      %v6254 = vadd.f32 %v3531, %v6253
      %v6255 = vpop.f32.mrb[0].mxu0
      %v6256 = vpop.f32.mrb[0].mxu0
      %v6257 = vadd.f32 %v3534, %v6256
      %v6258 = vpop.f32.mrb[0].mxu0
      %6259 = vmatprep.mubr.bf16.mxu0 0
      %6260 = vmatmul.mubr.bf16.gmra.mrb[0].mxu0 %v5540
      %v6261 = vpop.f32.mrb[0].mxu0
      %v6262 = vadd.f32 %v3539, %v6261
      %v6263 = vpop.f32.mrb[0].mxu0
      %v6264 = vpop.f32.mrb[0].mxu0
      %v6265 = vadd.f32 %v3542, %v6264
      %v6266 = vpop.f32.mrb[0].mxu0
      %6267 = vmatprep.mubr.bf16.mxu0 0
      %6268 = vmatmul.mubr.bf16.gmra.mrb[0].mxu0 %v5541
      %v6269 = vpop.f32.mrb[0].mxu0
      %v6270 = vadd.f32 %v3547, %v6269
      %v6271 = vpop.f32.mrb[0].mxu0
      %v6272 = vpop.f32.mrb[0].mxu0
      %v6273 = vadd.f32 %v3550, %v6272
      %v6274 = vpop.f32.mrb[0].mxu0
      %6275 = vmatprep.mubr.bf16.mxu0 0
      %6276 = vmatmul.mubr.bf16.gmra.mrb[0].mxu0 %v5542
      %v6277 = vpop.f32.mrb[0].mxu0
      %v6278 = vadd.f32 %v3555, %v6277
      %v6279 = vpop.f32.mrb[0].mxu0
      %v6280 = vpop.f32.mrb[0].mxu0
      %v6281 = vadd.f32 %v3558, %v6280
      %v6282 = vpop.f32.mrb[0].mxu0
      %6283 = vmatprep.mubr.bf16.mxu0 0
      %6284 = vmatmul.mubr.bf16.gmra.mrb[0].mxu0 %v5543
      %v6285 = vpop.f32.mrb[0].mxu0
      %v6286 = vadd.f32 %v3563, %v6285
      %v6287 = vpop.f32.mrb[0].mxu0
      %v6288 = vpop.f32.mrb[0].mxu0
      %v6289 = vadd.f32 %v3566, %v6288
      %v6290 = vpop.f32.mrb[0].mxu0
      %6291 = vmatprep.mubr.bf16.mxu0 0
      %6292 = vmatmul.mubr.bf16.gmra.mrb[0].mxu0 %v5544
      %v6293 = vpop.f32.mrb[0].mxu0
      %v6294 = vadd.f32 %v3571, %v6293
      %v6295 = vpop.f32.mrb[0].mxu0
      %v6296 = vpop.f32.mrb[0].mxu0
      %v6297 = vadd.f32 %v3574, %v6296
      %v6298 = vpop.f32.mrb[0].mxu0
      %6299 = vmatprep.mubr.bf16.mxu0 0
      %6300 = vmatmul.mubr.bf16.gmra.mrb[0].mxu0 %v5545
      %v6301 = vpop.f32.mrb[0].mxu0
      %v6302 = vadd.f32 %v3579, %v6301
      %v6303 = vpop.f32.mrb[0].mxu0
      %v6304 = vpop.f32.mrb[0].mxu0
      %v6305 = vadd.f32 %v3582, %v6304
      %v6306 = vpop.f32.mrb[0].mxu0
      %6307 = vmatprep.mubr.bf16.mxu0 0
      %6308 = vmatmul.mubr.bf16.gmra.mrb[0].mxu0 %v5546
      %v6309 = vpop.f32.mrb[0].mxu0
      %v6310 = vadd.f32 %v3587, %v6309
      %v6311 = vpop.f32.mrb[0].mxu0
      %v6312 = vpop.f32.mrb[0].mxu0
      %v6313 = vadd.f32 %v3590, %v6312
      %v6314 = vpop.f32.mrb[0].mxu0
      %6315 = vdwg.mxu0
      %v6316 = vlaneseq
      %v6317 = vshrl.u32 %v6316, 7
      %v6318 = vsub.s32 2, %v6317
      %v6319 = vrot.slane %v3593, %v6318
      %v6320 = vadd.f32 %v5646, %v6319
      %v6321 = vadd.f32 %v5649, %v6319
      %v6322 = vadd.f32 %v5654, %v6319
      %v6323 = vadd.f32 %v5657, %v6319
      %v6324 = vadd.f32 %v5662, %v6319
      %v6325 = vadd.f32 %v5665, %v6319
      %v6326 = vadd.f32 %v5670, %v6319
      %v6327 = vadd.f32 %v5673, %v6319
      %v6328 = vadd.f32 %v5678, %v6319
      %v6329 = vadd.f32 %v5681, %v6319
      %v6330 = vadd.f32 %v5686, %v6319
      %v6331 = vadd.f32 %v5689, %v6319
      %v6332 = vadd.f32 %v5694, %v6319
      %v6333 = vadd.f32 %v5697, %v6319
      %v6334 = vadd.f32 %v5702, %v6319
      %v6335 = vadd.f32 %v5705, %v6319
      %v6336 = vadd.f32 %v5710, %v6319
      %v6337 = vadd.f32 %v5713, %v6319
      %v6338 = vadd.f32 %v5718, %v6319
      %v6339 = vadd.f32 %v5721, %v6319
      %v6340 = vadd.f32 %v5726, %v6319
      %v6341 = vadd.f32 %v5729, %v6319
      %v6342 = vadd.f32 %v5734, %v6319
      %v6343 = vadd.f32 %v5737, %v6319
      %v6344 = vadd.f32 %v5742, %v6319
      %v6345 = vadd.f32 %v5745, %v6319
      %v6346 = vadd.f32 %v5750, %v6319
      %v6347 = vadd.f32 %v5753, %v6319
      %v6348 = vadd.f32 %v5758, %v6319
      %v6349 = vadd.f32 %v5761, %v6319
      %v6350 = vadd.f32 %v5766, %v6319
      %v6351 = vadd.f32 %v5769, %v6319
      %v6352 = vadd.f32 %v5774, %v6319
      %v6353 = vadd.f32 %v5777, %v6319
      %v6354 = vadd.f32 %v5782, %v6319
      %v6355 = vadd.f32 %v5785, %v6319
      %v6356 = vadd.f32 %v5790, %v6319
      %v6357 = vadd.f32 %v5793, %v6319
      %v6358 = vadd.f32 %v5798, %v6319
      %v6359 = vadd.f32 %v5801, %v6319
      %v6360 = vadd.f32 %v5806, %v6319
      %v6361 = vadd.f32 %v5809, %v6319
      %v6362 = vadd.f32 %v5814, %v6319
      %v6363 = vadd.f32 %v5817, %v6319
      %v6364 = vadd.f32 %v5822, %v6319
      %v6365 = vadd.f32 %v5825, %v6319
      %v6366 = vadd.f32 %v5830, %v6319
      %v6367 = vadd.f32 %v5833, %v6319
      %v6368 = vadd.f32 %v5838, %v6319
      %v6369 = vadd.f32 %v5841, %v6319
      %v6370 = vadd.f32 %v5846, %v6319
      %v6371 = vadd.f32 %v5849, %v6319
      %v6372 = vadd.f32 %v5854, %v6319
      %v6373 = vadd.f32 %v5857, %v6319
      %v6374 = vadd.f32 %v5862, %v6319
      %v6375 = vadd.f32 %v5865, %v6319
      %v6376 = vadd.f32 %v5870, %v6319
      %v6377 = vadd.f32 %v5873, %v6319
      %v6378 = vadd.f32 %v5878, %v6319
      %v6379 = vadd.f32 %v5881, %v6319
      %v6380 = vadd.f32 %v5886, %v6319
      %v6381 = vadd.f32 %v5889, %v6319
      %v6382 = vadd.f32 %v5894, %v6319
      %v6383 = vadd.f32 %v5897, %v6319
      %v6384 = vadd.f32 %v5902, %v6319
      %v6385 = vadd.f32 %v5905, %v6319
      %v6386 = vadd.f32 %v5910, %v6319
      %v6387 = vadd.f32 %v5913, %v6319
      %v6388 = vadd.f32 %v5918, %v6319
      %v6389 = vadd.f32 %v5921, %v6319
      %v6390 = vadd.f32 %v5926, %v6319
      %v6391 = vadd.f32 %v5929, %v6319
      %v6392 = vadd.f32 %v5934, %v6319
      %v6393 = vadd.f32 %v5937, %v6319
      %v6394 = vadd.f32 %v5942, %v6319
      %v6395 = vadd.f32 %v5945, %v6319
      %v6396 = vadd.f32 %v5950, %v6319
      %v6397 = vadd.f32 %v5953, %v6319
      %v6398 = vadd.f32 %v5958, %v6319
      %v6399 = vadd.f32 %v5961, %v6319
      %v6400 = vadd.f32 %v5966, %v6319
      %v6401 = vadd.f32 %v5969, %v6319
      %v6402 = vadd.f32 %v5974, %v6319
      %v6403 = vadd.f32 %v5977, %v6319
      %v6404 = vadd.f32 %v5982, %v6319
      %v6405 = vadd.f32 %v5985, %v6319
      %v6406 = vadd.f32 %v5990, %v6319
      %v6407 = vadd.f32 %v5993, %v6319
      %v6408 = vadd.f32 %v5998, %v6319
      %v6409 = vadd.f32 %v6001, %v6319
      %v6410 = vadd.f32 %v6006, %v6319
      %v6411 = vadd.f32 %v6009, %v6319
      %v6412 = vadd.f32 %v6014, %v6319
      %v6413 = vadd.f32 %v6017, %v6319
      %v6414 = vadd.f32 %v6022, %v6319
      %v6415 = vadd.f32 %v6025, %v6319
      %v6416 = vadd.f32 %v6030, %v6319
      %v6417 = vadd.f32 %v6033, %v6319
      %v6418 = vadd.f32 %v6038, %v6319
      %v6419 = vadd.f32 %v6041, %v6319
      %v6420 = vadd.f32 %v6046, %v6319
      %v6421 = vadd.f32 %v6049, %v6319
      %v6422 = vadd.f32 %v6054, %v6319
      %v6423 = vadd.f32 %v6057, %v6319
      %v6424 = vadd.f32 %v6062, %v6319
      %v6425 = vadd.f32 %v6065, %v6319
      %v6426 = vadd.f32 %v6070, %v6319
      %v6427 = vadd.f32 %v6073, %v6319
      %v6428 = vadd.f32 %v6078, %v6319
      %v6429 = vadd.f32 %v6081, %v6319
      %v6430 = vadd.f32 %v6086, %v6319
      %v6431 = vadd.f32 %v6089, %v6319
      %v6432 = vadd.f32 %v6094, %v6319
      %v6433 = vadd.f32 %v6097, %v6319
      %v6434 = vadd.f32 %v6102, %v6319
      %v6435 = vadd.f32 %v6105, %v6319
      %v6436 = vadd.f32 %v6110, %v6319
      %v6437 = vadd.f32 %v6113, %v6319
      %v6438 = vadd.f32 %v6118, %v6319
      %v6439 = vadd.f32 %v6121, %v6319
      %v6440 = vadd.f32 %v6126, %v6319
      %v6441 = vadd.f32 %v6129, %v6319
      %v6442 = vadd.f32 %v6134, %v6319
      %v6443 = vadd.f32 %v6137, %v6319
      %v6444 = vadd.f32 %v6142, %v6319
      %v6445 = vadd.f32 %v6145, %v6319
      %v6446 = vadd.f32 %v6150, %v6319
      %v6447 = vadd.f32 %v6153, %v6319
      %v6448 = vadd.f32 %v6158, %v6319
      %v6449 = vadd.f32 %v6161, %v6319
      %v6450 = vadd.f32 %v6166, %v6319
      %v6451 = vadd.f32 %v6169, %v6319
      %v6452 = vadd.f32 %v6174, %v6319
      %v6453 = vadd.f32 %v6177, %v6319
      %v6454 = vadd.f32 %v6182, %v6319
      %v6455 = vadd.f32 %v6185, %v6319
      %v6456 = vadd.f32 %v6190, %v6319
      %v6457 = vadd.f32 %v6193, %v6319
      %v6458 = vadd.f32 %v6198, %v6319
      %v6459 = vadd.f32 %v6201, %v6319
      %v6460 = vadd.f32 %v6206, %v6319
      %v6461 = vadd.f32 %v6209, %v6319
      %v6462 = vadd.f32 %v6214, %v6319
      %v6463 = vadd.f32 %v6217, %v6319
      %v6464 = vadd.f32 %v6222, %v6319
      %v6465 = vadd.f32 %v6225, %v6319
      %v6466 = vadd.f32 %v6230, %v6319
      %v6467 = vadd.f32 %v6233, %v6319
      %v6468 = vadd.f32 %v6238, %v6319
      %v6469 = vadd.f32 %v6241, %v6319
      %v6470 = vadd.f32 %v6246, %v6319
      %v6471 = vadd.f32 %v6249, %v6319
      %v6472 = vadd.f32 %v6254, %v6319
      %v6473 = vadd.f32 %v6257, %v6319
      %v6474 = vadd.f32 %v6262, %v6319
      %v6475 = vadd.f32 %v6265, %v6319
      %v6476 = vadd.f32 %v6270, %v6319
      %v6477 = vadd.f32 %v6273, %v6319
      %v6478 = vadd.f32 %v6278, %v6319
      %v6479 = vadd.f32 %v6281, %v6319
      %v6480 = vadd.f32 %v6286, %v6319
      %v6481 = vadd.f32 %v6289, %v6319
      %v6482 = vadd.f32 %v6294, %v6319
      %v6483 = vadd.f32 %v6297, %v6319
      %v6484 = vadd.f32 %v6302, %v6319
      %v6485 = vadd.f32 %v6305, %v6319
      %v6486 = vadd.f32 %v6310, %v6319
      %v6487 = vadd.f32 %v6313, %v6319
      %v6488 = vmul.f32 %v6320, 0.2
      %v6489 = vmul.f32 %v6321, 0.2
      %v6490 = vmul.f32 %v6322, 0.2
      %v6491 = vmul.f32 %v6323, 0.2
      %v6492 = vmul.f32 %v6324, 0.2
      %v6493 = vmul.f32 %v6325, 0.2
      %v6494 = vmul.f32 %v6326, 0.2
      %v6495 = vmul.f32 %v6327, 0.2
      %v6496 = vmul.f32 %v6328, 0.2
      %v6497 = vmul.f32 %v6329, 0.2
      %v6498 = vmul.f32 %v6330, 0.2
      %v6499 = vmul.f32 %v6331, 0.2
      %v6500 = vmul.f32 %v6332, 0.2
      %v6501 = vmul.f32 %v6333, 0.2
      %v6502 = vmul.f32 %v6334, 0.2
      %v6503 = vmul.f32 %v6335, 0.2
      %v6504 = vmul.f32 %v6336, 0.2
      %v6505 = vmul.f32 %v6337, 0.2
      %v6506 = vmul.f32 %v6338, 0.2
      %v6507 = vmul.f32 %v6339, 0.2
      %v6508 = vmul.f32 %v6340, 0.2
      %v6509 = vmul.f32 %v6341, 0.2
      %v6510 = vmul.f32 %v6342, 0.2
      %v6511 = vmul.f32 %v6343, 0.2
      %v6512 = vmul.f32 %v6344, 0.2
      %v6513 = vmul.f32 %v6345, 0.2
      %v6514 = vmul.f32 %v6346, 0.2
      %v6515 = vmul.f32 %v6347, 0.2
      %v6516 = vmul.f32 %v6348, 0.2
      %v6517 = vmul.f32 %v6349, 0.2
      %v6518 = vmul.f32 %v6350, 0.2
      %v6519 = vmul.f32 %v6351, 0.2
      %v6520 = vmul.f32 %v6352, 0.2
      %v6521 = vmul.f32 %v6353, 0.2
      %v6522 = vmul.f32 %v6354, 0.2
      %v6523 = vmul.f32 %v6355, 0.2
      %v6524 = vmul.f32 %v6356, 0.2
      %v6525 = vmul.f32 %v6357, 0.2
      %v6526 = vmul.f32 %v6358, 0.2
      %v6527 = vmul.f32 %v6359, 0.2
      %v6528 = vmul.f32 %v6360, 0.2
      %v6529 = vmul.f32 %v6361, 0.2
      %v6530 = vmul.f32 %v6362, 0.2
      %v6531 = vmul.f32 %v6363, 0.2
      %v6532 = vmul.f32 %v6364, 0.2
      %v6533 = vmul.f32 %v6365, 0.2
      %v6534 = vmul.f32 %v6366, 0.2
      %v6535 = vmul.f32 %v6367, 0.2
      %v6536 = vmul.f32 %v6368, 0.2
      %v6537 = vmul.f32 %v6369, 0.2
      %v6538 = vmul.f32 %v6370, 0.2
      %v6539 = vmul.f32 %v6371, 0.2
      %v6540 = vmul.f32 %v6372, 0.2
      %v6541 = vmul.f32 %v6373, 0.2
      %v6542 = vmul.f32 %v6374, 0.2
      %v6543 = vmul.f32 %v6375, 0.2
      %v6544 = vmul.f32 %v6376, 0.2
      %v6545 = vmul.f32 %v6377, 0.2
      %v6546 = vmul.f32 %v6378, 0.2
      %v6547 = vmul.f32 %v6379, 0.2
      %v6548 = vmul.f32 %v6380, 0.2
      %v6549 = vmul.f32 %v6381, 0.2
      %v6550 = vmul.f32 %v6382, 0.2
      %v6551 = vmul.f32 %v6383, 0.2
      %v6552 = vmul.f32 %v6384, 0.2
      %v6553 = vmul.f32 %v6385, 0.2
      %v6554 = vmul.f32 %v6386, 0.2
      %v6555 = vmul.f32 %v6387, 0.2
      %v6556 = vmul.f32 %v6388, 0.2
      %v6557 = vmul.f32 %v6389, 0.2
      %v6558 = vmul.f32 %v6390, 0.2
      %v6559 = vmul.f32 %v6391, 0.2
      %v6560 = vmul.f32 %v6392, 0.2
      %v6561 = vmul.f32 %v6393, 0.2
      %v6562 = vmul.f32 %v6394, 0.2
      %v6563 = vmul.f32 %v6395, 0.2
      %v6564 = vmul.f32 %v6396, 0.2
      %v6565 = vmul.f32 %v6397, 0.2
      %v6566 = vmul.f32 %v6398, 0.2
      %v6567 = vmul.f32 %v6399, 0.2
      %v6568 = vmul.f32 %v6400, 0.2
      %v6569 = vmul.f32 %v6401, 0.2
      %v6570 = vmul.f32 %v6402, 0.2
      %v6571 = vmul.f32 %v6403, 0.2
      %v6572 = vmul.f32 %v6404, 0.2
      %v6573 = vmul.f32 %v6405, 0.2
      %v6574 = vmul.f32 %v6406, 0.2
      %v6575 = vmul.f32 %v6407, 0.2
      %v6576 = vmul.f32 %v6408, 0.2
      %v6577 = vmul.f32 %v6409, 0.2
      %v6578 = vmul.f32 %v6410, 0.2
      %v6579 = vmul.f32 %v6411, 0.2
      %v6580 = vmul.f32 %v6412, 0.2
      %v6581 = vmul.f32 %v6413, 0.2
      %v6582 = vmul.f32 %v6414, 0.2
      %v6583 = vmul.f32 %v6415, 0.2
      %v6584 = vmul.f32 %v6416, 0.2
      %v6585 = vmul.f32 %v6417, 0.2
      %v6586 = vmul.f32 %v6418, 0.2
      %v6587 = vmul.f32 %v6419, 0.2
      %v6588 = vmul.f32 %v6420, 0.2
      %v6589 = vmul.f32 %v6421, 0.2
      %v6590 = vmul.f32 %v6422, 0.2
      %v6591 = vmul.f32 %v6423, 0.2
      %v6592 = vmul.f32 %v6424, 0.2
      %v6593 = vmul.f32 %v6425, 0.2
      %v6594 = vmul.f32 %v6426, 0.2
      %v6595 = vmul.f32 %v6427, 0.2
      %v6596 = vmul.f32 %v6428, 0.2
      %v6597 = vmul.f32 %v6429, 0.2
      %v6598 = vmul.f32 %v6430, 0.2
      %v6599 = vmul.f32 %v6431, 0.2
      %v6600 = vmul.f32 %v6432, 0.2
      %v6601 = vmul.f32 %v6433, 0.2
      %v6602 = vmul.f32 %v6434, 0.2
      %v6603 = vmul.f32 %v6435, 0.2
      %v6604 = vmul.f32 %v6436, 0.2
      %v6605 = vmul.f32 %v6437, 0.2
      %v6606 = vmul.f32 %v6438, 0.2
      %v6607 = vmul.f32 %v6439, 0.2
      %v6608 = vmul.f32 %v6440, 0.2
      %v6609 = vmul.f32 %v6441, 0.2
      %v6610 = vmul.f32 %v6442, 0.2
      %v6611 = vmul.f32 %v6443, 0.2
      %v6612 = vmul.f32 %v6444, 0.2
      %v6613 = vmul.f32 %v6445, 0.2
      %v6614 = vmul.f32 %v6446, 0.2
      %v6615 = vmul.f32 %v6447, 0.2
      %v6616 = vmul.f32 %v6448, 0.2
      %v6617 = vmul.f32 %v6449, 0.2
      %v6618 = vmul.f32 %v6450, 0.2
      %v6619 = vmul.f32 %v6451, 0.2
      %v6620 = vmul.f32 %v6452, 0.2
      %v6621 = vmul.f32 %v6453, 0.2
      %v6622 = vmul.f32 %v6454, 0.2
      %v6623 = vmul.f32 %v6455, 0.2
      %v6624 = vmul.f32 %v6456, 0.2
      %v6625 = vmul.f32 %v6457, 0.2
      %v6626 = vmul.f32 %v6458, 0.2
      %v6627 = vmul.f32 %v6459, 0.2
      %v6628 = vmul.f32 %v6460, 0.2
      %v6629 = vmul.f32 %v6461, 0.2
      %v6630 = vmul.f32 %v6462, 0.2
      %v6631 = vmul.f32 %v6463, 0.2
      %v6632 = vmul.f32 %v6464, 0.2
      %v6633 = vmul.f32 %v6465, 0.2
      %v6634 = vmul.f32 %v6466, 0.2
      %v6635 = vmul.f32 %v6467, 0.2
      %v6636 = vmul.f32 %v6468, 0.2
      %v6637 = vmul.f32 %v6469, 0.2
      %v6638 = vmul.f32 %v6470, 0.2
      %v6639 = vmul.f32 %v6471, 0.2
      %v6640 = vmul.f32 %v6472, 0.2
      %v6641 = vmul.f32 %v6473, 0.2
      %v6642 = vmul.f32 %v6474, 0.2
      %v6643 = vmul.f32 %v6475, 0.2
      %v6644 = vmul.f32 %v6476, 0.2
      %v6645 = vmul.f32 %v6477, 0.2
      %v6646 = vmul.f32 %v6478, 0.2
      %v6647 = vmul.f32 %v6479, 0.2
      %v6648 = vmul.f32 %v6480, 0.2
      %v6649 = vmul.f32 %v6481, 0.2
      %v6650 = vmul.f32 %v6482, 0.2
      %v6651 = vmul.f32 %v6483, 0.2
      %v6652 = vmul.f32 %v6484, 0.2
      %v6653 = vmul.f32 %v6485, 0.2
      %v6654 = vmul.f32 %v6486, 0.2
      %v6655 = vmul.f32 %v6487, 0.2
      %v6656 = vmax.f32 %v6320, %v6488
      %v6657 = vmax.f32 %v6321, %v6489
      %v6658 = vmax.f32 %v6322, %v6490
      %v6659 = vmax.f32 %v6323, %v6491
      %v6660 = vmax.f32 %v6324, %v6492
      %v6661 = vmax.f32 %v6325, %v6493
      %v6662 = vmax.f32 %v6326, %v6494
      %v6663 = vmax.f32 %v6327, %v6495
      %v6664 = vmax.f32 %v6328, %v6496
      %v6665 = vmax.f32 %v6329, %v6497
      %v6666 = vmax.f32 %v6330, %v6498
      %v6667 = vmax.f32 %v6331, %v6499
      %v6668 = vmax.f32 %v6332, %v6500
      %v6669 = vmax.f32 %v6333, %v6501
      %v6670 = vmax.f32 %v6334, %v6502
      %v6671 = vmax.f32 %v6335, %v6503
      %v6672 = vmax.f32 %v6336, %v6504
      %v6673 = vmax.f32 %v6337, %v6505
      %v6674 = vmax.f32 %v6338, %v6506
      %v6675 = vmax.f32 %v6339, %v6507
      %v6676 = vmax.f32 %v6340, %v6508
      %v6677 = vmax.f32 %v6341, %v6509
      %v6678 = vmax.f32 %v6342, %v6510
      %v6679 = vmax.f32 %v6343, %v6511
      %v6680 = vmax.f32 %v6344, %v6512
      %v6681 = vmax.f32 %v6345, %v6513
      %v6682 = vmax.f32 %v6346, %v6514
      %v6683 = vmax.f32 %v6347, %v6515
      %v6684 = vmax.f32 %v6348, %v6516
      %v6685 = vmax.f32 %v6349, %v6517
      %v6686 = vmax.f32 %v6350, %v6518
      %v6687 = vmax.f32 %v6351, %v6519
      %v6688 = vmax.f32 %v6352, %v6520
      %v6689 = vmax.f32 %v6353, %v6521
      %v6690 = vmax.f32 %v6354, %v6522
      %v6691 = vmax.f32 %v6355, %v6523
      %v6692 = vmax.f32 %v6356, %v6524
      %v6693 = vmax.f32 %v6357, %v6525
      %v6694 = vmax.f32 %v6358, %v6526
      %v6695 = vmax.f32 %v6359, %v6527
      %v6696 = vmax.f32 %v6360, %v6528
      %v6697 = vmax.f32 %v6361, %v6529
      %v6698 = vmax.f32 %v6362, %v6530
      %v6699 = vmax.f32 %v6363, %v6531
      %v6700 = vmax.f32 %v6364, %v6532
      %v6701 = vmax.f32 %v6365, %v6533
      %v6702 = vmax.f32 %v6366, %v6534
      %v6703 = vmax.f32 %v6367, %v6535
      %v6704 = vmax.f32 %v6368, %v6536
      %v6705 = vmax.f32 %v6369, %v6537
      %v6706 = vmax.f32 %v6370, %v6538
      %v6707 = vmax.f32 %v6371, %v6539
      %v6708 = vmax.f32 %v6372, %v6540
      %v6709 = vmax.f32 %v6373, %v6541
      %v6710 = vmax.f32 %v6374, %v6542
      %v6711 = vmax.f32 %v6375, %v6543
      %v6712 = vmax.f32 %v6376, %v6544
      %v6713 = vmax.f32 %v6377, %v6545
      %v6714 = vmax.f32 %v6378, %v6546
      %v6715 = vmax.f32 %v6379, %v6547
      %v6716 = vmax.f32 %v6380, %v6548
      %v6717 = vmax.f32 %v6381, %v6549
      %v6718 = vmax.f32 %v6382, %v6550
      %v6719 = vmax.f32 %v6383, %v6551
      %v6720 = vmax.f32 %v6384, %v6552
      %v6721 = vmax.f32 %v6385, %v6553
      %v6722 = vmax.f32 %v6386, %v6554
      %v6723 = vmax.f32 %v6387, %v6555
      %v6724 = vmax.f32 %v6388, %v6556
      %v6725 = vmax.f32 %v6389, %v6557
      %v6726 = vmax.f32 %v6390, %v6558
      %v6727 = vmax.f32 %v6391, %v6559
      %v6728 = vmax.f32 %v6392, %v6560
      %v6729 = vmax.f32 %v6393, %v6561
      %v6730 = vmax.f32 %v6394, %v6562
      %v6731 = vmax.f32 %v6395, %v6563
      %v6732 = vmax.f32 %v6396, %v6564
      %v6733 = vmax.f32 %v6397, %v6565
      %v6734 = vmax.f32 %v6398, %v6566
      %v6735 = vmax.f32 %v6399, %v6567
      %v6736 = vmax.f32 %v6400, %v6568
      %v6737 = vmax.f32 %v6401, %v6569
      %v6738 = vmax.f32 %v6402, %v6570
      %v6739 = vmax.f32 %v6403, %v6571
      %v6740 = vmax.f32 %v6404, %v6572
      %v6741 = vmax.f32 %v6405, %v6573
      %v6742 = vmax.f32 %v6406, %v6574
      %v6743 = vmax.f32 %v6407, %v6575
      %v6744 = vmax.f32 %v6408, %v6576
      %v6745 = vmax.f32 %v6409, %v6577
      %v6746 = vmax.f32 %v6410, %v6578
      %v6747 = vmax.f32 %v6411, %v6579
      %v6748 = vmax.f32 %v6412, %v6580
      %v6749 = vmax.f32 %v6413, %v6581
      %v6750 = vmax.f32 %v6414, %v6582
      %v6751 = vmax.f32 %v6415, %v6583
      %v6752 = vmax.f32 %v6416, %v6584
      %v6753 = vmax.f32 %v6417, %v6585
      %v6754 = vmax.f32 %v6418, %v6586
      %v6755 = vmax.f32 %v6419, %v6587
      %v6756 = vmax.f32 %v6420, %v6588
      %v6757 = vmax.f32 %v6421, %v6589
      %v6758 = vmax.f32 %v6422, %v6590
      %v6759 = vmax.f32 %v6423, %v6591
      %v6760 = vmax.f32 %v6424, %v6592
      %v6761 = vmax.f32 %v6425, %v6593
      %v6762 = vmax.f32 %v6426, %v6594
      %v6763 = vmax.f32 %v6427, %v6595
      %v6764 = vmax.f32 %v6428, %v6596
      %v6765 = vmax.f32 %v6429, %v6597
      %v6766 = vmax.f32 %v6430, %v6598
      %v6767 = vmax.f32 %v6431, %v6599
      %v6768 = vmax.f32 %v6432, %v6600
      %v6769 = vmax.f32 %v6433, %v6601
      %v6770 = vmax.f32 %v6434, %v6602
      %v6771 = vmax.f32 %v6435, %v6603
      %v6772 = vmax.f32 %v6436, %v6604
      %v6773 = vmax.f32 %v6437, %v6605
      %v6774 = vmax.f32 %v6438, %v6606
      %v6775 = vmax.f32 %v6439, %v6607
      %v6776 = vmax.f32 %v6440, %v6608
      %v6777 = vmax.f32 %v6441, %v6609
      %v6778 = vmax.f32 %v6442, %v6610
      %v6779 = vmax.f32 %v6443, %v6611
      %v6780 = vmax.f32 %v6444, %v6612
      %v6781 = vmax.f32 %v6445, %v6613
      %v6782 = vmax.f32 %v6446, %v6614
      %v6783 = vmax.f32 %v6447, %v6615
      %v6784 = vmax.f32 %v6448, %v6616
      %v6785 = vmax.f32 %v6449, %v6617
      %v6786 = vmax.f32 %v6450, %v6618
      %v6787 = vmax.f32 %v6451, %v6619
      %v6788 = vmax.f32 %v6452, %v6620
      %v6789 = vmax.f32 %v6453, %v6621
      %v6790 = vmax.f32 %v6454, %v6622
      %v6791 = vmax.f32 %v6455, %v6623
      %v6792 = vmax.f32 %v6456, %v6624
      %v6793 = vmax.f32 %v6457, %v6625
      %v6794 = vmax.f32 %v6458, %v6626
      %v6795 = vmax.f32 %v6459, %v6627
      %v6796 = vmax.f32 %v6460, %v6628
      %v6797 = vmax.f32 %v6461, %v6629
      %v6798 = vmax.f32 %v6462, %v6630
      %v6799 = vmax.f32 %v6463, %v6631
      %v6800 = vmax.f32 %v6464, %v6632
      %v6801 = vmax.f32 %v6465, %v6633
      %v6802 = vmax.f32 %v6466, %v6634
      %v6803 = vmax.f32 %v6467, %v6635
      %v6804 = vmax.f32 %v6468, %v6636
      %v6805 = vmax.f32 %v6469, %v6637
      %v6806 = vmax.f32 %v6470, %v6638
      %v6807 = vmax.f32 %v6471, %v6639
      %v6808 = vmax.f32 %v6472, %v6640
      %v6809 = vmax.f32 %v6473, %v6641
      %v6810 = vmax.f32 %v6474, %v6642
      %v6811 = vmax.f32 %v6475, %v6643
      %v6812 = vmax.f32 %v6476, %v6644
      %v6813 = vmax.f32 %v6477, %v6645
      %v6814 = vmax.f32 %v6478, %v6646
      %v6815 = vmax.f32 %v6479, %v6647
      %v6816 = vmax.f32 %v6480, %v6648
      %v6817 = vmax.f32 %v6481, %v6649
      %v6818 = vmax.f32 %v6482, %v6650
      %v6819 = vmax.f32 %v6483, %v6651
      %v6820 = vmax.f32 %v6484, %v6652
      %v6821 = vmax.f32 %v6485, %v6653
      %v6822 = vmax.f32 %v6486, %v6654
      %v6823 = vmax.f32 %v6487, %v6655
      %6824 = vst [vmem:[%s328] sm:$0xff] %v6656
      %6825 = vst [vmem:[%s328 + $0x8] sm:$0xff] %v6657
      %6826 = vst [vmem:[%s328 + $0x10] sm:$0xff] %v6658
      %6827 = vst [vmem:[%s328 + $0x18] sm:$0xff] %v6659
      %6828 = vst [vmem:[%s328 + $0x20] sm:$0xff] %v6660
      %6829 = vst [vmem:[%s328 + $0x28] sm:$0xff] %v6661
      %6830 = vst [vmem:[%s328 + $0x30] sm:$0xff] %v6662
      %6831 = vst [vmem:[%s328 + $0x38] sm:$0xff] %v6663
      %6832 = vst [vmem:[%s328 + $0x40] sm:$0xff] %v6664
      %6833 = vst [vmem:[%s328 + $0x48] sm:$0xff] %v6665
      %6834 = vst [vmem:[%s328 + $0x50] sm:$0xff] %v6666
      %6835 = vst [vmem:[%s328 + $0x58] sm:$0xff] %v6667
      %6836 = vst [vmem:[%s328 + $0x60] sm:$0xff] %v6668
      %6837 = vst [vmem:[%s328 + $0x68] sm:$0xff] %v6669
      %6838 = vst [vmem:[%s328 + $0x70] sm:$0xff] %v6670
      %6839 = vst [vmem:[%s328 + $0x78] sm:$0xff] %v6671
      %6840 = vst [vmem:[%s328 + $0x80] sm:$0xff] %v6672
      %6841 = vst [vmem:[%s328 + $0x88] sm:$0xff] %v6673
      %6842 = vst [vmem:[%s328 + $0x90] sm:$0xff] %v6674
      %6843 = vst [vmem:[%s328 + $0x98] sm:$0xff] %v6675
      %6844 = vst [vmem:[%s328 + $0xa0] sm:$0xff] %v6676
      %6845 = vst [vmem:[%s328 + $0xa8] sm:$0xff] %v6677
      %6846 = vst [vmem:[%s328 + $0xb0] sm:$0xff] %v6678
      %6847 = vst [vmem:[%s328 + $0xb8] sm:$0xff] %v6679
      %6848 = vst [vmem:[%s328 + $0xc0] sm:$0xff] %v6680
      %6849 = vst [vmem:[%s328 + $0xc8] sm:$0xff] %v6681
      %6850 = vst [vmem:[%s328 + $0xd0] sm:$0xff] %v6682
      %6851 = vst [vmem:[%s328 + $0xd8] sm:$0xff] %v6683
      %6852 = vst [vmem:[%s328 + $0xe0] sm:$0xff] %v6684
      %6853 = vst [vmem:[%s328 + $0xe8] sm:$0xff] %v6685
      %6854 = vst [vmem:[%s328 + $0xf0] sm:$0xff] %v6686
      %6855 = vst [vmem:[%s328 + $0xf8] sm:$0xff] %v6687
      %6856 = vst [vmem:[%s328 + $0x100] sm:$0xff] %v6688
      %6857 = vst [vmem:[%s328 + $0x108] sm:$0xff] %v6689
      %6858 = vst [vmem:[%s328 + $0x110] sm:$0xff] %v6690
      %6859 = vst [vmem:[%s328 + $0x118] sm:$0xff] %v6691
      %6860 = vst [vmem:[%s328 + $0x120] sm:$0xff] %v6692
      %6861 = vst [vmem:[%s328 + $0x128] sm:$0xff] %v6693
      %6862 = vst [vmem:[%s328 + $0x130] sm:$0xff] %v6694
      %6863 = vst [vmem:[%s328 + $0x138] sm:$0xff] %v6695
      %6864 = vst [vmem:[%s328 + $0x140] sm:$0xff] %v6696
      %6865 = vst [vmem:[%s328 + $0x148] sm:$0xff] %v6697
      %6866 = vst [vmem:[%s328 + $0x150] sm:$0xff] %v6698
      %6867 = vst [vmem:[%s328 + $0x158] sm:$0xff] %v6699
      %6868 = vst [vmem:[%s328 + $0x160] sm:$0xff] %v6700
      %6869 = vst [vmem:[%s328 + $0x168] sm:$0xff] %v6701
      %6870 = vst [vmem:[%s328 + $0x170] sm:$0xff] %v6702
      %6871 = vst [vmem:[%s328 + $0x178] sm:$0xff] %v6703
      %6872 = vst [vmem:[%s328 + $0x180] sm:$0xff] %v6704
      %6873 = vst [vmem:[%s328 + $0x188] sm:$0xff] %v6705
      %6874 = vst [vmem:[%s328 + $0x190] sm:$0xff] %v6706
      %6875 = vst [vmem:[%s328 + $0x198] sm:$0xff] %v6707
      %6876 = vst [vmem:[%s328 + $0x1a0] sm:$0xff] %v6708
      %6877 = vst [vmem:[%s328 + $0x1a8] sm:$0xff] %v6709
      %6878 = vst [vmem:[%s328 + $0x1b0] sm:$0xff] %v6710
      %6879 = vst [vmem:[%s328 + $0x1b8] sm:$0xff] %v6711
      %6880 = vst [vmem:[%s328 + $0x1c0] sm:$0xff] %v6712
      %6881 = vst [vmem:[%s328 + $0x1c8] sm:$0xff] %v6713
      %6882 = vst [vmem:[%s328 + $0x1d0] sm:$0xff] %v6714
      %6883 = vst [vmem:[%s328 + $0x1d8] sm:$0xff] %v6715
      %6884 = vst [vmem:[%s328 + $0x1e0] sm:$0xff] %v6716
      %6885 = vst [vmem:[%s328 + $0x1e8] sm:$0xff] %v6717
      %6886 = vst [vmem:[%s328 + $0x1f0] sm:$0xff] %v6718
      %6887 = vst [vmem:[%s328 + $0x1f8] sm:$0xff] %v6719
      %6888 = vst [vmem:[%s328 + $0x200] sm:$0xff] %v6720
      %6889 = vst [vmem:[%s328 + $0x208] sm:$0xff] %v6721
      %6890 = vst [vmem:[%s328 + $0x210] sm:$0xff] %v6722
      %6891 = vst [vmem:[%s328 + $0x218] sm:$0xff] %v6723
      %6892 = vst [vmem:[%s328 + $0x220] sm:$0xff] %v6724
      %6893 = vst [vmem:[%s328 + $0x228] sm:$0xff] %v6725
      %6894 = vst [vmem:[%s328 + $0x230] sm:$0xff] %v6726
      %6895 = vst [vmem:[%s328 + $0x238] sm:$0xff] %v6727
      %6896 = vst [vmem:[%s328 + $0x240] sm:$0xff] %v6728
      %6897 = vst [vmem:[%s328 + $0x248] sm:$0xff] %v6729
      %6898 = vst [vmem:[%s328 + $0x250] sm:$0xff] %v6730
      %6899 = vst [vmem:[%s328 + $0x258] sm:$0xff] %v6731
      %6900 = vst [vmem:[%s328 + $0x260] sm:$0xff] %v6732
      %6901 = vst [vmem:[%s328 + $0x268] sm:$0xff] %v6733
      %6902 = vst [vmem:[%s328 + $0x270] sm:$0xff] %v6734
      %6903 = vst [vmem:[%s328 + $0x278] sm:$0xff] %v6735
      %6904 = vst [vmem:[%s328 + $0x280] sm:$0xff] %v6736
      %6905 = vst [vmem:[%s328 + $0x288] sm:$0xff] %v6737
      %6906 = vst [vmem:[%s328 + $0x290] sm:$0xff] %v6738
      %6907 = vst [vmem:[%s328 + $0x298] sm:$0xff] %v6739
      %6908 = vst [vmem:[%s328 + $0x2a0] sm:$0xff] %v6740
      %6909 = vst [vmem:[%s328 + $0x2a8] sm:$0xff] %v6741
      %6910 = vst [vmem:[%s328 + $0x2b0] sm:$0xff] %v6742
      %6911 = vst [vmem:[%s328 + $0x2b8] sm:$0xff] %v6743
      %6912 = vst [vmem:[%s328 + $0x2c0] sm:$0xff] %v6744
      %6913 = vst [vmem:[%s328 + $0x2c8] sm:$0xff] %v6745
      %6914 = vst [vmem:[%s328 + $0x2d0] sm:$0xff] %v6746
      %6915 = vst [vmem:[%s328 + $0x2d8] sm:$0xff] %v6747
      %6916 = vst [vmem:[%s328 + $0x2e0] sm:$0xff] %v6748
      %6917 = vst [vmem:[%s328 + $0x2e8] sm:$0xff] %v6749
      %6918 = vst [vmem:[%s328 + $0x2f0] sm:$0xff] %v6750
      %6919 = vst [vmem:[%s328 + $0x2f8] sm:$0xff] %v6751
      %6920 = vst [vmem:[%s328 + $0x300] sm:$0xff] %v6752
      %6921 = vst [vmem:[%s328 + $0x308] sm:$0xff] %v6753
      %6922 = vst [vmem:[%s328 + $0x310] sm:$0xff] %v6754
      %6923 = vst [vmem:[%s328 + $0x318] sm:$0xff] %v6755
      %6924 = vst [vmem:[%s328 + $0x320] sm:$0xff] %v6756
      %6925 = vst [vmem:[%s328 + $0x328] sm:$0xff] %v6757
      %6926 = vst [vmem:[%s328 + $0x330] sm:$0xff] %v6758
      %6927 = vst [vmem:[%s328 + $0x338] sm:$0xff] %v6759
      %6928 = vst [vmem:[%s328 + $0x340] sm:$0xff] %v6760
      %6929 = vst [vmem:[%s328 + $0x348] sm:$0xff] %v6761
      %6930 = vst [vmem:[%s328 + $0x350] sm:$0xff] %v6762
      %6931 = vst [vmem:[%s328 + $0x358] sm:$0xff] %v6763
      %6932 = vst [vmem:[%s328 + $0x360] sm:$0xff] %v6764
      %6933 = vst [vmem:[%s328 + $0x368] sm:$0xff] %v6765
      %6934 = vst [vmem:[%s328 + $0x370] sm:$0xff] %v6766
      %6935 = vst [vmem:[%s328 + $0x378] sm:$0xff] %v6767
      %6936 = vst [vmem:[%s328 + $0x380] sm:$0xff] %v6768
      %6937 = vst [vmem:[%s328 + $0x388] sm:$0xff] %v6769
      %6938 = vst [vmem:[%s328 + $0x390] sm:$0xff] %v6770
      %6939 = vst [vmem:[%s328 + $0x398] sm:$0xff] %v6771
      %6940 = vst [vmem:[%s328 + $0x3a0] sm:$0xff] %v6772
      %6941 = vst [vmem:[%s328 + $0x3a8] sm:$0xff] %v6773
      %6942 = vst [vmem:[%s328 + $0x3b0] sm:$0xff] %v6774
      %6943 = vst [vmem:[%s328 + $0x3b8] sm:$0xff] %v6775
      %6944 = vst [vmem:[%s328 + $0x3c0] sm:$0xff] %v6776
      %6945 = vst [vmem:[%s328 + $0x3c8] sm:$0xff] %v6777
      %6946 = vst [vmem:[%s328 + $0x3d0] sm:$0xff] %v6778
      %6947 = vst [vmem:[%s328 + $0x3d8] sm:$0xff] %v6779
      %6948 = vst [vmem:[%s328 + $0x3e0] sm:$0xff] %v6780
      %6949 = vst [vmem:[%s328 + $0x3e8] sm:$0xff] %v6781
      %6950 = vst [vmem:[%s328 + $0x3f0] sm:$0xff] %v6782
      %6951 = vst [vmem:[%s328 + $0x3f8] sm:$0xff] %v6783
      %6952 = vst [vmem:[%s328 + $0x400] sm:$0xff] %v6784
      %6953 = vst [vmem:[%s328 + $0x408] sm:$0xff] %v6785
      %6954 = vst [vmem:[%s328 + $0x410] sm:$0xff] %v6786
      %6955 = vst [vmem:[%s328 + $0x418] sm:$0xff] %v6787
      %6956 = vst [vmem:[%s328 + $0x420] sm:$0xff] %v6788
      %6957 = vst [vmem:[%s328 + $0x428] sm:$0xff] %v6789
      %6958 = vst [vmem:[%s328 + $0x430] sm:$0xff] %v6790
      %6959 = vst [vmem:[%s328 + $0x438] sm:$0xff] %v6791
      %6960 = vst [vmem:[%s328 + $0x440] sm:$0xff] %v6792
      %6961 = vst [vmem:[%s328 + $0x448] sm:$0xff] %v6793
      %6962 = vst [vmem:[%s328 + $0x450] sm:$0xff] %v6794
      %6963 = vst [vmem:[%s328 + $0x458] sm:$0xff] %v6795
      %6964 = vst [vmem:[%s328 + $0x460] sm:$0xff] %v6796
      %6965 = vst [vmem:[%s328 + $0x468] sm:$0xff] %v6797
      %6966 = vst [vmem:[%s328 + $0x470] sm:$0xff] %v6798
      %6967 = vst [vmem:[%s328 + $0x478] sm:$0xff] %v6799
      %6968 = vst [vmem:[%s328 + $0x480] sm:$0xff] %v6800
      %6969 = vst [vmem:[%s328 + $0x488] sm:$0xff] %v6801
      %6970 = vst [vmem:[%s328 + $0x490] sm:$0xff] %v6802
      %6971 = vst [vmem:[%s328 + $0x498] sm:$0xff] %v6803
      %6972 = vst [vmem:[%s328 + $0x4a0] sm:$0xff] %v6804
      %6973 = vst [vmem:[%s328 + $0x4a8] sm:$0xff] %v6805
      %6974 = vst [vmem:[%s328 + $0x4b0] sm:$0xff] %v6806
      %6975 = vst [vmem:[%s328 + $0x4b8] sm:$0xff] %v6807
      %6976 = vst [vmem:[%s328 + $0x4c0] sm:$0xff] %v6808
      %6977 = vst [vmem:[%s328 + $0x4c8] sm:$0xff] %v6809
      %6978 = vst [vmem:[%s328 + $0x4d0] sm:$0xff] %v6810
      %6979 = vst [vmem:[%s328 + $0x4d8] sm:$0xff] %v6811
      %6980 = vst [vmem:[%s328 + $0x4e0] sm:$0xff] %v6812
      %6981 = vst [vmem:[%s328 + $0x4e8] sm:$0xff] %v6813
      %6982 = vst [vmem:[%s328 + $0x4f0] sm:$0xff] %v6814
      %6983 = vst [vmem:[%s328 + $0x4f8] sm:$0xff] %v6815
      %6984 = vst [vmem:[%s328 + $0x500] sm:$0xff] %v6816
      %6985 = vst [vmem:[%s328 + $0x508] sm:$0xff] %v6817
      %6986 = vst [vmem:[%s328 + $0x510] sm:$0xff] %v6818
      %6987 = vst [vmem:[%s328 + $0x518] sm:$0xff] %v6819
      %6988 = vst [vmem:[%s328 + $0x520] sm:$0xff] %v6820
      %6989 = vst [vmem:[%s328 + $0x528] sm:$0xff] %v6821
      %6990 = vst [vmem:[%s328 + $0x530] sm:$0xff] %v6822
      %6991 = vst [vmem:[%s328 + $0x538] sm:$0xff] %v6823
      %p6992 = scmp.lt.s32.totalorder %s17, 1
      %s6993 = scalar_select %p6992, %s17, 1
      %s6994 = smul.addr %s6993, 168
      %s6995 = smul.addr %s6994, 8
      %s6996 = scalar_lea.vmem %s6, %s6995
      // Predicated region
      $region45: #{forward.3} parent=43 // pred_check
        %p6997 = pneg %p186
      $region46: #{forward.3} parent=43 // pred_check_branch
        %6999 = sbr.rel (%p6997) target = $region48
      $region47: #{forward.3} parent=43 // pred_region
        _
      $region48: #{forward.3} parent=43 // pred_fallthru
        _
    $region44: #{forward.3} parent=5 // pred_fallthru
      _
    %p7000 = scmp.le.s32.totalorder 2, %s12
    // Predicated region
    $region49: #{forward.3} parent=5 // pred_check
      %p7001 = pneg %p7000
    $region50: #{forward.3} parent=5 // pred_check_branch
      %7003 = sbr.rel (%p7001) target = $region52
    $region51: #{forward.3} parent=5 // pred_region
      %s7004 = ssub.s32 %s12, 2
      // Predicated region
      $region53: #{forward.3} parent=51 // pred_check
        %p7005 = pneg %p192
      $region54: #{forward.3} parent=51 // pred_check_branch
        %7007 = sbr.rel (%p7005) target = $region56
      $region55: #{forward.3} parent=51 // pred_region
        %p7008 = scmp.lt.s32.totalorder %s18, 1
        %s7009 = scalar_select %p7008, %s18, 1
        %s7010 = smul.addr %s7009, 168
        %s7011 = smul.addr %s7010, 8
        %s7012 = scalar_lea.vmem %s6, %s7011
      $region56: #{forward.3} parent=51 // pred_fallthru
        _
    $region52: #{forward.3} parent=5 // pred_fallthru
      _
  $region6: #{forward.3} parent=0 // loop_footer
    %s16 = sadd.s32 1, %s12
  $region7: #{forward.3} parent=0 // loop_footer_branch
    %11 = sbr.rel target = $region3
  $region8: #{forward.3} parent=0 // loop_exit
    _

</llo_original>
